<compile_context>
chip_gen: v6e
topology: v6e:2x2x1
jax: 0.10.0
libtpu: 0.0.40
codegen_flags: <defaults>
</compile_context>

<pallas_src>
import jax
import jax.numpy as jnp
from jax.experimental import pallas as pl
from jax.experimental.pallas import tpu as pltpu


# ---------------------------------------------------------------------------
# Fused kernel: ReLULin(x3) -> uL/vL/vv + residuals -> MLP -> residual
# All tensors stay in the flat (C, N*N) lane-dense layout.
# ---------------------------------------------------------------------------
def _sswl_plus_kernel(x_ref, a_ref, at_ref, wb_ref, bb_ref, w1_ref, b1_ref,
                      w2_ref, b2_ref, r_ref, rt_ref, t_ref, tt_ref,
                      eyeblk_ref, blkdiag_ref, sdiag_ref,
                      out_ref, ku_ref, kv_ref):
    C = w1_ref.shape[0]
    G = x_ref.shape[0]          # graphs per grid step (static)
    f32 = jnp.float32

    for g in range(G):          # static unroll over the graphs of this block
        x = x_ref[g]            # (C, NN)   lane-dense
        a = a_ref[g]            # (N, N)    adjacency
        at = at_ref[g]          # (N, N)    adjacency transposed

        # ---- phase 1: packed ReLULin for the uL / vL / vv branches (MXU) ----
        # wb: (3C, C);  relu(x): (C, NN)  ->  hp: (3C, NN)
        hp = jnp.dot(wb_ref[...], jnp.maximum(x, 0.0),
                     preferred_element_type=f32) + bb_ref[...]
        hu = hp[0:C]            # branch 'uL' after_nn   (C, NN)
        hv = hp[C:2 * C]        # branch 'vL' after_nn
        hw = hp[2 * C:3 * C]    # branch 'vv' after_nn

        # ---- build per-graph kron operators in VMEM (MXU + one masked mul) --
        #   ku = kron(A^T, I_N):  ku[w*N+v', u*N+v] = A[u,w] * (v'==v)
        #   kv = kron(I_N, A):    kv[u*N+w, u'*N+v] = (u==u') * A[w,v]
        ku_ref[...] = jnp.dot(
            r_ref[...], jnp.dot(at, rt_ref[...], preferred_element_type=f32),
            preferred_element_type=f32) * eyeblk_ref[...]
        kv_ref[...] = jnp.dot(
            t_ref[...], jnp.dot(a, tt_ref[...], preferred_element_type=f32),
            preferred_element_type=f32) * blkdiag_ref[...]

        # ---- phase 2: residuals + uL / vL / vv as lane-dense MXU matmuls ----
        agg = (hu + hv + hw
               + jnp.dot(hu, ku_ref[...], preferred_element_type=f32)     # uL
               + jnp.dot(hv, kv_ref[...], preferred_element_type=f32)     # vL
               + jnp.dot(hw, sdiag_ref[...], preferred_element_type=f32)) # vv

        # ---- phase 3: out = agg + Conv1x1(ReLULin(agg));  one store ---------
        t1 = jnp.dot(w1_ref[...], jnp.maximum(agg, 0.0),
                     preferred_element_type=f32) + b1_ref[...]
        out_ref[g] = agg + jnp.dot(w2_ref[...], t1,
                                   preferred_element_type=f32) + b2_ref[...]


# ---------------------------------------------------------------------------
# pallas_call wrapper (fully fused layer forward)
# ---------------------------------------------------------------------------
def _pick_graphs_per_step(batch, max_graphs=8, min_steps=4):
    """Largest divisor of `batch` (<= max_graphs) that still leaves the grid
    with >= min_steps steps (keeps both v7x TensorCores pipelined)."""
    target_steps = min(min_steps, batch)
    for g in range(min(batch, max_graphs), 0, -1):
        if batch % g == 0 and batch // g >= target_steps:
            return g
    return 1


def sswl_plus_layer_forward(X, A, params, graphs_per_step=None):
    """X: (B, C, N, N) float32, A: (B, N, N) float32.  Returns (B, C, N, N)."""
    B, C, N, _ = X.shape
    NN = N * N
    G = graphs_per_step if graphs_per_step is not None else _pick_graphs_per_step(B)
    assert B % G == 0, "graphs_per_step must divide the batch"
    num_steps = B // G

    # Pack the three branch ReLULin weights: one (3C, C) matmul instead of three.
    wb = jnp.concatenate(
        [params["w_uL"], params["w_vL"], params["w_vv"]], axis=0)        # (3C, C)
    bb = jnp.concatenate(
        [params["b_uL"], params["b_vL"], params["b_vv"]], axis=0)[:, None]
    w1, b1 = params["w_m1"], params["b_m1"][:, None]
    w2, b2 = params["w_m2"], params["b_m2"][:, None]

    # Constant (N-only) helper matrices: repeat/tile factors + block-identity
    # masks + the diagonal-broadcast operator.  Passed with a constant
    # index_map -> DMA'd once, resident in VMEM for all grid steps.
    eye_n = jnp.eye(N, dtype=jnp.float32)
    r_mat = jnp.repeat(eye_n, N, axis=0)          # (NN, N): R[p*N+r, q] = (p==q)
    t_mat = jnp.tile(eye_n, (N, 1))               # (NN, N): T[u*N+w, q] = (w==q)
    rt_mat = r_mat.T                              # (N, NN)
    tt_mat = t_mat.T                              # (N, NN)
    jr = jnp.arange(NN)[:, None]
    ic = jnp.arange(NN)[None, :]
    eyeblk = ((jr % N) == (ic % N)).astype(jnp.float32)     # kron(.., I_N) mask
    blkdiag = ((jr // N) == (ic // N)).astype(jnp.float32)  # kron(I_N, ..) mask
    s_diag = (jr == (ic % N) * (N + 1)).astype(jnp.float32) # vv diag-broadcast

    xf = X.reshape(B, C, NN)                 # free, contiguous (stays NCHW)
    a_t = jnp.transpose(A, (0, 2, 1))        # tiny (B,N,N) transpose in XLA
    whole2 = lambda b: (0, 0)

    outf = pl.pallas_call(
        _sswl_plus_kernel,
        out_shape=jax.ShapeDtypeStruct((B, C, NN), jnp.float32),
        grid=(num_steps,),
        in_specs=[
            pl.BlockSpec((G, C, NN), lambda b: (b, 0, 0)),    # X (G graphs)
            pl.BlockSpec((G, N, N), lambda b: (b, 0, 0)),     # A
            pl.BlockSpec((G, N, N), lambda b: (b, 0, 0)),     # A^T
            pl.BlockSpec((3 * C, C), whole2),                 # packed branch W
            pl.BlockSpec((3 * C, 1), whole2),                 # packed branch b
            pl.BlockSpec((C, C), whole2),                     # mlp W1
            pl.BlockSpec((C, 1), whole2),                     # mlp b1
            pl.BlockSpec((C, C), whole2),                     # mlp W2
            pl.BlockSpec((C, 1), whole2),                     # mlp b2
            pl.BlockSpec((NN, N), whole2),                    # R   (repeat)
            pl.BlockSpec((N, NN), whole2),                    # R^T
            pl.BlockSpec((NN, N), whole2),                    # T   (tile)
            pl.BlockSpec((N, NN), whole2),                    # T^T
            pl.BlockSpec((NN, NN), whole2),                   # eyeblk mask
            pl.BlockSpec((NN, NN), whole2),                   # blkdiag mask
            pl.BlockSpec((NN, NN), whole2),                   # S_diag (vv op)
        ],
        out_specs=pl.BlockSpec((G, C, NN), lambda b: (b, 0, 0)),
        scratch_shapes=[pltpu.VMEM((NN, NN), jnp.float32),    # ku operator
                        pltpu.VMEM((NN, NN), jnp.float32)],   # kv operator
        compiler_params=pltpu.CompilerParams(
            dimension_semantics=("parallel",),   # independent graph blocks
            vmem_limit_bytes=32 * 1024 * 1024,
        ),
    )(xf, A, a_t, wb, bb, w1, b1, w2, b2,
      r_mat, rt_mat, t_mat, tt_mat, eyeblk, blkdiag, s_diag)
    return outf.reshape(B, C, N, N)


# ---------------------------------------------------------------------------
# Pure-JAX reference (for self-check) and deterministic parameter init
# ---------------------------------------------------------------------------
def reference_forward(X, A, p):
    hp = jax.lax.Precision.HIGHEST

    def relulin(x, w, b):
        h = jnp.maximum(x, 0.0)
        return (jnp.einsum('oc,bcuv->bouv', w, h, precision=hp)
                + b.reshape(1, -1, 1, 1))

    hu = relulin(X, p["w_uL"], p["b_uL"])
    hv = relulin(X, p["w_vL"], p["b_vL"])
    hw = relulin(X, p["w_vv"], p["b_vv"])
    op_u = jnp.einsum('buw,bcwv->bcuv', A, hu, precision=hp)        # uL
    op_v = jnp.einsum('bcuw,bwv->bcuv', hv, A, precision=hp)        # vL
    op_w = jnp.diagonal(hw, axis1=-2, axis2=-1)[:, :, None, :]      # vv
    agg = (hu + op_u) + (hv + op_v) + (hw + op_w)
    t = relulin(agg, p["w_m1"], p["b_m1"])
    m = (jnp.einsum('oc,bcuv->bouv', p["w_m2"], t, precision=hp)
         + p["b_m2"].reshape(1, -1, 1, 1))
    return agg + m


def init_params(key, C):
    # 1x1-conv weights stored PyTorch-style as (C_out, C_in); biases as (C,)
    ks = jax.random.split(key, 10)
    s = 1.0 / jnp.sqrt(jnp.float32(C))
    w = lambda k: jax.random.normal(k, (C, C), jnp.float32) * s
    b = lambda k: jax.random.normal(k, (C,), jnp.float32) * 0.1
    return dict(w_uL=w(ks[0]), b_uL=b(ks[1]),
                w_vL=w(ks[2]), b_vL=b(ks[3]),
                w_vv=w(ks[4]), b_vv=b(ks[5]),
                w_m1=w(ks[6]), b_m1=b(ks[7]),
                w_m2=w(ks[8]), b_m2=b(ks[9]))


# ---------------------------------------------------------------------------
if __name__ == "__main__":
    key = jax.random.PRNGKey(0)
    kx, ka, kp = jax.random.split(key, 3)

    B, C, N = 8, 32, 16                       # batch, channels, num nodes
    X = jax.random.normal(kx, (B, C, N, N), jnp.float32)
    A = (jax.random.uniform(ka, (B, N, N)) < 0.3).astype(jnp.float32)
    A = jnp.maximum(A, jnp.transpose(A, (0, 2, 1)))   # undirected adjacency
    params = init_params(kp, C)

    fwd = jax.jit(sswl_plus_layer_forward)
    out = jax.block_until_ready(fwd(X, A, params))

    ref = reference_forward(X, A, params)
    err = float(jnp.max(jnp.abs(out - ref)))
    assert out.shape == (B, C, N, N) and out.dtype == jnp.float32
    assert jnp.allclose(out, ref, rtol=5e-3, atol=5e-3), f"max abs err {err}"

    print("KERNEL_OK")
</pallas_src>

<mosaic_0001>
module attributes {stable_mosaic.version = 11 : i64} {
  func.func @_sswl_plus_kernel(%arg0: i32, %arg1: memref<2x32x256xf32, #tpu.memory_space<vmem>>, %arg2: memref<2x16x16xf32, #tpu.memory_space<vmem>>, %arg3: memref<2x16x16xf32, #tpu.memory_space<vmem>>, %arg4: memref<96x32xf32, #tpu.memory_space<vmem>>, %arg5: memref<96x1xf32, #tpu.memory_space<vmem>>, %arg6: memref<32x32xf32, #tpu.memory_space<vmem>>, %arg7: memref<32x1xf32, #tpu.memory_space<vmem>>, %arg8: memref<32x32xf32, #tpu.memory_space<vmem>>, %arg9: memref<32x1xf32, #tpu.memory_space<vmem>>, %arg10: memref<256x16xf32, #tpu.memory_space<vmem>>, %arg11: memref<16x256xf32, #tpu.memory_space<vmem>>, %arg12: memref<256x16xf32, #tpu.memory_space<vmem>>, %arg13: memref<16x256xf32, #tpu.memory_space<vmem>>, %arg14: memref<256x256xf32, #tpu.memory_space<vmem>>, %arg15: memref<256x256xf32, #tpu.memory_space<vmem>>, %arg16: memref<256x256xf32, #tpu.memory_space<vmem>>, %arg17: memref<2x32x256xf32, #tpu.memory_space<vmem>>, %arg18: memref<256x256xf32, #tpu.memory_space<vmem>>, %arg19: memref<256x256xf32, #tpu.memory_space<vmem>>) attributes {dimension_semantics = [#tpu.dimension_semantics<parallel>], iteration_bounds = array<i64: 4>, scalar_prefetch = 0 : i64, scratch_operands = 2 : i64, tpu.core_type = #tpu.core_type<tc>, window_params = [{transform_indices = @transform_0, window_bounds = array<i64: 2, 32, 256>}, {transform_indices = @transform_1, window_bounds = array<i64: 2, 16, 16>}, {transform_indices = @transform_2, window_bounds = array<i64: 2, 16, 16>}, {pipeline_mode = #tpu.pipeline_mode<synchronous>, transform_indices = @transform_3, window_bounds = array<i64: 96, 32>}, {pipeline_mode = #tpu.pipeline_mode<synchronous>, transform_indices = @transform_4, window_bounds = array<i64: 96, 1>}, {pipeline_mode = #tpu.pipeline_mode<synchronous>, transform_indices = @transform_5, window_bounds = array<i64: 32, 32>}, {pipeline_mode = #tpu.pipeline_mode<synchronous>, transform_indices = @transform_6, window_bounds = array<i64: 32, 1>}, {pipeline_mode = #tpu.pipeline_mode<synchronous>, transform_indices = @transform_7, window_bounds = array<i64: 32, 32>}, {pipeline_mode = #tpu.pipeline_mode<synchronous>, transform_indices = @transform_8, window_bounds = array<i64: 32, 1>}, {pipeline_mode = #tpu.pipeline_mode<synchronous>, transform_indices = @transform_9, window_bounds = array<i64: 256, 16>}, {pipeline_mode = #tpu.pipeline_mode<synchronous>, transform_indices = @transform_10, window_bounds = array<i64: 16, 256>}, {pipeline_mode = #tpu.pipeline_mode<synchronous>, transform_indices = @transform_11, window_bounds = array<i64: 256, 16>}, {pipeline_mode = #tpu.pipeline_mode<synchronous>, transform_indices = @transform_12, window_bounds = array<i64: 16, 256>}, {pipeline_mode = #tpu.pipeline_mode<synchronous>, transform_indices = @transform_13, window_bounds = array<i64: 256, 256>}, {pipeline_mode = #tpu.pipeline_mode<synchronous>, transform_indices = @transform_14, window_bounds = array<i64: 256, 256>}, {pipeline_mode = #tpu.pipeline_mode<synchronous>, transform_indices = @transform_15, window_bounds = array<i64: 256, 256>}, {transform_indices = @transform_16, window_bounds = array<i64: 2, 32, 256>}]} {
    %c0 = arith.constant 0 : index
    %c0_0 = arith.constant 0 : index
    %c0_1 = arith.constant 0 : index
    %0 = vector.load %arg1[%c0, %c0_0, %c0_1] : memref<2x32x256xf32, #tpu.memory_space<vmem>>, vector<1x32x256xf32>
    %1 = vector.shape_cast %0 : vector<1x32x256xf32> to vector<32x256xf32>
    %c0_2 = arith.constant 0 : index
    %c0_3 = arith.constant 0 : index
    %c0_4 = arith.constant 0 : index
    %2 = vector.load %arg2[%c0_2, %c0_3, %c0_4] : memref<2x16x16xf32, #tpu.memory_space<vmem>>, vector<1x16x16xf32>
    %3 = vector.shape_cast %2 : vector<1x16x16xf32> to vector<16x16xf32>
    %c0_5 = arith.constant 0 : index
    %c0_6 = arith.constant 0 : index
    %c0_7 = arith.constant 0 : index
    %4 = vector.load %arg3[%c0_5, %c0_6, %c0_7] : memref<2x16x16xf32, #tpu.memory_space<vmem>>, vector<1x16x16xf32>
    %5 = vector.shape_cast %4 : vector<1x16x16xf32> to vector<16x16xf32>
    %c0_8 = arith.constant 0 : index
    %c0_9 = arith.constant 0 : index
    %6 = vector.load %arg4[%c0_8, %c0_9] : memref<96x32xf32, #tpu.memory_space<vmem>>, vector<96x32xf32>
    %cst = arith.constant 0.000000e+00 : f32
    %7 = vector.broadcast %cst : f32 to vector<32x256xf32>
    %8 = arith.maximumf %1, %7 : vector<32x256xf32>
    %cst_10 = arith.constant dense<0.000000e+00> : vector<96x256xf32>
    %9 = tpu.matmul %6, %8, %cst_10 {dimension_numbers = #tpu.dot_dimension_numbers<[1], [0], [0], [1], [0, 0, 1, 1], [], []>} : vector<96x32xf32>, vector<32x256xf32>, vector<96x256xf32> -> vector<96x256xf32>
    %c0_11 = arith.constant 0 : index
    %c0_12 = arith.constant 0 : index
    %10 = vector.load %arg5[%c0_11, %c0_12] : memref<96x1xf32, #tpu.memory_space<vmem>>, vector<96x1xf32>
    %11 = vector.broadcast %10 : vector<96x1xf32> to vector<96x256xf32>
    %12 = arith.addf %9, %11 : vector<96x256xf32>
    %13 = vector.extract_strided_slice %12 {offsets = [0, 0], sizes = [32, 256], strides = [1, 1]} : vector<96x256xf32> to vector<32x256xf32>
    %14 = vector.extract_strided_slice %12 {offsets = [32, 0], sizes = [32, 256], strides = [1, 1]} : vector<96x256xf32> to vector<32x256xf32>
    %15 = vector.extract_strided_slice %12 {offsets = [64, 0], sizes = [32, 256], strides = [1, 1]} : vector<96x256xf32> to vector<32x256xf32>
    %c0_13 = arith.constant 0 : index
    %c0_14 = arith.constant 0 : index
    %16 = vector.load %arg10[%c0_13, %c0_14] : memref<256x16xf32, #tpu.memory_space<vmem>>, vector<256x16xf32>
    %c0_15 = arith.constant 0 : index
    %c0_16 = arith.constant 0 : index
    %17 = vector.load %arg11[%c0_15, %c0_16] : memref<16x256xf32, #tpu.memory_space<vmem>>, vector<16x256xf32>
    %cst_17 = arith.constant dense<0.000000e+00> : vector<16x256xf32>
    %18 = tpu.matmul %5, %17, %cst_17 {dimension_numbers = #tpu.dot_dimension_numbers<[1], [0], [0], [1], [0, 0, 1, 1], [], []>} : vector<16x16xf32>, vector<16x256xf32>, vector<16x256xf32> -> vector<16x256xf32>
    %cst_18 = arith.constant dense<0.000000e+00> : vector<256x256xf32>
    %19 = tpu.matmul %16, %18, %cst_18 {dimension_numbers = #tpu.dot_dimension_numbers<[1], [0], [0], [1], [0, 0, 1, 1], [], []>} : vector<256x16xf32>, vector<16x256xf32>, vector<256x256xf32> -> vector<256x256xf32>
    %c0_19 = arith.constant 0 : index
    %c0_20 = arith.constant 0 : index
    %20 = vector.load %arg14[%c0_19, %c0_20] : memref<256x256xf32, #tpu.memory_space<vmem>>, vector<256x256xf32>
    %21 = arith.mulf %19, %20 : vector<256x256xf32>
    %c0_21 = arith.constant 0 : index
    %c0_22 = arith.constant 0 : index
    %22 = vector.load %arg18[%c0_21, %c0_22] : memref<256x256xf32, #tpu.memory_space<vmem>>, vector<256x256xf32>
    tpu.vector_store %arg18[%c0_21, %c0_22], %21 {strides = array<i32>} : memref<256x256xf32, #tpu.memory_space<vmem>>, vector<256x256xf32>,
    %c0_23 = arith.constant 0 : index
    %c0_24 = arith.constant 0 : index
    %23 = vector.load %arg12[%c0_23, %c0_24] : memref<256x16xf32, #tpu.memory_space<vmem>>, vector<256x16xf32>
    %c0_25 = arith.constant 0 : index
    %c0_26 = arith.constant 0 : index
    %24 = vector.load %arg13[%c0_25, %c0_26] : memref<16x256xf32, #tpu.memory_space<vmem>>, vector<16x256xf32>
    %cst_27 = arith.constant dense<0.000000e+00> : vector<16x256xf32>
    %25 = tpu.matmul %3, %24, %cst_27 {dimension_numbers = #tpu.dot_dimension_numbers<[1], [0], [0], [1], [0, 0, 1, 1], [], []>} : vector<16x16xf32>, vector<16x256xf32>, vector<16x256xf32> -> vector<16x256xf32>
    %cst_28 = arith.constant dense<0.000000e+00> : vector<256x256xf32>
    %26 = tpu.matmul %23, %25, %cst_28 {dimension_numbers = #tpu.dot_dimension_numbers<[1], [0], [0], [1], [0, 0, 1, 1], [], []>} : vector<256x16xf32>, vector<16x256xf32>, vector<256x256xf32> -> vector<256x256xf32>
    %c0_29 = arith.constant 0 : index
    %c0_30 = arith.constant 0 : index
    %27 = vector.load %arg15[%c0_29, %c0_30] : memref<256x256xf32, #tpu.memory_space<vmem>>, vector<256x256xf32>
    %28 = arith.mulf %26, %27 : vector<256x256xf32>
    %c0_31 = arith.constant 0 : index
    %c0_32 = arith.constant 0 : index
    %29 = vector.load %arg19[%c0_31, %c0_32] : memref<256x256xf32, #tpu.memory_space<vmem>>, vector<256x256xf32>
    tpu.vector_store %arg19[%c0_31, %c0_32], %28 {strides = array<i32>} : memref<256x256xf32, #tpu.memory_space<vmem>>, vector<256x256xf32>,
    %30 = arith.addf %13, %14 : vector<32x256xf32>
    %31 = arith.addf %30, %15 : vector<32x256xf32>
    %c0_33 = arith.constant 0 : index
    %c0_34 = arith.constant 0 : index
    %32 = vector.load %arg18[%c0_33, %c0_34] : memref<256x256xf32, #tpu.memory_space<vmem>>, vector<256x256xf32>
    %cst_35 = arith.constant dense<0.000000e+00> : vector<32x256xf32>
    %33 = tpu.matmul %13, %32, %cst_35 {dimension_numbers = #tpu.dot_dimension_numbers<[1], [0], [0], [1], [0, 0, 1, 1], [], []>} : vector<32x256xf32>, vector<256x256xf32>, vector<32x256xf32> -> vector<32x256xf32>
    %34 = arith.addf %31, %33 : vector<32x256xf32>
    %c0_36 = arith.constant 0 : index
    %c0_37 = arith.constant 0 : index
    %35 = vector.load %arg19[%c0_36, %c0_37] : memref<256x256xf32, #tpu.memory_space<vmem>>, vector<256x256xf32>
    %cst_38 = arith.constant dense<0.000000e+00> : vector<32x256xf32>
    %36 = tpu.matmul %14, %35, %cst_38 {dimension_numbers = #tpu.dot_dimension_numbers<[1], [0], [0], [1], [0, 0, 1, 1], [], []>} : vector<32x256xf32>, vector<256x256xf32>, vector<32x256xf32> -> vector<32x256xf32>
    %37 = arith.addf %34, %36 : vector<32x256xf32>
    %c0_39 = arith.constant 0 : index
    %c0_40 = arith.constant 0 : index
    %38 = vector.load %arg16[%c0_39, %c0_40] : memref<256x256xf32, #tpu.memory_space<vmem>>, vector<256x256xf32>
    %cst_41 = arith.constant dense<0.000000e+00> : vector<32x256xf32>
    %39 = tpu.matmul %15, %38, %cst_41 {dimension_numbers = #tpu.dot_dimension_numbers<[1], [0], [0], [1], [0, 0, 1, 1], [], []>} : vector<32x256xf32>, vector<256x256xf32>, vector<32x256xf32> -> vector<32x256xf32>
    %40 = arith.addf %37, %39 : vector<32x256xf32>
    %c0_42 = arith.constant 0 : index
    %c0_43 = arith.constant 0 : index
    %41 = vector.load %arg6[%c0_42, %c0_43] : memref<32x32xf32, #tpu.memory_space<vmem>>, vector<32x32xf32>
    %cst_44 = arith.constant 0.000000e+00 : f32
    %42 = vector.broadcast %cst_44 : f32 to vector<32x256xf32>
    %43 = arith.maximumf %40, %42 : vector<32x256xf32>
    %cst_45 = arith.constant dense<0.000000e+00> : vector<32x256xf32>
    %44 = tpu.matmul %41, %43, %cst_45 {dimension_numbers = #tpu.dot_dimension_numbers<[1], [0], [0], [1], [0, 0, 1, 1], [], []>} : vector<32x32xf32>, vector<32x256xf32>, vector<32x256xf32> -> vector<32x256xf32>
    %c0_46 = arith.constant 0 : index
    %c0_47 = arith.constant 0 : index
    %45 = vector.load %arg7[%c0_46, %c0_47] : memref<32x1xf32, #tpu.memory_space<vmem>>, vector<32x1xf32>
    %46 = vector.broadcast %45 : vector<32x1xf32> to vector<32x256xf32>
    %47 = arith.addf %44, %46 : vector<32x256xf32>
    %c0_48 = arith.constant 0 : index
    %c0_49 = arith.constant 0 : index
    %48 = vector.load %arg8[%c0_48, %c0_49] : memref<32x32xf32, #tpu.memory_space<vmem>>, vector<32x32xf32>
    %cst_50 = arith.constant dense<0.000000e+00> : vector<32x256xf32>
    %49 = tpu.matmul %48, %47, %cst_50 {dimension_numbers = #tpu.dot_dimension_numbers<[1], [0], [0], [1], [0, 0, 1, 1], [], []>} : vector<32x32xf32>, vector<32x256xf32>, vector<32x256xf32> -> vector<32x256xf32>
    %50 = arith.addf %40, %49 : vector<32x256xf32>
    %c0_51 = arith.constant 0 : index
    %c0_52 = arith.constant 0 : index
    %51 = vector.load %arg9[%c0_51, %c0_52] : memref<32x1xf32, #tpu.memory_space<vmem>>, vector<32x1xf32>
    %52 = vector.broadcast %51 : vector<32x1xf32> to vector<32x256xf32>
    %53 = arith.addf %50, %52 : vector<32x256xf32>
    %c0_53 = arith.constant 0 : index
    %c0_54 = arith.constant 0 : index
    %c0_55 = arith.constant 0 : index
    %54 = vector.load %arg17[%c0_53, %c0_54, %c0_55] : memref<2x32x256xf32, #tpu.memory_space<vmem>>, vector<1x32x256xf32>
    %55 = vector.shape_cast %54 : vector<1x32x256xf32> to vector<32x256xf32>
    %56 = vector.shape_cast %53 : vector<32x256xf32> to vector<1x32x256xf32>
    tpu.vector_store %arg17[%c0_53, %c0_54, %c0_55], %56 {strides = array<i32>} : memref<2x32x256xf32, #tpu.memory_space<vmem>>, vector<1x32x256xf32>,
    %c1 = arith.constant 1 : index
    %c0_56 = arith.constant 0 : index
    %c0_57 = arith.constant 0 : index
    %57 = vector.load %arg1[%c1, %c0_56, %c0_57] : memref<2x32x256xf32, #tpu.memory_space<vmem>>, vector<1x32x256xf32>
    %58 = vector.shape_cast %57 : vector<1x32x256xf32> to vector<32x256xf32>
    %c1_58 = arith.constant 1 : index
    %c0_59 = arith.constant 0 : index
    %c0_60 = arith.constant 0 : index
    %59 = vector.load %arg2[%c1_58, %c0_59, %c0_60] : memref<2x16x16xf32, #tpu.memory_space<vmem>>, vector<1x16x16xf32>
    %60 = vector.shape_cast %59 : vector<1x16x16xf32> to vector<16x16xf32>
    %c1_61 = arith.constant 1 : index
    %c0_62 = arith.constant 0 : index
    %c0_63 = arith.constant 0 : index
    %61 = vector.load %arg3[%c1_61, %c0_62, %c0_63] : memref<2x16x16xf32, #tpu.memory_space<vmem>>, vector<1x16x16xf32>
    %62 = vector.shape_cast %61 : vector<1x16x16xf32> to vector<16x16xf32>
    %c0_64 = arith.constant 0 : index
    %c0_65 = arith.constant 0 : index
    %63 = vector.load %arg4[%c0_64, %c0_65] : memref<96x32xf32, #tpu.memory_space<vmem>>, vector<96x32xf32>
    %cst_66 = arith.constant 0.000000e+00 : f32
    %64 = vector.broadcast %cst_66 : f32 to vector<32x256xf32>
    %65 = arith.maximumf %58, %64 : vector<32x256xf32>
    %cst_67 = arith.constant dense<0.000000e+00> : vector<96x256xf32>
    %66 = tpu.matmul %63, %65, %cst_67 {dimension_numbers = #tpu.dot_dimension_numbers<[1], [0], [0], [1], [0, 0, 1, 1], [], []>} : vector<96x32xf32>, vector<32x256xf32>, vector<96x256xf32> -> vector<96x256xf32>
    %c0_68 = arith.constant 0 : index
    %c0_69 = arith.constant 0 : index
    %67 = vector.load %arg5[%c0_68, %c0_69] : memref<96x1xf32, #tpu.memory_space<vmem>>, vector<96x1xf32>
    %68 = vector.broadcast %67 : vector<96x1xf32> to vector<96x256xf32>
    %69 = arith.addf %66, %68 : vector<96x256xf32>
    %70 = vector.extract_strided_slice %69 {offsets = [0, 0], sizes = [32, 256], strides = [1, 1]} : vector<96x256xf32> to vector<32x256xf32>
    %71 = vector.extract_strided_slice %69 {offsets = [32, 0], sizes = [32, 256], strides = [1, 1]} : vector<96x256xf32> to vector<32x256xf32>
    %72 = vector.extract_strided_slice %69 {offsets = [64, 0], sizes = [32, 256], strides = [1, 1]} : vector<96x256xf32> to vector<32x256xf32>
    %c0_70 = arith.constant 0 : index
    %c0_71 = arith.constant 0 : index
    %73 = vector.load %arg10[%c0_70, %c0_71] : memref<256x16xf32, #tpu.memory_space<vmem>>, vector<256x16xf32>
    %c0_72 = arith.constant 0 : index
    %c0_73 = arith.constant 0 : index
    %74 = vector.load %arg11[%c0_72, %c0_73] : memref<16x256xf32, #tpu.memory_space<vmem>>, vector<16x256xf32>
    %cst_74 = arith.constant dense<0.000000e+00> : vector<16x256xf32>
    %75 = tpu.matmul %62, %74, %cst_74 {dimension_numbers = #tpu.dot_dimension_numbers<[1], [0], [0], [1], [0, 0, 1, 1], [], []>} : vector<16x16xf32>, vector<16x256xf32>, vector<16x256xf32> -> vector<16x256xf32>
    %cst_75 = arith.constant dense<0.000000e+00> : vector<256x256xf32>
    %76 = tpu.matmul %73, %75, %cst_75 {dimension_numbers = #tpu.dot_dimension_numbers<[1], [0], [0], [1], [0, 0, 1, 1], [], []>} : vector<256x16xf32>, vector<16x256xf32>, vector<256x256xf32> -> vector<256x256xf32>
    %c0_76 = arith.constant 0 : index
    %c0_77 = arith.constant 0 : index
    %77 = vector.load %arg14[%c0_76, %c0_77] : memref<256x256xf32, #tpu.memory_space<vmem>>, vector<256x256xf32>
    %78 = arith.mulf %76, %77 : vector<256x256xf32>
    %c0_78 = arith.constant 0 : index
    %c0_79 = arith.constant 0 : index
    %79 = vector.load %arg18[%c0_78, %c0_79] : memref<256x256xf32, #tpu.memory_space<vmem>>, vector<256x256xf32>
    tpu.vector_store %arg18[%c0_78, %c0_79], %78 {strides = array<i32>} : memref<256x256xf32, #tpu.memory_space<vmem>>, vector<256x256xf32>,
    %c0_80 = arith.constant 0 : index
    %c0_81 = arith.constant 0 : index
    %80 = vector.load %arg12[%c0_80, %c0_81] : memref<256x16xf32, #tpu.memory_space<vmem>>, vector<256x16xf32>
    %c0_82 = arith.constant 0 : index
    %c0_83 = arith.constant 0 : index
    %81 = vector.load %arg13[%c0_82, %c0_83] : memref<16x256xf32, #tpu.memory_space<vmem>>, vector<16x256xf32>
    %cst_84 = arith.constant dense<0.000000e+00> : vector<16x256xf32>
    %82 = tpu.matmul %60, %81, %cst_84 {dimension_numbers = #tpu.dot_dimension_numbers<[1], [0], [0], [1], [0, 0, 1, 1], [], []>} : vector<16x16xf32>, vector<16x256xf32>, vector<16x256xf32> -> vector<16x256xf32>
    %cst_85 = arith.constant dense<0.000000e+00> : vector<256x256xf32>
    %83 = tpu.matmul %80, %82, %cst_85 {dimension_numbers = #tpu.dot_dimension_numbers<[1], [0], [0], [1], [0, 0, 1, 1], [], []>} : vector<256x16xf32>, vector<16x256xf32>, vector<256x256xf32> -> vector<256x256xf32>
    %c0_86 = arith.constant 0 : index
    %c0_87 = arith.constant 0 : index
    %84 = vector.load %arg15[%c0_86, %c0_87] : memref<256x256xf32, #tpu.memory_space<vmem>>, vector<256x256xf32>
    %85 = arith.mulf %83, %84 : vector<256x256xf32>
    %c0_88 = arith.constant 0 : index
    %c0_89 = arith.constant 0 : index
    %86 = vector.load %arg19[%c0_88, %c0_89] : memref<256x256xf32, #tpu.memory_space<vmem>>, vector<256x256xf32>
    tpu.vector_store %arg19[%c0_88, %c0_89], %85 {strides = array<i32>} : memref<256x256xf32, #tpu.memory_space<vmem>>, vector<256x256xf32>,
    %87 = arith.addf %70, %71 : vector<32x256xf32>
    %88 = arith.addf %87, %72 : vector<32x256xf32>
    %c0_90 = arith.constant 0 : index
    %c0_91 = arith.constant 0 : index
    %89 = vector.load %arg18[%c0_90, %c0_91] : memref<256x256xf32, #tpu.memory_space<vmem>>, vector<256x256xf32>
    %cst_92 = arith.constant dense<0.000000e+00> : vector<32x256xf32>
    %90 = tpu.matmul %70, %89, %cst_92 {dimension_numbers = #tpu.dot_dimension_numbers<[1], [0], [0], [1], [0, 0, 1, 1], [], []>} : vector<32x256xf32>, vector<256x256xf32>, vector<32x256xf32> -> vector<32x256xf32>
    %91 = arith.addf %88, %90 : vector<32x256xf32>
    %c0_93 = arith.constant 0 : index
    %c0_94 = arith.constant 0 : index
    %92 = vector.load %arg19[%c0_93, %c0_94] : memref<256x256xf32, #tpu.memory_space<vmem>>, vector<256x256xf32>
    %cst_95 = arith.constant dense<0.000000e+00> : vector<32x256xf32>
    %93 = tpu.matmul %71, %92, %cst_95 {dimension_numbers = #tpu.dot_dimension_numbers<[1], [0], [0], [1], [0, 0, 1, 1], [], []>} : vector<32x256xf32>, vector<256x256xf32>, vector<32x256xf32> -> vector<32x256xf32>
    %94 = arith.addf %91, %93 : vector<32x256xf32>
    %c0_96 = arith.constant 0 : index
    %c0_97 = arith.constant 0 : index
    %95 = vector.load %arg16[%c0_96, %c0_97] : memref<256x256xf32, #tpu.memory_space<vmem>>, vector<256x256xf32>
    %cst_98 = arith.constant dense<0.000000e+00> : vector<32x256xf32>
    %96 = tpu.matmul %72, %95, %cst_98 {dimension_numbers = #tpu.dot_dimension_numbers<[1], [0], [0], [1], [0, 0, 1, 1], [], []>} : vector<32x256xf32>, vector<256x256xf32>, vector<32x256xf32> -> vector<32x256xf32>
    %97 = arith.addf %94, %96 : vector<32x256xf32>
    %c0_99 = arith.constant 0 : index
    %c0_100 = arith.constant 0 : index
    %98 = vector.load %arg6[%c0_99, %c0_100] : memref<32x32xf32, #tpu.memory_space<vmem>>, vector<32x32xf32>
    %cst_101 = arith.constant 0.000000e+00 : f32
    %99 = vector.broadcast %cst_101 : f32 to vector<32x256xf32>
    %100 = arith.maximumf %97, %99 : vector<32x256xf32>
    %cst_102 = arith.constant dense<0.000000e+00> : vector<32x256xf32>
    %101 = tpu.matmul %98, %100, %cst_102 {dimension_numbers = #tpu.dot_dimension_numbers<[1], [0], [0], [1], [0, 0, 1, 1], [], []>} : vector<32x32xf32>, vector<32x256xf32>, vector<32x256xf32> -> vector<32x256xf32>
    %c0_103 = arith.constant 0 : index
    %c0_104 = arith.constant 0 : index
    %102 = vector.load %arg7[%c0_103, %c0_104] : memref<32x1xf32, #tpu.memory_space<vmem>>, vector<32x1xf32>
    %103 = vector.broadcast %102 : vector<32x1xf32> to vector<32x256xf32>
    %104 = arith.addf %101, %103 : vector<32x256xf32>
    %c0_105 = arith.constant 0 : index
    %c0_106 = arith.constant 0 : index
    %105 = vector.load %arg8[%c0_105, %c0_106] : memref<32x32xf32, #tpu.memory_space<vmem>>, vector<32x32xf32>
    %cst_107 = arith.constant dense<0.000000e+00> : vector<32x256xf32>
    %106 = tpu.matmul %105, %104, %cst_107 {dimension_numbers = #tpu.dot_dimension_numbers<[1], [0], [0], [1], [0, 0, 1, 1], [], []>} : vector<32x32xf32>, vector<32x256xf32>, vector<32x256xf32> -> vector<32x256xf32>
    %107 = arith.addf %97, %106 : vector<32x256xf32>
    %c0_108 = arith.constant 0 : index
    %c0_109 = arith.constant 0 : index
    %108 = vector.load %arg9[%c0_108, %c0_109] : memref<32x1xf32, #tpu.memory_space<vmem>>, vector<32x1xf32>
    %109 = vector.broadcast %108 : vector<32x1xf32> to vector<32x256xf32>
    %110 = arith.addf %107, %109 : vector<32x256xf32>
    %c1_110 = arith.constant 1 : index
    %c0_111 = arith.constant 0 : index
    %c0_112 = arith.constant 0 : index
    %111 = vector.load %arg17[%c1_110, %c0_111, %c0_112] : memref<2x32x256xf32, #tpu.memory_space<vmem>>, vector<1x32x256xf32>
    %112 = vector.shape_cast %111 : vector<1x32x256xf32> to vector<32x256xf32>
    %113 = vector.shape_cast %110 : vector<32x256xf32> to vector<1x32x256xf32>
    tpu.vector_store %arg17[%c1_110, %c0_111, %c0_112], %113 {strides = array<i32>} : memref<2x32x256xf32, #tpu.memory_space<vmem>>, vector<1x32x256xf32>,
    return
  }
  func.func @transform_0(%arg0: i32) -> (i32, i32, i32) {
    %c0_i32 = arith.constant 0 : i32
    %c0_i32_0 = arith.constant 0 : i32
    %c0_i32_1 = arith.constant 0 : i32
    return %arg0, %c0_i32, %c0_i32_0 : i32, i32, i32
  }
  func.func @transform_1(%arg0: i32) -> (i32, i32, i32) {
    %c0_i32 = arith.constant 0 : i32
    %c0_i32_0 = arith.constant 0 : i32
    %c0_i32_1 = arith.constant 0 : i32
    return %arg0, %c0_i32, %c0_i32_0 : i32, i32, i32
  }
  func.func @transform_2(%arg0: i32) -> (i32, i32, i32) {
    %c0_i32 = arith.constant 0 : i32
    %c0_i32_0 = arith.constant 0 : i32
    %c0_i32_1 = arith.constant 0 : i32
    return %arg0, %c0_i32, %c0_i32_0 : i32, i32, i32
  }
  func.func @transform_3(%arg0: i32) -> (i32, i32) {
    %c0_i32 = arith.constant 0 : i32
    %c0_i32_0 = arith.constant 0 : i32
    %c0_i32_1 = arith.constant 0 : i32
    return %c0_i32, %c0_i32_0 : i32, i32
  }
  func.func @transform_4(%arg0: i32) -> (i32, i32) {
    %c0_i32 = arith.constant 0 : i32
    %c0_i32_0 = arith.constant 0 : i32
    %c0_i32_1 = arith.constant 0 : i32
    return %c0_i32, %c0_i32_0 : i32, i32
  }
  func.func @transform_5(%arg0: i32) -> (i32, i32) {
    %c0_i32 = arith.constant 0 : i32
    %c0_i32_0 = arith.constant 0 : i32
    %c0_i32_1 = arith.constant 0 : i32
    return %c0_i32, %c0_i32_0 : i32, i32
  }
  func.func @transform_6(%arg0: i32) -> (i32, i32) {
    %c0_i32 = arith.constant 0 : i32
    %c0_i32_0 = arith.constant 0 : i32
    %c0_i32_1 = arith.constant 0 : i32
    return %c0_i32, %c0_i32_0 : i32, i32
  }
  func.func @transform_7(%arg0: i32) -> (i32, i32) {
    %c0_i32 = arith.constant 0 : i32
    %c0_i32_0 = arith.constant 0 : i32
    %c0_i32_1 = arith.constant 0 : i32
    return %c0_i32, %c0_i32_0 : i32, i32
  }
  func.func @transform_8(%arg0: i32) -> (i32, i32) {
    %c0_i32 = arith.constant 0 : i32
    %c0_i32_0 = arith.constant 0 : i32
    %c0_i32_1 = arith.constant 0 : i32
    return %c0_i32, %c0_i32_0 : i32, i32
  }
  func.func @transform_9(%arg0: i32) -> (i32, i32) {
    %c0_i32 = arith.constant 0 : i32
    %c0_i32_0 = arith.constant 0 : i32
    %c0_i32_1 = arith.constant 0 : i32
    return %c0_i32, %c0_i32_0 : i32, i32
  }
  func.func @transform_10(%arg0: i32) -> (i32, i32) {
    %c0_i32 = arith.constant 0 : i32
    %c0_i32_0 = arith.constant 0 : i32
    %c0_i32_1 = arith.constant 0 : i32
    return %c0_i32, %c0_i32_0 : i32, i32
  }
  func.func @transform_11(%arg0: i32) -> (i32, i32) {
    %c0_i32 = arith.constant 0 : i32
    %c0_i32_0 = arith.constant 0 : i32
    %c0_i32_1 = arith.constant 0 : i32
    return %c0_i32, %c0_i32_0 : i32, i32
  }
  func.func @transform_12(%arg0: i32) -> (i32, i32) {
    %c0_i32 = arith.constant 0 : i32
    %c0_i32_0 = arith.constant 0 : i32
    %c0_i32_1 = arith.constant 0 : i32
    return %c0_i32, %c0_i32_0 : i32, i32
  }
  func.func @transform_13(%arg0: i32) -> (i32, i32) {
    %c0_i32 = arith.constant 0 : i32
    %c0_i32_0 = arith.constant 0 : i32
    %c0_i32_1 = arith.constant 0 : i32
    return %c0_i32, %c0_i32_0 : i32, i32
  }
  func.func @transform_14(%arg0: i32) -> (i32, i32) {
    %c0_i32 = arith.constant 0 : i32
    %c0_i32_0 = arith.constant 0 : i32
    %c0_i32_1 = arith.constant 0 : i32
    return %c0_i32, %c0_i32_0 : i32, i32
  }
  func.func @transform_15(%arg0: i32) -> (i32, i32) {
    %c0_i32 = arith.constant 0 : i32
    %c0_i32_0 = arith.constant 0 : i32
    %c0_i32_1 = arith.constant 0 : i32
    return %c0_i32, %c0_i32_0 : i32, i32
  }
  func.func @transform_16(%arg0: i32) -> (i32, i32, i32) {
    %c0_i32 = arith.constant 0 : i32
    %c0_i32_0 = arith.constant 0 : i32
    %c0_i32_1 = arith.constant 0 : i32
    return %arg0, %c0_i32, %c0_i32_0 : i32, i32, i32
  }
}

</mosaic_0001>

<llo_original>
// kernel: tile.9
$region0: #{tile.9}
  %s0 = inlined_call_operand.vmem [shape: f32[16,16,16], index: 0, kind: input, shape index: {}]
  %s1 = inlined_call_operand.vmem [shape: f32[256,16], index: 1, kind: output, shape index: {}]
  %v2 = vld [vmem:[%s0] ss:$8 sm:$0xf]
  %v3 = vld [vmem:[%s0] ss:$8 sm:$0xf0]
  %vm4 = vcmask 1047556
  %v5 = vsel %vm4, %v3, %v2
  %vm6 = vcmask 130048
  %7 = vst.msk [vmem:[%s1] ss:$8 sm:$0x3] %vm6, %v5
  %s8 = scalar_lea.vmem %s1, 4294967281
  %9 = vst.msk [vmem:[%s8] ss:$8 sm:$0xc] %vm6, %v5
  %s10 = scalar_lea.vmem %s1, 4294967266
  %11 = vst.msk [vmem:[%s10] ss:$8 sm:$0x30] %vm6, %v5
  %s12 = scalar_lea.vmem %s1, 4294967251
  %13 = vst.msk [vmem:[%s12] ss:$8 sm:$0xc0] %vm6, %v5
  %s14 = scalar_lea.vmem %s0, 64
  %v15 = vld [vmem:[%s14] ss:$8 sm:$0xf]
  %s16 = scalar_lea.vmem %s0, 64
  %v17 = vld [vmem:[%s16] ss:$8 sm:$0xf0]
  %vm18 = vcmask 1047556
  %v19 = vsel %vm18, %v17, %v15
  %vm20 = vcmask 130048
  %s21 = scalar_lea.vmem %s1, 4
  %22 = vst.msk [vmem:[%s21] ss:$8 sm:$0x3] %vm20, %v19
  %s23 = scalar_lea.vmem %s1, 4294967285
  %24 = vst.msk [vmem:[%s23] ss:$8 sm:$0xc] %vm20, %v19
  %s25 = scalar_lea.vmem %s1, 4294967270
  %26 = vst.msk [vmem:[%s25] ss:$8 sm:$0x30] %vm20, %v19
  %s27 = scalar_lea.vmem %s1, 4294967255
  %28 = vst.msk [vmem:[%s27] ss:$8 sm:$0xc0] %vm20, %v19
  %s29 = scalar_lea.vmem %s0, 128
  %v30 = vld [vmem:[%s29] ss:$8 sm:$0xf]
  %s31 = scalar_lea.vmem %s0, 128
  %v32 = vld [vmem:[%s31] ss:$8 sm:$0xf0]
  %vm33 = vcmask 1047556
  %v34 = vsel %vm33, %v32, %v30
  %vm35 = vcmask 130048
  %s36 = scalar_lea.vmem %s1, 16
  %37 = vst.msk [vmem:[%s36] ss:$8 sm:$0x3] %vm35, %v34
  %s38 = scalar_lea.vmem %s1, 1
  %39 = vst.msk [vmem:[%s38] ss:$8 sm:$0xc] %vm35, %v34
  %s40 = scalar_lea.vmem %s1, 4294967282
  %41 = vst.msk [vmem:[%s40] ss:$8 sm:$0x30] %vm35, %v34
  %s42 = scalar_lea.vmem %s1, 4294967267
  %43 = vst.msk [vmem:[%s42] ss:$8 sm:$0xc0] %vm35, %v34
  %s44 = scalar_lea.vmem %s0, 192
  %v45 = vld [vmem:[%s44] ss:$8 sm:$0xf]
  %s46 = scalar_lea.vmem %s0, 192
  %v47 = vld [vmem:[%s46] ss:$8 sm:$0xf0]
  %vm48 = vcmask 1047556
  %v49 = vsel %vm48, %v47, %v45
  %vm50 = vcmask 130048
  %s51 = scalar_lea.vmem %s1, 20
  %52 = vst.msk [vmem:[%s51] ss:$8 sm:$0x3] %vm50, %v49
  %s53 = scalar_lea.vmem %s1, 5
  %54 = vst.msk [vmem:[%s53] ss:$8 sm:$0xc] %vm50, %v49
  %s55 = scalar_lea.vmem %s1, 4294967286
  %56 = vst.msk [vmem:[%s55] ss:$8 sm:$0x30] %vm50, %v49
  %s57 = scalar_lea.vmem %s1, 4294967271
  %58 = vst.msk [vmem:[%s57] ss:$8 sm:$0xc0] %vm50, %v49
  %s59 = scalar_lea.vmem %s0, 7
  %s60 = smov 3
  %v61 = vld [vmem:[%s59] ss:$16 sm:%s60]
  %s62 = scalar_lea.vmem %s0, 7
  %s63 = smov 12
  %v64 = vld [vmem:[%s62] ss:$16 sm:%s63]
  %vm65 = vcmask 1043458
  %v66 = vsel %vm65, %v64, %v61
  %s67 = scalar_lea.vmem %s0, 7
  %s68 = smov 48
  %v69 = vld [vmem:[%s67] ss:$16 sm:%s68]
  %vm70 = vcmask 1045508
  %v71 = vsel %vm70, %v69, %v66
  %s72 = scalar_lea.vmem %s0, 7
  %s73 = smov 192
  %v74 = vld [vmem:[%s72] ss:$16 sm:%s73]
  %vm75 = vcmask 1047558
  %v76 = vsel %vm75, %v74, %v71
  %77 = vrot.lane.b32.xlu0 %v76, 112
  %v78 = vpop.permute.xlu0 %77
  %vm79 = vcmask 1048448
  %80 = vst.msk [vmem:[%s1] sm:$0xff] %vm79, %v78
  %s81 = scalar_lea.vmem %s0, 15
  %s82 = smov 3
  %v83 = vld [vmem:[%s81] ss:$16 sm:%s82]
  %s84 = scalar_lea.vmem %s0, 15
  %s85 = smov 12
  %v86 = vld [vmem:[%s84] ss:$16 sm:%s85]
  %vm87 = vcmask 1043458
  %v88 = vsel %vm87, %v86, %v83
  %s89 = scalar_lea.vmem %s0, 15
  %s90 = smov 48
  %v91 = vld [vmem:[%s89] ss:$16 sm:%s90]
  %vm92 = vcmask 1045508
  %v93 = vsel %vm92, %v91, %v88
  %s94 = scalar_lea.vmem %s0, 15
  %s95 = smov 192
  %v96 = vld [vmem:[%s94] ss:$16 sm:%s95]
  %vm97 = vcmask 1047558
  %v98 = vsel %vm97, %v96, %v93
  %99 = vrot.lane.b32.xlu0 %v98, 112
  %v100 = vpop.permute.xlu0 %99
  %vm101 = vcmask 1048448
  %s102 = scalar_lea.vmem %s1, 8
  %103 = vst.msk [vmem:[%s102] sm:$0xff] %vm101, %v100
  %s104 = scalar_lea.vmem %s0, 135
  %s105 = smov 3
  %v106 = vld [vmem:[%s104] ss:$16 sm:%s105]
  %s107 = scalar_lea.vmem %s0, 135
  %s108 = smov 12
  %v109 = vld [vmem:[%s107] ss:$16 sm:%s108]
  %vm110 = vcmask 1043458
  %v111 = vsel %vm110, %v109, %v106
  %s112 = scalar_lea.vmem %s0, 135
  %s113 = smov 48
  %v114 = vld [vmem:[%s112] ss:$16 sm:%s113]
  %vm115 = vcmask 1045508
  %v116 = vsel %vm115, %v114, %v111
  %s117 = scalar_lea.vmem %s0, 135
  %s118 = smov 192
  %v119 = vld [vmem:[%s117] ss:$16 sm:%s118]
  %vm120 = vcmask 1047558
  %v121 = vsel %vm120, %v119, %v116
  %122 = vrot.lane.b32.xlu0 %v121, 112
  %v123 = vpop.permute.xlu0 %122
  %vm124 = vcmask 1048448
  %s125 = scalar_lea.vmem %s1, 16
  %126 = vst.msk [vmem:[%s125] sm:$0xff] %vm124, %v123
  %s127 = scalar_lea.vmem %s0, 143
  %s128 = smov 3
  %v129 = vld [vmem:[%s127] ss:$16 sm:%s128]
  %s130 = scalar_lea.vmem %s0, 143
  %s131 = smov 12
  %v132 = vld [vmem:[%s130] ss:$16 sm:%s131]
  %vm133 = vcmask 1043458
  %v134 = vsel %vm133, %v132, %v129
  %s135 = scalar_lea.vmem %s0, 143
  %s136 = smov 48
  %v137 = vld [vmem:[%s135] ss:$16 sm:%s136]
  %vm138 = vcmask 1045508
  %v139 = vsel %vm138, %v137, %v134
  %s140 = scalar_lea.vmem %s0, 143
  %s141 = smov 192
  %v142 = vld [vmem:[%s140] ss:$16 sm:%s141]
  %vm143 = vcmask 1047558
  %v144 = vsel %vm143, %v142, %v139
  %145 = vrot.lane.b32.xlu0 %v144, 112
  %v146 = vpop.permute.xlu0 %145
  %vm147 = vcmask 1048448
  %s148 = scalar_lea.vmem %s1, 24
  %149 = vst.msk [vmem:[%s148] sm:$0xff] %vm147, %v146
  %s150 = scalar_lea.vmem %s0, 6
  %s151 = smov 3
  %v152 = vld [vmem:[%s150] ss:$16 sm:%s151]
  %s153 = scalar_lea.vmem %s0, 6
  %s154 = smov 12
  %v155 = vld [vmem:[%s153] ss:$16 sm:%s154]
  %vm156 = vcmask 1043458
  %v157 = vsel %vm156, %v155, %v152
  %s158 = scalar_lea.vmem %s0, 6
  %s159 = smov 48
  %v160 = vld [vmem:[%s158] ss:$16 sm:%s159]
  %vm161 = vcmask 1045508
  %v162 = vsel %vm161, %v160, %v157
  %s163 = scalar_lea.vmem %s0, 6
  %s164 = smov 192
  %v165 = vld [vmem:[%s163] ss:$16 sm:%s164]
  %vm166 = vcmask 1047558
  %v167 = vsel %vm166, %v165, %v162
  %168 = vrot.lane.b32.xlu0 %v167, 96
  %v169 = vpop.permute.xlu0 %168
  %vm170 = vcmask 917248
  %171 = vst.msk [vmem:[%s1] sm:$0xff] %vm170, %v169
  %s172 = scalar_lea.vmem %s0, 14
  %s173 = smov 3
  %v174 = vld [vmem:[%s172] ss:$16 sm:%s173]
  %s175 = scalar_lea.vmem %s0, 14
  %s176 = smov 12
  %v177 = vld [vmem:[%s175] ss:$16 sm:%s176]
  %vm178 = vcmask 1043458
  %v179 = vsel %vm178, %v177, %v174
  %s180 = scalar_lea.vmem %s0, 14
  %s181 = smov 48
  %v182 = vld [vmem:[%s180] ss:$16 sm:%s181]
  %vm183 = vcmask 1045508
  %v184 = vsel %vm183, %v182, %v179
  %s185 = scalar_lea.vmem %s0, 14
  %s186 = smov 192
  %v187 = vld [vmem:[%s185] ss:$16 sm:%s186]
  %vm188 = vcmask 1047558
  %v189 = vsel %vm188, %v187, %v184
  %190 = vrot.lane.b32.xlu0 %v189, 96
  %v191 = vpop.permute.xlu0 %190
  %vm192 = vcmask 917248
  %s193 = scalar_lea.vmem %s1, 8
  %194 = vst.msk [vmem:[%s193] sm:$0xff] %vm192, %v191
  %s195 = scalar_lea.vmem %s0, 134
  %s196 = smov 3
  %v197 = vld [vmem:[%s195] ss:$16 sm:%s196]
  %s198 = scalar_lea.vmem %s0, 134
  %s199 = smov 12
  %v200 = vld [vmem:[%s198] ss:$16 sm:%s199]
  %vm201 = vcmask 1043458
  %v202 = vsel %vm201, %v200, %v197
  %s203 = scalar_lea.vmem %s0, 134
  %s204 = smov 48
  %v205 = vld [vmem:[%s203] ss:$16 sm:%s204]
  %vm206 = vcmask 1045508
  %v207 = vsel %vm206, %v205, %v202
  %s208 = scalar_lea.vmem %s0, 134
  %s209 = smov 192
  %v210 = vld [vmem:[%s208] ss:$16 sm:%s209]
  %vm211 = vcmask 1047558
  %v212 = vsel %vm211, %v210, %v207
  %213 = vrot.lane.b32.xlu0 %v212, 96
  %v214 = vpop.permute.xlu0 %213
  %vm215 = vcmask 917248
  %s216 = scalar_lea.vmem %s1, 16
  %217 = vst.msk [vmem:[%s216] sm:$0xff] %vm215, %v214
  %s218 = scalar_lea.vmem %s0, 142
  %s219 = smov 3
  %v220 = vld [vmem:[%s218] ss:$16 sm:%s219]
  %s221 = scalar_lea.vmem %s0, 142
  %s222 = smov 12
  %v223 = vld [vmem:[%s221] ss:$16 sm:%s222]
  %vm224 = vcmask 1043458
  %v225 = vsel %vm224, %v223, %v220
  %s226 = scalar_lea.vmem %s0, 142
  %s227 = smov 48
  %v228 = vld [vmem:[%s226] ss:$16 sm:%s227]
  %vm229 = vcmask 1045508
  %v230 = vsel %vm229, %v228, %v225
  %s231 = scalar_lea.vmem %s0, 142
  %s232 = smov 192
  %v233 = vld [vmem:[%s231] ss:$16 sm:%s232]
  %vm234 = vcmask 1047558
  %v235 = vsel %vm234, %v233, %v230
  %236 = vrot.lane.b32.xlu0 %v235, 96
  %v237 = vpop.permute.xlu0 %236
  %vm238 = vcmask 917248
  %s239 = scalar_lea.vmem %s1, 24
  %240 = vst.msk [vmem:[%s239] sm:$0xff] %vm238, %v237
  %s241 = scalar_lea.vmem %s0, 5
  %s242 = smov 3
  %v243 = vld [vmem:[%s241] ss:$16 sm:%s242]
  %s244 = scalar_lea.vmem %s0, 5
  %s245 = smov 12
  %v246 = vld [vmem:[%s244] ss:$16 sm:%s245]
  %vm247 = vcmask 1043458
  %v248 = vsel %vm247, %v246, %v243
  %s249 = scalar_lea.vmem %s0, 5
  %s250 = smov 48
  %v251 = vld [vmem:[%s249] ss:$16 sm:%s250]
  %vm252 = vcmask 1045508
  %v253 = vsel %vm252, %v251, %v248
  %s254 = scalar_lea.vmem %s0, 5
  %s255 = smov 192
  %v256 = vld [vmem:[%s254] ss:$16 sm:%s255]
  %vm257 = vcmask 1047558
  %v258 = vsel %vm257, %v256, %v253
  %259 = vrot.lane.b32.xlu0 %v258, 80
  %v260 = vpop.permute.xlu0 %259
  %vm261 = vcmask 786048
  %262 = vst.msk [vmem:[%s1] sm:$0xff] %vm261, %v260
  %s263 = scalar_lea.vmem %s0, 13
  %s264 = smov 3
  %v265 = vld [vmem:[%s263] ss:$16 sm:%s264]
  %s266 = scalar_lea.vmem %s0, 13
  %s267 = smov 12
  %v268 = vld [vmem:[%s266] ss:$16 sm:%s267]
  %vm269 = vcmask 1043458
  %v270 = vsel %vm269, %v268, %v265
  %s271 = scalar_lea.vmem %s0, 13
  %s272 = smov 48
  %v273 = vld [vmem:[%s271] ss:$16 sm:%s272]
  %vm274 = vcmask 1045508
  %v275 = vsel %vm274, %v273, %v270
  %s276 = scalar_lea.vmem %s0, 13
  %s277 = smov 192
  %v278 = vld [vmem:[%s276] ss:$16 sm:%s277]
  %vm279 = vcmask 1047558
  %v280 = vsel %vm279, %v278, %v275
  %281 = vrot.lane.b32.xlu0 %v280, 80
  %v282 = vpop.permute.xlu0 %281
  %vm283 = vcmask 786048
  %s284 = scalar_lea.vmem %s1, 8
  %285 = vst.msk [vmem:[%s284] sm:$0xff] %vm283, %v282
  %s286 = scalar_lea.vmem %s0, 133
  %s287 = smov 3
  %v288 = vld [vmem:[%s286] ss:$16 sm:%s287]
  %s289 = scalar_lea.vmem %s0, 133
  %s290 = smov 12
  %v291 = vld [vmem:[%s289] ss:$16 sm:%s290]
  %vm292 = vcmask 1043458
  %v293 = vsel %vm292, %v291, %v288
  %s294 = scalar_lea.vmem %s0, 133
  %s295 = smov 48
  %v296 = vld [vmem:[%s294] ss:$16 sm:%s295]
  %vm297 = vcmask 1045508
  %v298 = vsel %vm297, %v296, %v293
  %s299 = scalar_lea.vmem %s0, 133
  %s300 = smov 192
  %v301 = vld [vmem:[%s299] ss:$16 sm:%s300]
  %vm302 = vcmask 1047558
  %v303 = vsel %vm302, %v301, %v298
  %304 = vrot.lane.b32.xlu0 %v303, 80
  %v305 = vpop.permute.xlu0 %304
  %vm306 = vcmask 786048
  %s307 = scalar_lea.vmem %s1, 16
  %308 = vst.msk [vmem:[%s307] sm:$0xff] %vm306, %v305
  %s309 = scalar_lea.vmem %s0, 141
  %s310 = smov 3
  %v311 = vld [vmem:[%s309] ss:$16 sm:%s310]
  %s312 = scalar_lea.vmem %s0, 141
  %s313 = smov 12
  %v314 = vld [vmem:[%s312] ss:$16 sm:%s313]
  %vm315 = vcmask 1043458
  %v316 = vsel %vm315, %v314, %v311
  %s317 = scalar_lea.vmem %s0, 141
  %s318 = smov 48
  %v319 = vld [vmem:[%s317] ss:$16 sm:%s318]
  %vm320 = vcmask 1045508
  %v321 = vsel %vm320, %v319, %v316
  %s322 = scalar_lea.vmem %s0, 141
  %s323 = smov 192
  %v324 = vld [vmem:[%s322] ss:$16 sm:%s323]
  %vm325 = vcmask 1047558
  %v326 = vsel %vm325, %v324, %v321
  %327 = vrot.lane.b32.xlu0 %v326, 80
  %v328 = vpop.permute.xlu0 %327
  %vm329 = vcmask 786048
  %s330 = scalar_lea.vmem %s1, 24
  %331 = vst.msk [vmem:[%s330] sm:$0xff] %vm329, %v328
  %s332 = scalar_lea.vmem %s0, 4
  %s333 = smov 3
  %v334 = vld [vmem:[%s332] ss:$16 sm:%s333]
  %s335 = scalar_lea.vmem %s0, 4
  %s336 = smov 12
  %v337 = vld [vmem:[%s335] ss:$16 sm:%s336]
  %vm338 = vcmask 1043458
  %v339 = vsel %vm338, %v337, %v334
  %s340 = scalar_lea.vmem %s0, 4
  %s341 = smov 48
  %v342 = vld [vmem:[%s340] ss:$16 sm:%s341]
  %vm343 = vcmask 1045508
  %v344 = vsel %vm343, %v342, %v339
  %s345 = scalar_lea.vmem %s0, 4
  %s346 = smov 192
  %v347 = vld [vmem:[%s345] ss:$16 sm:%s346]
  %vm348 = vcmask 1047558
  %v349 = vsel %vm348, %v347, %v344
  %350 = vrot.lane.b32.xlu0 %v349, 64
  %v351 = vpop.permute.xlu0 %350
  %vm352 = vcmask 654848
  %353 = vst.msk [vmem:[%s1] sm:$0xff] %vm352, %v351
  %s354 = scalar_lea.vmem %s0, 12
  %s355 = smov 3
  %v356 = vld [vmem:[%s354] ss:$16 sm:%s355]
  %s357 = scalar_lea.vmem %s0, 12
  %s358 = smov 12
  %v359 = vld [vmem:[%s357] ss:$16 sm:%s358]
  %vm360 = vcmask 1043458
  %v361 = vsel %vm360, %v359, %v356
  %s362 = scalar_lea.vmem %s0, 12
  %s363 = smov 48
  %v364 = vld [vmem:[%s362] ss:$16 sm:%s363]
  %vm365 = vcmask 1045508
  %v366 = vsel %vm365, %v364, %v361
  %s367 = scalar_lea.vmem %s0, 12
  %s368 = smov 192
  %v369 = vld [vmem:[%s367] ss:$16 sm:%s368]
  %vm370 = vcmask 1047558
  %v371 = vsel %vm370, %v369, %v366
  %372 = vrot.lane.b32.xlu0 %v371, 64
  %v373 = vpop.permute.xlu0 %372
  %vm374 = vcmask 654848
  %s375 = scalar_lea.vmem %s1, 8
  %376 = vst.msk [vmem:[%s375] sm:$0xff] %vm374, %v373
  %s377 = scalar_lea.vmem %s0, 132
  %s378 = smov 3
  %v379 = vld [vmem:[%s377] ss:$16 sm:%s378]
  %s380 = scalar_lea.vmem %s0, 132
  %s381 = smov 12
  %v382 = vld [vmem:[%s380] ss:$16 sm:%s381]
  %vm383 = vcmask 1043458
  %v384 = vsel %vm383, %v382, %v379
  %s385 = scalar_lea.vmem %s0, 132
  %s386 = smov 48
  %v387 = vld [vmem:[%s385] ss:$16 sm:%s386]
  %vm388 = vcmask 1045508
  %v389 = vsel %vm388, %v387, %v384
  %s390 = scalar_lea.vmem %s0, 132
  %s391 = smov 192
  %v392 = vld [vmem:[%s390] ss:$16 sm:%s391]
  %vm393 = vcmask 1047558
  %v394 = vsel %vm393, %v392, %v389
  %395 = vrot.lane.b32.xlu0 %v394, 64
  %v396 = vpop.permute.xlu0 %395
  %vm397 = vcmask 654848
  %s398 = scalar_lea.vmem %s1, 16
  %399 = vst.msk [vmem:[%s398] sm:$0xff] %vm397, %v396
  %s400 = scalar_lea.vmem %s0, 140
  %s401 = smov 3
  %v402 = vld [vmem:[%s400] ss:$16 sm:%s401]
  %s403 = scalar_lea.vmem %s0, 140
  %s404 = smov 12
  %v405 = vld [vmem:[%s403] ss:$16 sm:%s404]
  %vm406 = vcmask 1043458
  %v407 = vsel %vm406, %v405, %v402
  %s408 = scalar_lea.vmem %s0, 140
  %s409 = smov 48
  %v410 = vld [vmem:[%s408] ss:$16 sm:%s409]
  %vm411 = vcmask 1045508
  %v412 = vsel %vm411, %v410, %v407
  %s413 = scalar_lea.vmem %s0, 140
  %s414 = smov 192
  %v415 = vld [vmem:[%s413] ss:$16 sm:%s414]
  %vm416 = vcmask 1047558
  %v417 = vsel %vm416, %v415, %v412
  %418 = vrot.lane.b32.xlu0 %v417, 64
  %v419 = vpop.permute.xlu0 %418
  %vm420 = vcmask 654848
  %s421 = scalar_lea.vmem %s1, 24
  %422 = vst.msk [vmem:[%s421] sm:$0xff] %vm420, %v419
  %s423 = scalar_lea.vmem %s0, 3
  %s424 = smov 3
  %v425 = vld [vmem:[%s423] ss:$16 sm:%s424]
  %s426 = scalar_lea.vmem %s0, 3
  %s427 = smov 12
  %v428 = vld [vmem:[%s426] ss:$16 sm:%s427]
  %vm429 = vcmask 1043458
  %v430 = vsel %vm429, %v428, %v425
  %s431 = scalar_lea.vmem %s0, 3
  %s432 = smov 48
  %v433 = vld [vmem:[%s431] ss:$16 sm:%s432]
  %vm434 = vcmask 1045508
  %v435 = vsel %vm434, %v433, %v430
  %s436 = scalar_lea.vmem %s0, 3
  %s437 = smov 192
  %v438 = vld [vmem:[%s436] ss:$16 sm:%s437]
  %vm439 = vcmask 1047558
  %v440 = vsel %vm439, %v438, %v435
  %441 = vrot.lane.b32.xlu0 %v440, 48
  %v442 = vpop.permute.xlu0 %441
  %vm443 = vcmask 523648
  %444 = vst.msk [vmem:[%s1] sm:$0xff] %vm443, %v442
  %s445 = scalar_lea.vmem %s0, 11
  %s446 = smov 3
  %v447 = vld [vmem:[%s445] ss:$16 sm:%s446]
  %s448 = scalar_lea.vmem %s0, 11
  %s449 = smov 12
  %v450 = vld [vmem:[%s448] ss:$16 sm:%s449]
  %vm451 = vcmask 1043458
  %v452 = vsel %vm451, %v450, %v447
  %s453 = scalar_lea.vmem %s0, 11
  %s454 = smov 48
  %v455 = vld [vmem:[%s453] ss:$16 sm:%s454]
  %vm456 = vcmask 1045508
  %v457 = vsel %vm456, %v455, %v452
  %s458 = scalar_lea.vmem %s0, 11
  %s459 = smov 192
  %v460 = vld [vmem:[%s458] ss:$16 sm:%s459]
  %vm461 = vcmask 1047558
  %v462 = vsel %vm461, %v460, %v457
  %463 = vrot.lane.b32.xlu0 %v462, 48
  %v464 = vpop.permute.xlu0 %463
  %vm465 = vcmask 523648
  %s466 = scalar_lea.vmem %s1, 8
  %467 = vst.msk [vmem:[%s466] sm:$0xff] %vm465, %v464
  %s468 = scalar_lea.vmem %s0, 131
  %s469 = smov 3
  %v470 = vld [vmem:[%s468] ss:$16 sm:%s469]
  %s471 = scalar_lea.vmem %s0, 131
  %s472 = smov 12
  %v473 = vld [vmem:[%s471] ss:$16 sm:%s472]
  %vm474 = vcmask 1043458
  %v475 = vsel %vm474, %v473, %v470
  %s476 = scalar_lea.vmem %s0, 131
  %s477 = smov 48
  %v478 = vld [vmem:[%s476] ss:$16 sm:%s477]
  %vm479 = vcmask 1045508
  %v480 = vsel %vm479, %v478, %v475
  %s481 = scalar_lea.vmem %s0, 131
  %s482 = smov 192
  %v483 = vld [vmem:[%s481] ss:$16 sm:%s482]
  %vm484 = vcmask 1047558
  %v485 = vsel %vm484, %v483, %v480
  %486 = vrot.lane.b32.xlu0 %v485, 48
  %v487 = vpop.permute.xlu0 %486
  %vm488 = vcmask 523648
  %s489 = scalar_lea.vmem %s1, 16
  %490 = vst.msk [vmem:[%s489] sm:$0xff] %vm488, %v487
  %s491 = scalar_lea.vmem %s0, 139
  %s492 = smov 3
  %v493 = vld [vmem:[%s491] ss:$16 sm:%s492]
  %s494 = scalar_lea.vmem %s0, 139
  %s495 = smov 12
  %v496 = vld [vmem:[%s494] ss:$16 sm:%s495]
  %vm497 = vcmask 1043458
  %v498 = vsel %vm497, %v496, %v493
  %s499 = scalar_lea.vmem %s0, 139
  %s500 = smov 48
  %v501 = vld [vmem:[%s499] ss:$16 sm:%s500]
  %vm502 = vcmask 1045508
  %v503 = vsel %vm502, %v501, %v498
  %s504 = scalar_lea.vmem %s0, 139
  %s505 = smov 192
  %v506 = vld [vmem:[%s504] ss:$16 sm:%s505]
  %vm507 = vcmask 1047558
  %v508 = vsel %vm507, %v506, %v503
  %509 = vrot.lane.b32.xlu0 %v508, 48
  %v510 = vpop.permute.xlu0 %509
  %vm511 = vcmask 523648
  %s512 = scalar_lea.vmem %s1, 24
  %513 = vst.msk [vmem:[%s512] sm:$0xff] %vm511, %v510
  %s514 = scalar_lea.vmem %s0, 2
  %s515 = smov 3
  %v516 = vld [vmem:[%s514] ss:$16 sm:%s515]
  %s517 = scalar_lea.vmem %s0, 2
  %s518 = smov 12
  %v519 = vld [vmem:[%s517] ss:$16 sm:%s518]
  %vm520 = vcmask 1043458
  %v521 = vsel %vm520, %v519, %v516
  %s522 = scalar_lea.vmem %s0, 2
  %s523 = smov 48
  %v524 = vld [vmem:[%s522] ss:$16 sm:%s523]
  %vm525 = vcmask 1045508
  %v526 = vsel %vm525, %v524, %v521
  %s527 = scalar_lea.vmem %s0, 2
  %s528 = smov 192
  %v529 = vld [vmem:[%s527] ss:$16 sm:%s528]
  %vm530 = vcmask 1047558
  %v531 = vsel %vm530, %v529, %v526
  %532 = vrot.lane.b32.xlu0 %v531, 32
  %v533 = vpop.permute.xlu0 %532
  %vm534 = vcmask 392448
  %535 = vst.msk [vmem:[%s1] sm:$0xff] %vm534, %v533
  %s536 = scalar_lea.vmem %s0, 10
  %s537 = smov 3
  %v538 = vld [vmem:[%s536] ss:$16 sm:%s537]
  %s539 = scalar_lea.vmem %s0, 10
  %s540 = smov 12
  %v541 = vld [vmem:[%s539] ss:$16 sm:%s540]
  %vm542 = vcmask 1043458
  %v543 = vsel %vm542, %v541, %v538
  %s544 = scalar_lea.vmem %s0, 10
  %s545 = smov 48
  %v546 = vld [vmem:[%s544] ss:$16 sm:%s545]
  %vm547 = vcmask 1045508
  %v548 = vsel %vm547, %v546, %v543
  %s549 = scalar_lea.vmem %s0, 10
  %s550 = smov 192
  %v551 = vld [vmem:[%s549] ss:$16 sm:%s550]
  %vm552 = vcmask 1047558
  %v553 = vsel %vm552, %v551, %v548
  %554 = vrot.lane.b32.xlu0 %v553, 32
  %v555 = vpop.permute.xlu0 %554
  %vm556 = vcmask 392448
  %s557 = scalar_lea.vmem %s1, 8
  %558 = vst.msk [vmem:[%s557] sm:$0xff] %vm556, %v555
  %s559 = scalar_lea.vmem %s0, 130
  %s560 = smov 3
  %v561 = vld [vmem:[%s559] ss:$16 sm:%s560]
  %s562 = scalar_lea.vmem %s0, 130
  %s563 = smov 12
  %v564 = vld [vmem:[%s562] ss:$16 sm:%s563]
  %vm565 = vcmask 1043458
  %v566 = vsel %vm565, %v564, %v561
  %s567 = scalar_lea.vmem %s0, 130
  %s568 = smov 48
  %v569 = vld [vmem:[%s567] ss:$16 sm:%s568]
  %vm570 = vcmask 1045508
  %v571 = vsel %vm570, %v569, %v566
  %s572 = scalar_lea.vmem %s0, 130
  %s573 = smov 192
  %v574 = vld [vmem:[%s572] ss:$16 sm:%s573]
  %vm575 = vcmask 1047558
  %v576 = vsel %vm575, %v574, %v571
  %577 = vrot.lane.b32.xlu0 %v576, 32
  %v578 = vpop.permute.xlu0 %577
  %vm579 = vcmask 392448
  %s580 = scalar_lea.vmem %s1, 16
  %581 = vst.msk [vmem:[%s580] sm:$0xff] %vm579, %v578
  %s582 = scalar_lea.vmem %s0, 138
  %s583 = smov 3
  %v584 = vld [vmem:[%s582] ss:$16 sm:%s583]
  %s585 = scalar_lea.vmem %s0, 138
  %s586 = smov 12
  %v587 = vld [vmem:[%s585] ss:$16 sm:%s586]
  %vm588 = vcmask 1043458
  %v589 = vsel %vm588, %v587, %v584
  %s590 = scalar_lea.vmem %s0, 138
  %s591 = smov 48
  %v592 = vld [vmem:[%s590] ss:$16 sm:%s591]
  %vm593 = vcmask 1045508
  %v594 = vsel %vm593, %v592, %v589
  %s595 = scalar_lea.vmem %s0, 138
  %s596 = smov 192
  %v597 = vld [vmem:[%s595] ss:$16 sm:%s596]
  %vm598 = vcmask 1047558
  %v599 = vsel %vm598, %v597, %v594
  %600 = vrot.lane.b32.xlu0 %v599, 32
  %v601 = vpop.permute.xlu0 %600
  %vm602 = vcmask 392448
  %s603 = scalar_lea.vmem %s1, 24
  %604 = vst.msk [vmem:[%s603] sm:$0xff] %vm602, %v601
  %s605 = scalar_lea.vmem %s0, 1
  %s606 = smov 3
  %v607 = vld [vmem:[%s605] ss:$16 sm:%s606]
  %s608 = scalar_lea.vmem %s0, 1
  %s609 = smov 12
  %v610 = vld [vmem:[%s608] ss:$16 sm:%s609]
  %vm611 = vcmask 1043458
  %v612 = vsel %vm611, %v610, %v607
  %s613 = scalar_lea.vmem %s0, 1
  %s614 = smov 48
  %v615 = vld [vmem:[%s613] ss:$16 sm:%s614]
  %vm616 = vcmask 1045508
  %v617 = vsel %vm616, %v615, %v612
  %s618 = scalar_lea.vmem %s0, 1
  %s619 = smov 192
  %v620 = vld [vmem:[%s618] ss:$16 sm:%s619]
  %vm621 = vcmask 1047558
  %v622 = vsel %vm621, %v620, %v617
  %623 = vrot.lane.b32.xlu0 %v622, 16
  %v624 = vpop.permute.xlu0 %623
  %vm625 = vcmask 261248
  %626 = vst.msk [vmem:[%s1] sm:$0xff] %vm625, %v624
  %s627 = scalar_lea.vmem %s0, 9
  %s628 = smov 3
  %v629 = vld [vmem:[%s627] ss:$16 sm:%s628]
  %s630 = scalar_lea.vmem %s0, 9
  %s631 = smov 12
  %v632 = vld [vmem:[%s630] ss:$16 sm:%s631]
  %vm633 = vcmask 1043458
  %v634 = vsel %vm633, %v632, %v629
  %s635 = scalar_lea.vmem %s0, 9
  %s636 = smov 48
  %v637 = vld [vmem:[%s635] ss:$16 sm:%s636]
  %vm638 = vcmask 1045508
  %v639 = vsel %vm638, %v637, %v634
  %s640 = scalar_lea.vmem %s0, 9
  %s641 = smov 192
  %v642 = vld [vmem:[%s640] ss:$16 sm:%s641]
  %vm643 = vcmask 1047558
  %v644 = vsel %vm643, %v642, %v639
  %645 = vrot.lane.b32.xlu0 %v644, 16
  %v646 = vpop.permute.xlu0 %645
  %vm647 = vcmask 261248
  %s648 = scalar_lea.vmem %s1, 8
  %649 = vst.msk [vmem:[%s648] sm:$0xff] %vm647, %v646
  %s650 = scalar_lea.vmem %s0, 129
  %s651 = smov 3
  %v652 = vld [vmem:[%s650] ss:$16 sm:%s651]
  %s653 = scalar_lea.vmem %s0, 129
  %s654 = smov 12
  %v655 = vld [vmem:[%s653] ss:$16 sm:%s654]
  %vm656 = vcmask 1043458
  %v657 = vsel %vm656, %v655, %v652
  %s658 = scalar_lea.vmem %s0, 129
  %s659 = smov 48
  %v660 = vld [vmem:[%s658] ss:$16 sm:%s659]
  %vm661 = vcmask 1045508
  %v662 = vsel %vm661, %v660, %v657
  %s663 = scalar_lea.vmem %s0, 129
  %s664 = smov 192
  %v665 = vld [vmem:[%s663] ss:$16 sm:%s664]
  %vm666 = vcmask 1047558
  %v667 = vsel %vm666, %v665, %v662
  %668 = vrot.lane.b32.xlu0 %v667, 16
  %v669 = vpop.permute.xlu0 %668
  %vm670 = vcmask 261248
  %s671 = scalar_lea.vmem %s1, 16
  %672 = vst.msk [vmem:[%s671] sm:$0xff] %vm670, %v669
  %s673 = scalar_lea.vmem %s0, 137
  %s674 = smov 3
  %v675 = vld [vmem:[%s673] ss:$16 sm:%s674]
  %s676 = scalar_lea.vmem %s0, 137
  %s677 = smov 12
  %v678 = vld [vmem:[%s676] ss:$16 sm:%s677]
  %vm679 = vcmask 1043458
  %v680 = vsel %vm679, %v678, %v675
  %s681 = scalar_lea.vmem %s0, 137
  %s682 = smov 48
  %v683 = vld [vmem:[%s681] ss:$16 sm:%s682]
  %vm684 = vcmask 1045508
  %v685 = vsel %vm684, %v683, %v680
  %s686 = scalar_lea.vmem %s0, 137
  %s687 = smov 192
  %v688 = vld [vmem:[%s686] ss:$16 sm:%s687]
  %vm689 = vcmask 1047558
  %v690 = vsel %vm689, %v688, %v685
  %691 = vrot.lane.b32.xlu0 %v690, 16
  %v692 = vpop.permute.xlu0 %691
  %vm693 = vcmask 261248
  %s694 = scalar_lea.vmem %s1, 24
  %695 = vst.msk [vmem:[%s694] sm:$0xff] %vm693, %v692

// kernel: sswl_plus_layer_forward.1
$region0: #{sswl_plus_layer_forward.1}
  #allocation0 [shape = 'u32[]', space=smem, size = 0x4, offset = 0x4, fixed_abs, tag = 'smem constant byte address 0x4 - core index']
  #allocation1 [shape = 'u32[144,128]{1,0:T(1,128)}', space=vmem, size = 0x12000, scoped, tag = 'internal scratch']
  #allocation2 [shape = 'f32[256,256]{1,0:T(8,128)}', space=vmem, size = 0x40000, scoped, tag = 'scratch operand']
  #allocation3 [shape = 'f32[256,256]{1,0:T(8,128)}', space=vmem, size = 0x40000, scoped, tag = 'scratch operand']
  %s0 = inlined_call_operand.vmem [shape: f32[8,32,256], index: 0, kind: input, shape index: {}]
  %s1 = inlined_call_operand.vmem [shape: f32[8,16,16], index: 1, kind: input, shape index: {}]
  %s2 = inlined_call_operand.vmem [shape: f32[8,16,16], index: 2, kind: input, shape index: {}]
  %s3 = inlined_call_operand.vmem [shape: f32[96,32], index: 3, kind: input, shape index: {}]
  %s4 = inlined_call_operand.vmem [shape: f32[96,1], index: 4, kind: input, shape index: {}]
  %s5 = inlined_call_operand.vmem [shape: f32[32,32], index: 5, kind: input, shape index: {}]
  %s6 = inlined_call_operand.vmem [shape: f32[32,1], index: 6, kind: input, shape index: {}]
  %s7 = inlined_call_operand.vmem [shape: f32[32,32], index: 7, kind: input, shape index: {}]
  %s8 = inlined_call_operand.vmem [shape: f32[32,1], index: 8, kind: input, shape index: {}]
  %s9 = inlined_call_operand.vmem [shape: f32[256,16], index: 9, kind: input, shape index: {}]
  %s10 = inlined_call_operand.vmem [shape: f32[16,256], index: 10, kind: input, shape index: {}]
  %s11 = inlined_call_operand.vmem [shape: f32[256,16], index: 11, kind: input, shape index: {}]
  %s12 = inlined_call_operand.vmem [shape: f32[16,256], index: 12, kind: input, shape index: {}]
  %s13 = inlined_call_operand.vmem [shape: f32[256,256], index: 13, kind: input, shape index: {}]
  %s14 = inlined_call_operand.vmem [shape: f32[256,256], index: 14, kind: input, shape index: {}]
  %s15 = inlined_call_operand.vmem [shape: f32[256,256], index: 15, kind: input, shape index: {}]
  %s16 = inlined_call_operand.vmem [shape: f32[8,32,256], index: 16, kind: output, shape index: {}]
  %s17 = sld [smem:[#allocation0]]
  $region97: #{sswl_plus_layer_forward.1} parent=0
    _
  %s19 = ssub.s32 1, %s17
  %s20 = scalar_select 0, %s19, %s17
  loop: start=0, step=1, limit=6
  $region2: #{sswl_plus_layer_forward.1} parent=0 // loop_pre_header
    _
  $region3: #{sswl_plus_layer_forward.1} parent=0 // loop_header
    %s22 = sphi 0, %s26
    %p23 = scmp.ge.s32.totalorder %s22, 6
    %s32 = sphi 0, %s34
    %s35 = sphi 0, %s32
    %s36 = sphi 0, %s35
    %s52 = sphi 0, %s36
    %s58 = sphi 0, %s60
    %s61 = sphi 0, %s58
    %s62 = sphi 0, %s61
    %s78 = sphi 0, %s62
    %s84 = sphi 0, %s86
    %s87 = sphi 0, %s84
    %s88 = sphi 0, %s87
    %s104 = sphi 0, %s88
    %s108 = sphi 0, %s108
    %s110 = sphi 0, %s108
    %s111 = sphi 0, %s110
    %s125 = sphi 0, %s111
    %s129 = sphi 0, %s129
    %s131 = sphi 0, %s129
    %s132 = sphi 0, %s131
    %s146 = sphi 0, %s132
    %s150 = sphi 0, %s150
    %s152 = sphi 0, %s150
    %s153 = sphi 0, %s152
    %s167 = sphi 0, %s153
    %s171 = sphi 0, %s171
    %s173 = sphi 0, %s171
    %s174 = sphi 0, %s173
    %s188 = sphi 0, %s174
    %s192 = sphi 0, %s192
    %s194 = sphi 0, %s192
    %s195 = sphi 0, %s194
    %s209 = sphi 0, %s195
    %s213 = sphi 0, %s213
    %s215 = sphi 0, %s213
    %s216 = sphi 0, %s215
    %s230 = sphi 0, %s216
    %s234 = sphi 0, %s234
    %s236 = sphi 0, %s234
    %s237 = sphi 0, %s236
    %s251 = sphi 0, %s237
    %s255 = sphi 0, %s255
    %s257 = sphi 0, %s255
    %s258 = sphi 0, %s257
    %s272 = sphi 0, %s258
    %s276 = sphi 0, %s276
    %s278 = sphi 0, %s276
    %s279 = sphi 0, %s278
    %s293 = sphi 0, %s279
    %s297 = sphi 0, %s297
    %s299 = sphi 0, %s297
    %s300 = sphi 0, %s299
    %s314 = sphi 0, %s300
    %s318 = sphi 0, %s318
    %s320 = sphi 0, %s318
    %s321 = sphi 0, %s320
    %s335 = sphi 0, %s321
    %s339 = sphi 0, %s339
    %s341 = sphi 0, %s339
    %s342 = sphi 0, %s341
    %s356 = sphi 0, %s342
    %s360 = sphi 0, %s360
    %s362 = sphi 0, %s360
    %s363 = sphi 0, %s362
    %s377 = sphi 0, %s363
    %s383 = sphi 0, %s385
    %s386 = sphi 0, %s383
    %s387 = sphi 0, %s386
    %s403 = sphi 0, %s387
  $region4: #{sswl_plus_layer_forward.1} parent=0 // loop_header_branch
    %25 = sbr.rel (%p23) target = $region8
  $region5: #{sswl_plus_layer_forward.1} parent=0 // loop_body
    %s27 = ssub.s32 %s22, 1
    %s28 = ssub.s32 %s22, 2
    %s29 = sadd.s32 %s22, 1
    %s30 = ssub.s32 %s22, %s29
    %p31 = scmp.eq.s32.totalorder %s30, 0
    %s33 = sadd.s32 %s32, 1
    %s34 = scalar_select %p31, %s32, %s33
    %p37 = pneg %p31
    %p38 = scmp.eq.s32.totalorder %s22, 3
    %p39 = por %p37, %p38
    %p40 = scmp.ne.s32.totalorder %s32, %s35
    %p41 = scmp.eq.s32.totalorder %s22, 0
    %p42 = por %p40, %p41
    %p43 = scmp.ne.s32.totalorder %s32, %s35
    %p44 = scmp.eq.s32.totalorder %s27, 3
    %p45 = por %p43, %p44
    %p46 = scmp.ne.s32.totalorder %s35, %s36
    %p47 = scmp.eq.s32.totalorder %s27, 0
    %p48 = por %p46, %p47
    %p49 = scmp.ne.s32.totalorder %s35, %s36
    %p50 = scmp.eq.s32.totalorder %s28, 3
    %p51 = por %p49, %p50
    %p53 = scmp.ne.s32.totalorder %s36, %s52
    %p54 = scmp.eq.s32.totalorder %s28, 0
    %p55 = por %p53, %p54
    %s56 = ssub.s32 %s22, %s29
    %p57 = scmp.eq.s32.totalorder %s56, 0
    %s59 = sadd.s32 %s58, 1
    %s60 = scalar_select %p57, %s58, %s59
    %p63 = pneg %p57
    %p64 = scmp.eq.s32.totalorder %s22, 3
    %p65 = por %p63, %p64
    %p66 = scmp.ne.s32.totalorder %s58, %s61
    %p67 = scmp.eq.s32.totalorder %s22, 0
    %p68 = por %p66, %p67
    %p69 = scmp.ne.s32.totalorder %s58, %s61
    %p70 = scmp.eq.s32.totalorder %s27, 3
    %p71 = por %p69, %p70
    %p72 = scmp.ne.s32.totalorder %s61, %s62
    %p73 = scmp.eq.s32.totalorder %s27, 0
    %p74 = por %p72, %p73
    %p75 = scmp.ne.s32.totalorder %s61, %s62
    %p76 = scmp.eq.s32.totalorder %s28, 3
    %p77 = por %p75, %p76
    %p79 = scmp.ne.s32.totalorder %s62, %s78
    %p80 = scmp.eq.s32.totalorder %s28, 0
    %p81 = por %p79, %p80
    %s82 = ssub.s32 %s22, %s29
    %p83 = scmp.eq.s32.totalorder %s82, 0
    %s85 = sadd.s32 %s84, 1
    %s86 = scalar_select %p83, %s84, %s85
    %p89 = pneg %p83
    %p90 = scmp.eq.s32.totalorder %s22, 3
    %p91 = por %p89, %p90
    %p92 = scmp.ne.s32.totalorder %s84, %s87
    %p93 = scmp.eq.s32.totalorder %s22, 0
    %p94 = por %p92, %p93
    %p95 = scmp.ne.s32.totalorder %s84, %s87
    %p96 = scmp.eq.s32.totalorder %s27, 3
    %p97 = por %p95, %p96
    %p98 = scmp.ne.s32.totalorder %s87, %s88
    %p99 = scmp.eq.s32.totalorder %s27, 0
    %p100 = por %p98, %p99
    %p101 = scmp.ne.s32.totalorder %s87, %s88
    %p102 = scmp.eq.s32.totalorder %s28, 3
    %p103 = por %p101, %p102
    %p105 = scmp.ne.s32.totalorder %s88, %s104
    %p106 = scmp.eq.s32.totalorder %s28, 0
    %p107 = por %p105, %p106
    %s109 = sadd.s32 %s108, 1
    %p112 = scmp.eq.s32.totalorder %s22, 3
    %p113 = scmp.ne.s32.totalorder %s108, %s110
    %p114 = scmp.eq.s32.totalorder %s22, 0
    %p115 = por %p113, %p114
    %p116 = scmp.ne.s32.totalorder %s108, %s110
    %p117 = scmp.eq.s32.totalorder %s27, 3
    %p118 = por %p116, %p117
    %p119 = scmp.ne.s32.totalorder %s110, %s111
    %p120 = scmp.eq.s32.totalorder %s27, 0
    %p121 = por %p119, %p120
    %p122 = scmp.ne.s32.totalorder %s110, %s111
    %p123 = scmp.eq.s32.totalorder %s28, 3
    %p124 = por %p122, %p123
    %p126 = scmp.ne.s32.totalorder %s111, %s125
    %p127 = scmp.eq.s32.totalorder %s28, 0
    %p128 = por %p126, %p127
    %s130 = sadd.s32 %s129, 1
    %p133 = scmp.eq.s32.totalorder %s22, 3
    %p134 = scmp.ne.s32.totalorder %s129, %s131
    %p135 = scmp.eq.s32.totalorder %s22, 0
    %p136 = por %p134, %p135
    %p137 = scmp.ne.s32.totalorder %s129, %s131
    %p138 = scmp.eq.s32.totalorder %s27, 3
    %p139 = por %p137, %p138
    %p140 = scmp.ne.s32.totalorder %s131, %s132
    %p141 = scmp.eq.s32.totalorder %s27, 0
    %p142 = por %p140, %p141
    %p143 = scmp.ne.s32.totalorder %s131, %s132
    %p144 = scmp.eq.s32.totalorder %s28, 3
    %p145 = por %p143, %p144
    %p147 = scmp.ne.s32.totalorder %s132, %s146
    %p148 = scmp.eq.s32.totalorder %s28, 0
    %p149 = por %p147, %p148
    %s151 = sadd.s32 %s150, 1
    %p154 = scmp.eq.s32.totalorder %s22, 3
    %p155 = scmp.ne.s32.totalorder %s150, %s152
    %p156 = scmp.eq.s32.totalorder %s22, 0
    %p157 = por %p155, %p156
    %p158 = scmp.ne.s32.totalorder %s150, %s152
    %p159 = scmp.eq.s32.totalorder %s27, 3
    %p160 = por %p158, %p159
    %p161 = scmp.ne.s32.totalorder %s152, %s153
    %p162 = scmp.eq.s32.totalorder %s27, 0
    %p163 = por %p161, %p162
    %p164 = scmp.ne.s32.totalorder %s152, %s153
    %p165 = scmp.eq.s32.totalorder %s28, 3
    %p166 = por %p164, %p165
    %p168 = scmp.ne.s32.totalorder %s153, %s167
    %p169 = scmp.eq.s32.totalorder %s28, 0
    %p170 = por %p168, %p169
    %s172 = sadd.s32 %s171, 1
    %p175 = scmp.eq.s32.totalorder %s22, 3
    %p176 = scmp.ne.s32.totalorder %s171, %s173
    %p177 = scmp.eq.s32.totalorder %s22, 0
    %p178 = por %p176, %p177
    %p179 = scmp.ne.s32.totalorder %s171, %s173
    %p180 = scmp.eq.s32.totalorder %s27, 3
    %p181 = por %p179, %p180
    %p182 = scmp.ne.s32.totalorder %s173, %s174
    %p183 = scmp.eq.s32.totalorder %s27, 0
    %p184 = por %p182, %p183
    %p185 = scmp.ne.s32.totalorder %s173, %s174
    %p186 = scmp.eq.s32.totalorder %s28, 3
    %p187 = por %p185, %p186
    %p189 = scmp.ne.s32.totalorder %s174, %s188
    %p190 = scmp.eq.s32.totalorder %s28, 0
    %p191 = por %p189, %p190
    %s193 = sadd.s32 %s192, 1
    %p196 = scmp.eq.s32.totalorder %s22, 3
    %p197 = scmp.ne.s32.totalorder %s192, %s194
    %p198 = scmp.eq.s32.totalorder %s22, 0
    %p199 = por %p197, %p198
    %p200 = scmp.ne.s32.totalorder %s192, %s194
    %p201 = scmp.eq.s32.totalorder %s27, 3
    %p202 = por %p200, %p201
    %p203 = scmp.ne.s32.totalorder %s194, %s195
    %p204 = scmp.eq.s32.totalorder %s27, 0
    %p205 = por %p203, %p204
    %p206 = scmp.ne.s32.totalorder %s194, %s195
    %p207 = scmp.eq.s32.totalorder %s28, 3
    %p208 = por %p206, %p207
    %p210 = scmp.ne.s32.totalorder %s195, %s209
    %p211 = scmp.eq.s32.totalorder %s28, 0
    %p212 = por %p210, %p211
    %s214 = sadd.s32 %s213, 1
    %p217 = scmp.eq.s32.totalorder %s22, 3
    %p218 = scmp.ne.s32.totalorder %s213, %s215
    %p219 = scmp.eq.s32.totalorder %s22, 0
    %p220 = por %p218, %p219
    %p221 = scmp.ne.s32.totalorder %s213, %s215
    %p222 = scmp.eq.s32.totalorder %s27, 3
    %p223 = por %p221, %p222
    %p224 = scmp.ne.s32.totalorder %s215, %s216
    %p225 = scmp.eq.s32.totalorder %s27, 0
    %p226 = por %p224, %p225
    %p227 = scmp.ne.s32.totalorder %s215, %s216
    %p228 = scmp.eq.s32.totalorder %s28, 3
    %p229 = por %p227, %p228
    %p231 = scmp.ne.s32.totalorder %s216, %s230
    %p232 = scmp.eq.s32.totalorder %s28, 0
    %p233 = por %p231, %p232
    %s235 = sadd.s32 %s234, 1
    %p238 = scmp.eq.s32.totalorder %s22, 3
    %p239 = scmp.ne.s32.totalorder %s234, %s236
    %p240 = scmp.eq.s32.totalorder %s22, 0
    %p241 = por %p239, %p240
    %p242 = scmp.ne.s32.totalorder %s234, %s236
    %p243 = scmp.eq.s32.totalorder %s27, 3
    %p244 = por %p242, %p243
    %p245 = scmp.ne.s32.totalorder %s236, %s237
    %p246 = scmp.eq.s32.totalorder %s27, 0
    %p247 = por %p245, %p246
    %p248 = scmp.ne.s32.totalorder %s236, %s237
    %p249 = scmp.eq.s32.totalorder %s28, 3
    %p250 = por %p248, %p249
    %p252 = scmp.ne.s32.totalorder %s237, %s251
    %p253 = scmp.eq.s32.totalorder %s28, 0
    %p254 = por %p252, %p253
    %s256 = sadd.s32 %s255, 1
    %p259 = scmp.eq.s32.totalorder %s22, 3
    %p260 = scmp.ne.s32.totalorder %s255, %s257
    %p261 = scmp.eq.s32.totalorder %s22, 0
    %p262 = por %p260, %p261
    %p263 = scmp.ne.s32.totalorder %s255, %s257
    %p264 = scmp.eq.s32.totalorder %s27, 3
    %p265 = por %p263, %p264
    %p266 = scmp.ne.s32.totalorder %s257, %s258
    %p267 = scmp.eq.s32.totalorder %s27, 0
    %p268 = por %p266, %p267
    %p269 = scmp.ne.s32.totalorder %s257, %s258
    %p270 = scmp.eq.s32.totalorder %s28, 3
    %p271 = por %p269, %p270
    %p273 = scmp.ne.s32.totalorder %s258, %s272
    %p274 = scmp.eq.s32.totalorder %s28, 0
    %p275 = por %p273, %p274
    %s277 = sadd.s32 %s276, 1
    %p280 = scmp.eq.s32.totalorder %s22, 3
    %p281 = scmp.ne.s32.totalorder %s276, %s278
    %p282 = scmp.eq.s32.totalorder %s22, 0
    %p283 = por %p281, %p282
    %p284 = scmp.ne.s32.totalorder %s276, %s278
    %p285 = scmp.eq.s32.totalorder %s27, 3
    %p286 = por %p284, %p285
    %p287 = scmp.ne.s32.totalorder %s278, %s279
    %p288 = scmp.eq.s32.totalorder %s27, 0
    %p289 = por %p287, %p288
    %p290 = scmp.ne.s32.totalorder %s278, %s279
    %p291 = scmp.eq.s32.totalorder %s28, 3
    %p292 = por %p290, %p291
    %p294 = scmp.ne.s32.totalorder %s279, %s293
    %p295 = scmp.eq.s32.totalorder %s28, 0
    %p296 = por %p294, %p295
    %s298 = sadd.s32 %s297, 1
    %p301 = scmp.eq.s32.totalorder %s22, 3
    %p302 = scmp.ne.s32.totalorder %s297, %s299
    %p303 = scmp.eq.s32.totalorder %s22, 0
    %p304 = por %p302, %p303
    %p305 = scmp.ne.s32.totalorder %s297, %s299
    %p306 = scmp.eq.s32.totalorder %s27, 3
    %p307 = por %p305, %p306
    %p308 = scmp.ne.s32.totalorder %s299, %s300
    %p309 = scmp.eq.s32.totalorder %s27, 0
    %p310 = por %p308, %p309
    %p311 = scmp.ne.s32.totalorder %s299, %s300
    %p312 = scmp.eq.s32.totalorder %s28, 3
    %p313 = por %p311, %p312
    %p315 = scmp.ne.s32.totalorder %s300, %s314
    %p316 = scmp.eq.s32.totalorder %s28, 0
    %p317 = por %p315, %p316
    %s319 = sadd.s32 %s318, 1
    %p322 = scmp.eq.s32.totalorder %s22, 3
    %p323 = scmp.ne.s32.totalorder %s318, %s320
    %p324 = scmp.eq.s32.totalorder %s22, 0
    %p325 = por %p323, %p324
    %p326 = scmp.ne.s32.totalorder %s318, %s320
    %p327 = scmp.eq.s32.totalorder %s27, 3
    %p328 = por %p326, %p327
    %p329 = scmp.ne.s32.totalorder %s320, %s321
    %p330 = scmp.eq.s32.totalorder %s27, 0
    %p331 = por %p329, %p330
    %p332 = scmp.ne.s32.totalorder %s320, %s321
    %p333 = scmp.eq.s32.totalorder %s28, 3
    %p334 = por %p332, %p333
    %p336 = scmp.ne.s32.totalorder %s321, %s335
    %p337 = scmp.eq.s32.totalorder %s28, 0
    %p338 = por %p336, %p337
    %s340 = sadd.s32 %s339, 1
    %p343 = scmp.eq.s32.totalorder %s22, 3
    %p344 = scmp.ne.s32.totalorder %s339, %s341
    %p345 = scmp.eq.s32.totalorder %s22, 0
    %p346 = por %p344, %p345
    %p347 = scmp.ne.s32.totalorder %s339, %s341
    %p348 = scmp.eq.s32.totalorder %s27, 3
    %p349 = por %p347, %p348
    %p350 = scmp.ne.s32.totalorder %s341, %s342
    %p351 = scmp.eq.s32.totalorder %s27, 0
    %p352 = por %p350, %p351
    %p353 = scmp.ne.s32.totalorder %s341, %s342
    %p354 = scmp.eq.s32.totalorder %s28, 3
    %p355 = por %p353, %p354
    %p357 = scmp.ne.s32.totalorder %s342, %s356
    %p358 = scmp.eq.s32.totalorder %s28, 0
    %p359 = por %p357, %p358
    %s361 = sadd.s32 %s360, 1
    %p364 = scmp.eq.s32.totalorder %s22, 3
    %p365 = scmp.ne.s32.totalorder %s360, %s362
    %p366 = scmp.eq.s32.totalorder %s22, 0
    %p367 = por %p365, %p366
    %p368 = scmp.ne.s32.totalorder %s360, %s362
    %p369 = scmp.eq.s32.totalorder %s27, 3
    %p370 = por %p368, %p369
    %p371 = scmp.ne.s32.totalorder %s362, %s363
    %p372 = scmp.eq.s32.totalorder %s27, 0
    %p373 = por %p371, %p372
    %p374 = scmp.ne.s32.totalorder %s362, %s363
    %p375 = scmp.eq.s32.totalorder %s28, 3
    %p376 = por %p374, %p375
    %p378 = scmp.ne.s32.totalorder %s363, %s377
    %p379 = scmp.eq.s32.totalorder %s28, 0
    %p380 = por %p378, %p379
    %s381 = ssub.s32 %s22, %s29
    %p382 = scmp.eq.s32.totalorder %s381, 0
    %s384 = sadd.s32 %s383, 1
    %s385 = scalar_select %p382, %s383, %s384
    %p388 = pneg %p382
    %p389 = scmp.eq.s32.totalorder %s22, 3
    %p390 = por %p388, %p389
    %p391 = scmp.ne.s32.totalorder %s383, %s386
    %p392 = scmp.eq.s32.totalorder %s22, 0
    %p393 = por %p391, %p392
    %p394 = scmp.ne.s32.totalorder %s383, %s386
    %p395 = scmp.eq.s32.totalorder %s27, 3
    %p396 = por %p394, %p395
    %p397 = scmp.ne.s32.totalorder %s386, %s387
    %p398 = scmp.eq.s32.totalorder %s27, 0
    %p399 = por %p397, %p398
    %p400 = scmp.ne.s32.totalorder %s386, %s387
    %p401 = scmp.eq.s32.totalorder %s28, 3
    %p402 = por %p400, %p401
    %p404 = scmp.ne.s32.totalorder %s387, %s403
    %p405 = scmp.eq.s32.totalorder %s28, 0
    %p406 = por %p404, %p405
    %p407 = scmp.le.s32.totalorder 1, %s22
    %p408 = scmp.lt.s32.totalorder %s22, 5
    %p409 = pnand %p407, %p408
    %p410 = pneg %p409
    // Predicated region
    $region9: #{sswl_plus_layer_forward.1} parent=5 // pred_check
      _
    $region10: #{sswl_plus_layer_forward.1} parent=5 // pred_check_branch
      %412 = sbr.rel (%p409) target = $region12
    $region11: #{sswl_plus_layer_forward.1} parent=5 // pred_region
      %s413 = ssub.s32 %s22, 1
      // Predicated region
      $region13: #{sswl_plus_layer_forward.1} parent=11 // pred_check
        %p414 = pneg %p121
      $region14: #{sswl_plus_layer_forward.1} parent=11 // pred_check_branch
        %416 = sbr.rel (%p414) target = $region16
      $region15: #{sswl_plus_layer_forward.1} parent=11 // pred_region
        _
      $region16: #{sswl_plus_layer_forward.1} parent=11 // pred_fallthru
        _
      // Predicated region
      $region17: #{sswl_plus_layer_forward.1} parent=11 // pred_check
        %p417 = pneg %p142
      $region18: #{sswl_plus_layer_forward.1} parent=11 // pred_check_branch
        %419 = sbr.rel (%p417) target = $region20
      $region19: #{sswl_plus_layer_forward.1} parent=11 // pred_region
        _
      $region20: #{sswl_plus_layer_forward.1} parent=11 // pred_fallthru
        _
      // Predicated region
      $region21: #{sswl_plus_layer_forward.1} parent=11 // pred_check
        %p420 = pneg %p163
      $region22: #{sswl_plus_layer_forward.1} parent=11 // pred_check_branch
        %422 = sbr.rel (%p420) target = $region24
      $region23: #{sswl_plus_layer_forward.1} parent=11 // pred_region
        _
      $region24: #{sswl_plus_layer_forward.1} parent=11 // pred_fallthru
        _
      // Predicated region
      $region25: #{sswl_plus_layer_forward.1} parent=11 // pred_check
        %p423 = pneg %p184
      $region26: #{sswl_plus_layer_forward.1} parent=11 // pred_check_branch
        %425 = sbr.rel (%p423) target = $region28
      $region27: #{sswl_plus_layer_forward.1} parent=11 // pred_region
        _
      $region28: #{sswl_plus_layer_forward.1} parent=11 // pred_fallthru
        _
      // Predicated region
      $region29: #{sswl_plus_layer_forward.1} parent=11 // pred_check
        %p426 = pneg %p205
      $region30: #{sswl_plus_layer_forward.1} parent=11 // pred_check_branch
        %428 = sbr.rel (%p426) target = $region32
      $region31: #{sswl_plus_layer_forward.1} parent=11 // pred_region
        _
      $region32: #{sswl_plus_layer_forward.1} parent=11 // pred_fallthru
        _
      // Predicated region
      $region33: #{sswl_plus_layer_forward.1} parent=11 // pred_check
        %p429 = pneg %p226
      $region34: #{sswl_plus_layer_forward.1} parent=11 // pred_check_branch
        %431 = sbr.rel (%p429) target = $region36
      $region35: #{sswl_plus_layer_forward.1} parent=11 // pred_region
        _
      $region36: #{sswl_plus_layer_forward.1} parent=11 // pred_fallthru
        _
      // Predicated region
      $region37: #{sswl_plus_layer_forward.1} parent=11 // pred_check
        %p432 = pneg %p247
      $region38: #{sswl_plus_layer_forward.1} parent=11 // pred_check_branch
        %434 = sbr.rel (%p432) target = $region40
      $region39: #{sswl_plus_layer_forward.1} parent=11 // pred_region
        _
      $region40: #{sswl_plus_layer_forward.1} parent=11 // pred_fallthru
        _
      // Predicated region
      $region41: #{sswl_plus_layer_forward.1} parent=11 // pred_check
        %p435 = pneg %p268
      $region42: #{sswl_plus_layer_forward.1} parent=11 // pred_check_branch
        %437 = sbr.rel (%p435) target = $region44
      $region43: #{sswl_plus_layer_forward.1} parent=11 // pred_region
        _
      $region44: #{sswl_plus_layer_forward.1} parent=11 // pred_fallthru
        _
      // Predicated region
      $region45: #{sswl_plus_layer_forward.1} parent=11 // pred_check
        %p438 = pneg %p289
      $region46: #{sswl_plus_layer_forward.1} parent=11 // pred_check_branch
        %440 = sbr.rel (%p438) target = $region48
      $region47: #{sswl_plus_layer_forward.1} parent=11 // pred_region
        _
      $region48: #{sswl_plus_layer_forward.1} parent=11 // pred_fallthru
        _
      // Predicated region
      $region49: #{sswl_plus_layer_forward.1} parent=11 // pred_check
        %p441 = pneg %p310
      $region50: #{sswl_plus_layer_forward.1} parent=11 // pred_check_branch
        %443 = sbr.rel (%p441) target = $region52
      $region51: #{sswl_plus_layer_forward.1} parent=11 // pred_region
        _
      $region52: #{sswl_plus_layer_forward.1} parent=11 // pred_fallthru
        _
      // Predicated region
      $region53: #{sswl_plus_layer_forward.1} parent=11 // pred_check
        %p444 = pneg %p331
      $region54: #{sswl_plus_layer_forward.1} parent=11 // pred_check_branch
        %446 = sbr.rel (%p444) target = $region56
      $region55: #{sswl_plus_layer_forward.1} parent=11 // pred_region
        _
      $region56: #{sswl_plus_layer_forward.1} parent=11 // pred_fallthru
        _
      // Predicated region
      $region57: #{sswl_plus_layer_forward.1} parent=11 // pred_check
        %p447 = pneg %p352
      $region58: #{sswl_plus_layer_forward.1} parent=11 // pred_check_branch
        %449 = sbr.rel (%p447) target = $region60
      $region59: #{sswl_plus_layer_forward.1} parent=11 // pred_region
        _
      $region60: #{sswl_plus_layer_forward.1} parent=11 // pred_fallthru
        _
      // Predicated region
      $region61: #{sswl_plus_layer_forward.1} parent=11 // pred_check
        %p450 = pneg %p373
      $region62: #{sswl_plus_layer_forward.1} parent=11 // pred_check_branch
        %452 = sbr.rel (%p450) target = $region64
      $region63: #{sswl_plus_layer_forward.1} parent=11 // pred_region
        _
      $region64: #{sswl_plus_layer_forward.1} parent=11 // pred_fallthru
        _
    $region12: #{sswl_plus_layer_forward.1} parent=5 // pred_fallthru
      _
    %p453 = scmp.lt.s32.totalorder %s22, 4
    // Predicated region
    $region65: #{sswl_plus_layer_forward.1} parent=5 // pred_check
      %p454 = pneg %p453
    $region66: #{sswl_plus_layer_forward.1} parent=5 // pred_check_branch
      %456 = sbr.rel (%p454) target = $region68
    $region67: #{sswl_plus_layer_forward.1} parent=5 // pred_region
      // Predicated region
      $region69: #{sswl_plus_layer_forward.1} parent=67 // pred_check
        %p457 = pneg %p42
      $region70: #{sswl_plus_layer_forward.1} parent=67 // pred_check_branch
        %459 = sbr.rel (%p457) target = $region72
      $region71: #{sswl_plus_layer_forward.1} parent=67 // pred_region
        %s460 = smul.u32 2, %s22
        %p461 = scmp.lt.s32.totalorder %s460, 7
        %s462 = scalar_select %p461, %s460, 7
        %s463 = smul.addr %s462, 8
        %s464 = smul.addr %s463, 8
        %s465 = scalar_lea.vmem %s0, %s464
        %s466 = smul.u32 2, %s22
      $region72: #{sswl_plus_layer_forward.1} parent=67 // pred_fallthru
        _
      // Predicated region
      $region73: #{sswl_plus_layer_forward.1} parent=67 // pred_check
        %p467 = pneg %p68
      $region74: #{sswl_plus_layer_forward.1} parent=67 // pred_check_branch
        %469 = sbr.rel (%p467) target = $region76
      $region75: #{sswl_plus_layer_forward.1} parent=67 // pred_region
        %s470 = smul.u32 2, %s22
        %p471 = scmp.lt.s32.totalorder %s470, 7
        %s472 = scalar_select %p471, %s470, 7
        %s473 = smul.addr %s472, 2
        %s474 = smul.addr %s473, 8
        %s475 = scalar_lea.vmem %s1, %s474
        %s476 = smul.u32 2, %s22
      $region76: #{sswl_plus_layer_forward.1} parent=67 // pred_fallthru
        _
      // Predicated region
      $region77: #{sswl_plus_layer_forward.1} parent=67 // pred_check
        %p477 = pneg %p94
      $region78: #{sswl_plus_layer_forward.1} parent=67 // pred_check_branch
        %479 = sbr.rel (%p477) target = $region80
      $region79: #{sswl_plus_layer_forward.1} parent=67 // pred_region
        %s480 = smul.u32 2, %s22
        %p481 = scmp.lt.s32.totalorder %s480, 7
        %s482 = scalar_select %p481, %s480, 7
        %s483 = smul.addr %s482, 2
        %s484 = smul.addr %s483, 8
        %s485 = scalar_lea.vmem %s2, %s484
        %s486 = smul.u32 2, %s22
      $region80: #{sswl_plus_layer_forward.1} parent=67 // pred_fallthru
        _
    $region68: #{sswl_plus_layer_forward.1} parent=5 // pred_fallthru
      _
    %p487 = scmp.le.s32.totalorder 1, %s22
    %p488 = scmp.lt.s32.totalorder %s22, 5
    %p489 = pnand %p487, %p488
    %p490 = pneg %p489
    // Predicated region
    $region81: #{sswl_plus_layer_forward.1} parent=5 // pred_check
      _
    $region82: #{sswl_plus_layer_forward.1} parent=5 // pred_check_branch
      %492 = sbr.rel (%p489) target = $region84
    $region83: #{sswl_plus_layer_forward.1} parent=5 // pred_region
      %s493 = ssub.s32 %s22, 1
      %s494 = smul.u32 2, %s27
      %p495 = scmp.lt.s32.totalorder %s494, 7
      %s496 = scalar_select %p495, %s494, 7
      %s497 = smul.addr %s496, 8
      %s498 = smul.addr %s497, 8
      %s499 = scalar_lea.vmem %s0, %s498
      %p500 = pneg %p48
      %p501 = pneg %p45
      %s502 = smul.u32 2, %s27
      %p503 = scmp.lt.s32.totalorder %s502, 7
      %s504 = scalar_select %p503, %s502, 7
      %s505 = smul.addr %s504, 2
      %s506 = smul.addr %s505, 8
      %s507 = scalar_lea.vmem %s1, %s506
      %p508 = pneg %p74
      %p509 = pneg %p71
      %s510 = smul.u32 2, %s27
      %p511 = scmp.lt.s32.totalorder %s510, 7
      %s512 = scalar_select %p511, %s510, 7
      %s513 = smul.addr %s512, 2
      %s514 = smul.addr %s513, 8
      %s515 = scalar_lea.vmem %s2, %s514
      %p516 = pneg %p100
      %p517 = pneg %p97
      %p518 = pneg %p121
      %p519 = pneg %p118
      %p520 = pneg %p142
      %p521 = pneg %p139
      %p522 = pneg %p163
      %p523 = pneg %p160
      %p524 = pneg %p184
      %p525 = pneg %p181
      %p526 = pneg %p205
      %p527 = pneg %p202
      %p528 = pneg %p226
      %p529 = pneg %p223
      %p530 = pneg %p247
      %p531 = pneg %p244
      %p532 = pneg %p268
      %p533 = pneg %p265
      %p534 = pneg %p289
      %p535 = pneg %p286
      %p536 = pneg %p310
      %p537 = pneg %p307
      %p538 = pneg %p331
      %p539 = pneg %p328
      %p540 = pneg %p352
      %p541 = pneg %p349
      %p542 = pneg %p373
      %p543 = pneg %p370
      %p544 = pneg %p399
      %p545 = pneg %p396
      %s546 = smul.u32 2, %s27
      %p547 = scmp.lt.s32.totalorder %s546, 7
      %s548 = scalar_select %p547, %s546, 7
      %s549 = smul.addr %s548, 8
      %s550 = smul.addr %s549, 8
      %s551 = scalar_lea.vmem %s16, %s550
      %s552 = smul.u32 2, %s27
      %p553 = scmp.lt.s32.totalorder %s552, 7
      %s554 = scalar_select %p553, %s552, 7
      %s555 = smul.addr %s554, 8
      %s556 = smul.addr %s555, 8
      %s557 = scalar_lea.vmem %s0, %s556
      %s558 = smul.u32 2, %s27
      %s559 = smul.u32 2, %s27
      %p560 = scmp.lt.s32.totalorder %s559, 7
      %s561 = scalar_select %p560, %s559, 7
      %s562 = smul.addr %s561, 2
      %s563 = smul.addr %s562, 8
      %s564 = scalar_lea.vmem %s1, %s563
      %s565 = smul.u32 2, %s27
      %s566 = smul.u32 2, %s27
      %p567 = scmp.lt.s32.totalorder %s566, 7
      %s568 = scalar_select %p567, %s566, 7
      %s569 = smul.addr %s568, 2
      %s570 = smul.addr %s569, 8
      %s571 = scalar_lea.vmem %s2, %s570
      %s572 = smul.u32 2, %s27
      %s573 = smul.u32 2, %s27
      %p574 = scmp.lt.s32.totalorder %s573, 7
      %s575 = scalar_select %p574, %s573, 7
      %s576 = smul.addr %s575, 8
      %s577 = smul.addr %s576, 8
      %s578 = scalar_lea.vmem %s16, %s577
      %s579 = smul.u32 2, %s27
      %v580 = vld [vmem:[%s557] sm:$0xff]
      %v581 = vld [vmem:[%s557 + $0x8] sm:$0xff]
      %v582 = vld [vmem:[%s557 + $0x10] sm:$0xff]
      %v583 = vld [vmem:[%s557 + $0x18] sm:$0xff]
      %v584 = vld [vmem:[%s557 + $0x20] sm:$0xff]
      %v585 = vld [vmem:[%s557 + $0x28] sm:$0xff]
      %v586 = vld [vmem:[%s557 + $0x30] sm:$0xff]
      %v587 = vld [vmem:[%s557 + $0x38] sm:$0xff]
      %v588 = vld [vmem:[%s564] sm:$0xff]
      %v589 = vld [vmem:[%s564 + $0x8] sm:$0xff]
      %v590 = vld [vmem:[%s571] sm:$0xff]
      %v591 = vld [vmem:[%s571 + $0x8] sm:$0xff]
      %v592 = vld [vmem:[%s3] sm:$0xff]
      %v593 = vld [vmem:[%s3 + $0x8] sm:$0xff]
      %v594 = vld [vmem:[%s3 + $0x10] sm:$0xff]
      %v595 = vld [vmem:[%s3 + $0x18] sm:$0xff]
      %v596 = vld [vmem:[%s3 + $0x20] sm:$0xff]
      %v597 = vld [vmem:[%s3 + $0x28] sm:$0xff]
      %v598 = vld [vmem:[%s3 + $0x30] sm:$0xff]
      %v599 = vld [vmem:[%s3 + $0x38] sm:$0xff]
      %v600 = vld [vmem:[%s3 + $0x40] sm:$0xff]
      %v601 = vld [vmem:[%s3 + $0x48] sm:$0xff]
      %v602 = vld [vmem:[%s3 + $0x50] sm:$0xff]
      %v603 = vld [vmem:[%s3 + $0x58] sm:$0xff]
      %v604 = vmax.f32 %v580, 0.0
      %v605 = vmax.f32 %v581, 0.0
      %v606 = vmax.f32 %v582, 0.0
      %v607 = vmax.f32 %v583, 0.0
      %v608 = vmax.f32 %v584, 0.0
      %v609 = vmax.f32 %v585, 0.0
      %v610 = vmax.f32 %v586, 0.0
      %v611 = vmax.f32 %v587, 0.0
      %v612 = vld [vmem:[%s4] sm:$0xff]
      %v613 = vld [vmem:[%s4 + $0x8] sm:$0xff]
      %v614 = vld [vmem:[%s4 + $0x10] sm:$0xff]
      %v615 = vld [vmem:[%s4 + $0x18] sm:$0xff]
      %v616 = vld [vmem:[%s4 + $0x20] sm:$0xff]
      %v617 = vld [vmem:[%s4 + $0x28] sm:$0xff]
      %v618 = vld [vmem:[%s4 + $0x30] sm:$0xff]
      %v619 = vld [vmem:[%s4 + $0x38] sm:$0xff]
      %v620 = vld [vmem:[%s4 + $0x40] sm:$0xff]
      %v621 = vld [vmem:[%s4 + $0x48] sm:$0xff]
      %v622 = vld [vmem:[%s4 + $0x50] sm:$0xff]
      %v623 = vld [vmem:[%s4 + $0x58] sm:$0xff]
      %625 = vset.pattern.permute.xlu0 0
      %626 = vperm.xlu0 %625, %v612
      %v627 = vpop.permute.xlu0 %626
      %630 = vset.pattern.permute.xlu0 0
      %631 = vperm.xlu0 %630, %v613
      %v632 = vpop.permute.xlu0 %631
      %635 = vset.pattern.permute.xlu0 0
      %636 = vperm.xlu0 %635, %v614
      %v637 = vpop.permute.xlu0 %636
      %640 = vset.pattern.permute.xlu0 0
      %641 = vperm.xlu0 %640, %v615
      %v642 = vpop.permute.xlu0 %641
      %645 = vset.pattern.permute.xlu0 0
      %646 = vperm.xlu0 %645, %v616
      %v647 = vpop.permute.xlu0 %646
      %650 = vset.pattern.permute.xlu0 0
      %651 = vperm.xlu0 %650, %v617
      %v652 = vpop.permute.xlu0 %651
      %655 = vset.pattern.permute.xlu0 0
      %656 = vperm.xlu0 %655, %v618
      %v657 = vpop.permute.xlu0 %656
      %660 = vset.pattern.permute.xlu0 0
      %661 = vperm.xlu0 %660, %v619
      %v662 = vpop.permute.xlu0 %661
      %665 = vset.pattern.permute.xlu0 0
      %666 = vperm.xlu0 %665, %v620
      %v667 = vpop.permute.xlu0 %666
      %670 = vset.pattern.permute.xlu0 0
      %671 = vperm.xlu0 %670, %v621
      %v672 = vpop.permute.xlu0 %671
      %675 = vset.pattern.permute.xlu0 0
      %676 = vperm.xlu0 %675, %v622
      %v677 = vpop.permute.xlu0 %676
      %680 = vset.pattern.permute.xlu0 0
      %681 = vperm.xlu0 %680, %v623
      %v682 = vpop.permute.xlu0 %681
      %vm684 = vcmask 261120
      %v686 = vsel %vm684, %v592, 0
      %v689 = vsel %vm684, %v593, 0
      %v692 = vsel %vm684, %v594, 0
      %v695 = vsel %vm684, %v595, 0
      %v698 = vsel %vm684, %v596, 0
      %v701 = vsel %vm684, %v597, 0
      %v704 = vsel %vm684, %v598, 0
      %v707 = vsel %vm684, %v599, 0
      %v710 = vsel %vm684, %v600, 0
      %v713 = vsel %vm684, %v601, 0
      %v716 = vsel %vm684, %v602, 0
      %v719 = vsel %vm684, %v603, 0
      %721 = vmatprep.subr.mxu0 0.0
      %722 = vmatpush1.msra.mxu0 0.0
      %723 = vmatprep.subr.mxu0 0.0
      %724 = vmatpush1.msra.mxu0 0.0
      %725 = vmatprep.subr.mxu0 0.0
      %726 = vmatpush1.msra.mxu0 0.0
      %727 = vmatprep.subr.mxu0 0.0
      %728 = vmatpush1.msra.mxu0 0.0
      %729 = vmatprep.subr.mxu0 0.0
      %730 = vmatpush1.msra.mxu0 0.0
      %731 = vmatprep.subr.mxu0 0.0
      %732 = vmatpush1.msra.mxu0 0.0
      %733 = vmatprep.subr.mxu0 0.0
      %734 = vmatpush1.msra.mxu0 0.0
      %735 = vmatprep.subr.mxu0 0.0
      %736 = vmatpush1.msra.mxu0 0.0
      %737 = vmatprep.subr.mxu0 0.0
      %738 = vmatpush1.msra.mxu0 0.0
      %739 = vmatprep.subr.mxu0 0.0
      %740 = vmatpush1.msra.mxu0 0.0
      %741 = vmatprep.subr.mxu0 0.0
      %742 = vmatpush1.msra.mxu0 0.0
      %743 = vmatprep.subr.mxu0 0.0
      %744 = vmatpush1.msra.mxu0 0.0
      %745 = vmatprep.subr.mxu0 %v611
      %746 = vmatpush1.msra.mxu0 %v610
      %747 = vmatprep.subr.mxu0 %v609
      %748 = vmatpush1.msra.mxu0 %v608
      %749 = vmatprep.subr.mxu0 %v607
      %750 = vmatpush1.msra.mxu0 %v606
      %751 = vmatprep.subr.mxu0 %v605
      %752 = vmatpush1.msra.mxu0 %v604
      %753 = vmatprep.subr.mxu0 0.0
      %754 = vmatpush2.msra.mxu0 0.0
      %755 = vmatprep.subr.mxu0 0.0
      %756 = vmatpush2.msra.mxu0 0.0
      %757 = vmatprep.subr.mxu0 0.0
      %758 = vmatpush2.msra.mxu0 0.0
      %759 = vmatprep.subr.mxu0 0.0
      %760 = vmatpush2.msra.mxu0 0.0
      %761 = vmatprep.subr.mxu0 0.0
      %762 = vmatpush2.msra.mxu0 0.0
      %763 = vmatprep.subr.mxu0 0.0
      %764 = vmatpush2.msra.mxu0 0.0
      %765 = vmatprep.subr.mxu0 0.0
      %766 = vmatpush2.msra.mxu0 0.0
      %767 = vmatprep.subr.mxu0 0.0
      %768 = vmatpush2.msra.mxu0 0.0
      %769 = vmatprep.subr.mxu0 0.0
      %770 = vmatpush2.msra.mxu0 0.0
      %771 = vmatprep.subr.mxu0 0.0
      %772 = vmatpush2.msra.mxu0 0.0
      %773 = vmatprep.subr.mxu0 0.0
      %774 = vmatpush2.msra.mxu0 0.0
      %775 = vmatprep.subr.mxu0 0.0
      %776 = vmatpush2.msra.mxu0 0.0
      %777 = vmatprep.subr.mxu0 0.0
      %778 = vmatpush2.msra.mxu0 0.0
      %779 = vmatprep.subr.mxu0 0.0
      %780 = vmatpush2.msra.mxu0 0.0
      %781 = vmatprep.subr.mxu0 0.0
      %782 = vmatpush2.msra.mxu0 0.0
      %783 = vmatprep.subr.mxu0 0.0
      %784 = vmatpush2.msra.mxu0 0.0
      %785 = vmatprep.mubr.f32.mxu0 0.0
      %786 = vmatmul.mubr.f32.gmra.mxu0 %v686
      %v787 = vpop.f32.mrf.mxu0
      %v788 = vadd.f32 %v627, %v787
      %v789 = vpop.f32.mrf.mxu0
      %v790 = vadd.f32 %v627, %v789
      %791 = vmatprep.mubr.f32.mxu0 0.0
      %792 = vmatmul.mubr.f32.gmra.mxu0 %v689
      %v793 = vpop.f32.mrf.mxu0
      %v794 = vadd.f32 %v632, %v793
      %v795 = vpop.f32.mrf.mxu0
      %v796 = vadd.f32 %v632, %v795
      %797 = vmatprep.mubr.f32.mxu0 0.0
      %798 = vmatmul.mubr.f32.gmra.mxu0 %v692
      %v799 = vpop.f32.mrf.mxu0
      %v800 = vadd.f32 %v637, %v799
      %v801 = vpop.f32.mrf.mxu0
      %v802 = vadd.f32 %v637, %v801
      %803 = vmatprep.mubr.f32.mxu0 0.0
      %804 = vmatmul.mubr.f32.gmra.mxu0 %v695
      %v805 = vpop.f32.mrf.mxu0
      %v806 = vadd.f32 %v642, %v805
      %v807 = vpop.f32.mrf.mxu0
      %v808 = vadd.f32 %v642, %v807
      %809 = vmatprep.mubr.f32.mxu0 0.0
      %810 = vmatmul.mubr.f32.gmra.mxu0 %v698
      %v811 = vpop.f32.mrf.mxu0
      %v812 = vadd.f32 %v647, %v811
      %v813 = vpop.f32.mrf.mxu0
      %v814 = vadd.f32 %v647, %v813
      %815 = vmatprep.mubr.f32.mxu0 0.0
      %816 = vmatmul.mubr.f32.gmra.mxu0 %v701
      %v817 = vpop.f32.mrf.mxu0
      %v818 = vadd.f32 %v652, %v817
      %v819 = vpop.f32.mrf.mxu0
      %v820 = vadd.f32 %v652, %v819
      %821 = vmatprep.mubr.f32.mxu0 0.0
      %822 = vmatmul.mubr.f32.gmra.mxu0 %v704
      %v823 = vpop.f32.mrf.mxu0
      %v824 = vadd.f32 %v657, %v823
      %v825 = vpop.f32.mrf.mxu0
      %v826 = vadd.f32 %v657, %v825
      %827 = vmatprep.mubr.f32.mxu0 0.0
      %828 = vmatmul.mubr.f32.gmra.mxu0 %v707
      %v829 = vpop.f32.mrf.mxu0
      %v830 = vadd.f32 %v662, %v829
      %v831 = vpop.f32.mrf.mxu0
      %v832 = vadd.f32 %v662, %v831
      %833 = vmatprep.mubr.f32.mxu0 0.0
      %834 = vmatmul.mubr.f32.gmra.mxu0 %v710
      %v835 = vpop.f32.mrf.mxu0
      %v836 = vadd.f32 %v667, %v835
      %v837 = vpop.f32.mrf.mxu0
      %v838 = vadd.f32 %v667, %v837
      %839 = vmatprep.mubr.f32.mxu0 0.0
      %840 = vmatmul.mubr.f32.gmra.mxu0 %v713
      %v841 = vpop.f32.mrf.mxu0
      %v842 = vadd.f32 %v672, %v841
      %v843 = vpop.f32.mrf.mxu0
      %v844 = vadd.f32 %v672, %v843
      %845 = vmatprep.mubr.f32.mxu0 0.0
      %846 = vmatmul.mubr.f32.gmra.mxu0 %v716
      %v847 = vpop.f32.mrf.mxu0
      %v848 = vadd.f32 %v677, %v847
      %v849 = vpop.f32.mrf.mxu0
      %v850 = vadd.f32 %v677, %v849
      %851 = vmatprep.mubr.f32.mxu0 0.0
      %852 = vmatmul.mubr.f32.gmra.mxu0 %v719
      %v853 = vpop.f32.mrf.mxu0
      %v854 = vadd.f32 %v682, %v853
      %v855 = vpop.f32.mrf.mxu0
      %v856 = vadd.f32 %v682, %v855
      %857 = vdwg.mxu0
      %v858 = vld [vmem:[%s9] sm:$0xff]
      %v859 = vld [vmem:[%s9 + $0x8] sm:$0xff]
      %v860 = vld [vmem:[%s9 + $0x10] sm:$0xff]
      %v861 = vld [vmem:[%s9 + $0x18] sm:$0xff]
      %v862 = vld [vmem:[%s9 + $0x20] sm:$0xff]
      %v863 = vld [vmem:[%s9 + $0x28] sm:$0xff]
      %v864 = vld [vmem:[%s9 + $0x30] sm:$0xff]
      %v865 = vld [vmem:[%s9 + $0x38] sm:$0xff]
      %v866 = vld [vmem:[%s9 + $0x40] sm:$0xff]
      %v867 = vld [vmem:[%s9 + $0x48] sm:$0xff]
      %v868 = vld [vmem:[%s9 + $0x50] sm:$0xff]
      %v869 = vld [vmem:[%s9 + $0x58] sm:$0xff]
      %v870 = vld [vmem:[%s9 + $0x60] sm:$0xff]
      %v871 = vld [vmem:[%s9 + $0x68] sm:$0xff]
      %v872 = vld [vmem:[%s9 + $0x70] sm:$0xff]
      %v873 = vld [vmem:[%s9 + $0x78] sm:$0xff]
      %v874 = vld [vmem:[%s9 + $0x80] sm:$0xff]
      %v875 = vld [vmem:[%s9 + $0x88] sm:$0xff]
      %v876 = vld [vmem:[%s9 + $0x90] sm:$0xff]
      %v877 = vld [vmem:[%s9 + $0x98] sm:$0xff]
      %v878 = vld [vmem:[%s9 + $0xa0] sm:$0xff]
      %v879 = vld [vmem:[%s9 + $0xa8] sm:$0xff]
      %v880 = vld [vmem:[%s9 + $0xb0] sm:$0xff]
      %v881 = vld [vmem:[%s9 + $0xb8] sm:$0xff]
      %v882 = vld [vmem:[%s9 + $0xc0] sm:$0xff]
      %v883 = vld [vmem:[%s9 + $0xc8] sm:$0xff]
      %v884 = vld [vmem:[%s9 + $0xd0] sm:$0xff]
      %v885 = vld [vmem:[%s9 + $0xd8] sm:$0xff]
      %v886 = vld [vmem:[%s9 + $0xe0] sm:$0xff]
      %v887 = vld [vmem:[%s9 + $0xe8] sm:$0xff]
      %v888 = vld [vmem:[%s9 + $0xf0] sm:$0xff]
      %v889 = vld [vmem:[%s9 + $0xf8] sm:$0xff]
      %v890 = vld [vmem:[%s10] sm:$0xff]
      %v891 = vld [vmem:[%s10 + $0x8] sm:$0xff]
      %v892 = vld [vmem:[%s10 + $0x10] sm:$0xff]
      %v893 = vld [vmem:[%s10 + $0x18] sm:$0xff]
      %vm894 = vcmask 130048
      %v896 = vsel %vm894, %v590, 0
      %v899 = vsel %vm894, %v591, 0
      %901 = vmatprep.subr.mxu0 0.0
      %902 = vmatpush1.msra.mxu0 0.0
      %903 = vmatprep.subr.mxu0 0.0
      %904 = vmatpush1.msra.mxu0 0.0
      %905 = vmatprep.subr.mxu0 0.0
      %906 = vmatpush1.msra.mxu0 0.0
      %907 = vmatprep.subr.mxu0 0.0
      %908 = vmatpush1.msra.mxu0 0.0
      %909 = vmatprep.subr.mxu0 0.0
      %910 = vmatpush1.msra.mxu0 0.0
      %911 = vmatprep.subr.mxu0 0.0
      %912 = vmatpush1.msra.mxu0 0.0
      %913 = vmatprep.subr.mxu0 0.0
      %914 = vmatpush1.msra.mxu0 0.0
      %915 = vmatprep.subr.mxu0 0.0
      %916 = vmatpush1.msra.mxu0 0.0
      %917 = vmatprep.subr.mxu0 0.0
      %918 = vmatpush1.msra.mxu0 0.0
      %919 = vmatprep.subr.mxu0 0.0
      %920 = vmatpush1.msra.mxu0 0.0
      %921 = vmatprep.subr.mxu0 0.0
      %922 = vmatpush1.msra.mxu0 0.0
      %923 = vmatprep.subr.mxu0 0.0
      %924 = vmatpush1.msra.mxu0 0.0
      %925 = vmatprep.subr.mxu0 0.0
      %926 = vmatpush1.msra.mxu0 0.0
      %927 = vmatprep.subr.mxu0 0.0
      %928 = vmatpush1.msra.mxu0 0.0
      %929 = vmatprep.subr.mxu0 %v893
      %930 = vmatpush1.msra.mxu0 %v892
      %931 = vmatprep.subr.mxu0 %v891
      %932 = vmatpush1.msra.mxu0 %v890
      %933 = vmatprep.subr.mxu0 0.0
      %934 = vmatpush2.msra.mxu0 0.0
      %935 = vmatprep.subr.mxu0 0.0
      %936 = vmatpush2.msra.mxu0 0.0
      %937 = vmatprep.subr.mxu0 0.0
      %938 = vmatpush2.msra.mxu0 0.0
      %939 = vmatprep.subr.mxu0 0.0
      %940 = vmatpush2.msra.mxu0 0.0
      %941 = vmatprep.subr.mxu0 0.0
      %942 = vmatpush2.msra.mxu0 0.0
      %943 = vmatprep.subr.mxu0 0.0
      %944 = vmatpush2.msra.mxu0 0.0
      %945 = vmatprep.subr.mxu0 0.0
      %946 = vmatpush2.msra.mxu0 0.0
      %947 = vmatprep.subr.mxu0 0.0
      %948 = vmatpush2.msra.mxu0 0.0
      %949 = vmatprep.subr.mxu0 0.0
      %950 = vmatpush2.msra.mxu0 0.0
      %951 = vmatprep.subr.mxu0 0.0
      %952 = vmatpush2.msra.mxu0 0.0
      %953 = vmatprep.subr.mxu0 0.0
      %954 = vmatpush2.msra.mxu0 0.0
      %955 = vmatprep.subr.mxu0 0.0
      %956 = vmatpush2.msra.mxu0 0.0
      %957 = vmatprep.subr.mxu0 0.0
      %958 = vmatpush2.msra.mxu0 0.0
      %959 = vmatprep.subr.mxu0 0.0
      %960 = vmatpush2.msra.mxu0 0.0
      %961 = vmatprep.subr.mxu0 0.0
      %962 = vmatpush2.msra.mxu0 0.0
      %963 = vmatprep.subr.mxu0 0.0
      %964 = vmatpush2.msra.mxu0 0.0
      %965 = vmatprep.mubr.f32.mxu0 0.0
      %966 = vmatmul.mubr.f32.gmra.mxu0 %v896
      %v967 = vpop.f32.mrf.mxu0
      %v968 = vadd.f32 0.0, %v967
      %v969 = vpop.f32.mrf.mxu0
      %v970 = vadd.f32 0.0, %v969
      %971 = vmatprep.mubr.f32.mxu0 0.0
      %972 = vmatmul.mubr.f32.gmra.mxu0 %v899
      %v973 = vpop.f32.mrf.mxu0
      %v974 = vadd.f32 0.0, %v973
      %v975 = vpop.f32.mrf.mxu0
      %v976 = vadd.f32 0.0, %v975
      %977 = vdwg.mxu0
      %v979 = vsel %vm894, %v858, 0
      %v982 = vsel %vm894, %v859, 0
      %v985 = vsel %vm894, %v860, 0
      %v988 = vsel %vm894, %v861, 0
      %v991 = vsel %vm894, %v862, 0
      %v994 = vsel %vm894, %v863, 0
      %v997 = vsel %vm894, %v864, 0
      %v1000 = vsel %vm894, %v865, 0
      %v1003 = vsel %vm894, %v866, 0
      %v1006 = vsel %vm894, %v867, 0
      %v1009 = vsel %vm894, %v868, 0
      %v1012 = vsel %vm894, %v869, 0
      %v1015 = vsel %vm894, %v870, 0
      %v1018 = vsel %vm894, %v871, 0
      %v1021 = vsel %vm894, %v872, 0
      %v1024 = vsel %vm894, %v873, 0
      %v1027 = vsel %vm894, %v874, 0
      %v1030 = vsel %vm894, %v875, 0
      %v1033 = vsel %vm894, %v876, 0
      %v1036 = vsel %vm894, %v877, 0
      %v1039 = vsel %vm894, %v878, 0
      %v1042 = vsel %vm894, %v879, 0
      %v1045 = vsel %vm894, %v880, 0
      %v1048 = vsel %vm894, %v881, 0
      %v1051 = vsel %vm894, %v882, 0
      %v1054 = vsel %vm894, %v883, 0
      %v1057 = vsel %vm894, %v884, 0
      %v1060 = vsel %vm894, %v885, 0
      %v1063 = vsel %vm894, %v886, 0
      %v1066 = vsel %vm894, %v887, 0
      %v1069 = vsel %vm894, %v888, 0
      %v1072 = vsel %vm894, %v889, 0
      %1074 = vmatprep.subr.mxu0 0.0
      %1075 = vmatpush1.msra.mxu0 0.0
      %1076 = vmatprep.subr.mxu0 0.0
      %1077 = vmatpush1.msra.mxu0 0.0
      %1078 = vmatprep.subr.mxu0 0.0
      %1079 = vmatpush1.msra.mxu0 0.0
      %1080 = vmatprep.subr.mxu0 0.0
      %1081 = vmatpush1.msra.mxu0 0.0
      %1082 = vmatprep.subr.mxu0 0.0
      %1083 = vmatpush1.msra.mxu0 0.0
      %1084 = vmatprep.subr.mxu0 0.0
      %1085 = vmatpush1.msra.mxu0 0.0
      %1086 = vmatprep.subr.mxu0 0.0
      %1087 = vmatpush1.msra.mxu0 0.0
      %1088 = vmatprep.subr.mxu0 0.0
      %1089 = vmatpush1.msra.mxu0 0.0
      %1090 = vmatprep.subr.mxu0 0.0
      %1091 = vmatpush1.msra.mxu0 0.0
      %1092 = vmatprep.subr.mxu0 0.0
      %1093 = vmatpush1.msra.mxu0 0.0
      %1094 = vmatprep.subr.mxu0 0.0
      %1095 = vmatpush1.msra.mxu0 0.0
      %1096 = vmatprep.subr.mxu0 0.0
      %1097 = vmatpush1.msra.mxu0 0.0
      %1098 = vmatprep.subr.mxu0 0.0
      %1099 = vmatpush1.msra.mxu0 0.0
      %1100 = vmatprep.subr.mxu0 0.0
      %1101 = vmatpush1.msra.mxu0 0.0
      %1102 = vmatprep.subr.mxu0 %v976
      %1103 = vmatpush1.msra.mxu0 %v974
      %1104 = vmatprep.subr.mxu0 %v970
      %1105 = vmatpush1.msra.mxu0 %v968
      %1106 = vmatprep.subr.mxu0 0.0
      %1107 = vmatpush2.msra.mxu0 0.0
      %1108 = vmatprep.subr.mxu0 0.0
      %1109 = vmatpush2.msra.mxu0 0.0
      %1110 = vmatprep.subr.mxu0 0.0
      %1111 = vmatpush2.msra.mxu0 0.0
      %1112 = vmatprep.subr.mxu0 0.0
      %1113 = vmatpush2.msra.mxu0 0.0
      %1114 = vmatprep.subr.mxu0 0.0
      %1115 = vmatpush2.msra.mxu0 0.0
      %1116 = vmatprep.subr.mxu0 0.0
      %1117 = vmatpush2.msra.mxu0 0.0
      %1118 = vmatprep.subr.mxu0 0.0
      %1119 = vmatpush2.msra.mxu0 0.0
      %1120 = vmatprep.subr.mxu0 0.0
      %1121 = vmatpush2.msra.mxu0 0.0
      %1122 = vmatprep.subr.mxu0 0.0
      %1123 = vmatpush2.msra.mxu0 0.0
      %1124 = vmatprep.subr.mxu0 0.0
      %1125 = vmatpush2.msra.mxu0 0.0
      %1126 = vmatprep.subr.mxu0 0.0
      %1127 = vmatpush2.msra.mxu0 0.0
      %1128 = vmatprep.subr.mxu0 0.0
      %1129 = vmatpush2.msra.mxu0 0.0
      %1130 = vmatprep.subr.mxu0 0.0
      %1131 = vmatpush2.msra.mxu0 0.0
      %1132 = vmatprep.subr.mxu0 0.0
      %1133 = vmatpush2.msra.mxu0 0.0
      %1134 = vmatprep.subr.mxu0 0.0
      %1135 = vmatpush2.msra.mxu0 0.0
      %1136 = vmatprep.subr.mxu0 0.0
      %1137 = vmatpush2.msra.mxu0 0.0
      %1138 = vmatprep.mubr.f32.mxu0 0.0
      %1139 = vmatmul.mubr.f32.gmra.mxu0 %v979
      %v1140 = vpop.f32.mrf.mxu0
      %v1141 = vadd.f32 0.0, %v1140
      %v1142 = vpop.f32.mrf.mxu0
      %v1143 = vadd.f32 0.0, %v1142
      %1144 = vmatprep.mubr.f32.mxu0 0.0
      %1145 = vmatmul.mubr.f32.gmra.mxu0 %v982
      %v1146 = vpop.f32.mrf.mxu0
      %v1147 = vadd.f32 0.0, %v1146
      %v1148 = vpop.f32.mrf.mxu0
      %v1149 = vadd.f32 0.0, %v1148
      %1150 = vmatprep.mubr.f32.mxu0 0.0
      %1151 = vmatmul.mubr.f32.gmra.mxu0 %v985
      %v1152 = vpop.f32.mrf.mxu0
      %v1153 = vadd.f32 0.0, %v1152
      %v1154 = vpop.f32.mrf.mxu0
      %v1155 = vadd.f32 0.0, %v1154
      %1156 = vmatprep.mubr.f32.mxu0 0.0
      %1157 = vmatmul.mubr.f32.gmra.mxu0 %v988
      %v1158 = vpop.f32.mrf.mxu0
      %v1159 = vadd.f32 0.0, %v1158
      %v1160 = vpop.f32.mrf.mxu0
      %v1161 = vadd.f32 0.0, %v1160
      %1162 = vmatprep.mubr.f32.mxu0 0.0
      %1163 = vmatmul.mubr.f32.gmra.mxu0 %v991
      %v1164 = vpop.f32.mrf.mxu0
      %v1165 = vadd.f32 0.0, %v1164
      %v1166 = vpop.f32.mrf.mxu0
      %v1167 = vadd.f32 0.0, %v1166
      %1168 = vmatprep.mubr.f32.mxu0 0.0
      %1169 = vmatmul.mubr.f32.gmra.mxu0 %v994
      %v1170 = vpop.f32.mrf.mxu0
      %v1171 = vadd.f32 0.0, %v1170
      %v1172 = vpop.f32.mrf.mxu0
      %v1173 = vadd.f32 0.0, %v1172
      %1174 = vmatprep.mubr.f32.mxu0 0.0
      %1175 = vmatmul.mubr.f32.gmra.mxu0 %v997
      %v1176 = vpop.f32.mrf.mxu0
      %v1177 = vadd.f32 0.0, %v1176
      %v1178 = vpop.f32.mrf.mxu0
      %v1179 = vadd.f32 0.0, %v1178
      %1180 = vmatprep.mubr.f32.mxu0 0.0
      %1181 = vmatmul.mubr.f32.gmra.mxu0 %v1000
      %v1182 = vpop.f32.mrf.mxu0
      %v1183 = vadd.f32 0.0, %v1182
      %v1184 = vpop.f32.mrf.mxu0
      %v1185 = vadd.f32 0.0, %v1184
      %1186 = vmatprep.mubr.f32.mxu0 0.0
      %1187 = vmatmul.mubr.f32.gmra.mxu0 %v1003
      %v1188 = vpop.f32.mrf.mxu0
      %v1189 = vadd.f32 0.0, %v1188
      %v1190 = vpop.f32.mrf.mxu0
      %v1191 = vadd.f32 0.0, %v1190
      %1192 = vmatprep.mubr.f32.mxu0 0.0
      %1193 = vmatmul.mubr.f32.gmra.mxu0 %v1006
      %v1194 = vpop.f32.mrf.mxu0
      %v1195 = vadd.f32 0.0, %v1194
      %v1196 = vpop.f32.mrf.mxu0
      %v1197 = vadd.f32 0.0, %v1196
      %1198 = vmatprep.mubr.f32.mxu0 0.0
      %1199 = vmatmul.mubr.f32.gmra.mxu0 %v1009
      %v1200 = vpop.f32.mrf.mxu0
      %v1201 = vadd.f32 0.0, %v1200
      %v1202 = vpop.f32.mrf.mxu0
      %v1203 = vadd.f32 0.0, %v1202
      %1204 = vmatprep.mubr.f32.mxu0 0.0
      %1205 = vmatmul.mubr.f32.gmra.mxu0 %v1012
      %v1206 = vpop.f32.mrf.mxu0
      %v1207 = vadd.f32 0.0, %v1206
      %v1208 = vpop.f32.mrf.mxu0
      %v1209 = vadd.f32 0.0, %v1208
      %1210 = vmatprep.mubr.f32.mxu0 0.0
      %1211 = vmatmul.mubr.f32.gmra.mxu0 %v1015
      %v1212 = vpop.f32.mrf.mxu0
      %v1213 = vadd.f32 0.0, %v1212
      %v1214 = vpop.f32.mrf.mxu0
      %v1215 = vadd.f32 0.0, %v1214
      %1216 = vmatprep.mubr.f32.mxu0 0.0
      %1217 = vmatmul.mubr.f32.gmra.mxu0 %v1018
      %v1218 = vpop.f32.mrf.mxu0
      %v1219 = vadd.f32 0.0, %v1218
      %v1220 = vpop.f32.mrf.mxu0
      %v1221 = vadd.f32 0.0, %v1220
      %1222 = vmatprep.mubr.f32.mxu0 0.0
      %1223 = vmatmul.mubr.f32.gmra.mxu0 %v1021
      %v1224 = vpop.f32.mrf.mxu0
      %v1225 = vadd.f32 0.0, %v1224
      %v1226 = vpop.f32.mrf.mxu0
      %v1227 = vadd.f32 0.0, %v1226
      %1228 = vmatprep.mubr.f32.mxu0 0.0
      %1229 = vmatmul.mubr.f32.gmra.mxu0 %v1024
      %v1230 = vpop.f32.mrf.mxu0
      %v1231 = vadd.f32 0.0, %v1230
      %v1232 = vpop.f32.mrf.mxu0
      %v1233 = vadd.f32 0.0, %v1232
      %1234 = vmatprep.mubr.f32.mxu0 0.0
      %1235 = vmatmul.mubr.f32.gmra.mxu0 %v1027
      %v1236 = vpop.f32.mrf.mxu0
      %v1237 = vadd.f32 0.0, %v1236
      %v1238 = vpop.f32.mrf.mxu0
      %v1239 = vadd.f32 0.0, %v1238
      %1240 = vmatprep.mubr.f32.mxu0 0.0
      %1241 = vmatmul.mubr.f32.gmra.mxu0 %v1030
      %v1242 = vpop.f32.mrf.mxu0
      %v1243 = vadd.f32 0.0, %v1242
      %v1244 = vpop.f32.mrf.mxu0
      %v1245 = vadd.f32 0.0, %v1244
      %1246 = vmatprep.mubr.f32.mxu0 0.0
      %1247 = vmatmul.mubr.f32.gmra.mxu0 %v1033
      %v1248 = vpop.f32.mrf.mxu0
      %v1249 = vadd.f32 0.0, %v1248
      %v1250 = vpop.f32.mrf.mxu0
      %v1251 = vadd.f32 0.0, %v1250
      %1252 = vmatprep.mubr.f32.mxu0 0.0
      %1253 = vmatmul.mubr.f32.gmra.mxu0 %v1036
      %v1254 = vpop.f32.mrf.mxu0
      %v1255 = vadd.f32 0.0, %v1254
      %v1256 = vpop.f32.mrf.mxu0
      %v1257 = vadd.f32 0.0, %v1256
      %1258 = vmatprep.mubr.f32.mxu0 0.0
      %1259 = vmatmul.mubr.f32.gmra.mxu0 %v1039
      %v1260 = vpop.f32.mrf.mxu0
      %v1261 = vadd.f32 0.0, %v1260
      %v1262 = vpop.f32.mrf.mxu0
      %v1263 = vadd.f32 0.0, %v1262
      %1264 = vmatprep.mubr.f32.mxu0 0.0
      %1265 = vmatmul.mubr.f32.gmra.mxu0 %v1042
      %v1266 = vpop.f32.mrf.mxu0
      %v1267 = vadd.f32 0.0, %v1266
      %v1268 = vpop.f32.mrf.mxu0
      %v1269 = vadd.f32 0.0, %v1268
      %1270 = vmatprep.mubr.f32.mxu0 0.0
      %1271 = vmatmul.mubr.f32.gmra.mxu0 %v1045
      %v1272 = vpop.f32.mrf.mxu0
      %v1273 = vadd.f32 0.0, %v1272
      %v1274 = vpop.f32.mrf.mxu0
      %v1275 = vadd.f32 0.0, %v1274
      %1276 = vmatprep.mubr.f32.mxu0 0.0
      %1277 = vmatmul.mubr.f32.gmra.mxu0 %v1048
      %v1278 = vpop.f32.mrf.mxu0
      %v1279 = vadd.f32 0.0, %v1278
      %v1280 = vpop.f32.mrf.mxu0
      %v1281 = vadd.f32 0.0, %v1280
      %1282 = vmatprep.mubr.f32.mxu0 0.0
      %1283 = vmatmul.mubr.f32.gmra.mxu0 %v1051
      %v1284 = vpop.f32.mrf.mxu0
      %v1285 = vadd.f32 0.0, %v1284
      %v1286 = vpop.f32.mrf.mxu0
      %v1287 = vadd.f32 0.0, %v1286
      %1288 = vmatprep.mubr.f32.mxu0 0.0
      %1289 = vmatmul.mubr.f32.gmra.mxu0 %v1054
      %v1290 = vpop.f32.mrf.mxu0
      %v1291 = vadd.f32 0.0, %v1290
      %v1292 = vpop.f32.mrf.mxu0
      %v1293 = vadd.f32 0.0, %v1292
      %1294 = vmatprep.mubr.f32.mxu0 0.0
      %1295 = vmatmul.mubr.f32.gmra.mxu0 %v1057
      %v1296 = vpop.f32.mrf.mxu0
      %v1297 = vadd.f32 0.0, %v1296
      %v1298 = vpop.f32.mrf.mxu0
      %v1299 = vadd.f32 0.0, %v1298
      %1300 = vmatprep.mubr.f32.mxu0 0.0
      %1301 = vmatmul.mubr.f32.gmra.mxu0 %v1060
      %v1302 = vpop.f32.mrf.mxu0
      %v1303 = vadd.f32 0.0, %v1302
      %v1304 = vpop.f32.mrf.mxu0
      %v1305 = vadd.f32 0.0, %v1304
      %1306 = vmatprep.mubr.f32.mxu0 0.0
      %1307 = vmatmul.mubr.f32.gmra.mxu0 %v1063
      %v1308 = vpop.f32.mrf.mxu0
      %v1309 = vadd.f32 0.0, %v1308
      %v1310 = vpop.f32.mrf.mxu0
      %v1311 = vadd.f32 0.0, %v1310
      %1312 = vmatprep.mubr.f32.mxu0 0.0
      %1313 = vmatmul.mubr.f32.gmra.mxu0 %v1066
      %v1314 = vpop.f32.mrf.mxu0
      %v1315 = vadd.f32 0.0, %v1314
      %v1316 = vpop.f32.mrf.mxu0
      %v1317 = vadd.f32 0.0, %v1316
      %1318 = vmatprep.mubr.f32.mxu0 0.0
      %1319 = vmatmul.mubr.f32.gmra.mxu0 %v1069
      %v1320 = vpop.f32.mrf.mxu0
      %v1321 = vadd.f32 0.0, %v1320
      %v1322 = vpop.f32.mrf.mxu0
      %v1323 = vadd.f32 0.0, %v1322
      %1324 = vmatprep.mubr.f32.mxu0 0.0
      %1325 = vmatmul.mubr.f32.gmra.mxu0 %v1072
      %v1326 = vpop.f32.mrf.mxu0
      %v1327 = vadd.f32 0.0, %v1326
      %v1328 = vpop.f32.mrf.mxu0
      %v1329 = vadd.f32 0.0, %v1328
      %1330 = vdwg.mxu0
      %v1331 = vld [vmem:[%s13] sm:$0xff]
      %v1332 = vld [vmem:[%s13 + $0x8] sm:$0xff]
      %v1333 = vld [vmem:[%s13 + $0x10] sm:$0xff]
      %v1334 = vld [vmem:[%s13 + $0x18] sm:$0xff]
      %v1335 = vld [vmem:[%s13 + $0x20] sm:$0xff]
      %v1336 = vld [vmem:[%s13 + $0x28] sm:$0xff]
      %v1337 = vld [vmem:[%s13 + $0x30] sm:$0xff]
      %v1338 = vld [vmem:[%s13 + $0x38] sm:$0xff]
      %v1339 = vld [vmem:[%s13 + $0x40] sm:$0xff]
      %v1340 = vld [vmem:[%s13 + $0x48] sm:$0xff]
      %v1341 = vld [vmem:[%s13 + $0x50] sm:$0xff]
      %v1342 = vld [vmem:[%s13 + $0x58] sm:$0xff]
      %v1343 = vld [vmem:[%s13 + $0x60] sm:$0xff]
      %v1344 = vld [vmem:[%s13 + $0x68] sm:$0xff]
      %v1345 = vld [vmem:[%s13 + $0x70] sm:$0xff]
      %v1346 = vld [vmem:[%s13 + $0x78] sm:$0xff]
      %v1347 = vld [vmem:[%s13 + $0x80] sm:$0xff]
      %v1348 = vld [vmem:[%s13 + $0x88] sm:$0xff]
      %v1349 = vld [vmem:[%s13 + $0x90] sm:$0xff]
      %v1350 = vld [vmem:[%s13 + $0x98] sm:$0xff]
      %v1351 = vld [vmem:[%s13 + $0xa0] sm:$0xff]
      %v1352 = vld [vmem:[%s13 + $0xa8] sm:$0xff]
      %v1353 = vld [vmem:[%s13 + $0xb0] sm:$0xff]
      %v1354 = vld [vmem:[%s13 + $0xb8] sm:$0xff]
      %v1355 = vld [vmem:[%s13 + $0xc0] sm:$0xff]
      %v1356 = vld [vmem:[%s13 + $0xc8] sm:$0xff]
      %v1357 = vld [vmem:[%s13 + $0xd0] sm:$0xff]
      %v1358 = vld [vmem:[%s13 + $0xd8] sm:$0xff]
      %v1359 = vld [vmem:[%s13 + $0xe0] sm:$0xff]
      %v1360 = vld [vmem:[%s13 + $0xe8] sm:$0xff]
      %v1361 = vld [vmem:[%s13 + $0xf0] sm:$0xff]
      %v1362 = vld [vmem:[%s13 + $0xf8] sm:$0xff]
      %v1363 = vld [vmem:[%s13 + $0x100] sm:$0xff]
      %v1364 = vld [vmem:[%s13 + $0x108] sm:$0xff]
      %v1365 = vld [vmem:[%s13 + $0x110] sm:$0xff]
      %v1366 = vld [vmem:[%s13 + $0x118] sm:$0xff]
      %v1367 = vld [vmem:[%s13 + $0x120] sm:$0xff]
      %v1368 = vld [vmem:[%s13 + $0x128] sm:$0xff]
      %v1369 = vld [vmem:[%s13 + $0x130] sm:$0xff]
      %v1370 = vld [vmem:[%s13 + $0x138] sm:$0xff]
      %v1371 = vld [vmem:[%s13 + $0x140] sm:$0xff]
      %v1372 = vld [vmem:[%s13 + $0x148] sm:$0xff]
      %v1373 = vld [vmem:[%s13 + $0x150] sm:$0xff]
      %v1374 = vld [vmem:[%s13 + $0x158] sm:$0xff]
      %v1375 = vld [vmem:[%s13 + $0x160] sm:$0xff]
      %v1376 = vld [vmem:[%s13 + $0x168] sm:$0xff]
      %v1377 = vld [vmem:[%s13 + $0x170] sm:$0xff]
      %v1378 = vld [vmem:[%s13 + $0x178] sm:$0xff]
      %v1379 = vld [vmem:[%s13 + $0x180] sm:$0xff]
      %v1380 = vld [vmem:[%s13 + $0x188] sm:$0xff]
      %v1381 = vld [vmem:[%s13 + $0x190] sm:$0xff]
      %v1382 = vld [vmem:[%s13 + $0x198] sm:$0xff]
      %v1383 = vld [vmem:[%s13 + $0x1a0] sm:$0xff]
      %v1384 = vld [vmem:[%s13 + $0x1a8] sm:$0xff]
      %v1385 = vld [vmem:[%s13 + $0x1b0] sm:$0xff]
      %v1386 = vld [vmem:[%s13 + $0x1b8] sm:$0xff]
      %v1387 = vld [vmem:[%s13 + $0x1c0] sm:$0xff]
      %v1388 = vld [vmem:[%s13 + $0x1c8] sm:$0xff]
      %v1389 = vld [vmem:[%s13 + $0x1d0] sm:$0xff]
      %v1390 = vld [vmem:[%s13 + $0x1d8] sm:$0xff]
      %v1391 = vld [vmem:[%s13 + $0x1e0] sm:$0xff]
      %v1392 = vld [vmem:[%s13 + $0x1e8] sm:$0xff]
      %v1393 = vld [vmem:[%s13 + $0x1f0] sm:$0xff]
      %v1394 = vld [vmem:[%s13 + $0x1f8] sm:$0xff]
      %v1395 = vmul.f32 %v1141, %v1331
      %v1396 = vmul.f32 %v1143, %v1332
      %v1397 = vmul.f32 %v1147, %v1333
      %v1398 = vmul.f32 %v1149, %v1334
      %v1399 = vmul.f32 %v1153, %v1335
      %v1400 = vmul.f32 %v1155, %v1336
      %v1401 = vmul.f32 %v1159, %v1337
      %v1402 = vmul.f32 %v1161, %v1338
      %v1403 = vmul.f32 %v1165, %v1339
      %v1404 = vmul.f32 %v1167, %v1340
      %v1405 = vmul.f32 %v1171, %v1341
      %v1406 = vmul.f32 %v1173, %v1342
      %v1407 = vmul.f32 %v1177, %v1343
      %v1408 = vmul.f32 %v1179, %v1344
      %v1409 = vmul.f32 %v1183, %v1345
      %v1410 = vmul.f32 %v1185, %v1346
      %v1411 = vmul.f32 %v1189, %v1347
      %v1412 = vmul.f32 %v1191, %v1348
      %v1413 = vmul.f32 %v1195, %v1349
      %v1414 = vmul.f32 %v1197, %v1350
      %v1415 = vmul.f32 %v1201, %v1351
      %v1416 = vmul.f32 %v1203, %v1352
      %v1417 = vmul.f32 %v1207, %v1353
      %v1418 = vmul.f32 %v1209, %v1354
      %v1419 = vmul.f32 %v1213, %v1355
      %v1420 = vmul.f32 %v1215, %v1356
      %v1421 = vmul.f32 %v1219, %v1357
      %v1422 = vmul.f32 %v1221, %v1358
      %v1423 = vmul.f32 %v1225, %v1359
      %v1424 = vmul.f32 %v1227, %v1360
      %v1425 = vmul.f32 %v1231, %v1361
      %v1426 = vmul.f32 %v1233, %v1362
      %v1427 = vmul.f32 %v1237, %v1363
      %v1428 = vmul.f32 %v1239, %v1364
      %v1429 = vmul.f32 %v1243, %v1365
      %v1430 = vmul.f32 %v1245, %v1366
      %v1431 = vmul.f32 %v1249, %v1367
      %v1432 = vmul.f32 %v1251, %v1368
      %v1433 = vmul.f32 %v1255, %v1369
      %v1434 = vmul.f32 %v1257, %v1370
      %v1435 = vmul.f32 %v1261, %v1371
      %v1436 = vmul.f32 %v1263, %v1372
      %v1437 = vmul.f32 %v1267, %v1373
      %v1438 = vmul.f32 %v1269, %v1374
      %v1439 = vmul.f32 %v1273, %v1375
      %v1440 = vmul.f32 %v1275, %v1376
      %v1441 = vmul.f32 %v1279, %v1377
      %v1442 = vmul.f32 %v1281, %v1378
      %v1443 = vmul.f32 %v1285, %v1379
      %v1444 = vmul.f32 %v1287, %v1380
      %v1445 = vmul.f32 %v1291, %v1381
      %v1446 = vmul.f32 %v1293, %v1382
      %v1447 = vmul.f32 %v1297, %v1383
      %v1448 = vmul.f32 %v1299, %v1384
      %v1449 = vmul.f32 %v1303, %v1385
      %v1450 = vmul.f32 %v1305, %v1386
      %v1451 = vmul.f32 %v1309, %v1387
      %v1452 = vmul.f32 %v1311, %v1388
      %v1453 = vmul.f32 %v1315, %v1389
      %v1454 = vmul.f32 %v1317, %v1390
      %v1455 = vmul.f32 %v1321, %v1391
      %v1456 = vmul.f32 %v1323, %v1392
      %v1457 = vmul.f32 %v1327, %v1393
      %v1458 = vmul.f32 %v1329, %v1394
      %1459 = vst [vmem:[#allocation2] sm:$0xff] %v1395
      %1460 = vst [vmem:[#allocation2 + $0x8] sm:$0xff] %v1396
      %1461 = vst [vmem:[#allocation2 + $0x10] sm:$0xff] %v1397
      %1462 = vst [vmem:[#allocation2 + $0x18] sm:$0xff] %v1398
      %1463 = vst [vmem:[#allocation2 + $0x20] sm:$0xff] %v1399
      %1464 = vst [vmem:[#allocation2 + $0x28] sm:$0xff] %v1400
      %1465 = vst [vmem:[#allocation2 + $0x30] sm:$0xff] %v1401
      %1466 = vst [vmem:[#allocation2 + $0x38] sm:$0xff] %v1402
      %1467 = vst [vmem:[#allocation2 + $0x40] sm:$0xff] %v1403
      %1468 = vst [vmem:[#allocation2 + $0x48] sm:$0xff] %v1404
      %1469 = vst [vmem:[#allocation2 + $0x50] sm:$0xff] %v1405
      %1470 = vst [vmem:[#allocation2 + $0x58] sm:$0xff] %v1406
      %1471 = vst [vmem:[#allocation2 + $0x60] sm:$0xff] %v1407
      %1472 = vst [vmem:[#allocation2 + $0x68] sm:$0xff] %v1408
      %1473 = vst [vmem:[#allocation2 + $0x70] sm:$0xff] %v1409
      %1474 = vst [vmem:[#allocation2 + $0x78] sm:$0xff] %v1410
      %1475 = vst [vmem:[#allocation2 + $0x80] sm:$0xff] %v1411
      %1476 = vst [vmem:[#allocation2 + $0x88] sm:$0xff] %v1412
      %1477 = vst [vmem:[#allocation2 + $0x90] sm:$0xff] %v1413
      %1478 = vst [vmem:[#allocation2 + $0x98] sm:$0xff] %v1414
      %1479 = vst [vmem:[#allocation2 + $0xa0] sm:$0xff] %v1415
      %1480 = vst [vmem:[#allocation2 + $0xa8] sm:$0xff] %v1416
      %1481 = vst [vmem:[#allocation2 + $0xb0] sm:$0xff] %v1417
      %1482 = vst [vmem:[#allocation2 + $0xb8] sm:$0xff] %v1418
      %1483 = vst [vmem:[#allocation2 + $0xc0] sm:$0xff] %v1419
      %1484 = vst [vmem:[#allocation2 + $0xc8] sm:$0xff] %v1420
      %1485 = vst [vmem:[#allocation2 + $0xd0] sm:$0xff] %v1421
      %1486 = vst [vmem:[#allocation2 + $0xd8] sm:$0xff] %v1422
      %1487 = vst [vmem:[#allocation2 + $0xe0] sm:$0xff] %v1423
      %1488 = vst [vmem:[#allocation2 + $0xe8] sm:$0xff] %v1424
      %1489 = vst [vmem:[#allocation2 + $0xf0] sm:$0xff] %v1425
      %1490 = vst [vmem:[#allocation2 + $0xf8] sm:$0xff] %v1426
      %1491 = vst [vmem:[#allocation2 + $0x100] sm:$0xff] %v1427
      %1492 = vst [vmem:[#allocation2 + $0x108] sm:$0xff] %v1428
      %1493 = vst [vmem:[#allocation2 + $0x110] sm:$0xff] %v1429
      %1494 = vst [vmem:[#allocation2 + $0x118] sm:$0xff] %v1430
      %1495 = vst [vmem:[#allocation2 + $0x120] sm:$0xff] %v1431
      %1496 = vst [vmem:[#allocation2 + $0x128] sm:$0xff] %v1432
      %1497 = vst [vmem:[#allocation2 + $0x130] sm:$0xff] %v1433
      %1498 = vst [vmem:[#allocation2 + $0x138] sm:$0xff] %v1434
      %1499 = vst [vmem:[#allocation2 + $0x140] sm:$0xff] %v1435
      %1500 = vst [vmem:[#allocation2 + $0x148] sm:$0xff] %v1436
      %1501 = vst [vmem:[#allocation2 + $0x150] sm:$0xff] %v1437
      %1502 = vst [vmem:[#allocation2 + $0x158] sm:$0xff] %v1438
      %1503 = vst [vmem:[#allocation2 + $0x160] sm:$0xff] %v1439
      %1504 = vst [vmem:[#allocation2 + $0x168] sm:$0xff] %v1440
      %1505 = vst [vmem:[#allocation2 + $0x170] sm:$0xff] %v1441
      %1506 = vst [vmem:[#allocation2 + $0x178] sm:$0xff] %v1442
      %1507 = vst [vmem:[#allocation2 + $0x180] sm:$0xff] %v1443
      %1508 = vst [vmem:[#allocation2 + $0x188] sm:$0xff] %v1444
      %1509 = vst [vmem:[#allocation2 + $0x190] sm:$0xff] %v1445
      %1510 = vst [vmem:[#allocation2 + $0x198] sm:$0xff] %v1446
      %1511 = vst [vmem:[#allocation2 + $0x1a0] sm:$0xff] %v1447
      %1512 = vst [vmem:[#allocation2 + $0x1a8] sm:$0xff] %v1448
      %1513 = vst [vmem:[#allocation2 + $0x1b0] sm:$0xff] %v1449
      %1514 = vst [vmem:[#allocation2 + $0x1b8] sm:$0xff] %v1450
      %1515 = vst [vmem:[#allocation2 + $0x1c0] sm:$0xff] %v1451
      %1516 = vst [vmem:[#allocation2 + $0x1c8] sm:$0xff] %v1452
      %1517 = vst [vmem:[#allocation2 + $0x1d0] sm:$0xff] %v1453
      %1518 = vst [vmem:[#allocation2 + $0x1d8] sm:$0xff] %v1454
      %1519 = vst [vmem:[#allocation2 + $0x1e0] sm:$0xff] %v1455
      %1520 = vst [vmem:[#allocation2 + $0x1e8] sm:$0xff] %v1456
      %1521 = vst [vmem:[#allocation2 + $0x1f0] sm:$0xff] %v1457
      %1522 = vst [vmem:[#allocation2 + $0x1f8] sm:$0xff] %v1458
      %v1523 = vld [vmem:[%s11] sm:$0xff]
      %v1524 = vld [vmem:[%s11 + $0x8] sm:$0xff]
      %v1525 = vld [vmem:[%s11 + $0x10] sm:$0xff]
      %v1526 = vld [vmem:[%s11 + $0x18] sm:$0xff]
      %v1527 = vld [vmem:[%s11 + $0x20] sm:$0xff]
      %v1528 = vld [vmem:[%s11 + $0x28] sm:$0xff]
      %v1529 = vld [vmem:[%s11 + $0x30] sm:$0xff]
      %v1530 = vld [vmem:[%s11 + $0x38] sm:$0xff]
      %v1531 = vld [vmem:[%s11 + $0x40] sm:$0xff]
      %v1532 = vld [vmem:[%s11 + $0x48] sm:$0xff]
      %v1533 = vld [vmem:[%s11 + $0x50] sm:$0xff]
      %v1534 = vld [vmem:[%s11 + $0x58] sm:$0xff]
      %v1535 = vld [vmem:[%s11 + $0x60] sm:$0xff]
      %v1536 = vld [vmem:[%s11 + $0x68] sm:$0xff]
      %v1537 = vld [vmem:[%s11 + $0x70] sm:$0xff]
      %v1538 = vld [vmem:[%s11 + $0x78] sm:$0xff]
      %v1539 = vld [vmem:[%s11 + $0x80] sm:$0xff]
      %v1540 = vld [vmem:[%s11 + $0x88] sm:$0xff]
      %v1541 = vld [vmem:[%s11 + $0x90] sm:$0xff]
      %v1542 = vld [vmem:[%s11 + $0x98] sm:$0xff]
      %v1543 = vld [vmem:[%s11 + $0xa0] sm:$0xff]
      %v1544 = vld [vmem:[%s11 + $0xa8] sm:$0xff]
      %v1545 = vld [vmem:[%s11 + $0xb0] sm:$0xff]
      %v1546 = vld [vmem:[%s11 + $0xb8] sm:$0xff]
      %v1547 = vld [vmem:[%s11 + $0xc0] sm:$0xff]
      %v1548 = vld [vmem:[%s11 + $0xc8] sm:$0xff]
      %v1549 = vld [vmem:[%s11 + $0xd0] sm:$0xff]
      %v1550 = vld [vmem:[%s11 + $0xd8] sm:$0xff]
      %v1551 = vld [vmem:[%s11 + $0xe0] sm:$0xff]
      %v1552 = vld [vmem:[%s11 + $0xe8] sm:$0xff]
      %v1553 = vld [vmem:[%s11 + $0xf0] sm:$0xff]
      %v1554 = vld [vmem:[%s11 + $0xf8] sm:$0xff]
      %v1555 = vld [vmem:[%s12] sm:$0xff]
      %v1556 = vld [vmem:[%s12 + $0x8] sm:$0xff]
      %v1557 = vld [vmem:[%s12 + $0x10] sm:$0xff]
      %v1558 = vld [vmem:[%s12 + $0x18] sm:$0xff]
      %v1560 = vsel %vm894, %v588, 0
      %v1563 = vsel %vm894, %v589, 0
      %1565 = vmatprep.subr.mxu0 0.0
      %1566 = vmatpush1.msra.mxu0 0.0
      %1567 = vmatprep.subr.mxu0 0.0
      %1568 = vmatpush1.msra.mxu0 0.0
      %1569 = vmatprep.subr.mxu0 0.0
      %1570 = vmatpush1.msra.mxu0 0.0
      %1571 = vmatprep.subr.mxu0 0.0
      %1572 = vmatpush1.msra.mxu0 0.0
      %1573 = vmatprep.subr.mxu0 0.0
      %1574 = vmatpush1.msra.mxu0 0.0
      %1575 = vmatprep.subr.mxu0 0.0
      %1576 = vmatpush1.msra.mxu0 0.0
      %1577 = vmatprep.subr.mxu0 0.0
      %1578 = vmatpush1.msra.mxu0 0.0
      %1579 = vmatprep.subr.mxu0 0.0
      %1580 = vmatpush1.msra.mxu0 0.0
      %1581 = vmatprep.subr.mxu0 0.0
      %1582 = vmatpush1.msra.mxu0 0.0
      %1583 = vmatprep.subr.mxu0 0.0
      %1584 = vmatpush1.msra.mxu0 0.0
      %1585 = vmatprep.subr.mxu0 0.0
      %1586 = vmatpush1.msra.mxu0 0.0
      %1587 = vmatprep.subr.mxu0 0.0
      %1588 = vmatpush1.msra.mxu0 0.0
      %1589 = vmatprep.subr.mxu0 0.0
      %1590 = vmatpush1.msra.mxu0 0.0
      %1591 = vmatprep.subr.mxu0 0.0
      %1592 = vmatpush1.msra.mxu0 0.0
      %1593 = vmatprep.subr.mxu0 %v1558
      %1594 = vmatpush1.msra.mxu0 %v1557
      %1595 = vmatprep.subr.mxu0 %v1556
      %1596 = vmatpush1.msra.mxu0 %v1555
      %1597 = vmatprep.subr.mxu0 0.0
      %1598 = vmatpush2.msra.mxu0 0.0
      %1599 = vmatprep.subr.mxu0 0.0
      %1600 = vmatpush2.msra.mxu0 0.0
      %1601 = vmatprep.subr.mxu0 0.0
      %1602 = vmatpush2.msra.mxu0 0.0
      %1603 = vmatprep.subr.mxu0 0.0
      %1604 = vmatpush2.msra.mxu0 0.0
      %1605 = vmatprep.subr.mxu0 0.0
      %1606 = vmatpush2.msra.mxu0 0.0
      %1607 = vmatprep.subr.mxu0 0.0
      %1608 = vmatpush2.msra.mxu0 0.0
      %1609 = vmatprep.subr.mxu0 0.0
      %1610 = vmatpush2.msra.mxu0 0.0
      %1611 = vmatprep.subr.mxu0 0.0
      %1612 = vmatpush2.msra.mxu0 0.0
      %1613 = vmatprep.subr.mxu0 0.0
      %1614 = vmatpush2.msra.mxu0 0.0
      %1615 = vmatprep.subr.mxu0 0.0
      %1616 = vmatpush2.msra.mxu0 0.0
      %1617 = vmatprep.subr.mxu0 0.0
      %1618 = vmatpush2.msra.mxu0 0.0
      %1619 = vmatprep.subr.mxu0 0.0
      %1620 = vmatpush2.msra.mxu0 0.0
      %1621 = vmatprep.subr.mxu0 0.0
      %1622 = vmatpush2.msra.mxu0 0.0
      %1623 = vmatprep.subr.mxu0 0.0
      %1624 = vmatpush2.msra.mxu0 0.0
      %1625 = vmatprep.subr.mxu0 0.0
      %1626 = vmatpush2.msra.mxu0 0.0
      %1627 = vmatprep.subr.mxu0 0.0
      %1628 = vmatpush2.msra.mxu0 0.0
      %1629 = vmatprep.mubr.f32.mxu0 0.0
      %1630 = vmatmul.mubr.f32.gmra.mxu0 %v1560
      %v1631 = vpop.f32.mrf.mxu0
      %v1632 = vadd.f32 0.0, %v1631
      %v1633 = vpop.f32.mrf.mxu0
      %v1634 = vadd.f32 0.0, %v1633
      %1635 = vmatprep.mubr.f32.mxu0 0.0
      %1636 = vmatmul.mubr.f32.gmra.mxu0 %v1563
      %v1637 = vpop.f32.mrf.mxu0
      %v1638 = vadd.f32 0.0, %v1637
      %v1639 = vpop.f32.mrf.mxu0
      %v1640 = vadd.f32 0.0, %v1639
      %1641 = vdwg.mxu0
      %v1643 = vsel %vm894, %v1523, 0
      %v1646 = vsel %vm894, %v1524, 0
      %v1649 = vsel %vm894, %v1525, 0
      %v1652 = vsel %vm894, %v1526, 0
      %v1655 = vsel %vm894, %v1527, 0
      %v1658 = vsel %vm894, %v1528, 0
      %v1661 = vsel %vm894, %v1529, 0
      %v1664 = vsel %vm894, %v1530, 0
      %v1667 = vsel %vm894, %v1531, 0
      %v1670 = vsel %vm894, %v1532, 0
      %v1673 = vsel %vm894, %v1533, 0
      %v1676 = vsel %vm894, %v1534, 0
      %v1679 = vsel %vm894, %v1535, 0
      %v1682 = vsel %vm894, %v1536, 0
      %v1685 = vsel %vm894, %v1537, 0
      %v1688 = vsel %vm894, %v1538, 0
      %v1691 = vsel %vm894, %v1539, 0
      %v1694 = vsel %vm894, %v1540, 0
      %v1697 = vsel %vm894, %v1541, 0
      %v1700 = vsel %vm894, %v1542, 0
      %v1703 = vsel %vm894, %v1543, 0
      %v1706 = vsel %vm894, %v1544, 0
      %v1709 = vsel %vm894, %v1545, 0
      %v1712 = vsel %vm894, %v1546, 0
      %v1715 = vsel %vm894, %v1547, 0
      %v1718 = vsel %vm894, %v1548, 0
      %v1721 = vsel %vm894, %v1549, 0
      %v1724 = vsel %vm894, %v1550, 0
      %v1727 = vsel %vm894, %v1551, 0
      %v1730 = vsel %vm894, %v1552, 0
      %v1733 = vsel %vm894, %v1553, 0
      %v1736 = vsel %vm894, %v1554, 0
      %1738 = vmatprep.subr.mxu0 0.0
      %1739 = vmatpush1.msra.mxu0 0.0
      %1740 = vmatprep.subr.mxu0 0.0
      %1741 = vmatpush1.msra.mxu0 0.0
      %1742 = vmatprep.subr.mxu0 0.0
      %1743 = vmatpush1.msra.mxu0 0.0
      %1744 = vmatprep.subr.mxu0 0.0
      %1745 = vmatpush1.msra.mxu0 0.0
      %1746 = vmatprep.subr.mxu0 0.0
      %1747 = vmatpush1.msra.mxu0 0.0
      %1748 = vmatprep.subr.mxu0 0.0
      %1749 = vmatpush1.msra.mxu0 0.0
      %1750 = vmatprep.subr.mxu0 0.0
      %1751 = vmatpush1.msra.mxu0 0.0
      %1752 = vmatprep.subr.mxu0 0.0
      %1753 = vmatpush1.msra.mxu0 0.0
      %1754 = vmatprep.subr.mxu0 0.0
      %1755 = vmatpush1.msra.mxu0 0.0
      %1756 = vmatprep.subr.mxu0 0.0
      %1757 = vmatpush1.msra.mxu0 0.0
      %1758 = vmatprep.subr.mxu0 0.0
      %1759 = vmatpush1.msra.mxu0 0.0
      %1760 = vmatprep.subr.mxu0 0.0
      %1761 = vmatpush1.msra.mxu0 0.0
      %1762 = vmatprep.subr.mxu0 0.0
      %1763 = vmatpush1.msra.mxu0 0.0
      %1764 = vmatprep.subr.mxu0 0.0
      %1765 = vmatpush1.msra.mxu0 0.0
      %1766 = vmatprep.subr.mxu0 %v1640
      %1767 = vmatpush1.msra.mxu0 %v1638
      %1768 = vmatprep.subr.mxu0 %v1634
      %1769 = vmatpush1.msra.mxu0 %v1632
      %1770 = vmatprep.subr.mxu0 0.0
      %1771 = vmatpush2.msra.mxu0 0.0
      %1772 = vmatprep.subr.mxu0 0.0
      %1773 = vmatpush2.msra.mxu0 0.0
      %1774 = vmatprep.subr.mxu0 0.0
      %1775 = vmatpush2.msra.mxu0 0.0
      %1776 = vmatprep.subr.mxu0 0.0
      %1777 = vmatpush2.msra.mxu0 0.0
      %1778 = vmatprep.subr.mxu0 0.0
      %1779 = vmatpush2.msra.mxu0 0.0
      %1780 = vmatprep.subr.mxu0 0.0
      %1781 = vmatpush2.msra.mxu0 0.0
      %1782 = vmatprep.subr.mxu0 0.0
      %1783 = vmatpush2.msra.mxu0 0.0
      %1784 = vmatprep.subr.mxu0 0.0
      %1785 = vmatpush2.msra.mxu0 0.0
      %1786 = vmatprep.subr.mxu0 0.0
      %1787 = vmatpush2.msra.mxu0 0.0
      %1788 = vmatprep.subr.mxu0 0.0
      %1789 = vmatpush2.msra.mxu0 0.0
      %1790 = vmatprep.subr.mxu0 0.0
      %1791 = vmatpush2.msra.mxu0 0.0
      %1792 = vmatprep.subr.mxu0 0.0
      %1793 = vmatpush2.msra.mxu0 0.0
      %1794 = vmatprep.subr.mxu0 0.0
      %1795 = vmatpush2.msra.mxu0 0.0
      %1796 = vmatprep.subr.mxu0 0.0
      %1797 = vmatpush2.msra.mxu0 0.0
      %1798 = vmatprep.subr.mxu0 0.0
      %1799 = vmatpush2.msra.mxu0 0.0
      %1800 = vmatprep.subr.mxu0 0.0
      %1801 = vmatpush2.msra.mxu0 0.0
      %1802 = vmatprep.mubr.f32.mxu0 0.0
      %1803 = vmatmul.mubr.f32.gmra.mxu0 %v1643
      %v1804 = vpop.f32.mrf.mxu0
      %v1805 = vadd.f32 0.0, %v1804
      %v1806 = vpop.f32.mrf.mxu0
      %v1807 = vadd.f32 0.0, %v1806
      %1808 = vmatprep.mubr.f32.mxu0 0.0
      %1809 = vmatmul.mubr.f32.gmra.mxu0 %v1646
      %v1810 = vpop.f32.mrf.mxu0
      %v1811 = vadd.f32 0.0, %v1810
      %v1812 = vpop.f32.mrf.mxu0
      %v1813 = vadd.f32 0.0, %v1812
      %1814 = vmatprep.mubr.f32.mxu0 0.0
      %1815 = vmatmul.mubr.f32.gmra.mxu0 %v1649
      %v1816 = vpop.f32.mrf.mxu0
      %v1817 = vadd.f32 0.0, %v1816
      %v1818 = vpop.f32.mrf.mxu0
      %v1819 = vadd.f32 0.0, %v1818
      %1820 = vmatprep.mubr.f32.mxu0 0.0
      %1821 = vmatmul.mubr.f32.gmra.mxu0 %v1652
      %v1822 = vpop.f32.mrf.mxu0
      %v1823 = vadd.f32 0.0, %v1822
      %v1824 = vpop.f32.mrf.mxu0
      %v1825 = vadd.f32 0.0, %v1824
      %1826 = vmatprep.mubr.f32.mxu0 0.0
      %1827 = vmatmul.mubr.f32.gmra.mxu0 %v1655
      %v1828 = vpop.f32.mrf.mxu0
      %v1829 = vadd.f32 0.0, %v1828
      %v1830 = vpop.f32.mrf.mxu0
      %v1831 = vadd.f32 0.0, %v1830
      %1832 = vmatprep.mubr.f32.mxu0 0.0
      %1833 = vmatmul.mubr.f32.gmra.mxu0 %v1658
      %v1834 = vpop.f32.mrf.mxu0
      %v1835 = vadd.f32 0.0, %v1834
      %v1836 = vpop.f32.mrf.mxu0
      %v1837 = vadd.f32 0.0, %v1836
      %1838 = vmatprep.mubr.f32.mxu0 0.0
      %1839 = vmatmul.mubr.f32.gmra.mxu0 %v1661
      %v1840 = vpop.f32.mrf.mxu0
      %v1841 = vadd.f32 0.0, %v1840
      %v1842 = vpop.f32.mrf.mxu0
      %v1843 = vadd.f32 0.0, %v1842
      %1844 = vmatprep.mubr.f32.mxu0 0.0
      %1845 = vmatmul.mubr.f32.gmra.mxu0 %v1664
      %v1846 = vpop.f32.mrf.mxu0
      %v1847 = vadd.f32 0.0, %v1846
      %v1848 = vpop.f32.mrf.mxu0
      %v1849 = vadd.f32 0.0, %v1848
      %1850 = vmatprep.mubr.f32.mxu0 0.0
      %1851 = vmatmul.mubr.f32.gmra.mxu0 %v1667
      %v1852 = vpop.f32.mrf.mxu0
      %v1853 = vadd.f32 0.0, %v1852
      %v1854 = vpop.f32.mrf.mxu0
      %v1855 = vadd.f32 0.0, %v1854
      %1856 = vmatprep.mubr.f32.mxu0 0.0
      %1857 = vmatmul.mubr.f32.gmra.mxu0 %v1670
      %v1858 = vpop.f32.mrf.mxu0
      %v1859 = vadd.f32 0.0, %v1858
      %v1860 = vpop.f32.mrf.mxu0
      %v1861 = vadd.f32 0.0, %v1860
      %1862 = vmatprep.mubr.f32.mxu0 0.0
      %1863 = vmatmul.mubr.f32.gmra.mxu0 %v1673
      %v1864 = vpop.f32.mrf.mxu0
      %v1865 = vadd.f32 0.0, %v1864
      %v1866 = vpop.f32.mrf.mxu0
      %v1867 = vadd.f32 0.0, %v1866
      %1868 = vmatprep.mubr.f32.mxu0 0.0
      %1869 = vmatmul.mubr.f32.gmra.mxu0 %v1676
      %v1870 = vpop.f32.mrf.mxu0
      %v1871 = vadd.f32 0.0, %v1870
      %v1872 = vpop.f32.mrf.mxu0
      %v1873 = vadd.f32 0.0, %v1872
      %1874 = vmatprep.mubr.f32.mxu0 0.0
      %1875 = vmatmul.mubr.f32.gmra.mxu0 %v1679
      %v1876 = vpop.f32.mrf.mxu0
      %v1877 = vadd.f32 0.0, %v1876
      %v1878 = vpop.f32.mrf.mxu0
      %v1879 = vadd.f32 0.0, %v1878
      %1880 = vmatprep.mubr.f32.mxu0 0.0
      %1881 = vmatmul.mubr.f32.gmra.mxu0 %v1682
      %v1882 = vpop.f32.mrf.mxu0
      %v1883 = vadd.f32 0.0, %v1882
      %v1884 = vpop.f32.mrf.mxu0
      %v1885 = vadd.f32 0.0, %v1884
      %1886 = vmatprep.mubr.f32.mxu0 0.0
      %1887 = vmatmul.mubr.f32.gmra.mxu0 %v1685
      %v1888 = vpop.f32.mrf.mxu0
      %v1889 = vadd.f32 0.0, %v1888
      %v1890 = vpop.f32.mrf.mxu0
      %v1891 = vadd.f32 0.0, %v1890
      %1892 = vmatprep.mubr.f32.mxu0 0.0
      %1893 = vmatmul.mubr.f32.gmra.mxu0 %v1688
      %v1894 = vpop.f32.mrf.mxu0
      %v1895 = vadd.f32 0.0, %v1894
      %v1896 = vpop.f32.mrf.mxu0
      %v1897 = vadd.f32 0.0, %v1896
      %1898 = vmatprep.mubr.f32.mxu0 0.0
      %1899 = vmatmul.mubr.f32.gmra.mxu0 %v1691
      %v1900 = vpop.f32.mrf.mxu0
      %v1901 = vadd.f32 0.0, %v1900
      %v1902 = vpop.f32.mrf.mxu0
      %v1903 = vadd.f32 0.0, %v1902
      %1904 = vmatprep.mubr.f32.mxu0 0.0
      %1905 = vmatmul.mubr.f32.gmra.mxu0 %v1694
      %v1906 = vpop.f32.mrf.mxu0
      %v1907 = vadd.f32 0.0, %v1906
      %v1908 = vpop.f32.mrf.mxu0
      %v1909 = vadd.f32 0.0, %v1908
      %1910 = vmatprep.mubr.f32.mxu0 0.0
      %1911 = vmatmul.mubr.f32.gmra.mxu0 %v1697
      %v1912 = vpop.f32.mrf.mxu0
      %v1913 = vadd.f32 0.0, %v1912
      %v1914 = vpop.f32.mrf.mxu0
      %v1915 = vadd.f32 0.0, %v1914
      %1916 = vmatprep.mubr.f32.mxu0 0.0
      %1917 = vmatmul.mubr.f32.gmra.mxu0 %v1700
      %v1918 = vpop.f32.mrf.mxu0
      %v1919 = vadd.f32 0.0, %v1918
      %v1920 = vpop.f32.mrf.mxu0
      %v1921 = vadd.f32 0.0, %v1920
      %1922 = vmatprep.mubr.f32.mxu0 0.0
      %1923 = vmatmul.mubr.f32.gmra.mxu0 %v1703
      %v1924 = vpop.f32.mrf.mxu0
      %v1925 = vadd.f32 0.0, %v1924
      %v1926 = vpop.f32.mrf.mxu0
      %v1927 = vadd.f32 0.0, %v1926
      %1928 = vmatprep.mubr.f32.mxu0 0.0
      %1929 = vmatmul.mubr.f32.gmra.mxu0 %v1706
      %v1930 = vpop.f32.mrf.mxu0
      %v1931 = vadd.f32 0.0, %v1930
      %v1932 = vpop.f32.mrf.mxu0
      %v1933 = vadd.f32 0.0, %v1932
      %1934 = vmatprep.mubr.f32.mxu0 0.0
      %1935 = vmatmul.mubr.f32.gmra.mxu0 %v1709
      %v1936 = vpop.f32.mrf.mxu0
      %v1937 = vadd.f32 0.0, %v1936
      %v1938 = vpop.f32.mrf.mxu0
      %v1939 = vadd.f32 0.0, %v1938
      %1940 = vmatprep.mubr.f32.mxu0 0.0
      %1941 = vmatmul.mubr.f32.gmra.mxu0 %v1712
      %v1942 = vpop.f32.mrf.mxu0
      %v1943 = vadd.f32 0.0, %v1942
      %v1944 = vpop.f32.mrf.mxu0
      %v1945 = vadd.f32 0.0, %v1944
      %1946 = vmatprep.mubr.f32.mxu0 0.0
      %1947 = vmatmul.mubr.f32.gmra.mxu0 %v1715
      %v1948 = vpop.f32.mrf.mxu0
      %v1949 = vadd.f32 0.0, %v1948
      %v1950 = vpop.f32.mrf.mxu0
      %v1951 = vadd.f32 0.0, %v1950
      %1952 = vmatprep.mubr.f32.mxu0 0.0
      %1953 = vmatmul.mubr.f32.gmra.mxu0 %v1718
      %v1954 = vpop.f32.mrf.mxu0
      %v1955 = vadd.f32 0.0, %v1954
      %v1956 = vpop.f32.mrf.mxu0
      %v1957 = vadd.f32 0.0, %v1956
      %1958 = vmatprep.mubr.f32.mxu0 0.0
      %1959 = vmatmul.mubr.f32.gmra.mxu0 %v1721
      %v1960 = vpop.f32.mrf.mxu0
      %v1961 = vadd.f32 0.0, %v1960
      %v1962 = vpop.f32.mrf.mxu0
      %v1963 = vadd.f32 0.0, %v1962
      %1964 = vmatprep.mubr.f32.mxu0 0.0
      %1965 = vmatmul.mubr.f32.gmra.mxu0 %v1724
      %v1966 = vpop.f32.mrf.mxu0
      %v1967 = vadd.f32 0.0, %v1966
      %v1968 = vpop.f32.mrf.mxu0
      %v1969 = vadd.f32 0.0, %v1968
      %1970 = vmatprep.mubr.f32.mxu0 0.0
      %1971 = vmatmul.mubr.f32.gmra.mxu0 %v1727
      %v1972 = vpop.f32.mrf.mxu0
      %v1973 = vadd.f32 0.0, %v1972
      %v1974 = vpop.f32.mrf.mxu0
      %v1975 = vadd.f32 0.0, %v1974
      %1976 = vmatprep.mubr.f32.mxu0 0.0
      %1977 = vmatmul.mubr.f32.gmra.mxu0 %v1730
      %v1978 = vpop.f32.mrf.mxu0
      %v1979 = vadd.f32 0.0, %v1978
      %v1980 = vpop.f32.mrf.mxu0
      %v1981 = vadd.f32 0.0, %v1980
      %1982 = vmatprep.mubr.f32.mxu0 0.0
      %1983 = vmatmul.mubr.f32.gmra.mxu0 %v1733
      %v1984 = vpop.f32.mrf.mxu0
      %v1985 = vadd.f32 0.0, %v1984
      %v1986 = vpop.f32.mrf.mxu0
      %v1987 = vadd.f32 0.0, %v1986
      %1988 = vmatprep.mubr.f32.mxu0 0.0
      %1989 = vmatmul.mubr.f32.gmra.mxu0 %v1736
      %v1990 = vpop.f32.mrf.mxu0
      %v1991 = vadd.f32 0.0, %v1990
      %v1992 = vpop.f32.mrf.mxu0
      %v1993 = vadd.f32 0.0, %v1992
      %1994 = vdwg.mxu0
      %v1995 = vld [vmem:[%s14] sm:$0xff]
      %v1996 = vld [vmem:[%s14 + $0x8] sm:$0xff]
      %v1997 = vld [vmem:[%s14 + $0x10] sm:$0xff]
      %v1998 = vld [vmem:[%s14 + $0x18] sm:$0xff]
      %v1999 = vld [vmem:[%s14 + $0x20] sm:$0xff]
      %v2000 = vld [vmem:[%s14 + $0x28] sm:$0xff]
      %v2001 = vld [vmem:[%s14 + $0x30] sm:$0xff]
      %v2002 = vld [vmem:[%s14 + $0x38] sm:$0xff]
      %v2003 = vld [vmem:[%s14 + $0x40] sm:$0xff]
      %v2004 = vld [vmem:[%s14 + $0x48] sm:$0xff]
      %v2005 = vld [vmem:[%s14 + $0x50] sm:$0xff]
      %v2006 = vld [vmem:[%s14 + $0x58] sm:$0xff]
      %v2007 = vld [vmem:[%s14 + $0x60] sm:$0xff]
      %v2008 = vld [vmem:[%s14 + $0x68] sm:$0xff]
      %v2009 = vld [vmem:[%s14 + $0x70] sm:$0xff]
      %v2010 = vld [vmem:[%s14 + $0x78] sm:$0xff]
      %v2011 = vld [vmem:[%s14 + $0x80] sm:$0xff]
      %v2012 = vld [vmem:[%s14 + $0x88] sm:$0xff]
      %v2013 = vld [vmem:[%s14 + $0x90] sm:$0xff]
      %v2014 = vld [vmem:[%s14 + $0x98] sm:$0xff]
      %v2015 = vld [vmem:[%s14 + $0xa0] sm:$0xff]
      %v2016 = vld [vmem:[%s14 + $0xa8] sm:$0xff]
      %v2017 = vld [vmem:[%s14 + $0xb0] sm:$0xff]
      %v2018 = vld [vmem:[%s14 + $0xb8] sm:$0xff]
      %v2019 = vld [vmem:[%s14 + $0xc0] sm:$0xff]
      %v2020 = vld [vmem:[%s14 + $0xc8] sm:$0xff]
      %v2021 = vld [vmem:[%s14 + $0xd0] sm:$0xff]
      %v2022 = vld [vmem:[%s14 + $0xd8] sm:$0xff]
      %v2023 = vld [vmem:[%s14 + $0xe0] sm:$0xff]
      %v2024 = vld [vmem:[%s14 + $0xe8] sm:$0xff]
      %v2025 = vld [vmem:[%s14 + $0xf0] sm:$0xff]
      %v2026 = vld [vmem:[%s14 + $0xf8] sm:$0xff]
      %v2027 = vld [vmem:[%s14 + $0x100] sm:$0xff]
      %v2028 = vld [vmem:[%s14 + $0x108] sm:$0xff]
      %v2029 = vld [vmem:[%s14 + $0x110] sm:$0xff]
      %v2030 = vld [vmem:[%s14 + $0x118] sm:$0xff]
      %v2031 = vld [vmem:[%s14 + $0x120] sm:$0xff]
      %v2032 = vld [vmem:[%s14 + $0x128] sm:$0xff]
      %v2033 = vld [vmem:[%s14 + $0x130] sm:$0xff]
      %v2034 = vld [vmem:[%s14 + $0x138] sm:$0xff]
      %v2035 = vld [vmem:[%s14 + $0x140] sm:$0xff]
      %v2036 = vld [vmem:[%s14 + $0x148] sm:$0xff]
      %v2037 = vld [vmem:[%s14 + $0x150] sm:$0xff]
      %v2038 = vld [vmem:[%s14 + $0x158] sm:$0xff]
      %v2039 = vld [vmem:[%s14 + $0x160] sm:$0xff]
      %v2040 = vld [vmem:[%s14 + $0x168] sm:$0xff]
      %v2041 = vld [vmem:[%s14 + $0x170] sm:$0xff]
      %v2042 = vld [vmem:[%s14 + $0x178] sm:$0xff]
      %v2043 = vld [vmem:[%s14 + $0x180] sm:$0xff]
      %v2044 = vld [vmem:[%s14 + $0x188] sm:$0xff]
      %v2045 = vld [vmem:[%s14 + $0x190] sm:$0xff]
      %v2046 = vld [vmem:[%s14 + $0x198] sm:$0xff]
      %v2047 = vld [vmem:[%s14 + $0x1a0] sm:$0xff]
      %v2048 = vld [vmem:[%s14 + $0x1a8] sm:$0xff]
      %v2049 = vld [vmem:[%s14 + $0x1b0] sm:$0xff]
      %v2050 = vld [vmem:[%s14 + $0x1b8] sm:$0xff]
      %v2051 = vld [vmem:[%s14 + $0x1c0] sm:$0xff]
      %v2052 = vld [vmem:[%s14 + $0x1c8] sm:$0xff]
      %v2053 = vld [vmem:[%s14 + $0x1d0] sm:$0xff]
      %v2054 = vld [vmem:[%s14 + $0x1d8] sm:$0xff]
      %v2055 = vld [vmem:[%s14 + $0x1e0] sm:$0xff]
      %v2056 = vld [vmem:[%s14 + $0x1e8] sm:$0xff]
      %v2057 = vld [vmem:[%s14 + $0x1f0] sm:$0xff]
      %v2058 = vld [vmem:[%s14 + $0x1f8] sm:$0xff]
      %v2059 = vmul.f32 %v1805, %v1995
      %v2060 = vmul.f32 %v1807, %v1996
      %v2061 = vmul.f32 %v1811, %v1997
      %v2062 = vmul.f32 %v1813, %v1998
      %v2063 = vmul.f32 %v1817, %v1999
      %v2064 = vmul.f32 %v1819, %v2000
      %v2065 = vmul.f32 %v1823, %v2001
      %v2066 = vmul.f32 %v1825, %v2002
      %v2067 = vmul.f32 %v1829, %v2003
      %v2068 = vmul.f32 %v1831, %v2004
      %v2069 = vmul.f32 %v1835, %v2005
      %v2070 = vmul.f32 %v1837, %v2006
      %v2071 = vmul.f32 %v1841, %v2007
      %v2072 = vmul.f32 %v1843, %v2008
      %v2073 = vmul.f32 %v1847, %v2009
      %v2074 = vmul.f32 %v1849, %v2010
      %v2075 = vmul.f32 %v1853, %v2011
      %v2076 = vmul.f32 %v1855, %v2012
      %v2077 = vmul.f32 %v1859, %v2013
      %v2078 = vmul.f32 %v1861, %v2014
      %v2079 = vmul.f32 %v1865, %v2015
      %v2080 = vmul.f32 %v1867, %v2016
      %v2081 = vmul.f32 %v1871, %v2017
      %v2082 = vmul.f32 %v1873, %v2018
      %v2083 = vmul.f32 %v1877, %v2019
      %v2084 = vmul.f32 %v1879, %v2020
      %v2085 = vmul.f32 %v1883, %v2021
      %v2086 = vmul.f32 %v1885, %v2022
      %v2087 = vmul.f32 %v1889, %v2023
      %v2088 = vmul.f32 %v1891, %v2024
      %v2089 = vmul.f32 %v1895, %v2025
      %v2090 = vmul.f32 %v1897, %v2026
      %v2091 = vmul.f32 %v1901, %v2027
      %v2092 = vmul.f32 %v1903, %v2028
      %v2093 = vmul.f32 %v1907, %v2029
      %v2094 = vmul.f32 %v1909, %v2030
      %v2095 = vmul.f32 %v1913, %v2031
      %v2096 = vmul.f32 %v1915, %v2032
      %v2097 = vmul.f32 %v1919, %v2033
      %v2098 = vmul.f32 %v1921, %v2034
      %v2099 = vmul.f32 %v1925, %v2035
      %v2100 = vmul.f32 %v1927, %v2036
      %v2101 = vmul.f32 %v1931, %v2037
      %v2102 = vmul.f32 %v1933, %v2038
      %v2103 = vmul.f32 %v1937, %v2039
      %v2104 = vmul.f32 %v1939, %v2040
      %v2105 = vmul.f32 %v1943, %v2041
      %v2106 = vmul.f32 %v1945, %v2042
      %v2107 = vmul.f32 %v1949, %v2043
      %v2108 = vmul.f32 %v1951, %v2044
      %v2109 = vmul.f32 %v1955, %v2045
      %v2110 = vmul.f32 %v1957, %v2046
      %v2111 = vmul.f32 %v1961, %v2047
      %v2112 = vmul.f32 %v1963, %v2048
      %v2113 = vmul.f32 %v1967, %v2049
      %v2114 = vmul.f32 %v1969, %v2050
      %v2115 = vmul.f32 %v1973, %v2051
      %v2116 = vmul.f32 %v1975, %v2052
      %v2117 = vmul.f32 %v1979, %v2053
      %v2118 = vmul.f32 %v1981, %v2054
      %v2119 = vmul.f32 %v1985, %v2055
      %v2120 = vmul.f32 %v1987, %v2056
      %v2121 = vmul.f32 %v1991, %v2057
      %v2122 = vmul.f32 %v1993, %v2058
      %2123 = vst [vmem:[#allocation3] sm:$0xff] %v2059
      %2124 = vst [vmem:[#allocation3 + $0x8] sm:$0xff] %v2060
      %2125 = vst [vmem:[#allocation3 + $0x10] sm:$0xff] %v2061
      %2126 = vst [vmem:[#allocation3 + $0x18] sm:$0xff] %v2062
      %2127 = vst [vmem:[#allocation3 + $0x20] sm:$0xff] %v2063
      %2128 = vst [vmem:[#allocation3 + $0x28] sm:$0xff] %v2064
      %2129 = vst [vmem:[#allocation3 + $0x30] sm:$0xff] %v2065
      %2130 = vst [vmem:[#allocation3 + $0x38] sm:$0xff] %v2066
      %2131 = vst [vmem:[#allocation3 + $0x40] sm:$0xff] %v2067
      %2132 = vst [vmem:[#allocation3 + $0x48] sm:$0xff] %v2068
      %2133 = vst [vmem:[#allocation3 + $0x50] sm:$0xff] %v2069
      %2134 = vst [vmem:[#allocation3 + $0x58] sm:$0xff] %v2070
      %2135 = vst [vmem:[#allocation3 + $0x60] sm:$0xff] %v2071
      %2136 = vst [vmem:[#allocation3 + $0x68] sm:$0xff] %v2072
      %2137 = vst [vmem:[#allocation3 + $0x70] sm:$0xff] %v2073
      %2138 = vst [vmem:[#allocation3 + $0x78] sm:$0xff] %v2074
      %2139 = vst [vmem:[#allocation3 + $0x80] sm:$0xff] %v2075
      %2140 = vst [vmem:[#allocation3 + $0x88] sm:$0xff] %v2076
      %2141 = vst [vmem:[#allocation3 + $0x90] sm:$0xff] %v2077
      %2142 = vst [vmem:[#allocation3 + $0x98] sm:$0xff] %v2078
      %2143 = vst [vmem:[#allocation3 + $0xa0] sm:$0xff] %v2079
      %2144 = vst [vmem:[#allocation3 + $0xa8] sm:$0xff] %v2080
      %2145 = vst [vmem:[#allocation3 + $0xb0] sm:$0xff] %v2081
      %2146 = vst [vmem:[#allocation3 + $0xb8] sm:$0xff] %v2082
      %2147 = vst [vmem:[#allocation3 + $0xc0] sm:$0xff] %v2083
      %2148 = vst [vmem:[#allocation3 + $0xc8] sm:$0xff] %v2084
      %2149 = vst [vmem:[#allocation3 + $0xd0] sm:$0xff] %v2085
      %2150 = vst [vmem:[#allocation3 + $0xd8] sm:$0xff] %v2086
      %2151 = vst [vmem:[#allocation3 + $0xe0] sm:$0xff] %v2087
      %2152 = vst [vmem:[#allocation3 + $0xe8] sm:$0xff] %v2088
      %2153 = vst [vmem:[#allocation3 + $0xf0] sm:$0xff] %v2089
      %2154 = vst [vmem:[#allocation3 + $0xf8] sm:$0xff] %v2090
      %2155 = vst [vmem:[#allocation3 + $0x100] sm:$0xff] %v2091
      %2156 = vst [vmem:[#allocation3 + $0x108] sm:$0xff] %v2092
      %2157 = vst [vmem:[#allocation3 + $0x110] sm:$0xff] %v2093
      %2158 = vst [vmem:[#allocation3 + $0x118] sm:$0xff] %v2094
      %2159 = vst [vmem:[#allocation3 + $0x120] sm:$0xff] %v2095
      %2160 = vst [vmem:[#allocation3 + $0x128] sm:$0xff] %v2096
      %2161 = vst [vmem:[#allocation3 + $0x130] sm:$0xff] %v2097
      %2162 = vst [vmem:[#allocation3 + $0x138] sm:$0xff] %v2098
      %2163 = vst [vmem:[#allocation3 + $0x140] sm:$0xff] %v2099
      %2164 = vst [vmem:[#allocation3 + $0x148] sm:$0xff] %v2100
      %2165 = vst [vmem:[#allocation3 + $0x150] sm:$0xff] %v2101
      %2166 = vst [vmem:[#allocation3 + $0x158] sm:$0xff] %v2102
      %2167 = vst [vmem:[#allocation3 + $0x160] sm:$0xff] %v2103
      %2168 = vst [vmem:[#allocation3 + $0x168] sm:$0xff] %v2104
      %2169 = vst [vmem:[#allocation3 + $0x170] sm:$0xff] %v2105
      %2170 = vst [vmem:[#allocation3 + $0x178] sm:$0xff] %v2106
      %2171 = vst [vmem:[#allocation3 + $0x180] sm:$0xff] %v2107
      %2172 = vst [vmem:[#allocation3 + $0x188] sm:$0xff] %v2108
      %2173 = vst [vmem:[#allocation3 + $0x190] sm:$0xff] %v2109
      %2174 = vst [vmem:[#allocation3 + $0x198] sm:$0xff] %v2110
      %2175 = vst [vmem:[#allocation3 + $0x1a0] sm:$0xff] %v2111
      %2176 = vst [vmem:[#allocation3 + $0x1a8] sm:$0xff] %v2112
      %2177 = vst [vmem:[#allocation3 + $0x1b0] sm:$0xff] %v2113
      %2178 = vst [vmem:[#allocation3 + $0x1b8] sm:$0xff] %v2114
      %2179 = vst [vmem:[#allocation3 + $0x1c0] sm:$0xff] %v2115
      %2180 = vst [vmem:[#allocation3 + $0x1c8] sm:$0xff] %v2116
      %2181 = vst [vmem:[#allocation3 + $0x1d0] sm:$0xff] %v2117
      %2182 = vst [vmem:[#allocation3 + $0x1d8] sm:$0xff] %v2118
      %2183 = vst [vmem:[#allocation3 + $0x1e0] sm:$0xff] %v2119
      %2184 = vst [vmem:[#allocation3 + $0x1e8] sm:$0xff] %v2120
      %2185 = vst [vmem:[#allocation3 + $0x1f0] sm:$0xff] %v2121
      %2186 = vst [vmem:[#allocation3 + $0x1f8] sm:$0xff] %v2122
      %v2187 = vadd.f32 %v788, %v812
      %v2188 = vadd.f32 %v790, %v814
      %v2189 = vadd.f32 %v794, %v818
      %v2190 = vadd.f32 %v796, %v820
      %v2191 = vadd.f32 %v800, %v824
      %v2192 = vadd.f32 %v802, %v826
      %v2193 = vadd.f32 %v806, %v830
      %v2194 = vadd.f32 %v808, %v832
      %v2195 = vadd.f32 %v2187, %v836
      %v2196 = vadd.f32 %v2188, %v838
      %v2197 = vadd.f32 %v2189, %v842
      %v2198 = vadd.f32 %v2190, %v844
      %v2199 = vadd.f32 %v2191, %v848
      %v2200 = vadd.f32 %v2192, %v850
      %v2201 = vadd.f32 %v2193, %v854
      %v2202 = vadd.f32 %v2194, %v856
      %v2203 = vld [vmem:[#allocation2] sm:$0xff]
      %v2204 = vld [vmem:[#allocation2 + $0x8] sm:$0xff]
      %v2205 = vld [vmem:[#allocation2 + $0x10] sm:$0xff]
      %v2206 = vld [vmem:[#allocation2 + $0x18] sm:$0xff]
      %v2207 = vld [vmem:[#allocation2 + $0x20] sm:$0xff]
      %v2208 = vld [vmem:[#allocation2 + $0x28] sm:$0xff]
      %v2209 = vld [vmem:[#allocation2 + $0x30] sm:$0xff]
      %v2210 = vld [vmem:[#allocation2 + $0x38] sm:$0xff]
      %v2211 = vld [vmem:[#allocation2 + $0x40] sm:$0xff]
      %v2212 = vld [vmem:[#allocation2 + $0x48] sm:$0xff]
      %v2213 = vld [vmem:[#allocation2 + $0x50] sm:$0xff]
      %v2214 = vld [vmem:[#allocation2 + $0x58] sm:$0xff]
      %v2215 = vld [vmem:[#allocation2 + $0x60] sm:$0xff]
      %v2216 = vld [vmem:[#allocation2 + $0x68] sm:$0xff]
      %v2217 = vld [vmem:[#allocation2 + $0x70] sm:$0xff]
      %v2218 = vld [vmem:[#allocation2 + $0x78] sm:$0xff]
      %v2219 = vld [vmem:[#allocation2 + $0x80] sm:$0xff]
      %v2220 = vld [vmem:[#allocation2 + $0x88] sm:$0xff]
      %v2221 = vld [vmem:[#allocation2 + $0x90] sm:$0xff]
      %v2222 = vld [vmem:[#allocation2 + $0x98] sm:$0xff]
      %v2223 = vld [vmem:[#allocation2 + $0xa0] sm:$0xff]
      %v2224 = vld [vmem:[#allocation2 + $0xa8] sm:$0xff]
      %v2225 = vld [vmem:[#allocation2 + $0xb0] sm:$0xff]
      %v2226 = vld [vmem:[#allocation2 + $0xb8] sm:$0xff]
      %v2227 = vld [vmem:[#allocation2 + $0xc0] sm:$0xff]
      %v2228 = vld [vmem:[#allocation2 + $0xc8] sm:$0xff]
      %v2229 = vld [vmem:[#allocation2 + $0xd0] sm:$0xff]
      %v2230 = vld [vmem:[#allocation2 + $0xd8] sm:$0xff]
      %v2231 = vld [vmem:[#allocation2 + $0xe0] sm:$0xff]
      %v2232 = vld [vmem:[#allocation2 + $0xe8] sm:$0xff]
      %v2233 = vld [vmem:[#allocation2 + $0xf0] sm:$0xff]
      %v2234 = vld [vmem:[#allocation2 + $0xf8] sm:$0xff]
      %v2235 = vld [vmem:[#allocation2 + $0x100] sm:$0xff]
      %v2236 = vld [vmem:[#allocation2 + $0x108] sm:$0xff]
      %v2237 = vld [vmem:[#allocation2 + $0x110] sm:$0xff]
      %v2238 = vld [vmem:[#allocation2 + $0x118] sm:$0xff]
      %v2239 = vld [vmem:[#allocation2 + $0x120] sm:$0xff]
      %v2240 = vld [vmem:[#allocation2 + $0x128] sm:$0xff]
      %v2241 = vld [vmem:[#allocation2 + $0x130] sm:$0xff]
      %v2242 = vld [vmem:[#allocation2 + $0x138] sm:$0xff]
      %v2243 = vld [vmem:[#allocation2 + $0x140] sm:$0xff]
      %v2244 = vld [vmem:[#allocation2 + $0x148] sm:$0xff]
      %v2245 = vld [vmem:[#allocation2 + $0x150] sm:$0xff]
      %v2246 = vld [vmem:[#allocation2 + $0x158] sm:$0xff]
      %v2247 = vld [vmem:[#allocation2 + $0x160] sm:$0xff]
      %v2248 = vld [vmem:[#allocation2 + $0x168] sm:$0xff]
      %v2249 = vld [vmem:[#allocation2 + $0x170] sm:$0xff]
      %v2250 = vld [vmem:[#allocation2 + $0x178] sm:$0xff]
      %v2251 = vld [vmem:[#allocation2 + $0x180] sm:$0xff]
      %v2252 = vld [vmem:[#allocation2 + $0x188] sm:$0xff]
      %v2253 = vld [vmem:[#allocation2 + $0x190] sm:$0xff]
      %v2254 = vld [vmem:[#allocation2 + $0x198] sm:$0xff]
      %v2255 = vld [vmem:[#allocation2 + $0x1a0] sm:$0xff]
      %v2256 = vld [vmem:[#allocation2 + $0x1a8] sm:$0xff]
      %v2257 = vld [vmem:[#allocation2 + $0x1b0] sm:$0xff]
      %v2258 = vld [vmem:[#allocation2 + $0x1b8] sm:$0xff]
      %v2259 = vld [vmem:[#allocation2 + $0x1c0] sm:$0xff]
      %v2260 = vld [vmem:[#allocation2 + $0x1c8] sm:$0xff]
      %v2261 = vld [vmem:[#allocation2 + $0x1d0] sm:$0xff]
      %v2262 = vld [vmem:[#allocation2 + $0x1d8] sm:$0xff]
      %v2263 = vld [vmem:[#allocation2 + $0x1e0] sm:$0xff]
      %v2264 = vld [vmem:[#allocation2 + $0x1e8] sm:$0xff]
      %v2265 = vld [vmem:[#allocation2 + $0x1f0] sm:$0xff]
      %v2266 = vld [vmem:[#allocation2 + $0x1f8] sm:$0xff]
      %2267 = vmatprep.subr.mxu0 %v2234
      %2268 = vmatpush1.msra.mxu0 %v2233
      %2269 = vmatprep.subr.mxu0 %v2232
      %2270 = vmatpush1.msra.mxu0 %v2231
      %2271 = vmatprep.subr.mxu0 %v2230
      %2272 = vmatpush1.msra.mxu0 %v2229
      %2273 = vmatprep.subr.mxu0 %v2228
      %2274 = vmatpush1.msra.mxu0 %v2227
      %2275 = vmatprep.subr.mxu0 %v2226
      %2276 = vmatpush1.msra.mxu0 %v2225
      %2277 = vmatprep.subr.mxu0 %v2224
      %2278 = vmatpush1.msra.mxu0 %v2223
      %2279 = vmatprep.subr.mxu0 %v2222
      %2280 = vmatpush1.msra.mxu0 %v2221
      %2281 = vmatprep.subr.mxu0 %v2220
      %2282 = vmatpush1.msra.mxu0 %v2219
      %2283 = vmatprep.subr.mxu0 %v2218
      %2284 = vmatpush1.msra.mxu0 %v2217
      %2285 = vmatprep.subr.mxu0 %v2216
      %2286 = vmatpush1.msra.mxu0 %v2215
      %2287 = vmatprep.subr.mxu0 %v2214
      %2288 = vmatpush1.msra.mxu0 %v2213
      %2289 = vmatprep.subr.mxu0 %v2212
      %2290 = vmatpush1.msra.mxu0 %v2211
      %2291 = vmatprep.subr.mxu0 %v2210
      %2292 = vmatpush1.msra.mxu0 %v2209
      %2293 = vmatprep.subr.mxu0 %v2208
      %2294 = vmatpush1.msra.mxu0 %v2207
      %2295 = vmatprep.subr.mxu0 %v2206
      %2296 = vmatpush1.msra.mxu0 %v2205
      %2297 = vmatprep.subr.mxu0 %v2204
      %2298 = vmatpush1.msra.mxu0 %v2203
      %2299 = vmatprep.subr.mxu0 %v2266
      %2300 = vmatpush2.msra.mxu0 %v2265
      %2301 = vmatprep.subr.mxu0 %v2264
      %2302 = vmatpush2.msra.mxu0 %v2263
      %2303 = vmatprep.subr.mxu0 %v2262
      %2304 = vmatpush2.msra.mxu0 %v2261
      %2305 = vmatprep.subr.mxu0 %v2260
      %2306 = vmatpush2.msra.mxu0 %v2259
      %2307 = vmatprep.subr.mxu0 %v2258
      %2308 = vmatpush2.msra.mxu0 %v2257
      %2309 = vmatprep.subr.mxu0 %v2256
      %2310 = vmatpush2.msra.mxu0 %v2255
      %2311 = vmatprep.subr.mxu0 %v2254
      %2312 = vmatpush2.msra.mxu0 %v2253
      %2313 = vmatprep.subr.mxu0 %v2252
      %2314 = vmatpush2.msra.mxu0 %v2251
      %2315 = vmatprep.subr.mxu0 %v2250
      %2316 = vmatpush2.msra.mxu0 %v2249
      %2317 = vmatprep.subr.mxu0 %v2248
      %2318 = vmatpush2.msra.mxu0 %v2247
      %2319 = vmatprep.subr.mxu0 %v2246
      %2320 = vmatpush2.msra.mxu0 %v2245
      %2321 = vmatprep.subr.mxu0 %v2244
      %2322 = vmatpush2.msra.mxu0 %v2243
      %2323 = vmatprep.subr.mxu0 %v2242
      %2324 = vmatpush2.msra.mxu0 %v2241
      %2325 = vmatprep.subr.mxu0 %v2240
      %2326 = vmatpush2.msra.mxu0 %v2239
      %2327 = vmatprep.subr.mxu0 %v2238
      %2328 = vmatpush2.msra.mxu0 %v2237
      %2329 = vmatprep.subr.mxu0 %v2236
      %2330 = vmatpush2.msra.mxu0 %v2235
      %2331 = vmatprep.mubr.f32.mxu0 %v790
      %2332 = vmatmul.mubr.f32.gmra.mxu0 %v788
      %v2333 = vpop.f32.mrf.mxu0
      %v2334 = vadd.f32 0.0, %v2333
      %v2335 = vpop.f32.mrf.mxu0
      %v2336 = vadd.f32 0.0, %v2335
      %2337 = vmatprep.mubr.f32.mxu0 %v796
      %2338 = vmatmul.mubr.f32.gmra.mxu0 %v794
      %v2339 = vpop.f32.mrf.mxu0
      %v2340 = vadd.f32 0.0, %v2339
      %v2341 = vpop.f32.mrf.mxu0
      %v2342 = vadd.f32 0.0, %v2341
      %2343 = vmatprep.mubr.f32.mxu0 %v802
      %2344 = vmatmul.mubr.f32.gmra.mxu0 %v800
      %v2345 = vpop.f32.mrf.mxu0
      %v2346 = vadd.f32 0.0, %v2345
      %v2347 = vpop.f32.mrf.mxu0
      %v2348 = vadd.f32 0.0, %v2347
      %2349 = vmatprep.mubr.f32.mxu0 %v808
      %2350 = vmatmul.mubr.f32.gmra.mxu0 %v806
      %v2351 = vpop.f32.mrf.mxu0
      %v2352 = vadd.f32 0.0, %v2351
      %v2353 = vpop.f32.mrf.mxu0
      %v2354 = vadd.f32 0.0, %v2353
      %2355 = vdwg.mxu0
      %v2356 = vadd.f32 %v2195, %v2334
      %v2357 = vadd.f32 %v2196, %v2336
      %v2358 = vadd.f32 %v2197, %v2340
      %v2359 = vadd.f32 %v2198, %v2342
      %v2360 = vadd.f32 %v2199, %v2346
      %v2361 = vadd.f32 %v2200, %v2348
      %v2362 = vadd.f32 %v2201, %v2352
      %v2363 = vadd.f32 %v2202, %v2354
      %v2364 = vld [vmem:[#allocation3] sm:$0xff]
      %v2365 = vld [vmem:[#allocation3 + $0x8] sm:$0xff]
      %v2366 = vld [vmem:[#allocation3 + $0x10] sm:$0xff]
      %v2367 = vld [vmem:[#allocation3 + $0x18] sm:$0xff]
      %v2368 = vld [vmem:[#allocation3 + $0x20] sm:$0xff]
      %v2369 = vld [vmem:[#allocation3 + $0x28] sm:$0xff]
      %v2370 = vld [vmem:[#allocation3 + $0x30] sm:$0xff]
      %v2371 = vld [vmem:[#allocation3 + $0x38] sm:$0xff]
      %v2372 = vld [vmem:[#allocation3 + $0x40] sm:$0xff]
      %v2373 = vld [vmem:[#allocation3 + $0x48] sm:$0xff]
      %v2374 = vld [vmem:[#allocation3 + $0x50] sm:$0xff]
      %v2375 = vld [vmem:[#allocation3 + $0x58] sm:$0xff]
      %v2376 = vld [vmem:[#allocation3 + $0x60] sm:$0xff]
      %v2377 = vld [vmem:[#allocation3 + $0x68] sm:$0xff]
      %v2378 = vld [vmem:[#allocation3 + $0x70] sm:$0xff]
      %v2379 = vld [vmem:[#allocation3 + $0x78] sm:$0xff]
      %v2380 = vld [vmem:[#allocation3 + $0x80] sm:$0xff]
      %v2381 = vld [vmem:[#allocation3 + $0x88] sm:$0xff]
      %v2382 = vld [vmem:[#allocation3 + $0x90] sm:$0xff]
      %v2383 = vld [vmem:[#allocation3 + $0x98] sm:$0xff]
      %v2384 = vld [vmem:[#allocation3 + $0xa0] sm:$0xff]
      %v2385 = vld [vmem:[#allocation3 + $0xa8] sm:$0xff]
      %v2386 = vld [vmem:[#allocation3 + $0xb0] sm:$0xff]
      %v2387 = vld [vmem:[#allocation3 + $0xb8] sm:$0xff]
      %v2388 = vld [vmem:[#allocation3 + $0xc0] sm:$0xff]
      %v2389 = vld [vmem:[#allocation3 + $0xc8] sm:$0xff]
      %v2390 = vld [vmem:[#allocation3 + $0xd0] sm:$0xff]
      %v2391 = vld [vmem:[#allocation3 + $0xd8] sm:$0xff]
      %v2392 = vld [vmem:[#allocation3 + $0xe0] sm:$0xff]
      %v2393 = vld [vmem:[#allocation3 + $0xe8] sm:$0xff]
      %v2394 = vld [vmem:[#allocation3 + $0xf0] sm:$0xff]
      %v2395 = vld [vmem:[#allocation3 + $0xf8] sm:$0xff]
      %v2396 = vld [vmem:[#allocation3 + $0x100] sm:$0xff]
      %v2397 = vld [vmem:[#allocation3 + $0x108] sm:$0xff]
      %v2398 = vld [vmem:[#allocation3 + $0x110] sm:$0xff]
      %v2399 = vld [vmem:[#allocation3 + $0x118] sm:$0xff]
      %v2400 = vld [vmem:[#allocation3 + $0x120] sm:$0xff]
      %v2401 = vld [vmem:[#allocation3 + $0x128] sm:$0xff]
      %v2402 = vld [vmem:[#allocation3 + $0x130] sm:$0xff]
      %v2403 = vld [vmem:[#allocation3 + $0x138] sm:$0xff]
      %v2404 = vld [vmem:[#allocation3 + $0x140] sm:$0xff]
      %v2405 = vld [vmem:[#allocation3 + $0x148] sm:$0xff]
      %v2406 = vld [vmem:[#allocation3 + $0x150] sm:$0xff]
      %v2407 = vld [vmem:[#allocation3 + $0x158] sm:$0xff]
      %v2408 = vld [vmem:[#allocation3 + $0x160] sm:$0xff]
      %v2409 = vld [vmem:[#allocation3 + $0x168] sm:$0xff]
      %v2410 = vld [vmem:[#allocation3 + $0x170] sm:$0xff]
      %v2411 = vld [vmem:[#allocation3 + $0x178] sm:$0xff]
      %v2412 = vld [vmem:[#allocation3 + $0x180] sm:$0xff]
      %v2413 = vld [vmem:[#allocation3 + $0x188] sm:$0xff]
      %v2414 = vld [vmem:[#allocation3 + $0x190] sm:$0xff]
      %v2415 = vld [vmem:[#allocation3 + $0x198] sm:$0xff]
      %v2416 = vld [vmem:[#allocation3 + $0x1a0] sm:$0xff]
      %v2417 = vld [vmem:[#allocation3 + $0x1a8] sm:$0xff]
      %v2418 = vld [vmem:[#allocation3 + $0x1b0] sm:$0xff]
      %v2419 = vld [vmem:[#allocation3 + $0x1b8] sm:$0xff]
      %v2420 = vld [vmem:[#allocation3 + $0x1c0] sm:$0xff]
      %v2421 = vld [vmem:[#allocation3 + $0x1c8] sm:$0xff]
      %v2422 = vld [vmem:[#allocation3 + $0x1d0] sm:$0xff]
      %v2423 = vld [vmem:[#allocation3 + $0x1d8] sm:$0xff]
      %v2424 = vld [vmem:[#allocation3 + $0x1e0] sm:$0xff]
      %v2425 = vld [vmem:[#allocation3 + $0x1e8] sm:$0xff]
      %v2426 = vld [vmem:[#allocation3 + $0x1f0] sm:$0xff]
      %v2427 = vld [vmem:[#allocation3 + $0x1f8] sm:$0xff]
      %2428 = vmatprep.subr.mxu0 %v2395
      %2429 = vmatpush1.msra.mxu0 %v2394
      %2430 = vmatprep.subr.mxu0 %v2393
      %2431 = vmatpush1.msra.mxu0 %v2392
      %2432 = vmatprep.subr.mxu0 %v2391
      %2433 = vmatpush1.msra.mxu0 %v2390
      %2434 = vmatprep.subr.mxu0 %v2389
      %2435 = vmatpush1.msra.mxu0 %v2388
      %2436 = vmatprep.subr.mxu0 %v2387
      %2437 = vmatpush1.msra.mxu0 %v2386
      %2438 = vmatprep.subr.mxu0 %v2385
      %2439 = vmatpush1.msra.mxu0 %v2384
      %2440 = vmatprep.subr.mxu0 %v2383
      %2441 = vmatpush1.msra.mxu0 %v2382
      %2442 = vmatprep.subr.mxu0 %v2381
      %2443 = vmatpush1.msra.mxu0 %v2380
      %2444 = vmatprep.subr.mxu0 %v2379
      %2445 = vmatpush1.msra.mxu0 %v2378
      %2446 = vmatprep.subr.mxu0 %v2377
      %2447 = vmatpush1.msra.mxu0 %v2376
      %2448 = vmatprep.subr.mxu0 %v2375
      %2449 = vmatpush1.msra.mxu0 %v2374
      %2450 = vmatprep.subr.mxu0 %v2373
      %2451 = vmatpush1.msra.mxu0 %v2372
      %2452 = vmatprep.subr.mxu0 %v2371
      %2453 = vmatpush1.msra.mxu0 %v2370
      %2454 = vmatprep.subr.mxu0 %v2369
      %2455 = vmatpush1.msra.mxu0 %v2368
      %2456 = vmatprep.subr.mxu0 %v2367
      %2457 = vmatpush1.msra.mxu0 %v2366
      %2458 = vmatprep.subr.mxu0 %v2365
      %2459 = vmatpush1.msra.mxu0 %v2364
      %2460 = vmatprep.subr.mxu0 %v2427
      %2461 = vmatpush2.msra.mxu0 %v2426
      %2462 = vmatprep.subr.mxu0 %v2425
      %2463 = vmatpush2.msra.mxu0 %v2424
      %2464 = vmatprep.subr.mxu0 %v2423
      %2465 = vmatpush2.msra.mxu0 %v2422
      %2466 = vmatprep.subr.mxu0 %v2421
      %2467 = vmatpush2.msra.mxu0 %v2420
      %2468 = vmatprep.subr.mxu0 %v2419
      %2469 = vmatpush2.msra.mxu0 %v2418
      %2470 = vmatprep.subr.mxu0 %v2417
      %2471 = vmatpush2.msra.mxu0 %v2416
      %2472 = vmatprep.subr.mxu0 %v2415
      %2473 = vmatpush2.msra.mxu0 %v2414
      %2474 = vmatprep.subr.mxu0 %v2413
      %2475 = vmatpush2.msra.mxu0 %v2412
      %2476 = vmatprep.subr.mxu0 %v2411
      %2477 = vmatpush2.msra.mxu0 %v2410
      %2478 = vmatprep.subr.mxu0 %v2409
      %2479 = vmatpush2.msra.mxu0 %v2408
      %2480 = vmatprep.subr.mxu0 %v2407
      %2481 = vmatpush2.msra.mxu0 %v2406
      %2482 = vmatprep.subr.mxu0 %v2405
      %2483 = vmatpush2.msra.mxu0 %v2404
      %2484 = vmatprep.subr.mxu0 %v2403
      %2485 = vmatpush2.msra.mxu0 %v2402
      %2486 = vmatprep.subr.mxu0 %v2401
      %2487 = vmatpush2.msra.mxu0 %v2400
      %2488 = vmatprep.subr.mxu0 %v2399
      %2489 = vmatpush2.msra.mxu0 %v2398
      %2490 = vmatprep.subr.mxu0 %v2397
      %2491 = vmatpush2.msra.mxu0 %v2396
      %2492 = vmatprep.mubr.f32.mxu0 %v814
      %2493 = vmatmul.mubr.f32.gmra.mxu0 %v812
      %v2494 = vpop.f32.mrf.mxu0
      %v2495 = vadd.f32 0.0, %v2494
      %v2496 = vpop.f32.mrf.mxu0
      %v2497 = vadd.f32 0.0, %v2496
      %2498 = vmatprep.mubr.f32.mxu0 %v820
      %2499 = vmatmul.mubr.f32.gmra.mxu0 %v818
      %v2500 = vpop.f32.mrf.mxu0
      %v2501 = vadd.f32 0.0, %v2500
      %v2502 = vpop.f32.mrf.mxu0
      %v2503 = vadd.f32 0.0, %v2502
      %2504 = vmatprep.mubr.f32.mxu0 %v826
      %2505 = vmatmul.mubr.f32.gmra.mxu0 %v824
      %v2506 = vpop.f32.mrf.mxu0
      %v2507 = vadd.f32 0.0, %v2506
      %v2508 = vpop.f32.mrf.mxu0
      %v2509 = vadd.f32 0.0, %v2508
      %2510 = vmatprep.mubr.f32.mxu0 %v832
      %2511 = vmatmul.mubr.f32.gmra.mxu0 %v830
      %v2512 = vpop.f32.mrf.mxu0
      %v2513 = vadd.f32 0.0, %v2512
      %v2514 = vpop.f32.mrf.mxu0
      %v2515 = vadd.f32 0.0, %v2514
      %2516 = vdwg.mxu0
      %v2517 = vadd.f32 %v2356, %v2495
      %v2518 = vadd.f32 %v2357, %v2497
      %v2519 = vadd.f32 %v2358, %v2501
      %v2520 = vadd.f32 %v2359, %v2503
      %v2521 = vadd.f32 %v2360, %v2507
      %v2522 = vadd.f32 %v2361, %v2509
      %v2523 = vadd.f32 %v2362, %v2513
      %v2524 = vadd.f32 %v2363, %v2515
      %v2525 = vld [vmem:[%s15] sm:$0xff]
      %v2526 = vld [vmem:[%s15 + $0x8] sm:$0xff]
      %v2527 = vld [vmem:[%s15 + $0x10] sm:$0xff]
      %v2528 = vld [vmem:[%s15 + $0x18] sm:$0xff]
      %v2529 = vld [vmem:[%s15 + $0x20] sm:$0xff]
      %v2530 = vld [vmem:[%s15 + $0x28] sm:$0xff]
      %v2531 = vld [vmem:[%s15 + $0x30] sm:$0xff]
      %v2532 = vld [vmem:[%s15 + $0x38] sm:$0xff]
      %v2533 = vld [vmem:[%s15 + $0x40] sm:$0xff]
      %v2534 = vld [vmem:[%s15 + $0x48] sm:$0xff]
      %v2535 = vld [vmem:[%s15 + $0x50] sm:$0xff]
      %v2536 = vld [vmem:[%s15 + $0x58] sm:$0xff]
      %v2537 = vld [vmem:[%s15 + $0x60] sm:$0xff]
      %v2538 = vld [vmem:[%s15 + $0x68] sm:$0xff]
      %v2539 = vld [vmem:[%s15 + $0x70] sm:$0xff]
      %v2540 = vld [vmem:[%s15 + $0x78] sm:$0xff]
      %v2541 = vld [vmem:[%s15 + $0x80] sm:$0xff]
      %v2542 = vld [vmem:[%s15 + $0x88] sm:$0xff]
      %v2543 = vld [vmem:[%s15 + $0x90] sm:$0xff]
      %v2544 = vld [vmem:[%s15 + $0x98] sm:$0xff]
      %v2545 = vld [vmem:[%s15 + $0xa0] sm:$0xff]
      %v2546 = vld [vmem:[%s15 + $0xa8] sm:$0xff]
      %v2547 = vld [vmem:[%s15 + $0xb0] sm:$0xff]
      %v2548 = vld [vmem:[%s15 + $0xb8] sm:$0xff]
      %v2549 = vld [vmem:[%s15 + $0xc0] sm:$0xff]
      %v2550 = vld [vmem:[%s15 + $0xc8] sm:$0xff]
      %v2551 = vld [vmem:[%s15 + $0xd0] sm:$0xff]
      %v2552 = vld [vmem:[%s15 + $0xd8] sm:$0xff]
      %v2553 = vld [vmem:[%s15 + $0xe0] sm:$0xff]
      %v2554 = vld [vmem:[%s15 + $0xe8] sm:$0xff]
      %v2555 = vld [vmem:[%s15 + $0xf0] sm:$0xff]
      %v2556 = vld [vmem:[%s15 + $0xf8] sm:$0xff]
      %v2557 = vld [vmem:[%s15 + $0x100] sm:$0xff]
      %v2558 = vld [vmem:[%s15 + $0x108] sm:$0xff]
      %v2559 = vld [vmem:[%s15 + $0x110] sm:$0xff]
      %v2560 = vld [vmem:[%s15 + $0x118] sm:$0xff]
      %v2561 = vld [vmem:[%s15 + $0x120] sm:$0xff]
      %v2562 = vld [vmem:[%s15 + $0x128] sm:$0xff]
      %v2563 = vld [vmem:[%s15 + $0x130] sm:$0xff]
      %v2564 = vld [vmem:[%s15 + $0x138] sm:$0xff]
      %v2565 = vld [vmem:[%s15 + $0x140] sm:$0xff]
      %v2566 = vld [vmem:[%s15 + $0x148] sm:$0xff]
      %v2567 = vld [vmem:[%s15 + $0x150] sm:$0xff]
      %v2568 = vld [vmem:[%s15 + $0x158] sm:$0xff]
      %v2569 = vld [vmem:[%s15 + $0x160] sm:$0xff]
      %v2570 = vld [vmem:[%s15 + $0x168] sm:$0xff]
      %v2571 = vld [vmem:[%s15 + $0x170] sm:$0xff]
      %v2572 = vld [vmem:[%s15 + $0x178] sm:$0xff]
      %v2573 = vld [vmem:[%s15 + $0x180] sm:$0xff]
      %v2574 = vld [vmem:[%s15 + $0x188] sm:$0xff]
      %v2575 = vld [vmem:[%s15 + $0x190] sm:$0xff]
      %v2576 = vld [vmem:[%s15 + $0x198] sm:$0xff]
      %v2577 = vld [vmem:[%s15 + $0x1a0] sm:$0xff]
      %v2578 = vld [vmem:[%s15 + $0x1a8] sm:$0xff]
      %v2579 = vld [vmem:[%s15 + $0x1b0] sm:$0xff]
      %v2580 = vld [vmem:[%s15 + $0x1b8] sm:$0xff]
      %v2581 = vld [vmem:[%s15 + $0x1c0] sm:$0xff]
      %v2582 = vld [vmem:[%s15 + $0x1c8] sm:$0xff]
      %v2583 = vld [vmem:[%s15 + $0x1d0] sm:$0xff]
      %v2584 = vld [vmem:[%s15 + $0x1d8] sm:$0xff]
      %v2585 = vld [vmem:[%s15 + $0x1e0] sm:$0xff]
      %v2586 = vld [vmem:[%s15 + $0x1e8] sm:$0xff]
      %v2587 = vld [vmem:[%s15 + $0x1f0] sm:$0xff]
      %v2588 = vld [vmem:[%s15 + $0x1f8] sm:$0xff]
      %2589 = vmatprep.subr.mxu0 %v2556
      %2590 = vmatpush1.msra.mxu0 %v2555
      %2591 = vmatprep.subr.mxu0 %v2554
      %2592 = vmatpush1.msra.mxu0 %v2553
      %2593 = vmatprep.subr.mxu0 %v2552
      %2594 = vmatpush1.msra.mxu0 %v2551
      %2595 = vmatprep.subr.mxu0 %v2550
      %2596 = vmatpush1.msra.mxu0 %v2549
      %2597 = vmatprep.subr.mxu0 %v2548
      %2598 = vmatpush1.msra.mxu0 %v2547
      %2599 = vmatprep.subr.mxu0 %v2546
      %2600 = vmatpush1.msra.mxu0 %v2545
      %2601 = vmatprep.subr.mxu0 %v2544
      %2602 = vmatpush1.msra.mxu0 %v2543
      %2603 = vmatprep.subr.mxu0 %v2542
      %2604 = vmatpush1.msra.mxu0 %v2541
      %2605 = vmatprep.subr.mxu0 %v2540
      %2606 = vmatpush1.msra.mxu0 %v2539
      %2607 = vmatprep.subr.mxu0 %v2538
      %2608 = vmatpush1.msra.mxu0 %v2537
      %2609 = vmatprep.subr.mxu0 %v2536
      %2610 = vmatpush1.msra.mxu0 %v2535
      %2611 = vmatprep.subr.mxu0 %v2534
      %2612 = vmatpush1.msra.mxu0 %v2533
      %2613 = vmatprep.subr.mxu0 %v2532
      %2614 = vmatpush1.msra.mxu0 %v2531
      %2615 = vmatprep.subr.mxu0 %v2530
      %2616 = vmatpush1.msra.mxu0 %v2529
      %2617 = vmatprep.subr.mxu0 %v2528
      %2618 = vmatpush1.msra.mxu0 %v2527
      %2619 = vmatprep.subr.mxu0 %v2526
      %2620 = vmatpush1.msra.mxu0 %v2525
      %2621 = vmatprep.subr.mxu0 %v2588
      %2622 = vmatpush2.msra.mxu0 %v2587
      %2623 = vmatprep.subr.mxu0 %v2586
      %2624 = vmatpush2.msra.mxu0 %v2585
      %2625 = vmatprep.subr.mxu0 %v2584
      %2626 = vmatpush2.msra.mxu0 %v2583
      %2627 = vmatprep.subr.mxu0 %v2582
      %2628 = vmatpush2.msra.mxu0 %v2581
      %2629 = vmatprep.subr.mxu0 %v2580
      %2630 = vmatpush2.msra.mxu0 %v2579
      %2631 = vmatprep.subr.mxu0 %v2578
      %2632 = vmatpush2.msra.mxu0 %v2577
      %2633 = vmatprep.subr.mxu0 %v2576
      %2634 = vmatpush2.msra.mxu0 %v2575
      %2635 = vmatprep.subr.mxu0 %v2574
      %2636 = vmatpush2.msra.mxu0 %v2573
      %2637 = vmatprep.subr.mxu0 %v2572
      %2638 = vmatpush2.msra.mxu0 %v2571
      %2639 = vmatprep.subr.mxu0 %v2570
      %2640 = vmatpush2.msra.mxu0 %v2569
      %2641 = vmatprep.subr.mxu0 %v2568
      %2642 = vmatpush2.msra.mxu0 %v2567
      %2643 = vmatprep.subr.mxu0 %v2566
      %2644 = vmatpush2.msra.mxu0 %v2565
      %2645 = vmatprep.subr.mxu0 %v2564
      %2646 = vmatpush2.msra.mxu0 %v2563
      %2647 = vmatprep.subr.mxu0 %v2562
      %2648 = vmatpush2.msra.mxu0 %v2561
      %2649 = vmatprep.subr.mxu0 %v2560
      %2650 = vmatpush2.msra.mxu0 %v2559
      %2651 = vmatprep.subr.mxu0 %v2558
      %2652 = vmatpush2.msra.mxu0 %v2557
      %2653 = vmatprep.mubr.f32.mxu0 %v838
      %2654 = vmatmul.mubr.f32.gmra.mxu0 %v836
      %v2655 = vpop.f32.mrf.mxu0
      %v2656 = vadd.f32 0.0, %v2655
      %v2657 = vpop.f32.mrf.mxu0
      %v2658 = vadd.f32 0.0, %v2657
      %2659 = vmatprep.mubr.f32.mxu0 %v844
      %2660 = vmatmul.mubr.f32.gmra.mxu0 %v842
      %v2661 = vpop.f32.mrf.mxu0
      %v2662 = vadd.f32 0.0, %v2661
      %v2663 = vpop.f32.mrf.mxu0
      %v2664 = vadd.f32 0.0, %v2663
      %2665 = vmatprep.mubr.f32.mxu0 %v850
      %2666 = vmatmul.mubr.f32.gmra.mxu0 %v848
      %v2667 = vpop.f32.mrf.mxu0
      %v2668 = vadd.f32 0.0, %v2667
      %v2669 = vpop.f32.mrf.mxu0
      %v2670 = vadd.f32 0.0, %v2669
      %2671 = vmatprep.mubr.f32.mxu0 %v856
      %2672 = vmatmul.mubr.f32.gmra.mxu0 %v854
      %v2673 = vpop.f32.mrf.mxu0
      %v2674 = vadd.f32 0.0, %v2673
      %v2675 = vpop.f32.mrf.mxu0
      %v2676 = vadd.f32 0.0, %v2675
      %2677 = vdwg.mxu0
      %v2678 = vadd.f32 %v2517, %v2656
      %v2679 = vadd.f32 %v2518, %v2658
      %v2680 = vadd.f32 %v2519, %v2662
      %v2681 = vadd.f32 %v2520, %v2664
      %v2682 = vadd.f32 %v2521, %v2668
      %v2683 = vadd.f32 %v2522, %v2670
      %v2684 = vadd.f32 %v2523, %v2674
      %v2685 = vadd.f32 %v2524, %v2676
      %v2686 = vld [vmem:[%s5] sm:$0xff]
      %v2687 = vld [vmem:[%s5 + $0x8] sm:$0xff]
      %v2688 = vld [vmem:[%s5 + $0x10] sm:$0xff]
      %v2689 = vld [vmem:[%s5 + $0x18] sm:$0xff]
      %v2690 = vmax.f32 %v2678, 0.0
      %v2691 = vmax.f32 %v2679, 0.0
      %v2692 = vmax.f32 %v2680, 0.0
      %v2693 = vmax.f32 %v2681, 0.0
      %v2694 = vmax.f32 %v2682, 0.0
      %v2695 = vmax.f32 %v2683, 0.0
      %v2696 = vmax.f32 %v2684, 0.0
      %v2697 = vmax.f32 %v2685, 0.0
      %v2698 = vld [vmem:[%s6] sm:$0xff]
      %v2699 = vld [vmem:[%s6 + $0x8] sm:$0xff]
      %v2700 = vld [vmem:[%s6 + $0x10] sm:$0xff]
      %v2701 = vld [vmem:[%s6 + $0x18] sm:$0xff]
      %2703 = vset.pattern.permute.xlu0 0
      %2704 = vperm.xlu0 %2703, %v2698
      %v2705 = vpop.permute.xlu0 %2704
      %2708 = vset.pattern.permute.xlu0 0
      %2709 = vperm.xlu0 %2708, %v2699
      %v2710 = vpop.permute.xlu0 %2709
      %2713 = vset.pattern.permute.xlu0 0
      %2714 = vperm.xlu0 %2713, %v2700
      %v2715 = vpop.permute.xlu0 %2714
      %2718 = vset.pattern.permute.xlu0 0
      %2719 = vperm.xlu0 %2718, %v2701
      %v2720 = vpop.permute.xlu0 %2719
      %v2723 = vsel %vm684, %v2686, 0
      %v2726 = vsel %vm684, %v2687, 0
      %v2729 = vsel %vm684, %v2688, 0
      %v2732 = vsel %vm684, %v2689, 0
      %2734 = vmatprep.subr.mxu0 0.0
      %2735 = vmatpush1.msra.mxu0 0.0
      %2736 = vmatprep.subr.mxu0 0.0
      %2737 = vmatpush1.msra.mxu0 0.0
      %2738 = vmatprep.subr.mxu0 0.0
      %2739 = vmatpush1.msra.mxu0 0.0
      %2740 = vmatprep.subr.mxu0 0.0
      %2741 = vmatpush1.msra.mxu0 0.0
      %2742 = vmatprep.subr.mxu0 0.0
      %2743 = vmatpush1.msra.mxu0 0.0
      %2744 = vmatprep.subr.mxu0 0.0
      %2745 = vmatpush1.msra.mxu0 0.0
      %2746 = vmatprep.subr.mxu0 0.0
      %2747 = vmatpush1.msra.mxu0 0.0
      %2748 = vmatprep.subr.mxu0 0.0
      %2749 = vmatpush1.msra.mxu0 0.0
      %2750 = vmatprep.subr.mxu0 0.0
      %2751 = vmatpush1.msra.mxu0 0.0
      %2752 = vmatprep.subr.mxu0 0.0
      %2753 = vmatpush1.msra.mxu0 0.0
      %2754 = vmatprep.subr.mxu0 0.0
      %2755 = vmatpush1.msra.mxu0 0.0
      %2756 = vmatprep.subr.mxu0 0.0
      %2757 = vmatpush1.msra.mxu0 0.0
      %2758 = vmatprep.subr.mxu0 %v2697
      %2759 = vmatpush1.msra.mxu0 %v2696
      %2760 = vmatprep.subr.mxu0 %v2695
      %2761 = vmatpush1.msra.mxu0 %v2694
      %2762 = vmatprep.subr.mxu0 %v2693
      %2763 = vmatpush1.msra.mxu0 %v2692
      %2764 = vmatprep.subr.mxu0 %v2691
      %2765 = vmatpush1.msra.mxu0 %v2690
      %2766 = vmatprep.subr.mxu0 0.0
      %2767 = vmatpush2.msra.mxu0 0.0
      %2768 = vmatprep.subr.mxu0 0.0
      %2769 = vmatpush2.msra.mxu0 0.0
      %2770 = vmatprep.subr.mxu0 0.0
      %2771 = vmatpush2.msra.mxu0 0.0
      %2772 = vmatprep.subr.mxu0 0.0
      %2773 = vmatpush2.msra.mxu0 0.0
      %2774 = vmatprep.subr.mxu0 0.0
      %2775 = vmatpush2.msra.mxu0 0.0
      %2776 = vmatprep.subr.mxu0 0.0
      %2777 = vmatpush2.msra.mxu0 0.0
      %2778 = vmatprep.subr.mxu0 0.0
      %2779 = vmatpush2.msra.mxu0 0.0
      %2780 = vmatprep.subr.mxu0 0.0
      %2781 = vmatpush2.msra.mxu0 0.0
      %2782 = vmatprep.subr.mxu0 0.0
      %2783 = vmatpush2.msra.mxu0 0.0
      %2784 = vmatprep.subr.mxu0 0.0
      %2785 = vmatpush2.msra.mxu0 0.0
      %2786 = vmatprep.subr.mxu0 0.0
      %2787 = vmatpush2.msra.mxu0 0.0
      %2788 = vmatprep.subr.mxu0 0.0
      %2789 = vmatpush2.msra.mxu0 0.0
      %2790 = vmatprep.subr.mxu0 0.0
      %2791 = vmatpush2.msra.mxu0 0.0
      %2792 = vmatprep.subr.mxu0 0.0
      %2793 = vmatpush2.msra.mxu0 0.0
      %2794 = vmatprep.subr.mxu0 0.0
      %2795 = vmatpush2.msra.mxu0 0.0
      %2796 = vmatprep.subr.mxu0 0.0
      %2797 = vmatpush2.msra.mxu0 0.0
      %2798 = vmatprep.mubr.f32.mxu0 0.0
      %2799 = vmatmul.mubr.f32.gmra.mxu0 %v2723
      %v2800 = vpop.f32.mrf.mxu0
      %v2801 = vadd.f32 %v2705, %v2800
      %v2802 = vpop.f32.mrf.mxu0
      %v2803 = vadd.f32 %v2705, %v2802
      %2804 = vmatprep.mubr.f32.mxu0 0.0
      %2805 = vmatmul.mubr.f32.gmra.mxu0 %v2726
      %v2806 = vpop.f32.mrf.mxu0
      %v2807 = vadd.f32 %v2710, %v2806
      %v2808 = vpop.f32.mrf.mxu0
      %v2809 = vadd.f32 %v2710, %v2808
      %2810 = vmatprep.mubr.f32.mxu0 0.0
      %2811 = vmatmul.mubr.f32.gmra.mxu0 %v2729
      %v2812 = vpop.f32.mrf.mxu0
      %v2813 = vadd.f32 %v2715, %v2812
      %v2814 = vpop.f32.mrf.mxu0
      %v2815 = vadd.f32 %v2715, %v2814
      %2816 = vmatprep.mubr.f32.mxu0 0.0
      %2817 = vmatmul.mubr.f32.gmra.mxu0 %v2732
      %v2818 = vpop.f32.mrf.mxu0
      %v2819 = vadd.f32 %v2720, %v2818
      %v2820 = vpop.f32.mrf.mxu0
      %v2821 = vadd.f32 %v2720, %v2820
      %2822 = vdwg.mxu0
      %v2823 = vld [vmem:[%s7] sm:$0xff]
      %v2824 = vld [vmem:[%s7 + $0x8] sm:$0xff]
      %v2825 = vld [vmem:[%s7 + $0x10] sm:$0xff]
      %v2826 = vld [vmem:[%s7 + $0x18] sm:$0xff]
      %v2828 = vsel %vm684, %v2823, 0
      %v2831 = vsel %vm684, %v2824, 0
      %v2834 = vsel %vm684, %v2825, 0
      %v2837 = vsel %vm684, %v2826, 0
      %2839 = vmatprep.subr.mxu0 0.0
      %2840 = vmatpush1.msra.mxu0 0.0
      %2841 = vmatprep.subr.mxu0 0.0
      %2842 = vmatpush1.msra.mxu0 0.0
      %2843 = vmatprep.subr.mxu0 0.0
      %2844 = vmatpush1.msra.mxu0 0.0
      %2845 = vmatprep.subr.mxu0 0.0
      %2846 = vmatpush1.msra.mxu0 0.0
      %2847 = vmatprep.subr.mxu0 0.0
      %2848 = vmatpush1.msra.mxu0 0.0
      %2849 = vmatprep.subr.mxu0 0.0
      %2850 = vmatpush1.msra.mxu0 0.0
      %2851 = vmatprep.subr.mxu0 0.0
      %2852 = vmatpush1.msra.mxu0 0.0
      %2853 = vmatprep.subr.mxu0 0.0
      %2854 = vmatpush1.msra.mxu0 0.0
      %2855 = vmatprep.subr.mxu0 0.0
      %2856 = vmatpush1.msra.mxu0 0.0
      %2857 = vmatprep.subr.mxu0 0.0
      %2858 = vmatpush1.msra.mxu0 0.0
      %2859 = vmatprep.subr.mxu0 0.0
      %2860 = vmatpush1.msra.mxu0 0.0
      %2861 = vmatprep.subr.mxu0 0.0
      %2862 = vmatpush1.msra.mxu0 0.0
      %2863 = vmatprep.subr.mxu0 %v2821
      %2864 = vmatpush1.msra.mxu0 %v2819
      %2865 = vmatprep.subr.mxu0 %v2815
      %2866 = vmatpush1.msra.mxu0 %v2813
      %2867 = vmatprep.subr.mxu0 %v2809
      %2868 = vmatpush1.msra.mxu0 %v2807
      %2869 = vmatprep.subr.mxu0 %v2803
      %2870 = vmatpush1.msra.mxu0 %v2801
      %2871 = vmatprep.subr.mxu0 0.0
      %2872 = vmatpush2.msra.mxu0 0.0
      %2873 = vmatprep.subr.mxu0 0.0
      %2874 = vmatpush2.msra.mxu0 0.0
      %2875 = vmatprep.subr.mxu0 0.0
      %2876 = vmatpush2.msra.mxu0 0.0
      %2877 = vmatprep.subr.mxu0 0.0
      %2878 = vmatpush2.msra.mxu0 0.0
      %2879 = vmatprep.subr.mxu0 0.0
      %2880 = vmatpush2.msra.mxu0 0.0
      %2881 = vmatprep.subr.mxu0 0.0
      %2882 = vmatpush2.msra.mxu0 0.0
      %2883 = vmatprep.subr.mxu0 0.0
      %2884 = vmatpush2.msra.mxu0 0.0
      %2885 = vmatprep.subr.mxu0 0.0
      %2886 = vmatpush2.msra.mxu0 0.0
      %2887 = vmatprep.subr.mxu0 0.0
      %2888 = vmatpush2.msra.mxu0 0.0
      %2889 = vmatprep.subr.mxu0 0.0
      %2890 = vmatpush2.msra.mxu0 0.0
      %2891 = vmatprep.subr.mxu0 0.0
      %2892 = vmatpush2.msra.mxu0 0.0
      %2893 = vmatprep.subr.mxu0 0.0
      %2894 = vmatpush2.msra.mxu0 0.0
      %2895 = vmatprep.subr.mxu0 0.0
      %2896 = vmatpush2.msra.mxu0 0.0
      %2897 = vmatprep.subr.mxu0 0.0
      %2898 = vmatpush2.msra.mxu0 0.0
      %2899 = vmatprep.subr.mxu0 0.0
      %2900 = vmatpush2.msra.mxu0 0.0
      %2901 = vmatprep.subr.mxu0 0.0
      %2902 = vmatpush2.msra.mxu0 0.0
      %2903 = vmatprep.mubr.f32.mxu0 0.0
      %2904 = vmatmul.mubr.f32.gmra.mxu0 %v2828
      %v2905 = vpop.f32.mrf.mxu0
      %v2906 = vadd.f32 0.0, %v2905
      %v2907 = vpop.f32.mrf.mxu0
      %v2908 = vadd.f32 0.0, %v2907
      %2909 = vmatprep.mubr.f32.mxu0 0.0
      %2910 = vmatmul.mubr.f32.gmra.mxu0 %v2831
      %v2911 = vpop.f32.mrf.mxu0
      %v2912 = vadd.f32 0.0, %v2911
      %v2913 = vpop.f32.mrf.mxu0
      %v2914 = vadd.f32 0.0, %v2913
      %2915 = vmatprep.mubr.f32.mxu0 0.0
      %2916 = vmatmul.mubr.f32.gmra.mxu0 %v2834
      %v2917 = vpop.f32.mrf.mxu0
      %v2918 = vadd.f32 0.0, %v2917
      %v2919 = vpop.f32.mrf.mxu0
      %v2920 = vadd.f32 0.0, %v2919
      %2921 = vmatprep.mubr.f32.mxu0 0.0
      %2922 = vmatmul.mubr.f32.gmra.mxu0 %v2837
      %v2923 = vpop.f32.mrf.mxu0
      %v2924 = vadd.f32 0.0, %v2923
      %v2925 = vpop.f32.mrf.mxu0
      %v2926 = vadd.f32 0.0, %v2925
      %2927 = vdwg.mxu0
      %v2928 = vadd.f32 %v2678, %v2906
      %v2929 = vadd.f32 %v2679, %v2908
      %v2930 = vadd.f32 %v2680, %v2912
      %v2931 = vadd.f32 %v2681, %v2914
      %v2932 = vadd.f32 %v2682, %v2918
      %v2933 = vadd.f32 %v2683, %v2920
      %v2934 = vadd.f32 %v2684, %v2924
      %v2935 = vadd.f32 %v2685, %v2926
      %v2936 = vld [vmem:[%s8] sm:$0xff]
      %v2937 = vld [vmem:[%s8 + $0x8] sm:$0xff]
      %v2938 = vld [vmem:[%s8 + $0x10] sm:$0xff]
      %v2939 = vld [vmem:[%s8 + $0x18] sm:$0xff]
      %2941 = vset.pattern.permute.xlu0 0
      %2942 = vperm.xlu0 %2941, %v2936
      %v2943 = vpop.permute.xlu0 %2942
      %2946 = vset.pattern.permute.xlu0 0
      %2947 = vperm.xlu0 %2946, %v2937
      %v2948 = vpop.permute.xlu0 %2947
      %2951 = vset.pattern.permute.xlu0 0
      %2952 = vperm.xlu0 %2951, %v2938
      %v2953 = vpop.permute.xlu0 %2952
      %2956 = vset.pattern.permute.xlu0 0
      %2957 = vperm.xlu0 %2956, %v2939
      %v2958 = vpop.permute.xlu0 %2957
      %v2960 = vadd.f32 %v2928, %v2943
      %v2961 = vadd.f32 %v2929, %v2943
      %v2962 = vadd.f32 %v2930, %v2948
      %v2963 = vadd.f32 %v2931, %v2948
      %v2964 = vadd.f32 %v2932, %v2953
      %v2965 = vadd.f32 %v2933, %v2953
      %v2966 = vadd.f32 %v2934, %v2958
      %v2967 = vadd.f32 %v2935, %v2958
      %2968 = vst [vmem:[%s578] sm:$0xff] %v2960
      %2969 = vst [vmem:[%s578 + $0x8] sm:$0xff] %v2961
      %2970 = vst [vmem:[%s578 + $0x10] sm:$0xff] %v2962
      %2971 = vst [vmem:[%s578 + $0x18] sm:$0xff] %v2963
      %2972 = vst [vmem:[%s578 + $0x20] sm:$0xff] %v2964
      %2973 = vst [vmem:[%s578 + $0x28] sm:$0xff] %v2965
      %2974 = vst [vmem:[%s578 + $0x30] sm:$0xff] %v2966
      %2975 = vst [vmem:[%s578 + $0x38] sm:$0xff] %v2967
      %s2976 = scalar_lea.vmem %s557, 64
      %v2977 = vld [vmem:[%s2976] sm:$0xff]
      %v2978 = vld [vmem:[%s2976 + $0x8] sm:$0xff]
      %v2979 = vld [vmem:[%s2976 + $0x10] sm:$0xff]
      %v2980 = vld [vmem:[%s2976 + $0x18] sm:$0xff]
      %v2981 = vld [vmem:[%s2976 + $0x20] sm:$0xff]
      %v2982 = vld [vmem:[%s2976 + $0x28] sm:$0xff]
      %v2983 = vld [vmem:[%s2976 + $0x30] sm:$0xff]
      %v2984 = vld [vmem:[%s2976 + $0x38] sm:$0xff]
      %s2985 = scalar_lea.vmem %s564, 16
      %v2986 = vld [vmem:[%s2985] sm:$0xff]
      %v2987 = vld [vmem:[%s2985 + $0x8] sm:$0xff]
      %s2988 = scalar_lea.vmem %s571, 16
      %v2989 = vld [vmem:[%s2988] sm:$0xff]
      %v2990 = vld [vmem:[%s2988 + $0x8] sm:$0xff]
      %v2991 = vld [vmem:[%s3] sm:$0xff]
      %v2992 = vld [vmem:[%s3 + $0x8] sm:$0xff]
      %v2993 = vld [vmem:[%s3 + $0x10] sm:$0xff]
      %v2994 = vld [vmem:[%s3 + $0x18] sm:$0xff]
      %v2995 = vld [vmem:[%s3 + $0x20] sm:$0xff]
      %v2996 = vld [vmem:[%s3 + $0x28] sm:$0xff]
      %v2997 = vld [vmem:[%s3 + $0x30] sm:$0xff]
      %v2998 = vld [vmem:[%s3 + $0x38] sm:$0xff]
      %v2999 = vld [vmem:[%s3 + $0x40] sm:$0xff]
      %v3000 = vld [vmem:[%s3 + $0x48] sm:$0xff]
      %v3001 = vld [vmem:[%s3 + $0x50] sm:$0xff]
      %v3002 = vld [vmem:[%s3 + $0x58] sm:$0xff]
      %v3003 = vmax.f32 %v2977, 0.0
      %v3004 = vmax.f32 %v2978, 0.0
      %v3005 = vmax.f32 %v2979, 0.0
      %v3006 = vmax.f32 %v2980, 0.0
      %v3007 = vmax.f32 %v2981, 0.0
      %v3008 = vmax.f32 %v2982, 0.0
      %v3009 = vmax.f32 %v2983, 0.0
      %v3010 = vmax.f32 %v2984, 0.0
      %v3011 = vld [vmem:[%s4] sm:$0xff]
      %v3012 = vld [vmem:[%s4 + $0x8] sm:$0xff]
      %v3013 = vld [vmem:[%s4 + $0x10] sm:$0xff]
      %v3014 = vld [vmem:[%s4 + $0x18] sm:$0xff]
      %v3015 = vld [vmem:[%s4 + $0x20] sm:$0xff]
      %v3016 = vld [vmem:[%s4 + $0x28] sm:$0xff]
      %v3017 = vld [vmem:[%s4 + $0x30] sm:$0xff]
      %v3018 = vld [vmem:[%s4 + $0x38] sm:$0xff]
      %v3019 = vld [vmem:[%s4 + $0x40] sm:$0xff]
      %v3020 = vld [vmem:[%s4 + $0x48] sm:$0xff]
      %v3021 = vld [vmem:[%s4 + $0x50] sm:$0xff]
      %v3022 = vld [vmem:[%s4 + $0x58] sm:$0xff]
      %3024 = vset.pattern.permute.xlu0 0
      %3025 = vperm.xlu0 %3024, %v3011
      %v3026 = vpop.permute.xlu0 %3025
      %3029 = vset.pattern.permute.xlu0 0
      %3030 = vperm.xlu0 %3029, %v3012
      %v3031 = vpop.permute.xlu0 %3030
      %3034 = vset.pattern.permute.xlu0 0
      %3035 = vperm.xlu0 %3034, %v3013
      %v3036 = vpop.permute.xlu0 %3035
      %3039 = vset.pattern.permute.xlu0 0
      %3040 = vperm.xlu0 %3039, %v3014
      %v3041 = vpop.permute.xlu0 %3040
      %3044 = vset.pattern.permute.xlu0 0
      %3045 = vperm.xlu0 %3044, %v3015
      %v3046 = vpop.permute.xlu0 %3045
      %3049 = vset.pattern.permute.xlu0 0
      %3050 = vperm.xlu0 %3049, %v3016
      %v3051 = vpop.permute.xlu0 %3050
      %3054 = vset.pattern.permute.xlu0 0
      %3055 = vperm.xlu0 %3054, %v3017
      %v3056 = vpop.permute.xlu0 %3055
      %3059 = vset.pattern.permute.xlu0 0
      %3060 = vperm.xlu0 %3059, %v3018
      %v3061 = vpop.permute.xlu0 %3060
      %3064 = vset.pattern.permute.xlu0 0
      %3065 = vperm.xlu0 %3064, %v3019
      %v3066 = vpop.permute.xlu0 %3065
      %3069 = vset.pattern.permute.xlu0 0
      %3070 = vperm.xlu0 %3069, %v3020
      %v3071 = vpop.permute.xlu0 %3070
      %3074 = vset.pattern.permute.xlu0 0
      %3075 = vperm.xlu0 %3074, %v3021
      %v3076 = vpop.permute.xlu0 %3075
      %3079 = vset.pattern.permute.xlu0 0
      %3080 = vperm.xlu0 %3079, %v3022
      %v3081 = vpop.permute.xlu0 %3080
      %v3084 = vsel %vm684, %v2991, 0
      %v3087 = vsel %vm684, %v2992, 0
      %v3090 = vsel %vm684, %v2993, 0
      %v3093 = vsel %vm684, %v2994, 0
      %v3096 = vsel %vm684, %v2995, 0
      %v3099 = vsel %vm684, %v2996, 0
      %v3102 = vsel %vm684, %v2997, 0
      %v3105 = vsel %vm684, %v2998, 0
      %v3108 = vsel %vm684, %v2999, 0
      %v3111 = vsel %vm684, %v3000, 0
      %v3114 = vsel %vm684, %v3001, 0
      %v3117 = vsel %vm684, %v3002, 0
      %3119 = vmatprep.subr.mxu0 0.0
      %3120 = vmatpush1.msra.mxu0 0.0
      %3121 = vmatprep.subr.mxu0 0.0
      %3122 = vmatpush1.msra.mxu0 0.0
      %3123 = vmatprep.subr.mxu0 0.0
      %3124 = vmatpush1.msra.mxu0 0.0
      %3125 = vmatprep.subr.mxu0 0.0
      %3126 = vmatpush1.msra.mxu0 0.0
      %3127 = vmatprep.subr.mxu0 0.0
      %3128 = vmatpush1.msra.mxu0 0.0
      %3129 = vmatprep.subr.mxu0 0.0
      %3130 = vmatpush1.msra.mxu0 0.0
      %3131 = vmatprep.subr.mxu0 0.0
      %3132 = vmatpush1.msra.mxu0 0.0
      %3133 = vmatprep.subr.mxu0 0.0
      %3134 = vmatpush1.msra.mxu0 0.0
      %3135 = vmatprep.subr.mxu0 0.0
      %3136 = vmatpush1.msra.mxu0 0.0
      %3137 = vmatprep.subr.mxu0 0.0
      %3138 = vmatpush1.msra.mxu0 0.0
      %3139 = vmatprep.subr.mxu0 0.0
      %3140 = vmatpush1.msra.mxu0 0.0
      %3141 = vmatprep.subr.mxu0 0.0
      %3142 = vmatpush1.msra.mxu0 0.0
      %3143 = vmatprep.subr.mxu0 %v3010
      %3144 = vmatpush1.msra.mxu0 %v3009
      %3145 = vmatprep.subr.mxu0 %v3008
      %3146 = vmatpush1.msra.mxu0 %v3007
      %3147 = vmatprep.subr.mxu0 %v3006
      %3148 = vmatpush1.msra.mxu0 %v3005
      %3149 = vmatprep.subr.mxu0 %v3004
      %3150 = vmatpush1.msra.mxu0 %v3003
      %3151 = vmatprep.subr.mxu0 0.0
      %3152 = vmatpush2.msra.mxu0 0.0
      %3153 = vmatprep.subr.mxu0 0.0
      %3154 = vmatpush2.msra.mxu0 0.0
      %3155 = vmatprep.subr.mxu0 0.0
      %3156 = vmatpush2.msra.mxu0 0.0
      %3157 = vmatprep.subr.mxu0 0.0
      %3158 = vmatpush2.msra.mxu0 0.0
      %3159 = vmatprep.subr.mxu0 0.0
      %3160 = vmatpush2.msra.mxu0 0.0
      %3161 = vmatprep.subr.mxu0 0.0
      %3162 = vmatpush2.msra.mxu0 0.0
      %3163 = vmatprep.subr.mxu0 0.0
      %3164 = vmatpush2.msra.mxu0 0.0
      %3165 = vmatprep.subr.mxu0 0.0
      %3166 = vmatpush2.msra.mxu0 0.0
      %3167 = vmatprep.subr.mxu0 0.0
      %3168 = vmatpush2.msra.mxu0 0.0
      %3169 = vmatprep.subr.mxu0 0.0
      %3170 = vmatpush2.msra.mxu0 0.0
      %3171 = vmatprep.subr.mxu0 0.0
      %3172 = vmatpush2.msra.mxu0 0.0
      %3173 = vmatprep.subr.mxu0 0.0
      %3174 = vmatpush2.msra.mxu0 0.0
      %3175 = vmatprep.subr.mxu0 0.0
      %3176 = vmatpush2.msra.mxu0 0.0
      %3177 = vmatprep.subr.mxu0 0.0
      %3178 = vmatpush2.msra.mxu0 0.0
      %3179 = vmatprep.subr.mxu0 0.0
      %3180 = vmatpush2.msra.mxu0 0.0
      %3181 = vmatprep.subr.mxu0 0.0
      %3182 = vmatpush2.msra.mxu0 0.0
      %3183 = vmatprep.mubr.f32.mxu0 0.0
      %3184 = vmatmul.mubr.f32.gmra.mxu0 %v3084
      %v3185 = vpop.f32.mrf.mxu0
      %v3186 = vadd.f32 %v3026, %v3185
      %v3187 = vpop.f32.mrf.mxu0
      %v3188 = vadd.f32 %v3026, %v3187
      %3189 = vmatprep.mubr.f32.mxu0 0.0
      %3190 = vmatmul.mubr.f32.gmra.mxu0 %v3087
      %v3191 = vpop.f32.mrf.mxu0
      %v3192 = vadd.f32 %v3031, %v3191
      %v3193 = vpop.f32.mrf.mxu0
      %v3194 = vadd.f32 %v3031, %v3193
      %3195 = vmatprep.mubr.f32.mxu0 0.0
      %3196 = vmatmul.mubr.f32.gmra.mxu0 %v3090
      %v3197 = vpop.f32.mrf.mxu0
      %v3198 = vadd.f32 %v3036, %v3197
      %v3199 = vpop.f32.mrf.mxu0
      %v3200 = vadd.f32 %v3036, %v3199
      %3201 = vmatprep.mubr.f32.mxu0 0.0
      %3202 = vmatmul.mubr.f32.gmra.mxu0 %v3093
      %v3203 = vpop.f32.mrf.mxu0
      %v3204 = vadd.f32 %v3041, %v3203
      %v3205 = vpop.f32.mrf.mxu0
      %v3206 = vadd.f32 %v3041, %v3205
      %3207 = vmatprep.mubr.f32.mxu0 0.0
      %3208 = vmatmul.mubr.f32.gmra.mxu0 %v3096
      %v3209 = vpop.f32.mrf.mxu0
      %v3210 = vadd.f32 %v3046, %v3209
      %v3211 = vpop.f32.mrf.mxu0
      %v3212 = vadd.f32 %v3046, %v3211
      %3213 = vmatprep.mubr.f32.mxu0 0.0
      %3214 = vmatmul.mubr.f32.gmra.mxu0 %v3099
      %v3215 = vpop.f32.mrf.mxu0
      %v3216 = vadd.f32 %v3051, %v3215
      %v3217 = vpop.f32.mrf.mxu0
      %v3218 = vadd.f32 %v3051, %v3217
      %3219 = vmatprep.mubr.f32.mxu0 0.0
      %3220 = vmatmul.mubr.f32.gmra.mxu0 %v3102
      %v3221 = vpop.f32.mrf.mxu0
      %v3222 = vadd.f32 %v3056, %v3221
      %v3223 = vpop.f32.mrf.mxu0
      %v3224 = vadd.f32 %v3056, %v3223
      %3225 = vmatprep.mubr.f32.mxu0 0.0
      %3226 = vmatmul.mubr.f32.gmra.mxu0 %v3105
      %v3227 = vpop.f32.mrf.mxu0
      %v3228 = vadd.f32 %v3061, %v3227
      %v3229 = vpop.f32.mrf.mxu0
      %v3230 = vadd.f32 %v3061, %v3229
      %3231 = vmatprep.mubr.f32.mxu0 0.0
      %3232 = vmatmul.mubr.f32.gmra.mxu0 %v3108
      %v3233 = vpop.f32.mrf.mxu0
      %v3234 = vadd.f32 %v3066, %v3233
      %v3235 = vpop.f32.mrf.mxu0
      %v3236 = vadd.f32 %v3066, %v3235
      %3237 = vmatprep.mubr.f32.mxu0 0.0
      %3238 = vmatmul.mubr.f32.gmra.mxu0 %v3111
      %v3239 = vpop.f32.mrf.mxu0
      %v3240 = vadd.f32 %v3071, %v3239
      %v3241 = vpop.f32.mrf.mxu0
      %v3242 = vadd.f32 %v3071, %v3241
      %3243 = vmatprep.mubr.f32.mxu0 0.0
      %3244 = vmatmul.mubr.f32.gmra.mxu0 %v3114
      %v3245 = vpop.f32.mrf.mxu0
      %v3246 = vadd.f32 %v3076, %v3245
      %v3247 = vpop.f32.mrf.mxu0
      %v3248 = vadd.f32 %v3076, %v3247
      %3249 = vmatprep.mubr.f32.mxu0 0.0
      %3250 = vmatmul.mubr.f32.gmra.mxu0 %v3117
      %v3251 = vpop.f32.mrf.mxu0
      %v3252 = vadd.f32 %v3081, %v3251
      %v3253 = vpop.f32.mrf.mxu0
      %v3254 = vadd.f32 %v3081, %v3253
      %3255 = vdwg.mxu0
      %v3256 = vld [vmem:[%s9] sm:$0xff]
      %v3257 = vld [vmem:[%s9 + $0x8] sm:$0xff]
      %v3258 = vld [vmem:[%s9 + $0x10] sm:$0xff]
      %v3259 = vld [vmem:[%s9 + $0x18] sm:$0xff]
      %v3260 = vld [vmem:[%s9 + $0x20] sm:$0xff]
      %v3261 = vld [vmem:[%s9 + $0x28] sm:$0xff]
      %v3262 = vld [vmem:[%s9 + $0x30] sm:$0xff]
      %v3263 = vld [vmem:[%s9 + $0x38] sm:$0xff]
      %v3264 = vld [vmem:[%s9 + $0x40] sm:$0xff]
      %v3265 = vld [vmem:[%s9 + $0x48] sm:$0xff]
      %v3266 = vld [vmem:[%s9 + $0x50] sm:$0xff]
      %v3267 = vld [vmem:[%s9 + $0x58] sm:$0xff]
      %v3268 = vld [vmem:[%s9 + $0x60] sm:$0xff]
      %v3269 = vld [vmem:[%s9 + $0x68] sm:$0xff]
      %v3270 = vld [vmem:[%s9 + $0x70] sm:$0xff]
      %v3271 = vld [vmem:[%s9 + $0x78] sm:$0xff]
      %v3272 = vld [vmem:[%s9 + $0x80] sm:$0xff]
      %v3273 = vld [vmem:[%s9 + $0x88] sm:$0xff]
      %v3274 = vld [vmem:[%s9 + $0x90] sm:$0xff]
      %v3275 = vld [vmem:[%s9 + $0x98] sm:$0xff]
      %v3276 = vld [vmem:[%s9 + $0xa0] sm:$0xff]
      %v3277 = vld [vmem:[%s9 + $0xa8] sm:$0xff]
      %v3278 = vld [vmem:[%s9 + $0xb0] sm:$0xff]
      %v3279 = vld [vmem:[%s9 + $0xb8] sm:$0xff]
      %v3280 = vld [vmem:[%s9 + $0xc0] sm:$0xff]
      %v3281 = vld [vmem:[%s9 + $0xc8] sm:$0xff]
      %v3282 = vld [vmem:[%s9 + $0xd0] sm:$0xff]
      %v3283 = vld [vmem:[%s9 + $0xd8] sm:$0xff]
      %v3284 = vld [vmem:[%s9 + $0xe0] sm:$0xff]
      %v3285 = vld [vmem:[%s9 + $0xe8] sm:$0xff]
      %v3286 = vld [vmem:[%s9 + $0xf0] sm:$0xff]
      %v3287 = vld [vmem:[%s9 + $0xf8] sm:$0xff]
      %v3288 = vld [vmem:[%s10] sm:$0xff]
      %v3289 = vld [vmem:[%s10 + $0x8] sm:$0xff]
      %v3290 = vld [vmem:[%s10 + $0x10] sm:$0xff]
      %v3291 = vld [vmem:[%s10 + $0x18] sm:$0xff]
      %v3293 = vsel %vm894, %v2989, 0
      %v3296 = vsel %vm894, %v2990, 0
      %3298 = vmatprep.subr.mxu0 0.0
      %3299 = vmatpush1.msra.mxu0 0.0
      %3300 = vmatprep.subr.mxu0 0.0
      %3301 = vmatpush1.msra.mxu0 0.0
      %3302 = vmatprep.subr.mxu0 0.0
      %3303 = vmatpush1.msra.mxu0 0.0
      %3304 = vmatprep.subr.mxu0 0.0
      %3305 = vmatpush1.msra.mxu0 0.0
      %3306 = vmatprep.subr.mxu0 0.0
      %3307 = vmatpush1.msra.mxu0 0.0
      %3308 = vmatprep.subr.mxu0 0.0
      %3309 = vmatpush1.msra.mxu0 0.0
      %3310 = vmatprep.subr.mxu0 0.0
      %3311 = vmatpush1.msra.mxu0 0.0
      %3312 = vmatprep.subr.mxu0 0.0
      %3313 = vmatpush1.msra.mxu0 0.0
      %3314 = vmatprep.subr.mxu0 0.0
      %3315 = vmatpush1.msra.mxu0 0.0
      %3316 = vmatprep.subr.mxu0 0.0
      %3317 = vmatpush1.msra.mxu0 0.0
      %3318 = vmatprep.subr.mxu0 0.0
      %3319 = vmatpush1.msra.mxu0 0.0
      %3320 = vmatprep.subr.mxu0 0.0
      %3321 = vmatpush1.msra.mxu0 0.0
      %3322 = vmatprep.subr.mxu0 0.0
      %3323 = vmatpush1.msra.mxu0 0.0
      %3324 = vmatprep.subr.mxu0 0.0
      %3325 = vmatpush1.msra.mxu0 0.0
      %3326 = vmatprep.subr.mxu0 %v3291
      %3327 = vmatpush1.msra.mxu0 %v3290
      %3328 = vmatprep.subr.mxu0 %v3289
      %3329 = vmatpush1.msra.mxu0 %v3288
      %3330 = vmatprep.subr.mxu0 0.0
      %3331 = vmatpush2.msra.mxu0 0.0
      %3332 = vmatprep.subr.mxu0 0.0
      %3333 = vmatpush2.msra.mxu0 0.0
      %3334 = vmatprep.subr.mxu0 0.0
      %3335 = vmatpush2.msra.mxu0 0.0
      %3336 = vmatprep.subr.mxu0 0.0
      %3337 = vmatpush2.msra.mxu0 0.0
      %3338 = vmatprep.subr.mxu0 0.0
      %3339 = vmatpush2.msra.mxu0 0.0
      %3340 = vmatprep.subr.mxu0 0.0
      %3341 = vmatpush2.msra.mxu0 0.0
      %3342 = vmatprep.subr.mxu0 0.0
      %3343 = vmatpush2.msra.mxu0 0.0
      %3344 = vmatprep.subr.mxu0 0.0
      %3345 = vmatpush2.msra.mxu0 0.0
      %3346 = vmatprep.subr.mxu0 0.0
      %3347 = vmatpush2.msra.mxu0 0.0
      %3348 = vmatprep.subr.mxu0 0.0
      %3349 = vmatpush2.msra.mxu0 0.0
      %3350 = vmatprep.subr.mxu0 0.0
      %3351 = vmatpush2.msra.mxu0 0.0
      %3352 = vmatprep.subr.mxu0 0.0
      %3353 = vmatpush2.msra.mxu0 0.0
      %3354 = vmatprep.subr.mxu0 0.0
      %3355 = vmatpush2.msra.mxu0 0.0
      %3356 = vmatprep.subr.mxu0 0.0
      %3357 = vmatpush2.msra.mxu0 0.0
      %3358 = vmatprep.subr.mxu0 0.0
      %3359 = vmatpush2.msra.mxu0 0.0
      %3360 = vmatprep.subr.mxu0 0.0
      %3361 = vmatpush2.msra.mxu0 0.0
      %3362 = vmatprep.mubr.f32.mxu0 0.0
      %3363 = vmatmul.mubr.f32.gmra.mxu0 %v3293
      %v3364 = vpop.f32.mrf.mxu0
      %v3365 = vadd.f32 0.0, %v3364
      %v3366 = vpop.f32.mrf.mxu0
      %v3367 = vadd.f32 0.0, %v3366
      %3368 = vmatprep.mubr.f32.mxu0 0.0
      %3369 = vmatmul.mubr.f32.gmra.mxu0 %v3296
      %v3370 = vpop.f32.mrf.mxu0
      %v3371 = vadd.f32 0.0, %v3370
      %v3372 = vpop.f32.mrf.mxu0
      %v3373 = vadd.f32 0.0, %v3372
      %3374 = vdwg.mxu0
      %v3376 = vsel %vm894, %v3256, 0
      %v3379 = vsel %vm894, %v3257, 0
      %v3382 = vsel %vm894, %v3258, 0
      %v3385 = vsel %vm894, %v3259, 0
      %v3388 = vsel %vm894, %v3260, 0
      %v3391 = vsel %vm894, %v3261, 0
      %v3394 = vsel %vm894, %v3262, 0
      %v3397 = vsel %vm894, %v3263, 0
      %v3400 = vsel %vm894, %v3264, 0
      %v3403 = vsel %vm894, %v3265, 0
      %v3406 = vsel %vm894, %v3266, 0
      %v3409 = vsel %vm894, %v3267, 0
      %v3412 = vsel %vm894, %v3268, 0
      %v3415 = vsel %vm894, %v3269, 0
      %v3418 = vsel %vm894, %v3270, 0
      %v3421 = vsel %vm894, %v3271, 0
      %v3424 = vsel %vm894, %v3272, 0
      %v3427 = vsel %vm894, %v3273, 0
      %v3430 = vsel %vm894, %v3274, 0
      %v3433 = vsel %vm894, %v3275, 0
      %v3436 = vsel %vm894, %v3276, 0
      %v3439 = vsel %vm894, %v3277, 0
      %v3442 = vsel %vm894, %v3278, 0
      %v3445 = vsel %vm894, %v3279, 0
      %v3448 = vsel %vm894, %v3280, 0
      %v3451 = vsel %vm894, %v3281, 0
      %v3454 = vsel %vm894, %v3282, 0
      %v3457 = vsel %vm894, %v3283, 0
      %v3460 = vsel %vm894, %v3284, 0
      %v3463 = vsel %vm894, %v3285, 0
      %v3466 = vsel %vm894, %v3286, 0
      %v3469 = vsel %vm894, %v3287, 0
      %3471 = vmatprep.subr.mxu0 0.0
      %3472 = vmatpush1.msra.mxu0 0.0
      %3473 = vmatprep.subr.mxu0 0.0
      %3474 = vmatpush1.msra.mxu0 0.0
      %3475 = vmatprep.subr.mxu0 0.0
      %3476 = vmatpush1.msra.mxu0 0.0
      %3477 = vmatprep.subr.mxu0 0.0
      %3478 = vmatpush1.msra.mxu0 0.0
      %3479 = vmatprep.subr.mxu0 0.0
      %3480 = vmatpush1.msra.mxu0 0.0
      %3481 = vmatprep.subr.mxu0 0.0
      %3482 = vmatpush1.msra.mxu0 0.0
      %3483 = vmatprep.subr.mxu0 0.0
      %3484 = vmatpush1.msra.mxu0 0.0
      %3485 = vmatprep.subr.mxu0 0.0
      %3486 = vmatpush1.msra.mxu0 0.0
      %3487 = vmatprep.subr.mxu0 0.0
      %3488 = vmatpush1.msra.mxu0 0.0
      %3489 = vmatprep.subr.mxu0 0.0
      %3490 = vmatpush1.msra.mxu0 0.0
      %3491 = vmatprep.subr.mxu0 0.0
      %3492 = vmatpush1.msra.mxu0 0.0
      %3493 = vmatprep.subr.mxu0 0.0
      %3494 = vmatpush1.msra.mxu0 0.0
      %3495 = vmatprep.subr.mxu0 0.0
      %3496 = vmatpush1.msra.mxu0 0.0
      %3497 = vmatprep.subr.mxu0 0.0
      %3498 = vmatpush1.msra.mxu0 0.0
      %3499 = vmatprep.subr.mxu0 %v3373
      %3500 = vmatpush1.msra.mxu0 %v3371
      %3501 = vmatprep.subr.mxu0 %v3367
      %3502 = vmatpush1.msra.mxu0 %v3365
      %3503 = vmatprep.subr.mxu0 0.0
      %3504 = vmatpush2.msra.mxu0 0.0
      %3505 = vmatprep.subr.mxu0 0.0
      %3506 = vmatpush2.msra.mxu0 0.0
      %3507 = vmatprep.subr.mxu0 0.0
      %3508 = vmatpush2.msra.mxu0 0.0
      %3509 = vmatprep.subr.mxu0 0.0
      %3510 = vmatpush2.msra.mxu0 0.0
      %3511 = vmatprep.subr.mxu0 0.0
      %3512 = vmatpush2.msra.mxu0 0.0
      %3513 = vmatprep.subr.mxu0 0.0
      %3514 = vmatpush2.msra.mxu0 0.0
      %3515 = vmatprep.subr.mxu0 0.0
      %3516 = vmatpush2.msra.mxu0 0.0
      %3517 = vmatprep.subr.mxu0 0.0
      %3518 = vmatpush2.msra.mxu0 0.0
      %3519 = vmatprep.subr.mxu0 0.0
      %3520 = vmatpush2.msra.mxu0 0.0
      %3521 = vmatprep.subr.mxu0 0.0
      %3522 = vmatpush2.msra.mxu0 0.0
      %3523 = vmatprep.subr.mxu0 0.0
      %3524 = vmatpush2.msra.mxu0 0.0
      %3525 = vmatprep.subr.mxu0 0.0
      %3526 = vmatpush2.msra.mxu0 0.0
      %3527 = vmatprep.subr.mxu0 0.0
      %3528 = vmatpush2.msra.mxu0 0.0
      %3529 = vmatprep.subr.mxu0 0.0
      %3530 = vmatpush2.msra.mxu0 0.0
      %3531 = vmatprep.subr.mxu0 0.0
      %3532 = vmatpush2.msra.mxu0 0.0
      %3533 = vmatprep.subr.mxu0 0.0
      %3534 = vmatpush2.msra.mxu0 0.0
      %3535 = vmatprep.mubr.f32.mxu0 0.0
      %3536 = vmatmul.mubr.f32.gmra.mxu0 %v3376
      %v3537 = vpop.f32.mrf.mxu0
      %v3538 = vadd.f32 0.0, %v3537
      %v3539 = vpop.f32.mrf.mxu0
      %v3540 = vadd.f32 0.0, %v3539
      %3541 = vmatprep.mubr.f32.mxu0 0.0
      %3542 = vmatmul.mubr.f32.gmra.mxu0 %v3379
      %v3543 = vpop.f32.mrf.mxu0
      %v3544 = vadd.f32 0.0, %v3543
      %v3545 = vpop.f32.mrf.mxu0
      %v3546 = vadd.f32 0.0, %v3545
      %3547 = vmatprep.mubr.f32.mxu0 0.0
      %3548 = vmatmul.mubr.f32.gmra.mxu0 %v3382
      %v3549 = vpop.f32.mrf.mxu0
      %v3550 = vadd.f32 0.0, %v3549
      %v3551 = vpop.f32.mrf.mxu0
      %v3552 = vadd.f32 0.0, %v3551
      %3553 = vmatprep.mubr.f32.mxu0 0.0
      %3554 = vmatmul.mubr.f32.gmra.mxu0 %v3385
      %v3555 = vpop.f32.mrf.mxu0
      %v3556 = vadd.f32 0.0, %v3555
      %v3557 = vpop.f32.mrf.mxu0
      %v3558 = vadd.f32 0.0, %v3557
      %3559 = vmatprep.mubr.f32.mxu0 0.0
      %3560 = vmatmul.mubr.f32.gmra.mxu0 %v3388
      %v3561 = vpop.f32.mrf.mxu0
      %v3562 = vadd.f32 0.0, %v3561
      %v3563 = vpop.f32.mrf.mxu0
      %v3564 = vadd.f32 0.0, %v3563
      %3565 = vmatprep.mubr.f32.mxu0 0.0
      %3566 = vmatmul.mubr.f32.gmra.mxu0 %v3391
      %v3567 = vpop.f32.mrf.mxu0
      %v3568 = vadd.f32 0.0, %v3567
      %v3569 = vpop.f32.mrf.mxu0
      %v3570 = vadd.f32 0.0, %v3569
      %3571 = vmatprep.mubr.f32.mxu0 0.0
      %3572 = vmatmul.mubr.f32.gmra.mxu0 %v3394
      %v3573 = vpop.f32.mrf.mxu0
      %v3574 = vadd.f32 0.0, %v3573
      %v3575 = vpop.f32.mrf.mxu0
      %v3576 = vadd.f32 0.0, %v3575
      %3577 = vmatprep.mubr.f32.mxu0 0.0
      %3578 = vmatmul.mubr.f32.gmra.mxu0 %v3397
      %v3579 = vpop.f32.mrf.mxu0
      %v3580 = vadd.f32 0.0, %v3579
      %v3581 = vpop.f32.mrf.mxu0
      %v3582 = vadd.f32 0.0, %v3581
      %3583 = vmatprep.mubr.f32.mxu0 0.0
      %3584 = vmatmul.mubr.f32.gmra.mxu0 %v3400
      %v3585 = vpop.f32.mrf.mxu0
      %v3586 = vadd.f32 0.0, %v3585
      %v3587 = vpop.f32.mrf.mxu0
      %v3588 = vadd.f32 0.0, %v3587
      %3589 = vmatprep.mubr.f32.mxu0 0.0
      %3590 = vmatmul.mubr.f32.gmra.mxu0 %v3403
      %v3591 = vpop.f32.mrf.mxu0
      %v3592 = vadd.f32 0.0, %v3591
      %v3593 = vpop.f32.mrf.mxu0
      %v3594 = vadd.f32 0.0, %v3593
      %3595 = vmatprep.mubr.f32.mxu0 0.0
      %3596 = vmatmul.mubr.f32.gmra.mxu0 %v3406
      %v3597 = vpop.f32.mrf.mxu0
      %v3598 = vadd.f32 0.0, %v3597
      %v3599 = vpop.f32.mrf.mxu0
      %v3600 = vadd.f32 0.0, %v3599
      %3601 = vmatprep.mubr.f32.mxu0 0.0
      %3602 = vmatmul.mubr.f32.gmra.mxu0 %v3409
      %v3603 = vpop.f32.mrf.mxu0
      %v3604 = vadd.f32 0.0, %v3603
      %v3605 = vpop.f32.mrf.mxu0
      %v3606 = vadd.f32 0.0, %v3605
      %3607 = vmatprep.mubr.f32.mxu0 0.0
      %3608 = vmatmul.mubr.f32.gmra.mxu0 %v3412
      %v3609 = vpop.f32.mrf.mxu0
      %v3610 = vadd.f32 0.0, %v3609
      %v3611 = vpop.f32.mrf.mxu0
      %v3612 = vadd.f32 0.0, %v3611
      %3613 = vmatprep.mubr.f32.mxu0 0.0
      %3614 = vmatmul.mubr.f32.gmra.mxu0 %v3415
      %v3615 = vpop.f32.mrf.mxu0
      %v3616 = vadd.f32 0.0, %v3615
      %v3617 = vpop.f32.mrf.mxu0
      %v3618 = vadd.f32 0.0, %v3617
      %3619 = vmatprep.mubr.f32.mxu0 0.0
      %3620 = vmatmul.mubr.f32.gmra.mxu0 %v3418
      %v3621 = vpop.f32.mrf.mxu0
      %v3622 = vadd.f32 0.0, %v3621
      %v3623 = vpop.f32.mrf.mxu0
      %v3624 = vadd.f32 0.0, %v3623
      %3625 = vmatprep.mubr.f32.mxu0 0.0
      %3626 = vmatmul.mubr.f32.gmra.mxu0 %v3421
      %v3627 = vpop.f32.mrf.mxu0
      %v3628 = vadd.f32 0.0, %v3627
      %v3629 = vpop.f32.mrf.mxu0
      %v3630 = vadd.f32 0.0, %v3629
      %3631 = vmatprep.mubr.f32.mxu0 0.0
      %3632 = vmatmul.mubr.f32.gmra.mxu0 %v3424
      %v3633 = vpop.f32.mrf.mxu0
      %v3634 = vadd.f32 0.0, %v3633
      %v3635 = vpop.f32.mrf.mxu0
      %v3636 = vadd.f32 0.0, %v3635
      %3637 = vmatprep.mubr.f32.mxu0 0.0
      %3638 = vmatmul.mubr.f32.gmra.mxu0 %v3427
      %v3639 = vpop.f32.mrf.mxu0
      %v3640 = vadd.f32 0.0, %v3639
      %v3641 = vpop.f32.mrf.mxu0
      %v3642 = vadd.f32 0.0, %v3641
      %3643 = vmatprep.mubr.f32.mxu0 0.0
      %3644 = vmatmul.mubr.f32.gmra.mxu0 %v3430
      %v3645 = vpop.f32.mrf.mxu0
      %v3646 = vadd.f32 0.0, %v3645
      %v3647 = vpop.f32.mrf.mxu0
      %v3648 = vadd.f32 0.0, %v3647
      %3649 = vmatprep.mubr.f32.mxu0 0.0
      %3650 = vmatmul.mubr.f32.gmra.mxu0 %v3433
      %v3651 = vpop.f32.mrf.mxu0
      %v3652 = vadd.f32 0.0, %v3651
      %v3653 = vpop.f32.mrf.mxu0
      %v3654 = vadd.f32 0.0, %v3653
      %3655 = vmatprep.mubr.f32.mxu0 0.0
      %3656 = vmatmul.mubr.f32.gmra.mxu0 %v3436
      %v3657 = vpop.f32.mrf.mxu0
      %v3658 = vadd.f32 0.0, %v3657
      %v3659 = vpop.f32.mrf.mxu0
      %v3660 = vadd.f32 0.0, %v3659
      %3661 = vmatprep.mubr.f32.mxu0 0.0
      %3662 = vmatmul.mubr.f32.gmra.mxu0 %v3439
      %v3663 = vpop.f32.mrf.mxu0
      %v3664 = vadd.f32 0.0, %v3663
      %v3665 = vpop.f32.mrf.mxu0
      %v3666 = vadd.f32 0.0, %v3665
      %3667 = vmatprep.mubr.f32.mxu0 0.0
      %3668 = vmatmul.mubr.f32.gmra.mxu0 %v3442
      %v3669 = vpop.f32.mrf.mxu0
      %v3670 = vadd.f32 0.0, %v3669
      %v3671 = vpop.f32.mrf.mxu0
      %v3672 = vadd.f32 0.0, %v3671
      %3673 = vmatprep.mubr.f32.mxu0 0.0
      %3674 = vmatmul.mubr.f32.gmra.mxu0 %v3445
      %v3675 = vpop.f32.mrf.mxu0
      %v3676 = vadd.f32 0.0, %v3675
      %v3677 = vpop.f32.mrf.mxu0
      %v3678 = vadd.f32 0.0, %v3677
      %3679 = vmatprep.mubr.f32.mxu0 0.0
      %3680 = vmatmul.mubr.f32.gmra.mxu0 %v3448
      %v3681 = vpop.f32.mrf.mxu0
      %v3682 = vadd.f32 0.0, %v3681
      %v3683 = vpop.f32.mrf.mxu0
      %v3684 = vadd.f32 0.0, %v3683
      %3685 = vmatprep.mubr.f32.mxu0 0.0
      %3686 = vmatmul.mubr.f32.gmra.mxu0 %v3451
      %v3687 = vpop.f32.mrf.mxu0
      %v3688 = vadd.f32 0.0, %v3687
      %v3689 = vpop.f32.mrf.mxu0
      %v3690 = vadd.f32 0.0, %v3689
      %3691 = vmatprep.mubr.f32.mxu0 0.0
      %3692 = vmatmul.mubr.f32.gmra.mxu0 %v3454
      %v3693 = vpop.f32.mrf.mxu0
      %v3694 = vadd.f32 0.0, %v3693
      %v3695 = vpop.f32.mrf.mxu0
      %v3696 = vadd.f32 0.0, %v3695
      %3697 = vmatprep.mubr.f32.mxu0 0.0
      %3698 = vmatmul.mubr.f32.gmra.mxu0 %v3457
      %v3699 = vpop.f32.mrf.mxu0
      %v3700 = vadd.f32 0.0, %v3699
      %v3701 = vpop.f32.mrf.mxu0
      %v3702 = vadd.f32 0.0, %v3701
      %3703 = vmatprep.mubr.f32.mxu0 0.0
      %3704 = vmatmul.mubr.f32.gmra.mxu0 %v3460
      %v3705 = vpop.f32.mrf.mxu0
      %v3706 = vadd.f32 0.0, %v3705
      %v3707 = vpop.f32.mrf.mxu0
      %v3708 = vadd.f32 0.0, %v3707
      %3709 = vmatprep.mubr.f32.mxu0 0.0
      %3710 = vmatmul.mubr.f32.gmra.mxu0 %v3463
      %v3711 = vpop.f32.mrf.mxu0
      %v3712 = vadd.f32 0.0, %v3711
      %v3713 = vpop.f32.mrf.mxu0
      %v3714 = vadd.f32 0.0, %v3713
      %3715 = vmatprep.mubr.f32.mxu0 0.0
      %3716 = vmatmul.mubr.f32.gmra.mxu0 %v3466
      %v3717 = vpop.f32.mrf.mxu0
      %v3718 = vadd.f32 0.0, %v3717
      %v3719 = vpop.f32.mrf.mxu0
      %v3720 = vadd.f32 0.0, %v3719
      %3721 = vmatprep.mubr.f32.mxu0 0.0
      %3722 = vmatmul.mubr.f32.gmra.mxu0 %v3469
      %v3723 = vpop.f32.mrf.mxu0
      %v3724 = vadd.f32 0.0, %v3723
      %v3725 = vpop.f32.mrf.mxu0
      %v3726 = vadd.f32 0.0, %v3725
      %3727 = vdwg.mxu0
      %v3728 = vld [vmem:[%s13] sm:$0xff]
      %v3729 = vld [vmem:[%s13 + $0x8] sm:$0xff]
      %v3730 = vld [vmem:[%s13 + $0x10] sm:$0xff]
      %v3731 = vld [vmem:[%s13 + $0x18] sm:$0xff]
      %v3732 = vld [vmem:[%s13 + $0x20] sm:$0xff]
      %v3733 = vld [vmem:[%s13 + $0x28] sm:$0xff]
      %v3734 = vld [vmem:[%s13 + $0x30] sm:$0xff]
      %v3735 = vld [vmem:[%s13 + $0x38] sm:$0xff]
      %v3736 = vld [vmem:[%s13 + $0x40] sm:$0xff]
      %v3737 = vld [vmem:[%s13 + $0x48] sm:$0xff]
      %v3738 = vld [vmem:[%s13 + $0x50] sm:$0xff]
      %v3739 = vld [vmem:[%s13 + $0x58] sm:$0xff]
      %v3740 = vld [vmem:[%s13 + $0x60] sm:$0xff]
      %v3741 = vld [vmem:[%s13 + $0x68] sm:$0xff]
      %v3742 = vld [vmem:[%s13 + $0x70] sm:$0xff]
      %v3743 = vld [vmem:[%s13 + $0x78] sm:$0xff]
      %v3744 = vld [vmem:[%s13 + $0x80] sm:$0xff]
      %v3745 = vld [vmem:[%s13 + $0x88] sm:$0xff]
      %v3746 = vld [vmem:[%s13 + $0x90] sm:$0xff]
      %v3747 = vld [vmem:[%s13 + $0x98] sm:$0xff]
      %v3748 = vld [vmem:[%s13 + $0xa0] sm:$0xff]
      %v3749 = vld [vmem:[%s13 + $0xa8] sm:$0xff]
      %v3750 = vld [vmem:[%s13 + $0xb0] sm:$0xff]
      %v3751 = vld [vmem:[%s13 + $0xb8] sm:$0xff]
      %v3752 = vld [vmem:[%s13 + $0xc0] sm:$0xff]
      %v3753 = vld [vmem:[%s13 + $0xc8] sm:$0xff]
      %v3754 = vld [vmem:[%s13 + $0xd0] sm:$0xff]
      %v3755 = vld [vmem:[%s13 + $0xd8] sm:$0xff]
      %v3756 = vld [vmem:[%s13 + $0xe0] sm:$0xff]
      %v3757 = vld [vmem:[%s13 + $0xe8] sm:$0xff]
      %v3758 = vld [vmem:[%s13 + $0xf0] sm:$0xff]
      %v3759 = vld [vmem:[%s13 + $0xf8] sm:$0xff]
      %v3760 = vld [vmem:[%s13 + $0x100] sm:$0xff]
      %v3761 = vld [vmem:[%s13 + $0x108] sm:$0xff]
      %v3762 = vld [vmem:[%s13 + $0x110] sm:$0xff]
      %v3763 = vld [vmem:[%s13 + $0x118] sm:$0xff]
      %v3764 = vld [vmem:[%s13 + $0x120] sm:$0xff]
      %v3765 = vld [vmem:[%s13 + $0x128] sm:$0xff]
      %v3766 = vld [vmem:[%s13 + $0x130] sm:$0xff]
      %v3767 = vld [vmem:[%s13 + $0x138] sm:$0xff]
      %v3768 = vld [vmem:[%s13 + $0x140] sm:$0xff]
      %v3769 = vld [vmem:[%s13 + $0x148] sm:$0xff]
      %v3770 = vld [vmem:[%s13 + $0x150] sm:$0xff]
      %v3771 = vld [vmem:[%s13 + $0x158] sm:$0xff]
      %v3772 = vld [vmem:[%s13 + $0x160] sm:$0xff]
      %v3773 = vld [vmem:[%s13 + $0x168] sm:$0xff]
      %v3774 = vld [vmem:[%s13 + $0x170] sm:$0xff]
      %v3775 = vld [vmem:[%s13 + $0x178] sm:$0xff]
      %v3776 = vld [vmem:[%s13 + $0x180] sm:$0xff]
      %v3777 = vld [vmem:[%s13 + $0x188] sm:$0xff]
      %v3778 = vld [vmem:[%s13 + $0x190] sm:$0xff]
      %v3779 = vld [vmem:[%s13 + $0x198] sm:$0xff]
      %v3780 = vld [vmem:[%s13 + $0x1a0] sm:$0xff]
      %v3781 = vld [vmem:[%s13 + $0x1a8] sm:$0xff]
      %v3782 = vld [vmem:[%s13 + $0x1b0] sm:$0xff]
      %v3783 = vld [vmem:[%s13 + $0x1b8] sm:$0xff]
      %v3784 = vld [vmem:[%s13 + $0x1c0] sm:$0xff]
      %v3785 = vld [vmem:[%s13 + $0x1c8] sm:$0xff]
      %v3786 = vld [vmem:[%s13 + $0x1d0] sm:$0xff]
      %v3787 = vld [vmem:[%s13 + $0x1d8] sm:$0xff]
      %v3788 = vld [vmem:[%s13 + $0x1e0] sm:$0xff]
      %v3789 = vld [vmem:[%s13 + $0x1e8] sm:$0xff]
      %v3790 = vld [vmem:[%s13 + $0x1f0] sm:$0xff]
      %v3791 = vld [vmem:[%s13 + $0x1f8] sm:$0xff]
      %v3792 = vmul.f32 %v3538, %v3728
      %v3793 = vmul.f32 %v3540, %v3729
      %v3794 = vmul.f32 %v3544, %v3730
      %v3795 = vmul.f32 %v3546, %v3731
      %v3796 = vmul.f32 %v3550, %v3732
      %v3797 = vmul.f32 %v3552, %v3733
      %v3798 = vmul.f32 %v3556, %v3734
      %v3799 = vmul.f32 %v3558, %v3735
      %v3800 = vmul.f32 %v3562, %v3736
      %v3801 = vmul.f32 %v3564, %v3737
      %v3802 = vmul.f32 %v3568, %v3738
      %v3803 = vmul.f32 %v3570, %v3739
      %v3804 = vmul.f32 %v3574, %v3740
      %v3805 = vmul.f32 %v3576, %v3741
      %v3806 = vmul.f32 %v3580, %v3742
      %v3807 = vmul.f32 %v3582, %v3743
      %v3808 = vmul.f32 %v3586, %v3744
      %v3809 = vmul.f32 %v3588, %v3745
      %v3810 = vmul.f32 %v3592, %v3746
      %v3811 = vmul.f32 %v3594, %v3747
      %v3812 = vmul.f32 %v3598, %v3748
      %v3813 = vmul.f32 %v3600, %v3749
      %v3814 = vmul.f32 %v3604, %v3750
      %v3815 = vmul.f32 %v3606, %v3751
      %v3816 = vmul.f32 %v3610, %v3752
      %v3817 = vmul.f32 %v3612, %v3753
      %v3818 = vmul.f32 %v3616, %v3754
      %v3819 = vmul.f32 %v3618, %v3755
      %v3820 = vmul.f32 %v3622, %v3756
      %v3821 = vmul.f32 %v3624, %v3757
      %v3822 = vmul.f32 %v3628, %v3758
      %v3823 = vmul.f32 %v3630, %v3759
      %v3824 = vmul.f32 %v3634, %v3760
      %v3825 = vmul.f32 %v3636, %v3761
      %v3826 = vmul.f32 %v3640, %v3762
      %v3827 = vmul.f32 %v3642, %v3763
      %v3828 = vmul.f32 %v3646, %v3764
      %v3829 = vmul.f32 %v3648, %v3765
      %v3830 = vmul.f32 %v3652, %v3766
      %v3831 = vmul.f32 %v3654, %v3767
      %v3832 = vmul.f32 %v3658, %v3768
      %v3833 = vmul.f32 %v3660, %v3769
      %v3834 = vmul.f32 %v3664, %v3770
      %v3835 = vmul.f32 %v3666, %v3771
      %v3836 = vmul.f32 %v3670, %v3772
      %v3837 = vmul.f32 %v3672, %v3773
      %v3838 = vmul.f32 %v3676, %v3774
      %v3839 = vmul.f32 %v3678, %v3775
      %v3840 = vmul.f32 %v3682, %v3776
      %v3841 = vmul.f32 %v3684, %v3777
      %v3842 = vmul.f32 %v3688, %v3778
      %v3843 = vmul.f32 %v3690, %v3779
      %v3844 = vmul.f32 %v3694, %v3780
      %v3845 = vmul.f32 %v3696, %v3781
      %v3846 = vmul.f32 %v3700, %v3782
      %v3847 = vmul.f32 %v3702, %v3783
      %v3848 = vmul.f32 %v3706, %v3784
      %v3849 = vmul.f32 %v3708, %v3785
      %v3850 = vmul.f32 %v3712, %v3786
      %v3851 = vmul.f32 %v3714, %v3787
      %v3852 = vmul.f32 %v3718, %v3788
      %v3853 = vmul.f32 %v3720, %v3789
      %v3854 = vmul.f32 %v3724, %v3790
      %v3855 = vmul.f32 %v3726, %v3791
      %3856 = vst [vmem:[#allocation2] sm:$0xff] %v3792
      %3857 = vst [vmem:[#allocation2 + $0x8] sm:$0xff] %v3793
      %3858 = vst [vmem:[#allocation2 + $0x10] sm:$0xff] %v3794
      %3859 = vst [vmem:[#allocation2 + $0x18] sm:$0xff] %v3795
      %3860 = vst [vmem:[#allocation2 + $0x20] sm:$0xff] %v3796
      %3861 = vst [vmem:[#allocation2 + $0x28] sm:$0xff] %v3797
      %3862 = vst [vmem:[#allocation2 + $0x30] sm:$0xff] %v3798
      %3863 = vst [vmem:[#allocation2 + $0x38] sm:$0xff] %v3799
      %3864 = vst [vmem:[#allocation2 + $0x40] sm:$0xff] %v3800
      %3865 = vst [vmem:[#allocation2 + $0x48] sm:$0xff] %v3801
      %3866 = vst [vmem:[#allocation2 + $0x50] sm:$0xff] %v3802
      %3867 = vst [vmem:[#allocation2 + $0x58] sm:$0xff] %v3803
      %3868 = vst [vmem:[#allocation2 + $0x60] sm:$0xff] %v3804
      %3869 = vst [vmem:[#allocation2 + $0x68] sm:$0xff] %v3805
      %3870 = vst [vmem:[#allocation2 + $0x70] sm:$0xff] %v3806
      %3871 = vst [vmem:[#allocation2 + $0x78] sm:$0xff] %v3807
      %3872 = vst [vmem:[#allocation2 + $0x80] sm:$0xff] %v3808
      %3873 = vst [vmem:[#allocation2 + $0x88] sm:$0xff] %v3809
      %3874 = vst [vmem:[#allocation2 + $0x90] sm:$0xff] %v3810
      %3875 = vst [vmem:[#allocation2 + $0x98] sm:$0xff] %v3811
      %3876 = vst [vmem:[#allocation2 + $0xa0] sm:$0xff] %v3812
      %3877 = vst [vmem:[#allocation2 + $0xa8] sm:$0xff] %v3813
      %3878 = vst [vmem:[#allocation2 + $0xb0] sm:$0xff] %v3814
      %3879 = vst [vmem:[#allocation2 + $0xb8] sm:$0xff] %v3815
      %3880 = vst [vmem:[#allocation2 + $0xc0] sm:$0xff] %v3816
      %3881 = vst [vmem:[#allocation2 + $0xc8] sm:$0xff] %v3817
      %3882 = vst [vmem:[#allocation2 + $0xd0] sm:$0xff] %v3818
      %3883 = vst [vmem:[#allocation2 + $0xd8] sm:$0xff] %v3819
      %3884 = vst [vmem:[#allocation2 + $0xe0] sm:$0xff] %v3820
      %3885 = vst [vmem:[#allocation2 + $0xe8] sm:$0xff] %v3821
      %3886 = vst [vmem:[#allocation2 + $0xf0] sm:$0xff] %v3822
      %3887 = vst [vmem:[#allocation2 + $0xf8] sm:$0xff] %v3823
      %3888 = vst [vmem:[#allocation2 + $0x100] sm:$0xff] %v3824
      %3889 = vst [vmem:[#allocation2 + $0x108] sm:$0xff] %v3825
      %3890 = vst [vmem:[#allocation2 + $0x110] sm:$0xff] %v3826
      %3891 = vst [vmem:[#allocation2 + $0x118] sm:$0xff] %v3827
      %3892 = vst [vmem:[#allocation2 + $0x120] sm:$0xff] %v3828
      %3893 = vst [vmem:[#allocation2 + $0x128] sm:$0xff] %v3829
      %3894 = vst [vmem:[#allocation2 + $0x130] sm:$0xff] %v3830
      %3895 = vst [vmem:[#allocation2 + $0x138] sm:$0xff] %v3831
      %3896 = vst [vmem:[#allocation2 + $0x140] sm:$0xff] %v3832
      %3897 = vst [vmem:[#allocation2 + $0x148] sm:$0xff] %v3833
      %3898 = vst [vmem:[#allocation2 + $0x150] sm:$0xff] %v3834
      %3899 = vst [vmem:[#allocation2 + $0x158] sm:$0xff] %v3835
      %3900 = vst [vmem:[#allocation2 + $0x160] sm:$0xff] %v3836
      %3901 = vst [vmem:[#allocation2 + $0x168] sm:$0xff] %v3837
      %3902 = vst [vmem:[#allocation2 + $0x170] sm:$0xff] %v3838
      %3903 = vst [vmem:[#allocation2 + $0x178] sm:$0xff] %v3839
      %3904 = vst [vmem:[#allocation2 + $0x180] sm:$0xff] %v3840
      %3905 = vst [vmem:[#allocation2 + $0x188] sm:$0xff] %v3841
      %3906 = vst [vmem:[#allocation2 + $0x190] sm:$0xff] %v3842
      %3907 = vst [vmem:[#allocation2 + $0x198] sm:$0xff] %v3843
      %3908 = vst [vmem:[#allocation2 + $0x1a0] sm:$0xff] %v3844
      %3909 = vst [vmem:[#allocation2 + $0x1a8] sm:$0xff] %v3845
      %3910 = vst [vmem:[#allocation2 + $0x1b0] sm:$0xff] %v3846
      %3911 = vst [vmem:[#allocation2 + $0x1b8] sm:$0xff] %v3847
      %3912 = vst [vmem:[#allocation2 + $0x1c0] sm:$0xff] %v3848
      %3913 = vst [vmem:[#allocation2 + $0x1c8] sm:$0xff] %v3849
      %3914 = vst [vmem:[#allocation2 + $0x1d0] sm:$0xff] %v3850
      %3915 = vst [vmem:[#allocation2 + $0x1d8] sm:$0xff] %v3851
      %3916 = vst [vmem:[#allocation2 + $0x1e0] sm:$0xff] %v3852
      %3917 = vst [vmem:[#allocation2 + $0x1e8] sm:$0xff] %v3853
      %3918 = vst [vmem:[#allocation2 + $0x1f0] sm:$0xff] %v3854
      %3919 = vst [vmem:[#allocation2 + $0x1f8] sm:$0xff] %v3855
      %v3920 = vld [vmem:[%s11] sm:$0xff]
      %v3921 = vld [vmem:[%s11 + $0x8] sm:$0xff]
      %v3922 = vld [vmem:[%s11 + $0x10] sm:$0xff]
      %v3923 = vld [vmem:[%s11 + $0x18] sm:$0xff]
      %v3924 = vld [vmem:[%s11 + $0x20] sm:$0xff]
      %v3925 = vld [vmem:[%s11 + $0x28] sm:$0xff]
      %v3926 = vld [vmem:[%s11 + $0x30] sm:$0xff]
      %v3927 = vld [vmem:[%s11 + $0x38] sm:$0xff]
      %v3928 = vld [vmem:[%s11 + $0x40] sm:$0xff]
      %v3929 = vld [vmem:[%s11 + $0x48] sm:$0xff]
      %v3930 = vld [vmem:[%s11 + $0x50] sm:$0xff]
      %v3931 = vld [vmem:[%s11 + $0x58] sm:$0xff]
      %v3932 = vld [vmem:[%s11 + $0x60] sm:$0xff]
      %v3933 = vld [vmem:[%s11 + $0x68] sm:$0xff]
      %v3934 = vld [vmem:[%s11 + $0x70] sm:$0xff]
      %v3935 = vld [vmem:[%s11 + $0x78] sm:$0xff]
      %v3936 = vld [vmem:[%s11 + $0x80] sm:$0xff]
      %v3937 = vld [vmem:[%s11 + $0x88] sm:$0xff]
      %v3938 = vld [vmem:[%s11 + $0x90] sm:$0xff]
      %v3939 = vld [vmem:[%s11 + $0x98] sm:$0xff]
      %v3940 = vld [vmem:[%s11 + $0xa0] sm:$0xff]
      %v3941 = vld [vmem:[%s11 + $0xa8] sm:$0xff]
      %v3942 = vld [vmem:[%s11 + $0xb0] sm:$0xff]
      %v3943 = vld [vmem:[%s11 + $0xb8] sm:$0xff]
      %v3944 = vld [vmem:[%s11 + $0xc0] sm:$0xff]
      %v3945 = vld [vmem:[%s11 + $0xc8] sm:$0xff]
      %v3946 = vld [vmem:[%s11 + $0xd0] sm:$0xff]
      %v3947 = vld [vmem:[%s11 + $0xd8] sm:$0xff]
      %v3948 = vld [vmem:[%s11 + $0xe0] sm:$0xff]
      %v3949 = vld [vmem:[%s11 + $0xe8] sm:$0xff]
      %v3950 = vld [vmem:[%s11 + $0xf0] sm:$0xff]
      %v3951 = vld [vmem:[%s11 + $0xf8] sm:$0xff]
      %v3952 = vld [vmem:[%s12] sm:$0xff]
      %v3953 = vld [vmem:[%s12 + $0x8] sm:$0xff]
      %v3954 = vld [vmem:[%s12 + $0x10] sm:$0xff]
      %v3955 = vld [vmem:[%s12 + $0x18] sm:$0xff]
      %v3957 = vsel %vm894, %v2986, 0
      %v3960 = vsel %vm894, %v2987, 0
      %3962 = vmatprep.subr.mxu0 0.0
      %3963 = vmatpush1.msra.mxu0 0.0
      %3964 = vmatprep.subr.mxu0 0.0
      %3965 = vmatpush1.msra.mxu0 0.0
      %3966 = vmatprep.subr.mxu0 0.0
      %3967 = vmatpush1.msra.mxu0 0.0
      %3968 = vmatprep.subr.mxu0 0.0
      %3969 = vmatpush1.msra.mxu0 0.0
      %3970 = vmatprep.subr.mxu0 0.0
      %3971 = vmatpush1.msra.mxu0 0.0
      %3972 = vmatprep.subr.mxu0 0.0
      %3973 = vmatpush1.msra.mxu0 0.0
      %3974 = vmatprep.subr.mxu0 0.0
      %3975 = vmatpush1.msra.mxu0 0.0
      %3976 = vmatprep.subr.mxu0 0.0
      %3977 = vmatpush1.msra.mxu0 0.0
      %3978 = vmatprep.subr.mxu0 0.0
      %3979 = vmatpush1.msra.mxu0 0.0
      %3980 = vmatprep.subr.mxu0 0.0
      %3981 = vmatpush1.msra.mxu0 0.0
      %3982 = vmatprep.subr.mxu0 0.0
      %3983 = vmatpush1.msra.mxu0 0.0
      %3984 = vmatprep.subr.mxu0 0.0
      %3985 = vmatpush1.msra.mxu0 0.0
      %3986 = vmatprep.subr.mxu0 0.0
      %3987 = vmatpush1.msra.mxu0 0.0
      %3988 = vmatprep.subr.mxu0 0.0
      %3989 = vmatpush1.msra.mxu0 0.0
      %3990 = vmatprep.subr.mxu0 %v3955
      %3991 = vmatpush1.msra.mxu0 %v3954
      %3992 = vmatprep.subr.mxu0 %v3953
      %3993 = vmatpush1.msra.mxu0 %v3952
      %3994 = vmatprep.subr.mxu0 0.0
      %3995 = vmatpush2.msra.mxu0 0.0
      %3996 = vmatprep.subr.mxu0 0.0
      %3997 = vmatpush2.msra.mxu0 0.0
      %3998 = vmatprep.subr.mxu0 0.0
      %3999 = vmatpush2.msra.mxu0 0.0
      %4000 = vmatprep.subr.mxu0 0.0
      %4001 = vmatpush2.msra.mxu0 0.0
      %4002 = vmatprep.subr.mxu0 0.0
      %4003 = vmatpush2.msra.mxu0 0.0
      %4004 = vmatprep.subr.mxu0 0.0
      %4005 = vmatpush2.msra.mxu0 0.0
      %4006 = vmatprep.subr.mxu0 0.0
      %4007 = vmatpush2.msra.mxu0 0.0
      %4008 = vmatprep.subr.mxu0 0.0
      %4009 = vmatpush2.msra.mxu0 0.0
      %4010 = vmatprep.subr.mxu0 0.0
      %4011 = vmatpush2.msra.mxu0 0.0
      %4012 = vmatprep.subr.mxu0 0.0
      %4013 = vmatpush2.msra.mxu0 0.0
      %4014 = vmatprep.subr.mxu0 0.0
      %4015 = vmatpush2.msra.mxu0 0.0
      %4016 = vmatprep.subr.mxu0 0.0
      %4017 = vmatpush2.msra.mxu0 0.0
      %4018 = vmatprep.subr.mxu0 0.0
      %4019 = vmatpush2.msra.mxu0 0.0
      %4020 = vmatprep.subr.mxu0 0.0
      %4021 = vmatpush2.msra.mxu0 0.0
      %4022 = vmatprep.subr.mxu0 0.0
      %4023 = vmatpush2.msra.mxu0 0.0
      %4024 = vmatprep.subr.mxu0 0.0
      %4025 = vmatpush2.msra.mxu0 0.0
      %4026 = vmatprep.mubr.f32.mxu0 0.0
      %4027 = vmatmul.mubr.f32.gmra.mxu0 %v3957
      %v4028 = vpop.f32.mrf.mxu0
      %v4029 = vadd.f32 0.0, %v4028
      %v4030 = vpop.f32.mrf.mxu0
      %v4031 = vadd.f32 0.0, %v4030
      %4032 = vmatprep.mubr.f32.mxu0 0.0
      %4033 = vmatmul.mubr.f32.gmra.mxu0 %v3960
      %v4034 = vpop.f32.mrf.mxu0
      %v4035 = vadd.f32 0.0, %v4034
      %v4036 = vpop.f32.mrf.mxu0
      %v4037 = vadd.f32 0.0, %v4036
      %4038 = vdwg.mxu0
      %v4040 = vsel %vm894, %v3920, 0
      %v4043 = vsel %vm894, %v3921, 0
      %v4046 = vsel %vm894, %v3922, 0
      %v4049 = vsel %vm894, %v3923, 0
      %v4052 = vsel %vm894, %v3924, 0
      %v4055 = vsel %vm894, %v3925, 0
      %v4058 = vsel %vm894, %v3926, 0
      %v4061 = vsel %vm894, %v3927, 0
      %v4064 = vsel %vm894, %v3928, 0
      %v4067 = vsel %vm894, %v3929, 0
      %v4070 = vsel %vm894, %v3930, 0
      %v4073 = vsel %vm894, %v3931, 0
      %v4076 = vsel %vm894, %v3932, 0
      %v4079 = vsel %vm894, %v3933, 0
      %v4082 = vsel %vm894, %v3934, 0
      %v4085 = vsel %vm894, %v3935, 0
      %v4088 = vsel %vm894, %v3936, 0
      %v4091 = vsel %vm894, %v3937, 0
      %v4094 = vsel %vm894, %v3938, 0
      %v4097 = vsel %vm894, %v3939, 0
      %v4100 = vsel %vm894, %v3940, 0
      %v4103 = vsel %vm894, %v3941, 0
      %v4106 = vsel %vm894, %v3942, 0
      %v4109 = vsel %vm894, %v3943, 0
      %v4112 = vsel %vm894, %v3944, 0
      %v4115 = vsel %vm894, %v3945, 0
      %v4118 = vsel %vm894, %v3946, 0
      %v4121 = vsel %vm894, %v3947, 0
      %v4124 = vsel %vm894, %v3948, 0
      %v4127 = vsel %vm894, %v3949, 0
      %v4130 = vsel %vm894, %v3950, 0
      %v4133 = vsel %vm894, %v3951, 0
      %4135 = vmatprep.subr.mxu0 0.0
      %4136 = vmatpush1.msra.mxu0 0.0
      %4137 = vmatprep.subr.mxu0 0.0
      %4138 = vmatpush1.msra.mxu0 0.0
      %4139 = vmatprep.subr.mxu0 0.0
      %4140 = vmatpush1.msra.mxu0 0.0
      %4141 = vmatprep.subr.mxu0 0.0
      %4142 = vmatpush1.msra.mxu0 0.0
      %4143 = vmatprep.subr.mxu0 0.0
      %4144 = vmatpush1.msra.mxu0 0.0
      %4145 = vmatprep.subr.mxu0 0.0
      %4146 = vmatpush1.msra.mxu0 0.0
      %4147 = vmatprep.subr.mxu0 0.0
      %4148 = vmatpush1.msra.mxu0 0.0
      %4149 = vmatprep.subr.mxu0 0.0
      %4150 = vmatpush1.msra.mxu0 0.0
      %4151 = vmatprep.subr.mxu0 0.0
      %4152 = vmatpush1.msra.mxu0 0.0
      %4153 = vmatprep.subr.mxu0 0.0
      %4154 = vmatpush1.msra.mxu0 0.0
      %4155 = vmatprep.subr.mxu0 0.0
      %4156 = vmatpush1.msra.mxu0 0.0
      %4157 = vmatprep.subr.mxu0 0.0
      %4158 = vmatpush1.msra.mxu0 0.0
      %4159 = vmatprep.subr.mxu0 0.0
      %4160 = vmatpush1.msra.mxu0 0.0
      %4161 = vmatprep.subr.mxu0 0.0
      %4162 = vmatpush1.msra.mxu0 0.0
      %4163 = vmatprep.subr.mxu0 %v4037
      %4164 = vmatpush1.msra.mxu0 %v4035
      %4165 = vmatprep.subr.mxu0 %v4031
      %4166 = vmatpush1.msra.mxu0 %v4029
      %4167 = vmatprep.subr.mxu0 0.0
      %4168 = vmatpush2.msra.mxu0 0.0
      %4169 = vmatprep.subr.mxu0 0.0
      %4170 = vmatpush2.msra.mxu0 0.0
      %4171 = vmatprep.subr.mxu0 0.0
      %4172 = vmatpush2.msra.mxu0 0.0
      %4173 = vmatprep.subr.mxu0 0.0
      %4174 = vmatpush2.msra.mxu0 0.0
      %4175 = vmatprep.subr.mxu0 0.0
      %4176 = vmatpush2.msra.mxu0 0.0
      %4177 = vmatprep.subr.mxu0 0.0
      %4178 = vmatpush2.msra.mxu0 0.0
      %4179 = vmatprep.subr.mxu0 0.0
      %4180 = vmatpush2.msra.mxu0 0.0
      %4181 = vmatprep.subr.mxu0 0.0
      %4182 = vmatpush2.msra.mxu0 0.0
      %4183 = vmatprep.subr.mxu0 0.0
      %4184 = vmatpush2.msra.mxu0 0.0
      %4185 = vmatprep.subr.mxu0 0.0
      %4186 = vmatpush2.msra.mxu0 0.0
      %4187 = vmatprep.subr.mxu0 0.0
      %4188 = vmatpush2.msra.mxu0 0.0
      %4189 = vmatprep.subr.mxu0 0.0
      %4190 = vmatpush2.msra.mxu0 0.0
      %4191 = vmatprep.subr.mxu0 0.0
      %4192 = vmatpush2.msra.mxu0 0.0
      %4193 = vmatprep.subr.mxu0 0.0
      %4194 = vmatpush2.msra.mxu0 0.0
      %4195 = vmatprep.subr.mxu0 0.0
      %4196 = vmatpush2.msra.mxu0 0.0
      %4197 = vmatprep.subr.mxu0 0.0
      %4198 = vmatpush2.msra.mxu0 0.0
      %4199 = vmatprep.mubr.f32.mxu0 0.0
      %4200 = vmatmul.mubr.f32.gmra.mxu0 %v4040
      %v4201 = vpop.f32.mrf.mxu0
      %v4202 = vadd.f32 0.0, %v4201
      %v4203 = vpop.f32.mrf.mxu0
      %v4204 = vadd.f32 0.0, %v4203
      %4205 = vmatprep.mubr.f32.mxu0 0.0
      %4206 = vmatmul.mubr.f32.gmra.mxu0 %v4043
      %v4207 = vpop.f32.mrf.mxu0
      %v4208 = vadd.f32 0.0, %v4207
      %v4209 = vpop.f32.mrf.mxu0
      %v4210 = vadd.f32 0.0, %v4209
      %4211 = vmatprep.mubr.f32.mxu0 0.0
      %4212 = vmatmul.mubr.f32.gmra.mxu0 %v4046
      %v4213 = vpop.f32.mrf.mxu0
      %v4214 = vadd.f32 0.0, %v4213
      %v4215 = vpop.f32.mrf.mxu0
      %v4216 = vadd.f32 0.0, %v4215
      %4217 = vmatprep.mubr.f32.mxu0 0.0
      %4218 = vmatmul.mubr.f32.gmra.mxu0 %v4049
      %v4219 = vpop.f32.mrf.mxu0
      %v4220 = vadd.f32 0.0, %v4219
      %v4221 = vpop.f32.mrf.mxu0
      %v4222 = vadd.f32 0.0, %v4221
      %4223 = vmatprep.mubr.f32.mxu0 0.0
      %4224 = vmatmul.mubr.f32.gmra.mxu0 %v4052
      %v4225 = vpop.f32.mrf.mxu0
      %v4226 = vadd.f32 0.0, %v4225
      %v4227 = vpop.f32.mrf.mxu0
      %v4228 = vadd.f32 0.0, %v4227
      %4229 = vmatprep.mubr.f32.mxu0 0.0
      %4230 = vmatmul.mubr.f32.gmra.mxu0 %v4055
      %v4231 = vpop.f32.mrf.mxu0
      %v4232 = vadd.f32 0.0, %v4231
      %v4233 = vpop.f32.mrf.mxu0
      %v4234 = vadd.f32 0.0, %v4233
      %4235 = vmatprep.mubr.f32.mxu0 0.0
      %4236 = vmatmul.mubr.f32.gmra.mxu0 %v4058
      %v4237 = vpop.f32.mrf.mxu0
      %v4238 = vadd.f32 0.0, %v4237
      %v4239 = vpop.f32.mrf.mxu0
      %v4240 = vadd.f32 0.0, %v4239
      %4241 = vmatprep.mubr.f32.mxu0 0.0
      %4242 = vmatmul.mubr.f32.gmra.mxu0 %v4061
      %v4243 = vpop.f32.mrf.mxu0
      %v4244 = vadd.f32 0.0, %v4243
      %v4245 = vpop.f32.mrf.mxu0
      %v4246 = vadd.f32 0.0, %v4245
      %4247 = vmatprep.mubr.f32.mxu0 0.0
      %4248 = vmatmul.mubr.f32.gmra.mxu0 %v4064
      %v4249 = vpop.f32.mrf.mxu0
      %v4250 = vadd.f32 0.0, %v4249
      %v4251 = vpop.f32.mrf.mxu0
      %v4252 = vadd.f32 0.0, %v4251
      %4253 = vmatprep.mubr.f32.mxu0 0.0
      %4254 = vmatmul.mubr.f32.gmra.mxu0 %v4067
      %v4255 = vpop.f32.mrf.mxu0
      %v4256 = vadd.f32 0.0, %v4255
      %v4257 = vpop.f32.mrf.mxu0
      %v4258 = vadd.f32 0.0, %v4257
      %4259 = vmatprep.mubr.f32.mxu0 0.0
      %4260 = vmatmul.mubr.f32.gmra.mxu0 %v4070
      %v4261 = vpop.f32.mrf.mxu0
      %v4262 = vadd.f32 0.0, %v4261
      %v4263 = vpop.f32.mrf.mxu0
      %v4264 = vadd.f32 0.0, %v4263
      %4265 = vmatprep.mubr.f32.mxu0 0.0
      %4266 = vmatmul.mubr.f32.gmra.mxu0 %v4073
      %v4267 = vpop.f32.mrf.mxu0
      %v4268 = vadd.f32 0.0, %v4267
      %v4269 = vpop.f32.mrf.mxu0
      %v4270 = vadd.f32 0.0, %v4269
      %4271 = vmatprep.mubr.f32.mxu0 0.0
      %4272 = vmatmul.mubr.f32.gmra.mxu0 %v4076
      %v4273 = vpop.f32.mrf.mxu0
      %v4274 = vadd.f32 0.0, %v4273
      %v4275 = vpop.f32.mrf.mxu0
      %v4276 = vadd.f32 0.0, %v4275
      %4277 = vmatprep.mubr.f32.mxu0 0.0
      %4278 = vmatmul.mubr.f32.gmra.mxu0 %v4079
      %v4279 = vpop.f32.mrf.mxu0
      %v4280 = vadd.f32 0.0, %v4279
      %v4281 = vpop.f32.mrf.mxu0
      %v4282 = vadd.f32 0.0, %v4281
      %4283 = vmatprep.mubr.f32.mxu0 0.0
      %4284 = vmatmul.mubr.f32.gmra.mxu0 %v4082
      %v4285 = vpop.f32.mrf.mxu0
      %v4286 = vadd.f32 0.0, %v4285
      %v4287 = vpop.f32.mrf.mxu0
      %v4288 = vadd.f32 0.0, %v4287
      %4289 = vmatprep.mubr.f32.mxu0 0.0
      %4290 = vmatmul.mubr.f32.gmra.mxu0 %v4085
      %v4291 = vpop.f32.mrf.mxu0
      %v4292 = vadd.f32 0.0, %v4291
      %v4293 = vpop.f32.mrf.mxu0
      %v4294 = vadd.f32 0.0, %v4293
      %4295 = vmatprep.mubr.f32.mxu0 0.0
      %4296 = vmatmul.mubr.f32.gmra.mxu0 %v4088
      %v4297 = vpop.f32.mrf.mxu0
      %v4298 = vadd.f32 0.0, %v4297
      %v4299 = vpop.f32.mrf.mxu0
      %v4300 = vadd.f32 0.0, %v4299
      %4301 = vmatprep.mubr.f32.mxu0 0.0
      %4302 = vmatmul.mubr.f32.gmra.mxu0 %v4091
      %v4303 = vpop.f32.mrf.mxu0
      %v4304 = vadd.f32 0.0, %v4303
      %v4305 = vpop.f32.mrf.mxu0
      %v4306 = vadd.f32 0.0, %v4305
      %4307 = vmatprep.mubr.f32.mxu0 0.0
      %4308 = vmatmul.mubr.f32.gmra.mxu0 %v4094
      %v4309 = vpop.f32.mrf.mxu0
      %v4310 = vadd.f32 0.0, %v4309
      %v4311 = vpop.f32.mrf.mxu0
      %v4312 = vadd.f32 0.0, %v4311
      %4313 = vmatprep.mubr.f32.mxu0 0.0
      %4314 = vmatmul.mubr.f32.gmra.mxu0 %v4097
      %v4315 = vpop.f32.mrf.mxu0
      %v4316 = vadd.f32 0.0, %v4315
      %v4317 = vpop.f32.mrf.mxu0
      %v4318 = vadd.f32 0.0, %v4317
      %4319 = vmatprep.mubr.f32.mxu0 0.0
      %4320 = vmatmul.mubr.f32.gmra.mxu0 %v4100
      %v4321 = vpop.f32.mrf.mxu0
      %v4322 = vadd.f32 0.0, %v4321
      %v4323 = vpop.f32.mrf.mxu0
      %v4324 = vadd.f32 0.0, %v4323
      %4325 = vmatprep.mubr.f32.mxu0 0.0
      %4326 = vmatmul.mubr.f32.gmra.mxu0 %v4103
      %v4327 = vpop.f32.mrf.mxu0
      %v4328 = vadd.f32 0.0, %v4327
      %v4329 = vpop.f32.mrf.mxu0
      %v4330 = vadd.f32 0.0, %v4329
      %4331 = vmatprep.mubr.f32.mxu0 0.0
      %4332 = vmatmul.mubr.f32.gmra.mxu0 %v4106
      %v4333 = vpop.f32.mrf.mxu0
      %v4334 = vadd.f32 0.0, %v4333
      %v4335 = vpop.f32.mrf.mxu0
      %v4336 = vadd.f32 0.0, %v4335
      %4337 = vmatprep.mubr.f32.mxu0 0.0
      %4338 = vmatmul.mubr.f32.gmra.mxu0 %v4109
      %v4339 = vpop.f32.mrf.mxu0
      %v4340 = vadd.f32 0.0, %v4339
      %v4341 = vpop.f32.mrf.mxu0
      %v4342 = vadd.f32 0.0, %v4341
      %4343 = vmatprep.mubr.f32.mxu0 0.0
      %4344 = vmatmul.mubr.f32.gmra.mxu0 %v4112
      %v4345 = vpop.f32.mrf.mxu0
      %v4346 = vadd.f32 0.0, %v4345
      %v4347 = vpop.f32.mrf.mxu0
      %v4348 = vadd.f32 0.0, %v4347
      %4349 = vmatprep.mubr.f32.mxu0 0.0
      %4350 = vmatmul.mubr.f32.gmra.mxu0 %v4115
      %v4351 = vpop.f32.mrf.mxu0
      %v4352 = vadd.f32 0.0, %v4351
      %v4353 = vpop.f32.mrf.mxu0
      %v4354 = vadd.f32 0.0, %v4353
      %4355 = vmatprep.mubr.f32.mxu0 0.0
      %4356 = vmatmul.mubr.f32.gmra.mxu0 %v4118
      %v4357 = vpop.f32.mrf.mxu0
      %v4358 = vadd.f32 0.0, %v4357
      %v4359 = vpop.f32.mrf.mxu0
      %v4360 = vadd.f32 0.0, %v4359
      %4361 = vmatprep.mubr.f32.mxu0 0.0
      %4362 = vmatmul.mubr.f32.gmra.mxu0 %v4121
      %v4363 = vpop.f32.mrf.mxu0
      %v4364 = vadd.f32 0.0, %v4363
      %v4365 = vpop.f32.mrf.mxu0
      %v4366 = vadd.f32 0.0, %v4365
      %4367 = vmatprep.mubr.f32.mxu0 0.0
      %4368 = vmatmul.mubr.f32.gmra.mxu0 %v4124
      %v4369 = vpop.f32.mrf.mxu0
      %v4370 = vadd.f32 0.0, %v4369
      %v4371 = vpop.f32.mrf.mxu0
      %v4372 = vadd.f32 0.0, %v4371
      %4373 = vmatprep.mubr.f32.mxu0 0.0
      %4374 = vmatmul.mubr.f32.gmra.mxu0 %v4127
      %v4375 = vpop.f32.mrf.mxu0
      %v4376 = vadd.f32 0.0, %v4375
      %v4377 = vpop.f32.mrf.mxu0
      %v4378 = vadd.f32 0.0, %v4377
      %4379 = vmatprep.mubr.f32.mxu0 0.0
      %4380 = vmatmul.mubr.f32.gmra.mxu0 %v4130
      %v4381 = vpop.f32.mrf.mxu0
      %v4382 = vadd.f32 0.0, %v4381
      %v4383 = vpop.f32.mrf.mxu0
      %v4384 = vadd.f32 0.0, %v4383
      %4385 = vmatprep.mubr.f32.mxu0 0.0
      %4386 = vmatmul.mubr.f32.gmra.mxu0 %v4133
      %v4387 = vpop.f32.mrf.mxu0
      %v4388 = vadd.f32 0.0, %v4387
      %v4389 = vpop.f32.mrf.mxu0
      %v4390 = vadd.f32 0.0, %v4389
      %4391 = vdwg.mxu0
      %v4392 = vld [vmem:[%s14] sm:$0xff]
      %v4393 = vld [vmem:[%s14 + $0x8] sm:$0xff]
      %v4394 = vld [vmem:[%s14 + $0x10] sm:$0xff]
      %v4395 = vld [vmem:[%s14 + $0x18] sm:$0xff]
      %v4396 = vld [vmem:[%s14 + $0x20] sm:$0xff]
      %v4397 = vld [vmem:[%s14 + $0x28] sm:$0xff]
      %v4398 = vld [vmem:[%s14 + $0x30] sm:$0xff]
      %v4399 = vld [vmem:[%s14 + $0x38] sm:$0xff]
      %v4400 = vld [vmem:[%s14 + $0x40] sm:$0xff]
      %v4401 = vld [vmem:[%s14 + $0x48] sm:$0xff]
      %v4402 = vld [vmem:[%s14 + $0x50] sm:$0xff]
      %v4403 = vld [vmem:[%s14 + $0x58] sm:$0xff]
      %v4404 = vld [vmem:[%s14 + $0x60] sm:$0xff]
      %v4405 = vld [vmem:[%s14 + $0x68] sm:$0xff]
      %v4406 = vld [vmem:[%s14 + $0x70] sm:$0xff]
      %v4407 = vld [vmem:[%s14 + $0x78] sm:$0xff]
      %v4408 = vld [vmem:[%s14 + $0x80] sm:$0xff]
      %v4409 = vld [vmem:[%s14 + $0x88] sm:$0xff]
      %v4410 = vld [vmem:[%s14 + $0x90] sm:$0xff]
      %v4411 = vld [vmem:[%s14 + $0x98] sm:$0xff]
      %v4412 = vld [vmem:[%s14 + $0xa0] sm:$0xff]
      %v4413 = vld [vmem:[%s14 + $0xa8] sm:$0xff]
      %v4414 = vld [vmem:[%s14 + $0xb0] sm:$0xff]
      %v4415 = vld [vmem:[%s14 + $0xb8] sm:$0xff]
      %v4416 = vld [vmem:[%s14 + $0xc0] sm:$0xff]
      %v4417 = vld [vmem:[%s14 + $0xc8] sm:$0xff]
      %v4418 = vld [vmem:[%s14 + $0xd0] sm:$0xff]
      %v4419 = vld [vmem:[%s14 + $0xd8] sm:$0xff]
      %v4420 = vld [vmem:[%s14 + $0xe0] sm:$0xff]
      %v4421 = vld [vmem:[%s14 + $0xe8] sm:$0xff]
      %v4422 = vld [vmem:[%s14 + $0xf0] sm:$0xff]
      %v4423 = vld [vmem:[%s14 + $0xf8] sm:$0xff]
      %v4424 = vld [vmem:[%s14 + $0x100] sm:$0xff]
      %v4425 = vld [vmem:[%s14 + $0x108] sm:$0xff]
      %v4426 = vld [vmem:[%s14 + $0x110] sm:$0xff]
      %v4427 = vld [vmem:[%s14 + $0x118] sm:$0xff]
      %v4428 = vld [vmem:[%s14 + $0x120] sm:$0xff]
      %v4429 = vld [vmem:[%s14 + $0x128] sm:$0xff]
      %v4430 = vld [vmem:[%s14 + $0x130] sm:$0xff]
      %v4431 = vld [vmem:[%s14 + $0x138] sm:$0xff]
      %v4432 = vld [vmem:[%s14 + $0x140] sm:$0xff]
      %v4433 = vld [vmem:[%s14 + $0x148] sm:$0xff]
      %v4434 = vld [vmem:[%s14 + $0x150] sm:$0xff]
      %v4435 = vld [vmem:[%s14 + $0x158] sm:$0xff]
      %v4436 = vld [vmem:[%s14 + $0x160] sm:$0xff]
      %v4437 = vld [vmem:[%s14 + $0x168] sm:$0xff]
      %v4438 = vld [vmem:[%s14 + $0x170] sm:$0xff]
      %v4439 = vld [vmem:[%s14 + $0x178] sm:$0xff]
      %v4440 = vld [vmem:[%s14 + $0x180] sm:$0xff]
      %v4441 = vld [vmem:[%s14 + $0x188] sm:$0xff]
      %v4442 = vld [vmem:[%s14 + $0x190] sm:$0xff]
      %v4443 = vld [vmem:[%s14 + $0x198] sm:$0xff]
      %v4444 = vld [vmem:[%s14 + $0x1a0] sm:$0xff]
      %v4445 = vld [vmem:[%s14 + $0x1a8] sm:$0xff]
      %v4446 = vld [vmem:[%s14 + $0x1b0] sm:$0xff]
      %v4447 = vld [vmem:[%s14 + $0x1b8] sm:$0xff]
      %v4448 = vld [vmem:[%s14 + $0x1c0] sm:$0xff]
      %v4449 = vld [vmem:[%s14 + $0x1c8] sm:$0xff]
      %v4450 = vld [vmem:[%s14 + $0x1d0] sm:$0xff]
      %v4451 = vld [vmem:[%s14 + $0x1d8] sm:$0xff]
      %v4452 = vld [vmem:[%s14 + $0x1e0] sm:$0xff]
      %v4453 = vld [vmem:[%s14 + $0x1e8] sm:$0xff]
      %v4454 = vld [vmem:[%s14 + $0x1f0] sm:$0xff]
      %v4455 = vld [vmem:[%s14 + $0x1f8] sm:$0xff]
      %v4456 = vmul.f32 %v4202, %v4392
      %v4457 = vmul.f32 %v4204, %v4393
      %v4458 = vmul.f32 %v4208, %v4394
      %v4459 = vmul.f32 %v4210, %v4395
      %v4460 = vmul.f32 %v4214, %v4396
      %v4461 = vmul.f32 %v4216, %v4397
      %v4462 = vmul.f32 %v4220, %v4398
      %v4463 = vmul.f32 %v4222, %v4399
      %v4464 = vmul.f32 %v4226, %v4400
      %v4465 = vmul.f32 %v4228, %v4401
      %v4466 = vmul.f32 %v4232, %v4402
      %v4467 = vmul.f32 %v4234, %v4403
      %v4468 = vmul.f32 %v4238, %v4404
      %v4469 = vmul.f32 %v4240, %v4405
      %v4470 = vmul.f32 %v4244, %v4406
      %v4471 = vmul.f32 %v4246, %v4407
      %v4472 = vmul.f32 %v4250, %v4408
      %v4473 = vmul.f32 %v4252, %v4409
      %v4474 = vmul.f32 %v4256, %v4410
      %v4475 = vmul.f32 %v4258, %v4411
      %v4476 = vmul.f32 %v4262, %v4412
      %v4477 = vmul.f32 %v4264, %v4413
      %v4478 = vmul.f32 %v4268, %v4414
      %v4479 = vmul.f32 %v4270, %v4415
      %v4480 = vmul.f32 %v4274, %v4416
      %v4481 = vmul.f32 %v4276, %v4417
      %v4482 = vmul.f32 %v4280, %v4418
      %v4483 = vmul.f32 %v4282, %v4419
      %v4484 = vmul.f32 %v4286, %v4420
      %v4485 = vmul.f32 %v4288, %v4421
      %v4486 = vmul.f32 %v4292, %v4422
      %v4487 = vmul.f32 %v4294, %v4423
      %v4488 = vmul.f32 %v4298, %v4424
      %v4489 = vmul.f32 %v4300, %v4425
      %v4490 = vmul.f32 %v4304, %v4426
      %v4491 = vmul.f32 %v4306, %v4427
      %v4492 = vmul.f32 %v4310, %v4428
      %v4493 = vmul.f32 %v4312, %v4429
      %v4494 = vmul.f32 %v4316, %v4430
      %v4495 = vmul.f32 %v4318, %v4431
      %v4496 = vmul.f32 %v4322, %v4432
      %v4497 = vmul.f32 %v4324, %v4433
      %v4498 = vmul.f32 %v4328, %v4434
      %v4499 = vmul.f32 %v4330, %v4435
      %v4500 = vmul.f32 %v4334, %v4436
      %v4501 = vmul.f32 %v4336, %v4437
      %v4502 = vmul.f32 %v4340, %v4438
      %v4503 = vmul.f32 %v4342, %v4439
      %v4504 = vmul.f32 %v4346, %v4440
      %v4505 = vmul.f32 %v4348, %v4441
      %v4506 = vmul.f32 %v4352, %v4442
      %v4507 = vmul.f32 %v4354, %v4443
      %v4508 = vmul.f32 %v4358, %v4444
      %v4509 = vmul.f32 %v4360, %v4445
      %v4510 = vmul.f32 %v4364, %v4446
      %v4511 = vmul.f32 %v4366, %v4447
      %v4512 = vmul.f32 %v4370, %v4448
      %v4513 = vmul.f32 %v4372, %v4449
      %v4514 = vmul.f32 %v4376, %v4450
      %v4515 = vmul.f32 %v4378, %v4451
      %v4516 = vmul.f32 %v4382, %v4452
      %v4517 = vmul.f32 %v4384, %v4453
      %v4518 = vmul.f32 %v4388, %v4454
      %v4519 = vmul.f32 %v4390, %v4455
      %4520 = vst [vmem:[#allocation3] sm:$0xff] %v4456
      %4521 = vst [vmem:[#allocation3 + $0x8] sm:$0xff] %v4457
      %4522 = vst [vmem:[#allocation3 + $0x10] sm:$0xff] %v4458
      %4523 = vst [vmem:[#allocation3 + $0x18] sm:$0xff] %v4459
      %4524 = vst [vmem:[#allocation3 + $0x20] sm:$0xff] %v4460
      %4525 = vst [vmem:[#allocation3 + $0x28] sm:$0xff] %v4461
      %4526 = vst [vmem:[#allocation3 + $0x30] sm:$0xff] %v4462
      %4527 = vst [vmem:[#allocation3 + $0x38] sm:$0xff] %v4463
      %4528 = vst [vmem:[#allocation3 + $0x40] sm:$0xff] %v4464
      %4529 = vst [vmem:[#allocation3 + $0x48] sm:$0xff] %v4465
      %4530 = vst [vmem:[#allocation3 + $0x50] sm:$0xff] %v4466
      %4531 = vst [vmem:[#allocation3 + $0x58] sm:$0xff] %v4467
      %4532 = vst [vmem:[#allocation3 + $0x60] sm:$0xff] %v4468
      %4533 = vst [vmem:[#allocation3 + $0x68] sm:$0xff] %v4469
      %4534 = vst [vmem:[#allocation3 + $0x70] sm:$0xff] %v4470
      %4535 = vst [vmem:[#allocation3 + $0x78] sm:$0xff] %v4471
      %4536 = vst [vmem:[#allocation3 + $0x80] sm:$0xff] %v4472
      %4537 = vst [vmem:[#allocation3 + $0x88] sm:$0xff] %v4473
      %4538 = vst [vmem:[#allocation3 + $0x90] sm:$0xff] %v4474
      %4539 = vst [vmem:[#allocation3 + $0x98] sm:$0xff] %v4475
      %4540 = vst [vmem:[#allocation3 + $0xa0] sm:$0xff] %v4476
      %4541 = vst [vmem:[#allocation3 + $0xa8] sm:$0xff] %v4477
      %4542 = vst [vmem:[#allocation3 + $0xb0] sm:$0xff] %v4478
      %4543 = vst [vmem:[#allocation3 + $0xb8] sm:$0xff] %v4479
      %4544 = vst [vmem:[#allocation3 + $0xc0] sm:$0xff] %v4480
      %4545 = vst [vmem:[#allocation3 + $0xc8] sm:$0xff] %v4481
      %4546 = vst [vmem:[#allocation3 + $0xd0] sm:$0xff] %v4482
      %4547 = vst [vmem:[#allocation3 + $0xd8] sm:$0xff] %v4483
      %4548 = vst [vmem:[#allocation3 + $0xe0] sm:$0xff] %v4484
      %4549 = vst [vmem:[#allocation3 + $0xe8] sm:$0xff] %v4485
      %4550 = vst [vmem:[#allocation3 + $0xf0] sm:$0xff] %v4486
      %4551 = vst [vmem:[#allocation3 + $0xf8] sm:$0xff] %v4487
      %4552 = vst [vmem:[#allocation3 + $0x100] sm:$0xff] %v4488
      %4553 = vst [vmem:[#allocation3 + $0x108] sm:$0xff] %v4489
      %4554 = vst [vmem:[#allocation3 + $0x110] sm:$0xff] %v4490
      %4555 = vst [vmem:[#allocation3 + $0x118] sm:$0xff] %v4491
      %4556 = vst [vmem:[#allocation3 + $0x120] sm:$0xff] %v4492
      %4557 = vst [vmem:[#allocation3 + $0x128] sm:$0xff] %v4493
      %4558 = vst [vmem:[#allocation3 + $0x130] sm:$0xff] %v4494
      %4559 = vst [vmem:[#allocation3 + $0x138] sm:$0xff] %v4495
      %4560 = vst [vmem:[#allocation3 + $0x140] sm:$0xff] %v4496
      %4561 = vst [vmem:[#allocation3 + $0x148] sm:$0xff] %v4497
      %4562 = vst [vmem:[#allocation3 + $0x150] sm:$0xff] %v4498
      %4563 = vst [vmem:[#allocation3 + $0x158] sm:$0xff] %v4499
      %4564 = vst [vmem:[#allocation3 + $0x160] sm:$0xff] %v4500
      %4565 = vst [vmem:[#allocation3 + $0x168] sm:$0xff] %v4501
      %4566 = vst [vmem:[#allocation3 + $0x170] sm:$0xff] %v4502
      %4567 = vst [vmem:[#allocation3 + $0x178] sm:$0xff] %v4503
      %4568 = vst [vmem:[#allocation3 + $0x180] sm:$0xff] %v4504
      %4569 = vst [vmem:[#allocation3 + $0x188] sm:$0xff] %v4505
      %4570 = vst [vmem:[#allocation3 + $0x190] sm:$0xff] %v4506
      %4571 = vst [vmem:[#allocation3 + $0x198] sm:$0xff] %v4507
      %4572 = vst [vmem:[#allocation3 + $0x1a0] sm:$0xff] %v4508
      %4573 = vst [vmem:[#allocation3 + $0x1a8] sm:$0xff] %v4509
      %4574 = vst [vmem:[#allocation3 + $0x1b0] sm:$0xff] %v4510
      %4575 = vst [vmem:[#allocation3 + $0x1b8] sm:$0xff] %v4511
      %4576 = vst [vmem:[#allocation3 + $0x1c0] sm:$0xff] %v4512
      %4577 = vst [vmem:[#allocation3 + $0x1c8] sm:$0xff] %v4513
      %4578 = vst [vmem:[#allocation3 + $0x1d0] sm:$0xff] %v4514
      %4579 = vst [vmem:[#allocation3 + $0x1d8] sm:$0xff] %v4515
      %4580 = vst [vmem:[#allocation3 + $0x1e0] sm:$0xff] %v4516
      %4581 = vst [vmem:[#allocation3 + $0x1e8] sm:$0xff] %v4517
      %4582 = vst [vmem:[#allocation3 + $0x1f0] sm:$0xff] %v4518
      %4583 = vst [vmem:[#allocation3 + $0x1f8] sm:$0xff] %v4519
      %v4584 = vadd.f32 %v3186, %v3210
      %v4585 = vadd.f32 %v3188, %v3212
      %v4586 = vadd.f32 %v3192, %v3216
      %v4587 = vadd.f32 %v3194, %v3218
      %v4588 = vadd.f32 %v3198, %v3222
      %v4589 = vadd.f32 %v3200, %v3224
      %v4590 = vadd.f32 %v3204, %v3228
      %v4591 = vadd.f32 %v3206, %v3230
      %v4592 = vadd.f32 %v4584, %v3234
      %v4593 = vadd.f32 %v4585, %v3236
      %v4594 = vadd.f32 %v4586, %v3240
      %v4595 = vadd.f32 %v4587, %v3242
      %v4596 = vadd.f32 %v4588, %v3246
      %v4597 = vadd.f32 %v4589, %v3248
      %v4598 = vadd.f32 %v4590, %v3252
      %v4599 = vadd.f32 %v4591, %v3254
      %v4600 = vld [vmem:[#allocation2] sm:$0xff]
      %v4601 = vld [vmem:[#allocation2 + $0x8] sm:$0xff]
      %v4602 = vld [vmem:[#allocation2 + $0x10] sm:$0xff]
      %v4603 = vld [vmem:[#allocation2 + $0x18] sm:$0xff]
      %v4604 = vld [vmem:[#allocation2 + $0x20] sm:$0xff]
      %v4605 = vld [vmem:[#allocation2 + $0x28] sm:$0xff]
      %v4606 = vld [vmem:[#allocation2 + $0x30] sm:$0xff]
      %v4607 = vld [vmem:[#allocation2 + $0x38] sm:$0xff]
      %v4608 = vld [vmem:[#allocation2 + $0x40] sm:$0xff]
      %v4609 = vld [vmem:[#allocation2 + $0x48] sm:$0xff]
      %v4610 = vld [vmem:[#allocation2 + $0x50] sm:$0xff]
      %v4611 = vld [vmem:[#allocation2 + $0x58] sm:$0xff]
      %v4612 = vld [vmem:[#allocation2 + $0x60] sm:$0xff]
      %v4613 = vld [vmem:[#allocation2 + $0x68] sm:$0xff]
      %v4614 = vld [vmem:[#allocation2 + $0x70] sm:$0xff]
      %v4615 = vld [vmem:[#allocation2 + $0x78] sm:$0xff]
      %v4616 = vld [vmem:[#allocation2 + $0x80] sm:$0xff]
      %v4617 = vld [vmem:[#allocation2 + $0x88] sm:$0xff]
      %v4618 = vld [vmem:[#allocation2 + $0x90] sm:$0xff]
      %v4619 = vld [vmem:[#allocation2 + $0x98] sm:$0xff]
      %v4620 = vld [vmem:[#allocation2 + $0xa0] sm:$0xff]
      %v4621 = vld [vmem:[#allocation2 + $0xa8] sm:$0xff]
      %v4622 = vld [vmem:[#allocation2 + $0xb0] sm:$0xff]
      %v4623 = vld [vmem:[#allocation2 + $0xb8] sm:$0xff]
      %v4624 = vld [vmem:[#allocation2 + $0xc0] sm:$0xff]
      %v4625 = vld [vmem:[#allocation2 + $0xc8] sm:$0xff]
      %v4626 = vld [vmem:[#allocation2 + $0xd0] sm:$0xff]
      %v4627 = vld [vmem:[#allocation2 + $0xd8] sm:$0xff]
      %v4628 = vld [vmem:[#allocation2 + $0xe0] sm:$0xff]
      %v4629 = vld [vmem:[#allocation2 + $0xe8] sm:$0xff]
      %v4630 = vld [vmem:[#allocation2 + $0xf0] sm:$0xff]
      %v4631 = vld [vmem:[#allocation2 + $0xf8] sm:$0xff]
      %v4632 = vld [vmem:[#allocation2 + $0x100] sm:$0xff]
      %v4633 = vld [vmem:[#allocation2 + $0x108] sm:$0xff]
      %v4634 = vld [vmem:[#allocation2 + $0x110] sm:$0xff]
      %v4635 = vld [vmem:[#allocation2 + $0x118] sm:$0xff]
      %v4636 = vld [vmem:[#allocation2 + $0x120] sm:$0xff]
      %v4637 = vld [vmem:[#allocation2 + $0x128] sm:$0xff]
      %v4638 = vld [vmem:[#allocation2 + $0x130] sm:$0xff]
      %v4639 = vld [vmem:[#allocation2 + $0x138] sm:$0xff]
      %v4640 = vld [vmem:[#allocation2 + $0x140] sm:$0xff]
      %v4641 = vld [vmem:[#allocation2 + $0x148] sm:$0xff]
      %v4642 = vld [vmem:[#allocation2 + $0x150] sm:$0xff]
      %v4643 = vld [vmem:[#allocation2 + $0x158] sm:$0xff]
      %v4644 = vld [vmem:[#allocation2 + $0x160] sm:$0xff]
      %v4645 = vld [vmem:[#allocation2 + $0x168] sm:$0xff]
      %v4646 = vld [vmem:[#allocation2 + $0x170] sm:$0xff]
      %v4647 = vld [vmem:[#allocation2 + $0x178] sm:$0xff]
      %v4648 = vld [vmem:[#allocation2 + $0x180] sm:$0xff]
      %v4649 = vld [vmem:[#allocation2 + $0x188] sm:$0xff]
      %v4650 = vld [vmem:[#allocation2 + $0x190] sm:$0xff]
      %v4651 = vld [vmem:[#allocation2 + $0x198] sm:$0xff]
      %v4652 = vld [vmem:[#allocation2 + $0x1a0] sm:$0xff]
      %v4653 = vld [vmem:[#allocation2 + $0x1a8] sm:$0xff]
      %v4654 = vld [vmem:[#allocation2 + $0x1b0] sm:$0xff]
      %v4655 = vld [vmem:[#allocation2 + $0x1b8] sm:$0xff]
      %v4656 = vld [vmem:[#allocation2 + $0x1c0] sm:$0xff]
      %v4657 = vld [vmem:[#allocation2 + $0x1c8] sm:$0xff]
      %v4658 = vld [vmem:[#allocation2 + $0x1d0] sm:$0xff]
      %v4659 = vld [vmem:[#allocation2 + $0x1d8] sm:$0xff]
      %v4660 = vld [vmem:[#allocation2 + $0x1e0] sm:$0xff]
      %v4661 = vld [vmem:[#allocation2 + $0x1e8] sm:$0xff]
      %v4662 = vld [vmem:[#allocation2 + $0x1f0] sm:$0xff]
      %v4663 = vld [vmem:[#allocation2 + $0x1f8] sm:$0xff]
      %4664 = vmatprep.subr.mxu0 %v4631
      %4665 = vmatpush1.msra.mxu0 %v4630
      %4666 = vmatprep.subr.mxu0 %v4629
      %4667 = vmatpush1.msra.mxu0 %v4628
      %4668 = vmatprep.subr.mxu0 %v4627
      %4669 = vmatpush1.msra.mxu0 %v4626
      %4670 = vmatprep.subr.mxu0 %v4625
      %4671 = vmatpush1.msra.mxu0 %v4624
      %4672 = vmatprep.subr.mxu0 %v4623
      %4673 = vmatpush1.msra.mxu0 %v4622
      %4674 = vmatprep.subr.mxu0 %v4621
      %4675 = vmatpush1.msra.mxu0 %v4620
      %4676 = vmatprep.subr.mxu0 %v4619
      %4677 = vmatpush1.msra.mxu0 %v4618
      %4678 = vmatprep.subr.mxu0 %v4617
      %4679 = vmatpush1.msra.mxu0 %v4616
      %4680 = vmatprep.subr.mxu0 %v4615
      %4681 = vmatpush1.msra.mxu0 %v4614
      %4682 = vmatprep.subr.mxu0 %v4613
      %4683 = vmatpush1.msra.mxu0 %v4612
      %4684 = vmatprep.subr.mxu0 %v4611
      %4685 = vmatpush1.msra.mxu0 %v4610
      %4686 = vmatprep.subr.mxu0 %v4609
      %4687 = vmatpush1.msra.mxu0 %v4608
      %4688 = vmatprep.subr.mxu0 %v4607
      %4689 = vmatpush1.msra.mxu0 %v4606
      %4690 = vmatprep.subr.mxu0 %v4605
      %4691 = vmatpush1.msra.mxu0 %v4604
      %4692 = vmatprep.subr.mxu0 %v4603
      %4693 = vmatpush1.msra.mxu0 %v4602
      %4694 = vmatprep.subr.mxu0 %v4601
      %4695 = vmatpush1.msra.mxu0 %v4600
      %4696 = vmatprep.subr.mxu0 %v4663
      %4697 = vmatpush2.msra.mxu0 %v4662
      %4698 = vmatprep.subr.mxu0 %v4661
      %4699 = vmatpush2.msra.mxu0 %v4660
      %4700 = vmatprep.subr.mxu0 %v4659
      %4701 = vmatpush2.msra.mxu0 %v4658
      %4702 = vmatprep.subr.mxu0 %v4657
      %4703 = vmatpush2.msra.mxu0 %v4656
      %4704 = vmatprep.subr.mxu0 %v4655
      %4705 = vmatpush2.msra.mxu0 %v4654
      %4706 = vmatprep.subr.mxu0 %v4653
      %4707 = vmatpush2.msra.mxu0 %v4652
      %4708 = vmatprep.subr.mxu0 %v4651
      %4709 = vmatpush2.msra.mxu0 %v4650
      %4710 = vmatprep.subr.mxu0 %v4649
      %4711 = vmatpush2.msra.mxu0 %v4648
      %4712 = vmatprep.subr.mxu0 %v4647
      %4713 = vmatpush2.msra.mxu0 %v4646
      %4714 = vmatprep.subr.mxu0 %v4645
      %4715 = vmatpush2.msra.mxu0 %v4644
      %4716 = vmatprep.subr.mxu0 %v4643
      %4717 = vmatpush2.msra.mxu0 %v4642
      %4718 = vmatprep.subr.mxu0 %v4641
      %4719 = vmatpush2.msra.mxu0 %v4640
      %4720 = vmatprep.subr.mxu0 %v4639
      %4721 = vmatpush2.msra.mxu0 %v4638
      %4722 = vmatprep.subr.mxu0 %v4637
      %4723 = vmatpush2.msra.mxu0 %v4636
      %4724 = vmatprep.subr.mxu0 %v4635
      %4725 = vmatpush2.msra.mxu0 %v4634
      %4726 = vmatprep.subr.mxu0 %v4633
      %4727 = vmatpush2.msra.mxu0 %v4632
      %4728 = vmatprep.mubr.f32.mxu0 %v3188
      %4729 = vmatmul.mubr.f32.gmra.mxu0 %v3186
      %v4730 = vpop.f32.mrf.mxu0
      %v4731 = vadd.f32 0.0, %v4730
      %v4732 = vpop.f32.mrf.mxu0
      %v4733 = vadd.f32 0.0, %v4732
      %4734 = vmatprep.mubr.f32.mxu0 %v3194
      %4735 = vmatmul.mubr.f32.gmra.mxu0 %v3192
      %v4736 = vpop.f32.mrf.mxu0
      %v4737 = vadd.f32 0.0, %v4736
      %v4738 = vpop.f32.mrf.mxu0
      %v4739 = vadd.f32 0.0, %v4738
      %4740 = vmatprep.mubr.f32.mxu0 %v3200
      %4741 = vmatmul.mubr.f32.gmra.mxu0 %v3198
      %v4742 = vpop.f32.mrf.mxu0
      %v4743 = vadd.f32 0.0, %v4742
      %v4744 = vpop.f32.mrf.mxu0
      %v4745 = vadd.f32 0.0, %v4744
      %4746 = vmatprep.mubr.f32.mxu0 %v3206
      %4747 = vmatmul.mubr.f32.gmra.mxu0 %v3204
      %v4748 = vpop.f32.mrf.mxu0
      %v4749 = vadd.f32 0.0, %v4748
      %v4750 = vpop.f32.mrf.mxu0
      %v4751 = vadd.f32 0.0, %v4750
      %4752 = vdwg.mxu0
      %v4753 = vadd.f32 %v4592, %v4731
      %v4754 = vadd.f32 %v4593, %v4733
      %v4755 = vadd.f32 %v4594, %v4737
      %v4756 = vadd.f32 %v4595, %v4739
      %v4757 = vadd.f32 %v4596, %v4743
      %v4758 = vadd.f32 %v4597, %v4745
      %v4759 = vadd.f32 %v4598, %v4749
      %v4760 = vadd.f32 %v4599, %v4751
      %v4761 = vld [vmem:[#allocation3] sm:$0xff]
      %v4762 = vld [vmem:[#allocation3 + $0x8] sm:$0xff]
      %v4763 = vld [vmem:[#allocation3 + $0x10] sm:$0xff]
      %v4764 = vld [vmem:[#allocation3 + $0x18] sm:$0xff]
      %v4765 = vld [vmem:[#allocation3 + $0x20] sm:$0xff]
      %v4766 = vld [vmem:[#allocation3 + $0x28] sm:$0xff]
      %v4767 = vld [vmem:[#allocation3 + $0x30] sm:$0xff]
      %v4768 = vld [vmem:[#allocation3 + $0x38] sm:$0xff]
      %v4769 = vld [vmem:[#allocation3 + $0x40] sm:$0xff]
      %v4770 = vld [vmem:[#allocation3 + $0x48] sm:$0xff]
      %v4771 = vld [vmem:[#allocation3 + $0x50] sm:$0xff]
      %v4772 = vld [vmem:[#allocation3 + $0x58] sm:$0xff]
      %v4773 = vld [vmem:[#allocation3 + $0x60] sm:$0xff]
      %v4774 = vld [vmem:[#allocation3 + $0x68] sm:$0xff]
      %v4775 = vld [vmem:[#allocation3 + $0x70] sm:$0xff]
      %v4776 = vld [vmem:[#allocation3 + $0x78] sm:$0xff]
      %v4777 = vld [vmem:[#allocation3 + $0x80] sm:$0xff]
      %v4778 = vld [vmem:[#allocation3 + $0x88] sm:$0xff]
      %v4779 = vld [vmem:[#allocation3 + $0x90] sm:$0xff]
      %v4780 = vld [vmem:[#allocation3 + $0x98] sm:$0xff]
      %v4781 = vld [vmem:[#allocation3 + $0xa0] sm:$0xff]
      %v4782 = vld [vmem:[#allocation3 + $0xa8] sm:$0xff]
      %v4783 = vld [vmem:[#allocation3 + $0xb0] sm:$0xff]
      %v4784 = vld [vmem:[#allocation3 + $0xb8] sm:$0xff]
      %v4785 = vld [vmem:[#allocation3 + $0xc0] sm:$0xff]
      %v4786 = vld [vmem:[#allocation3 + $0xc8] sm:$0xff]
      %v4787 = vld [vmem:[#allocation3 + $0xd0] sm:$0xff]
      %v4788 = vld [vmem:[#allocation3 + $0xd8] sm:$0xff]
      %v4789 = vld [vmem:[#allocation3 + $0xe0] sm:$0xff]
      %v4790 = vld [vmem:[#allocation3 + $0xe8] sm:$0xff]
      %v4791 = vld [vmem:[#allocation3 + $0xf0] sm:$0xff]
      %v4792 = vld [vmem:[#allocation3 + $0xf8] sm:$0xff]
      %v4793 = vld [vmem:[#allocation3 + $0x100] sm:$0xff]
      %v4794 = vld [vmem:[#allocation3 + $0x108] sm:$0xff]
      %v4795 = vld [vmem:[#allocation3 + $0x110] sm:$0xff]
      %v4796 = vld [vmem:[#allocation3 + $0x118] sm:$0xff]
      %v4797 = vld [vmem:[#allocation3 + $0x120] sm:$0xff]
      %v4798 = vld [vmem:[#allocation3 + $0x128] sm:$0xff]
      %v4799 = vld [vmem:[#allocation3 + $0x130] sm:$0xff]
      %v4800 = vld [vmem:[#allocation3 + $0x138] sm:$0xff]
      %v4801 = vld [vmem:[#allocation3 + $0x140] sm:$0xff]
      %v4802 = vld [vmem:[#allocation3 + $0x148] sm:$0xff]
      %v4803 = vld [vmem:[#allocation3 + $0x150] sm:$0xff]
      %v4804 = vld [vmem:[#allocation3 + $0x158] sm:$0xff]
      %v4805 = vld [vmem:[#allocation3 + $0x160] sm:$0xff]
      %v4806 = vld [vmem:[#allocation3 + $0x168] sm:$0xff]
      %v4807 = vld [vmem:[#allocation3 + $0x170] sm:$0xff]
      %v4808 = vld [vmem:[#allocation3 + $0x178] sm:$0xff]
      %v4809 = vld [vmem:[#allocation3 + $0x180] sm:$0xff]
      %v4810 = vld [vmem:[#allocation3 + $0x188] sm:$0xff]
      %v4811 = vld [vmem:[#allocation3 + $0x190] sm:$0xff]
      %v4812 = vld [vmem:[#allocation3 + $0x198] sm:$0xff]
      %v4813 = vld [vmem:[#allocation3 + $0x1a0] sm:$0xff]
      %v4814 = vld [vmem:[#allocation3 + $0x1a8] sm:$0xff]
      %v4815 = vld [vmem:[#allocation3 + $0x1b0] sm:$0xff]
      %v4816 = vld [vmem:[#allocation3 + $0x1b8] sm:$0xff]
      %v4817 = vld [vmem:[#allocation3 + $0x1c0] sm:$0xff]
      %v4818 = vld [vmem:[#allocation3 + $0x1c8] sm:$0xff]
      %v4819 = vld [vmem:[#allocation3 + $0x1d0] sm:$0xff]
      %v4820 = vld [vmem:[#allocation3 + $0x1d8] sm:$0xff]
      %v4821 = vld [vmem:[#allocation3 + $0x1e0] sm:$0xff]
      %v4822 = vld [vmem:[#allocation3 + $0x1e8] sm:$0xff]
      %v4823 = vld [vmem:[#allocation3 + $0x1f0] sm:$0xff]
      %v4824 = vld [vmem:[#allocation3 + $0x1f8] sm:$0xff]
      %4825 = vmatprep.subr.mxu0 %v4792
      %4826 = vmatpush1.msra.mxu0 %v4791
      %4827 = vmatprep.subr.mxu0 %v4790
      %4828 = vmatpush1.msra.mxu0 %v4789
      %4829 = vmatprep.subr.mxu0 %v4788
      %4830 = vmatpush1.msra.mxu0 %v4787
      %4831 = vmatprep.subr.mxu0 %v4786
      %4832 = vmatpush1.msra.mxu0 %v4785
      %4833 = vmatprep.subr.mxu0 %v4784
      %4834 = vmatpush1.msra.mxu0 %v4783
      %4835 = vmatprep.subr.mxu0 %v4782
      %4836 = vmatpush1.msra.mxu0 %v4781
      %4837 = vmatprep.subr.mxu0 %v4780
      %4838 = vmatpush1.msra.mxu0 %v4779
      %4839 = vmatprep.subr.mxu0 %v4778
      %4840 = vmatpush1.msra.mxu0 %v4777
      %4841 = vmatprep.subr.mxu0 %v4776
      %4842 = vmatpush1.msra.mxu0 %v4775
      %4843 = vmatprep.subr.mxu0 %v4774
      %4844 = vmatpush1.msra.mxu0 %v4773
      %4845 = vmatprep.subr.mxu0 %v4772
      %4846 = vmatpush1.msra.mxu0 %v4771
      %4847 = vmatprep.subr.mxu0 %v4770
      %4848 = vmatpush1.msra.mxu0 %v4769
      %4849 = vmatprep.subr.mxu0 %v4768
      %4850 = vmatpush1.msra.mxu0 %v4767
      %4851 = vmatprep.subr.mxu0 %v4766
      %4852 = vmatpush1.msra.mxu0 %v4765
      %4853 = vmatprep.subr.mxu0 %v4764
      %4854 = vmatpush1.msra.mxu0 %v4763
      %4855 = vmatprep.subr.mxu0 %v4762
      %4856 = vmatpush1.msra.mxu0 %v4761
      %4857 = vmatprep.subr.mxu0 %v4824
      %4858 = vmatpush2.msra.mxu0 %v4823
      %4859 = vmatprep.subr.mxu0 %v4822
      %4860 = vmatpush2.msra.mxu0 %v4821
      %4861 = vmatprep.subr.mxu0 %v4820
      %4862 = vmatpush2.msra.mxu0 %v4819
      %4863 = vmatprep.subr.mxu0 %v4818
      %4864 = vmatpush2.msra.mxu0 %v4817
      %4865 = vmatprep.subr.mxu0 %v4816
      %4866 = vmatpush2.msra.mxu0 %v4815
      %4867 = vmatprep.subr.mxu0 %v4814
      %4868 = vmatpush2.msra.mxu0 %v4813
      %4869 = vmatprep.subr.mxu0 %v4812
      %4870 = vmatpush2.msra.mxu0 %v4811
      %4871 = vmatprep.subr.mxu0 %v4810
      %4872 = vmatpush2.msra.mxu0 %v4809
      %4873 = vmatprep.subr.mxu0 %v4808
      %4874 = vmatpush2.msra.mxu0 %v4807
      %4875 = vmatprep.subr.mxu0 %v4806
      %4876 = vmatpush2.msra.mxu0 %v4805
      %4877 = vmatprep.subr.mxu0 %v4804
      %4878 = vmatpush2.msra.mxu0 %v4803
      %4879 = vmatprep.subr.mxu0 %v4802
      %4880 = vmatpush2.msra.mxu0 %v4801
      %4881 = vmatprep.subr.mxu0 %v4800
      %4882 = vmatpush2.msra.mxu0 %v4799
      %4883 = vmatprep.subr.mxu0 %v4798
      %4884 = vmatpush2.msra.mxu0 %v4797
      %4885 = vmatprep.subr.mxu0 %v4796
      %4886 = vmatpush2.msra.mxu0 %v4795
      %4887 = vmatprep.subr.mxu0 %v4794
      %4888 = vmatpush2.msra.mxu0 %v4793
      %4889 = vmatprep.mubr.f32.mxu0 %v3212
      %4890 = vmatmul.mubr.f32.gmra.mxu0 %v3210
      %v4891 = vpop.f32.mrf.mxu0
      %v4892 = vadd.f32 0.0, %v4891
      %v4893 = vpop.f32.mrf.mxu0
      %v4894 = vadd.f32 0.0, %v4893
      %4895 = vmatprep.mubr.f32.mxu0 %v3218
      %4896 = vmatmul.mubr.f32.gmra.mxu0 %v3216
      %v4897 = vpop.f32.mrf.mxu0
      %v4898 = vadd.f32 0.0, %v4897
      %v4899 = vpop.f32.mrf.mxu0
      %v4900 = vadd.f32 0.0, %v4899
      %4901 = vmatprep.mubr.f32.mxu0 %v3224
      %4902 = vmatmul.mubr.f32.gmra.mxu0 %v3222
      %v4903 = vpop.f32.mrf.mxu0
      %v4904 = vadd.f32 0.0, %v4903
      %v4905 = vpop.f32.mrf.mxu0
      %v4906 = vadd.f32 0.0, %v4905
      %4907 = vmatprep.mubr.f32.mxu0 %v3230
      %4908 = vmatmul.mubr.f32.gmra.mxu0 %v3228
      %v4909 = vpop.f32.mrf.mxu0
      %v4910 = vadd.f32 0.0, %v4909
      %v4911 = vpop.f32.mrf.mxu0
      %v4912 = vadd.f32 0.0, %v4911
      %4913 = vdwg.mxu0
      %v4914 = vadd.f32 %v4753, %v4892
      %v4915 = vadd.f32 %v4754, %v4894
      %v4916 = vadd.f32 %v4755, %v4898
      %v4917 = vadd.f32 %v4756, %v4900
      %v4918 = vadd.f32 %v4757, %v4904
      %v4919 = vadd.f32 %v4758, %v4906
      %v4920 = vadd.f32 %v4759, %v4910
      %v4921 = vadd.f32 %v4760, %v4912
      %v4922 = vld [vmem:[%s15] sm:$0xff]
      %v4923 = vld [vmem:[%s15 + $0x8] sm:$0xff]
      %v4924 = vld [vmem:[%s15 + $0x10] sm:$0xff]
      %v4925 = vld [vmem:[%s15 + $0x18] sm:$0xff]
      %v4926 = vld [vmem:[%s15 + $0x20] sm:$0xff]
      %v4927 = vld [vmem:[%s15 + $0x28] sm:$0xff]
      %v4928 = vld [vmem:[%s15 + $0x30] sm:$0xff]
      %v4929 = vld [vmem:[%s15 + $0x38] sm:$0xff]
      %v4930 = vld [vmem:[%s15 + $0x40] sm:$0xff]
      %v4931 = vld [vmem:[%s15 + $0x48] sm:$0xff]
      %v4932 = vld [vmem:[%s15 + $0x50] sm:$0xff]
      %v4933 = vld [vmem:[%s15 + $0x58] sm:$0xff]
      %v4934 = vld [vmem:[%s15 + $0x60] sm:$0xff]
      %v4935 = vld [vmem:[%s15 + $0x68] sm:$0xff]
      %v4936 = vld [vmem:[%s15 + $0x70] sm:$0xff]
      %v4937 = vld [vmem:[%s15 + $0x78] sm:$0xff]
      %v4938 = vld [vmem:[%s15 + $0x80] sm:$0xff]
      %v4939 = vld [vmem:[%s15 + $0x88] sm:$0xff]
      %v4940 = vld [vmem:[%s15 + $0x90] sm:$0xff]
      %v4941 = vld [vmem:[%s15 + $0x98] sm:$0xff]
      %v4942 = vld [vmem:[%s15 + $0xa0] sm:$0xff]
      %v4943 = vld [vmem:[%s15 + $0xa8] sm:$0xff]
      %v4944 = vld [vmem:[%s15 + $0xb0] sm:$0xff]
      %v4945 = vld [vmem:[%s15 + $0xb8] sm:$0xff]
      %v4946 = vld [vmem:[%s15 + $0xc0] sm:$0xff]
      %v4947 = vld [vmem:[%s15 + $0xc8] sm:$0xff]
      %v4948 = vld [vmem:[%s15 + $0xd0] sm:$0xff]
      %v4949 = vld [vmem:[%s15 + $0xd8] sm:$0xff]
      %v4950 = vld [vmem:[%s15 + $0xe0] sm:$0xff]
      %v4951 = vld [vmem:[%s15 + $0xe8] sm:$0xff]
      %v4952 = vld [vmem:[%s15 + $0xf0] sm:$0xff]
      %v4953 = vld [vmem:[%s15 + $0xf8] sm:$0xff]
      %v4954 = vld [vmem:[%s15 + $0x100] sm:$0xff]
      %v4955 = vld [vmem:[%s15 + $0x108] sm:$0xff]
      %v4956 = vld [vmem:[%s15 + $0x110] sm:$0xff]
      %v4957 = vld [vmem:[%s15 + $0x118] sm:$0xff]
      %v4958 = vld [vmem:[%s15 + $0x120] sm:$0xff]
      %v4959 = vld [vmem:[%s15 + $0x128] sm:$0xff]
      %v4960 = vld [vmem:[%s15 + $0x130] sm:$0xff]
      %v4961 = vld [vmem:[%s15 + $0x138] sm:$0xff]
      %v4962 = vld [vmem:[%s15 + $0x140] sm:$0xff]
      %v4963 = vld [vmem:[%s15 + $0x148] sm:$0xff]
      %v4964 = vld [vmem:[%s15 + $0x150] sm:$0xff]
      %v4965 = vld [vmem:[%s15 + $0x158] sm:$0xff]
      %v4966 = vld [vmem:[%s15 + $0x160] sm:$0xff]
      %v4967 = vld [vmem:[%s15 + $0x168] sm:$0xff]
      %v4968 = vld [vmem:[%s15 + $0x170] sm:$0xff]
      %v4969 = vld [vmem:[%s15 + $0x178] sm:$0xff]
      %v4970 = vld [vmem:[%s15 + $0x180] sm:$0xff]
      %v4971 = vld [vmem:[%s15 + $0x188] sm:$0xff]
      %v4972 = vld [vmem:[%s15 + $0x190] sm:$0xff]
      %v4973 = vld [vmem:[%s15 + $0x198] sm:$0xff]
      %v4974 = vld [vmem:[%s15 + $0x1a0] sm:$0xff]
      %v4975 = vld [vmem:[%s15 + $0x1a8] sm:$0xff]
      %v4976 = vld [vmem:[%s15 + $0x1b0] sm:$0xff]
      %v4977 = vld [vmem:[%s15 + $0x1b8] sm:$0xff]
      %v4978 = vld [vmem:[%s15 + $0x1c0] sm:$0xff]
      %v4979 = vld [vmem:[%s15 + $0x1c8] sm:$0xff]
      %v4980 = vld [vmem:[%s15 + $0x1d0] sm:$0xff]
      %v4981 = vld [vmem:[%s15 + $0x1d8] sm:$0xff]
      %v4982 = vld [vmem:[%s15 + $0x1e0] sm:$0xff]
      %v4983 = vld [vmem:[%s15 + $0x1e8] sm:$0xff]
      %v4984 = vld [vmem:[%s15 + $0x1f0] sm:$0xff]
      %v4985 = vld [vmem:[%s15 + $0x1f8] sm:$0xff]
      %4986 = vmatprep.subr.mxu0 %v4953
      %4987 = vmatpush1.msra.mxu0 %v4952
      %4988 = vmatprep.subr.mxu0 %v4951
      %4989 = vmatpush1.msra.mxu0 %v4950
      %4990 = vmatprep.subr.mxu0 %v4949
      %4991 = vmatpush1.msra.mxu0 %v4948
      %4992 = vmatprep.subr.mxu0 %v4947
      %4993 = vmatpush1.msra.mxu0 %v4946
      %4994 = vmatprep.subr.mxu0 %v4945
      %4995 = vmatpush1.msra.mxu0 %v4944
      %4996 = vmatprep.subr.mxu0 %v4943
      %4997 = vmatpush1.msra.mxu0 %v4942
      %4998 = vmatprep.subr.mxu0 %v4941
      %4999 = vmatpush1.msra.mxu0 %v4940
      %5000 = vmatprep.subr.mxu0 %v4939
      %5001 = vmatpush1.msra.mxu0 %v4938
      %5002 = vmatprep.subr.mxu0 %v4937
      %5003 = vmatpush1.msra.mxu0 %v4936
      %5004 = vmatprep.subr.mxu0 %v4935
      %5005 = vmatpush1.msra.mxu0 %v4934
      %5006 = vmatprep.subr.mxu0 %v4933
      %5007 = vmatpush1.msra.mxu0 %v4932
      %5008 = vmatprep.subr.mxu0 %v4931
      %5009 = vmatpush1.msra.mxu0 %v4930
      %5010 = vmatprep.subr.mxu0 %v4929
      %5011 = vmatpush1.msra.mxu0 %v4928
      %5012 = vmatprep.subr.mxu0 %v4927
      %5013 = vmatpush1.msra.mxu0 %v4926
      %5014 = vmatprep.subr.mxu0 %v4925
      %5015 = vmatpush1.msra.mxu0 %v4924
      %5016 = vmatprep.subr.mxu0 %v4923
      %5017 = vmatpush1.msra.mxu0 %v4922
      %5018 = vmatprep.subr.mxu0 %v4985
      %5019 = vmatpush2.msra.mxu0 %v4984
      %5020 = vmatprep.subr.mxu0 %v4983
      %5021 = vmatpush2.msra.mxu0 %v4982
      %5022 = vmatprep.subr.mxu0 %v4981
      %5023 = vmatpush2.msra.mxu0 %v4980
      %5024 = vmatprep.subr.mxu0 %v4979
      %5025 = vmatpush2.msra.mxu0 %v4978
      %5026 = vmatprep.subr.mxu0 %v4977
      %5027 = vmatpush2.msra.mxu0 %v4976
      %5028 = vmatprep.subr.mxu0 %v4975
      %5029 = vmatpush2.msra.mxu0 %v4974
      %5030 = vmatprep.subr.mxu0 %v4973
      %5031 = vmatpush2.msra.mxu0 %v4972
      %5032 = vmatprep.subr.mxu0 %v4971
      %5033 = vmatpush2.msra.mxu0 %v4970
      %5034 = vmatprep.subr.mxu0 %v4969
      %5035 = vmatpush2.msra.mxu0 %v4968
      %5036 = vmatprep.subr.mxu0 %v4967
      %5037 = vmatpush2.msra.mxu0 %v4966
      %5038 = vmatprep.subr.mxu0 %v4965
      %5039 = vmatpush2.msra.mxu0 %v4964
      %5040 = vmatprep.subr.mxu0 %v4963
      %5041 = vmatpush2.msra.mxu0 %v4962
      %5042 = vmatprep.subr.mxu0 %v4961
      %5043 = vmatpush2.msra.mxu0 %v4960
      %5044 = vmatprep.subr.mxu0 %v4959
      %5045 = vmatpush2.msra.mxu0 %v4958
      %5046 = vmatprep.subr.mxu0 %v4957
      %5047 = vmatpush2.msra.mxu0 %v4956
      %5048 = vmatprep.subr.mxu0 %v4955
      %5049 = vmatpush2.msra.mxu0 %v4954
      %5050 = vmatprep.mubr.f32.mxu0 %v3236
      %5051 = vmatmul.mubr.f32.gmra.mxu0 %v3234
      %v5052 = vpop.f32.mrf.mxu0
      %v5053 = vadd.f32 0.0, %v5052
      %v5054 = vpop.f32.mrf.mxu0
      %v5055 = vadd.f32 0.0, %v5054
      %5056 = vmatprep.mubr.f32.mxu0 %v3242
      %5057 = vmatmul.mubr.f32.gmra.mxu0 %v3240
      %v5058 = vpop.f32.mrf.mxu0
      %v5059 = vadd.f32 0.0, %v5058
      %v5060 = vpop.f32.mrf.mxu0
      %v5061 = vadd.f32 0.0, %v5060
      %5062 = vmatprep.mubr.f32.mxu0 %v3248
      %5063 = vmatmul.mubr.f32.gmra.mxu0 %v3246
      %v5064 = vpop.f32.mrf.mxu0
      %v5065 = vadd.f32 0.0, %v5064
      %v5066 = vpop.f32.mrf.mxu0
      %v5067 = vadd.f32 0.0, %v5066
      %5068 = vmatprep.mubr.f32.mxu0 %v3254
      %5069 = vmatmul.mubr.f32.gmra.mxu0 %v3252
      %v5070 = vpop.f32.mrf.mxu0
      %v5071 = vadd.f32 0.0, %v5070
      %v5072 = vpop.f32.mrf.mxu0
      %v5073 = vadd.f32 0.0, %v5072
      %5074 = vdwg.mxu0
      %v5075 = vadd.f32 %v4914, %v5053
      %v5076 = vadd.f32 %v4915, %v5055
      %v5077 = vadd.f32 %v4916, %v5059
      %v5078 = vadd.f32 %v4917, %v5061
      %v5079 = vadd.f32 %v4918, %v5065
      %v5080 = vadd.f32 %v4919, %v5067
      %v5081 = vadd.f32 %v4920, %v5071
      %v5082 = vadd.f32 %v4921, %v5073
      %v5083 = vld [vmem:[%s5] sm:$0xff]
      %v5084 = vld [vmem:[%s5 + $0x8] sm:$0xff]
      %v5085 = vld [vmem:[%s5 + $0x10] sm:$0xff]
      %v5086 = vld [vmem:[%s5 + $0x18] sm:$0xff]
      %v5087 = vmax.f32 %v5075, 0.0
      %v5088 = vmax.f32 %v5076, 0.0
      %v5089 = vmax.f32 %v5077, 0.0
      %v5090 = vmax.f32 %v5078, 0.0
      %v5091 = vmax.f32 %v5079, 0.0
      %v5092 = vmax.f32 %v5080, 0.0
      %v5093 = vmax.f32 %v5081, 0.0
      %v5094 = vmax.f32 %v5082, 0.0
      %v5095 = vld [vmem:[%s6] sm:$0xff]
      %v5096 = vld [vmem:[%s6 + $0x8] sm:$0xff]
      %v5097 = vld [vmem:[%s6 + $0x10] sm:$0xff]
      %v5098 = vld [vmem:[%s6 + $0x18] sm:$0xff]
      %5100 = vset.pattern.permute.xlu0 0
      %5101 = vperm.xlu0 %5100, %v5095
      %v5102 = vpop.permute.xlu0 %5101
      %5105 = vset.pattern.permute.xlu0 0
      %5106 = vperm.xlu0 %5105, %v5096
      %v5107 = vpop.permute.xlu0 %5106
      %5110 = vset.pattern.permute.xlu0 0
      %5111 = vperm.xlu0 %5110, %v5097
      %v5112 = vpop.permute.xlu0 %5111
      %5115 = vset.pattern.permute.xlu0 0
      %5116 = vperm.xlu0 %5115, %v5098
      %v5117 = vpop.permute.xlu0 %5116
      %v5120 = vsel %vm684, %v5083, 0
      %v5123 = vsel %vm684, %v5084, 0
      %v5126 = vsel %vm684, %v5085, 0
      %v5129 = vsel %vm684, %v5086, 0
      %5131 = vmatprep.subr.mxu0 0.0
      %5132 = vmatpush1.msra.mxu0 0.0
      %5133 = vmatprep.subr.mxu0 0.0
      %5134 = vmatpush1.msra.mxu0 0.0
      %5135 = vmatprep.subr.mxu0 0.0
      %5136 = vmatpush1.msra.mxu0 0.0
      %5137 = vmatprep.subr.mxu0 0.0
      %5138 = vmatpush1.msra.mxu0 0.0
      %5139 = vmatprep.subr.mxu0 0.0
      %5140 = vmatpush1.msra.mxu0 0.0
      %5141 = vmatprep.subr.mxu0 0.0
      %5142 = vmatpush1.msra.mxu0 0.0
      %5143 = vmatprep.subr.mxu0 0.0
      %5144 = vmatpush1.msra.mxu0 0.0
      %5145 = vmatprep.subr.mxu0 0.0
      %5146 = vmatpush1.msra.mxu0 0.0
      %5147 = vmatprep.subr.mxu0 0.0
      %5148 = vmatpush1.msra.mxu0 0.0
      %5149 = vmatprep.subr.mxu0 0.0
      %5150 = vmatpush1.msra.mxu0 0.0
      %5151 = vmatprep.subr.mxu0 0.0
      %5152 = vmatpush1.msra.mxu0 0.0
      %5153 = vmatprep.subr.mxu0 0.0
      %5154 = vmatpush1.msra.mxu0 0.0
      %5155 = vmatprep.subr.mxu0 %v5094
      %5156 = vmatpush1.msra.mxu0 %v5093
      %5157 = vmatprep.subr.mxu0 %v5092
      %5158 = vmatpush1.msra.mxu0 %v5091
      %5159 = vmatprep.subr.mxu0 %v5090
      %5160 = vmatpush1.msra.mxu0 %v5089
      %5161 = vmatprep.subr.mxu0 %v5088
      %5162 = vmatpush1.msra.mxu0 %v5087
      %5163 = vmatprep.subr.mxu0 0.0
      %5164 = vmatpush2.msra.mxu0 0.0
      %5165 = vmatprep.subr.mxu0 0.0
      %5166 = vmatpush2.msra.mxu0 0.0
      %5167 = vmatprep.subr.mxu0 0.0
      %5168 = vmatpush2.msra.mxu0 0.0
      %5169 = vmatprep.subr.mxu0 0.0
      %5170 = vmatpush2.msra.mxu0 0.0
      %5171 = vmatprep.subr.mxu0 0.0
      %5172 = vmatpush2.msra.mxu0 0.0
      %5173 = vmatprep.subr.mxu0 0.0
      %5174 = vmatpush2.msra.mxu0 0.0
      %5175 = vmatprep.subr.mxu0 0.0
      %5176 = vmatpush2.msra.mxu0 0.0
      %5177 = vmatprep.subr.mxu0 0.0
      %5178 = vmatpush2.msra.mxu0 0.0
      %5179 = vmatprep.subr.mxu0 0.0
      %5180 = vmatpush2.msra.mxu0 0.0
      %5181 = vmatprep.subr.mxu0 0.0
      %5182 = vmatpush2.msra.mxu0 0.0
      %5183 = vmatprep.subr.mxu0 0.0
      %5184 = vmatpush2.msra.mxu0 0.0
      %5185 = vmatprep.subr.mxu0 0.0
      %5186 = vmatpush2.msra.mxu0 0.0
      %5187 = vmatprep.subr.mxu0 0.0
      %5188 = vmatpush2.msra.mxu0 0.0
      %5189 = vmatprep.subr.mxu0 0.0
      %5190 = vmatpush2.msra.mxu0 0.0
      %5191 = vmatprep.subr.mxu0 0.0
      %5192 = vmatpush2.msra.mxu0 0.0
      %5193 = vmatprep.subr.mxu0 0.0
      %5194 = vmatpush2.msra.mxu0 0.0
      %5195 = vmatprep.mubr.f32.mxu0 0.0
      %5196 = vmatmul.mubr.f32.gmra.mxu0 %v5120
      %v5197 = vpop.f32.mrf.mxu0
      %v5198 = vadd.f32 %v5102, %v5197
      %v5199 = vpop.f32.mrf.mxu0
      %v5200 = vadd.f32 %v5102, %v5199
      %5201 = vmatprep.mubr.f32.mxu0 0.0
      %5202 = vmatmul.mubr.f32.gmra.mxu0 %v5123
      %v5203 = vpop.f32.mrf.mxu0
      %v5204 = vadd.f32 %v5107, %v5203
      %v5205 = vpop.f32.mrf.mxu0
      %v5206 = vadd.f32 %v5107, %v5205
      %5207 = vmatprep.mubr.f32.mxu0 0.0
      %5208 = vmatmul.mubr.f32.gmra.mxu0 %v5126
      %v5209 = vpop.f32.mrf.mxu0
      %v5210 = vadd.f32 %v5112, %v5209
      %v5211 = vpop.f32.mrf.mxu0
      %v5212 = vadd.f32 %v5112, %v5211
      %5213 = vmatprep.mubr.f32.mxu0 0.0
      %5214 = vmatmul.mubr.f32.gmra.mxu0 %v5129
      %v5215 = vpop.f32.mrf.mxu0
      %v5216 = vadd.f32 %v5117, %v5215
      %v5217 = vpop.f32.mrf.mxu0
      %v5218 = vadd.f32 %v5117, %v5217
      %5219 = vdwg.mxu0
      %v5220 = vld [vmem:[%s7] sm:$0xff]
      %v5221 = vld [vmem:[%s7 + $0x8] sm:$0xff]
      %v5222 = vld [vmem:[%s7 + $0x10] sm:$0xff]
      %v5223 = vld [vmem:[%s7 + $0x18] sm:$0xff]
      %v5225 = vsel %vm684, %v5220, 0
      %v5228 = vsel %vm684, %v5221, 0
      %v5231 = vsel %vm684, %v5222, 0
      %v5234 = vsel %vm684, %v5223, 0
      %5236 = vmatprep.subr.mxu0 0.0
      %5237 = vmatpush1.msra.mxu0 0.0
      %5238 = vmatprep.subr.mxu0 0.0
      %5239 = vmatpush1.msra.mxu0 0.0
      %5240 = vmatprep.subr.mxu0 0.0
      %5241 = vmatpush1.msra.mxu0 0.0
      %5242 = vmatprep.subr.mxu0 0.0
      %5243 = vmatpush1.msra.mxu0 0.0
      %5244 = vmatprep.subr.mxu0 0.0
      %5245 = vmatpush1.msra.mxu0 0.0
      %5246 = vmatprep.subr.mxu0 0.0
      %5247 = vmatpush1.msra.mxu0 0.0
      %5248 = vmatprep.subr.mxu0 0.0
      %5249 = vmatpush1.msra.mxu0 0.0
      %5250 = vmatprep.subr.mxu0 0.0
      %5251 = vmatpush1.msra.mxu0 0.0
      %5252 = vmatprep.subr.mxu0 0.0
      %5253 = vmatpush1.msra.mxu0 0.0
      %5254 = vmatprep.subr.mxu0 0.0
      %5255 = vmatpush1.msra.mxu0 0.0
      %5256 = vmatprep.subr.mxu0 0.0
      %5257 = vmatpush1.msra.mxu0 0.0
      %5258 = vmatprep.subr.mxu0 0.0
      %5259 = vmatpush1.msra.mxu0 0.0
      %5260 = vmatprep.subr.mxu0 %v5218
      %5261 = vmatpush1.msra.mxu0 %v5216
      %5262 = vmatprep.subr.mxu0 %v5212
      %5263 = vmatpush1.msra.mxu0 %v5210
      %5264 = vmatprep.subr.mxu0 %v5206
      %5265 = vmatpush1.msra.mxu0 %v5204
      %5266 = vmatprep.subr.mxu0 %v5200
      %5267 = vmatpush1.msra.mxu0 %v5198
      %5268 = vmatprep.subr.mxu0 0.0
      %5269 = vmatpush2.msra.mxu0 0.0
      %5270 = vmatprep.subr.mxu0 0.0
      %5271 = vmatpush2.msra.mxu0 0.0
      %5272 = vmatprep.subr.mxu0 0.0
      %5273 = vmatpush2.msra.mxu0 0.0
      %5274 = vmatprep.subr.mxu0 0.0
      %5275 = vmatpush2.msra.mxu0 0.0
      %5276 = vmatprep.subr.mxu0 0.0
      %5277 = vmatpush2.msra.mxu0 0.0
      %5278 = vmatprep.subr.mxu0 0.0
      %5279 = vmatpush2.msra.mxu0 0.0
      %5280 = vmatprep.subr.mxu0 0.0
      %5281 = vmatpush2.msra.mxu0 0.0
      %5282 = vmatprep.subr.mxu0 0.0
      %5283 = vmatpush2.msra.mxu0 0.0
      %5284 = vmatprep.subr.mxu0 0.0
      %5285 = vmatpush2.msra.mxu0 0.0
      %5286 = vmatprep.subr.mxu0 0.0
      %5287 = vmatpush2.msra.mxu0 0.0
      %5288 = vmatprep.subr.mxu0 0.0
      %5289 = vmatpush2.msra.mxu0 0.0
      %5290 = vmatprep.subr.mxu0 0.0
      %5291 = vmatpush2.msra.mxu0 0.0
      %5292 = vmatprep.subr.mxu0 0.0
      %5293 = vmatpush2.msra.mxu0 0.0
      %5294 = vmatprep.subr.mxu0 0.0
      %5295 = vmatpush2.msra.mxu0 0.0
      %5296 = vmatprep.subr.mxu0 0.0
      %5297 = vmatpush2.msra.mxu0 0.0
      %5298 = vmatprep.subr.mxu0 0.0
      %5299 = vmatpush2.msra.mxu0 0.0
      %5300 = vmatprep.mubr.f32.mxu0 0.0
      %5301 = vmatmul.mubr.f32.gmra.mxu0 %v5225
      %v5302 = vpop.f32.mrf.mxu0
      %v5303 = vadd.f32 0.0, %v5302
      %v5304 = vpop.f32.mrf.mxu0
      %v5305 = vadd.f32 0.0, %v5304
      %5306 = vmatprep.mubr.f32.mxu0 0.0
      %5307 = vmatmul.mubr.f32.gmra.mxu0 %v5228
      %v5308 = vpop.f32.mrf.mxu0
      %v5309 = vadd.f32 0.0, %v5308
      %v5310 = vpop.f32.mrf.mxu0
      %v5311 = vadd.f32 0.0, %v5310
      %5312 = vmatprep.mubr.f32.mxu0 0.0
      %5313 = vmatmul.mubr.f32.gmra.mxu0 %v5231
      %v5314 = vpop.f32.mrf.mxu0
      %v5315 = vadd.f32 0.0, %v5314
      %v5316 = vpop.f32.mrf.mxu0
      %v5317 = vadd.f32 0.0, %v5316
      %5318 = vmatprep.mubr.f32.mxu0 0.0
      %5319 = vmatmul.mubr.f32.gmra.mxu0 %v5234
      %v5320 = vpop.f32.mrf.mxu0
      %v5321 = vadd.f32 0.0, %v5320
      %v5322 = vpop.f32.mrf.mxu0
      %v5323 = vadd.f32 0.0, %v5322
      %5324 = vdwg.mxu0
      %v5325 = vadd.f32 %v5075, %v5303
      %v5326 = vadd.f32 %v5076, %v5305
      %v5327 = vadd.f32 %v5077, %v5309
      %v5328 = vadd.f32 %v5078, %v5311
      %v5329 = vadd.f32 %v5079, %v5315
      %v5330 = vadd.f32 %v5080, %v5317
      %v5331 = vadd.f32 %v5081, %v5321
      %v5332 = vadd.f32 %v5082, %v5323
      %v5333 = vld [vmem:[%s8] sm:$0xff]
      %v5334 = vld [vmem:[%s8 + $0x8] sm:$0xff]
      %v5335 = vld [vmem:[%s8 + $0x10] sm:$0xff]
      %v5336 = vld [vmem:[%s8 + $0x18] sm:$0xff]
      %5338 = vset.pattern.permute.xlu0 0
      %5339 = vperm.xlu0 %5338, %v5333
      %v5340 = vpop.permute.xlu0 %5339
      %5343 = vset.pattern.permute.xlu0 0
      %5344 = vperm.xlu0 %5343, %v5334
      %v5345 = vpop.permute.xlu0 %5344
      %5348 = vset.pattern.permute.xlu0 0
      %5349 = vperm.xlu0 %5348, %v5335
      %v5350 = vpop.permute.xlu0 %5349
      %5353 = vset.pattern.permute.xlu0 0
      %5354 = vperm.xlu0 %5353, %v5336
      %v5355 = vpop.permute.xlu0 %5354
      %v5357 = vadd.f32 %v5325, %v5340
      %v5358 = vadd.f32 %v5326, %v5340
      %v5359 = vadd.f32 %v5327, %v5345
      %v5360 = vadd.f32 %v5328, %v5345
      %v5361 = vadd.f32 %v5329, %v5350
      %v5362 = vadd.f32 %v5330, %v5350
      %v5363 = vadd.f32 %v5331, %v5355
      %v5364 = vadd.f32 %v5332, %v5355
      %s5365 = scalar_lea.vmem %s578, 64
      %5366 = vst [vmem:[%s5365] sm:$0xff] %v5357
      %5367 = vst [vmem:[%s5365 + $0x8] sm:$0xff] %v5358
      %5368 = vst [vmem:[%s5365 + $0x10] sm:$0xff] %v5359
      %5369 = vst [vmem:[%s5365 + $0x18] sm:$0xff] %v5360
      %5370 = vst [vmem:[%s5365 + $0x20] sm:$0xff] %v5361
      %5371 = vst [vmem:[%s5365 + $0x28] sm:$0xff] %v5362
      %5372 = vst [vmem:[%s5365 + $0x30] sm:$0xff] %v5363
      %5373 = vst [vmem:[%s5365 + $0x38] sm:$0xff] %v5364
      %s5374 = smul.u32 2, %s27
      %p5375 = scmp.lt.s32.totalorder %s5374, 7
      %s5376 = scalar_select %p5375, %s5374, 7
      %s5377 = smul.addr %s5376, 8
      %s5378 = smul.addr %s5377, 8
      %s5379 = scalar_lea.vmem %s16, %s5378
      // Predicated region
      $region85: #{sswl_plus_layer_forward.1} parent=83 // pred_check
        %p5380 = pneg %p396
      $region86: #{sswl_plus_layer_forward.1} parent=83 // pred_check_branch
        %5382 = sbr.rel (%p5380) target = $region88
      $region87: #{sswl_plus_layer_forward.1} parent=83 // pred_region
        %s5383 = smul.u32 2, %s27
      $region88: #{sswl_plus_layer_forward.1} parent=83 // pred_fallthru
        _
    $region84: #{sswl_plus_layer_forward.1} parent=5 // pred_fallthru
      _
    %p5384 = scmp.le.s32.totalorder 2, %s22
    // Predicated region
    $region89: #{sswl_plus_layer_forward.1} parent=5 // pred_check
      %p5385 = pneg %p5384
    $region90: #{sswl_plus_layer_forward.1} parent=5 // pred_check_branch
      %5387 = sbr.rel (%p5385) target = $region92
    $region91: #{sswl_plus_layer_forward.1} parent=5 // pred_region
      %s5388 = ssub.s32 %s22, 2
      // Predicated region
      $region93: #{sswl_plus_layer_forward.1} parent=91 // pred_check
        %p5389 = pneg %p402
      $region94: #{sswl_plus_layer_forward.1} parent=91 // pred_check_branch
        %5391 = sbr.rel (%p5389) target = $region96
      $region95: #{sswl_plus_layer_forward.1} parent=91 // pred_region
        %s5392 = smul.u32 2, %s28
        %p5393 = scmp.lt.s32.totalorder %s5392, 7
        %s5394 = scalar_select %p5393, %s5392, 7
        %s5395 = smul.addr %s5394, 8
        %s5396 = smul.addr %s5395, 8
        %s5397 = scalar_lea.vmem %s16, %s5396
      $region96: #{sswl_plus_layer_forward.1} parent=91 // pred_fallthru
        _
    $region92: #{sswl_plus_layer_forward.1} parent=5 // pred_fallthru
      _
  $region6: #{sswl_plus_layer_forward.1} parent=0 // loop_footer
    %s26 = sadd.s32 1, %s22
  $region7: #{sswl_plus_layer_forward.1} parent=0 // loop_footer_branch
    %21 = sbr.rel target = $region3
  $region8: #{sswl_plus_layer_forward.1} parent=0 // loop_exit
    _

</llo_original>
